<compile_context>
chip_gen: v5e
topology: v5e:2x2
jax: 0.10.0
libtpu: 0.0.40
codegen_flags: <defaults>
</compile_context>

<pallas_src>
import functools
import math

import jax
import jax.numpy as jnp
from jax import lax
from jax.experimental import pallas as pl
from jax.experimental.pallas import tpu as pltpu


def _block_kernel(x_ref, w1_ref, b1_ref, g1_ref, be1_ref,
                  t_ref, wt_ref, bt_ref,
                  w2_ref, b2_ref, g2_ref, be2_ref,
                  out_ref,
                  pad1_ref, pad2_ref, col1_ref, col2_ref,
                  *, eps: float):
    # x_ref   : (N, H, W, Cin)       f32  NHWC input
    # w1_ref  : (9*Cin, Cout)        bf16 conv1 weights, taps stacked on K
    # w2_ref  : (9*Cout, Cout)       bf16 conv2 weights, taps stacked on K
    # b*/g*/be* : (1, Cout)          f32  conv biases / BN gamma / BN beta
    # t_ref   : (N, T) bf16, wt_ref: (T, Cout) bf16, bt_ref: (1, Cout) f32
    # out_ref : (Cout, N*H2*W2)      f32  channel-major, lane-dense store
    # pad1_ref: (N, H+2, W+2, Cin)   f32  zero-padded conv1 input (scratch)
    # pad2_ref: (N, H+2, W+2, Cout)  f32  zero-padded conv2 input (scratch)
    # col1_ref: (N*H*W, 9*Cin)       bf16 im2col patches, conv1 (scratch)
    # col2_ref: (N*H*W, 9*Cout)      bf16 im2col patches, conv2 (scratch)
    N, H, W, Cin = x_ref.shape
    Cout = out_ref.shape[0]
    H2, W2 = H // 2, W // 2
    R = N * H * W            # pre-pool rows
    R2 = N * H2 * W          # rows after H-direction pooling
    Rout = N * H2 * W2       # pooled rows

    def im2col(pad_ref, col_ref, c):
        # One window read + one static lane-slice store per tap; the 3x3 conv
        # then becomes a single K = 9*c MXU matmul (no per-tap matmuls, no
        # concatenates, no accumulator adds).
        for k in range(9):
            dy, dx = k // 3, k % 3
            patch = pad_ref[:, dy:dy + H, dx:dx + W, :]        # (N, H, W, c)
            col_ref[:, k * c:(k + 1) * c] = (
                patch.reshape(R, c).astype(col_ref.dtype))

    def batchnorm(flat, g_ref, b_ref):
        # Train-mode BatchNorm2d over (N, H, W): one-pass stats, rsqrt on the
        # EUP, normalization folded into one fused scale+shift pass.
        mean = jnp.mean(flat, axis=0, keepdims=True)
        ex2 = jnp.mean(flat * flat, axis=0, keepdims=True)
        var = ex2 - mean * mean                                # biased variance
        scale = lax.rsqrt(var + eps) * g_ref[...]
        shift = b_ref[...] - mean * scale
        return flat * scale + shift

    # ---- conv1 (im2col, bf16 MXU operands, f32 accumulate) -> relu -> bn1 ---
    pad1_ref[...] = jnp.zeros(pad1_ref.shape, pad1_ref.dtype)
    pad1_ref[:, 1:H + 1, 1:W + 1, :] = x_ref[...]
    im2col(pad1_ref, col1_ref, Cin)
    h = jnp.dot(col1_ref[...], w1_ref[...],
                preferred_element_type=jnp.float32) + b1_ref[...]
    h = jnp.maximum(h, 0.0)
    h = batchnorm(h, g1_ref, be1_ref)                          # (R, Cout) f32

    # ---- time embedding: relu(t @ Wt + bt), broadcast over (H, W) -----------
    temb = jnp.dot(t_ref[...], wt_ref[...],
                   preferred_element_type=jnp.float32) + bt_ref[...]
    temb = jnp.maximum(temb, 0.0)                              # (N, Cout)
    h = (h.reshape(N, H * W, Cout) + temb[:, None, :]).reshape(R, Cout)

    # ---- conv2 (im2col) -> relu -> bn2 ---------------------------------------
    pad2_ref[...] = jnp.zeros(pad2_ref.shape, pad2_ref.dtype)
    pad2_ref[:, 1:H + 1, 1:W + 1, :] = h.reshape(N, H, W, Cout)
    im2col(pad2_ref, col2_ref, Cout)
    h = jnp.dot(col2_ref[...], w2_ref[...],
                preferred_element_type=jnp.float32) + b2_ref[...]
    h = jnp.maximum(h, 0.0)
    h = batchnorm(h, g2_ref, be2_ref)                          # (R, Cout) f32

    # ---- 2x2 max pool, stride 2, emitted channel-major ----------------------
    # H direction: leading-dim regroup + max (no relayout).
    hh = h.reshape(N * H2, 2, W, Cout)
    hp = jnp.maximum(hh[:, 0], hh[:, 1]).reshape(R2, Cout)     # (R2, Cout)
    # W direction: even/odd-row max folded straight into the output store via
    # two selection matmuls (MXU is otherwise idle here).  Each dot_general
    # contracts the row axis of hp, so it simultaneously picks the pooled rows
    # AND transposes to (Cout, Rout) -> a fully lane-dense (128-wide) store,
    # with no VMEM round-trip and no strided sublane loads.
    ri = lax.broadcasted_iota(jnp.int32, (R2, Rout), 0)
    ci = lax.broadcasted_iota(jnp.int32, (R2, Rout), 1)
    sel_even = (ri == 2 * ci).astype(jnp.float32)
    sel_odd = (ri == 2 * ci + 1).astype(jnp.float32)
    dnums = (((0,), (0,)), ((), ()))
    p_even = lax.dot_general(hp, sel_even, dnums,
                             preferred_element_type=jnp.float32)
    p_odd = lax.dot_general(hp, sel_odd, dnums,
                            preferred_element_type=jnp.float32)
    out_ref[...] = jnp.maximum(p_even, p_odd)                  # (Cout, Rout)


def _full_spec(shape):
    zeros = (0,) * len(shape)
    return pl.BlockSpec(shape, lambda: zeros)


def block_forward(x_nchw, t, params, *, eps: float = 1e-5,
                  matmul_dtype=jnp.bfloat16):
    """Forward of Block(in_ch, out_ch, time_emb_dim, up=False).

    x: (N, Cin, H, W), t: (N, T).  Conv / linear operands go through the MXU in
    `matmul_dtype` (bf16 by default) with f32 accumulation; everything else
    (BatchNorm, relu, pooling) stays in f32.
    """
    w1, b1, g1, be1, wt, bt, w2, b2, g2, be2 = params
    N, Cin, H, W = x_nchw.shape
    Cout = w1.shape[0]
    assert H % 2 == 0 and W % 2 == 0, "MaxPool2d(2) needs even H, W"
    H2, W2 = H // 2, W // 2

    # Wrapper-side glue: NCHW -> NHWC, conv weights (O,I,3,3) -> im2col layout
    # (9*I, O) with tap-major rows, 1-D params -> (1, C).
    x = jnp.transpose(x_nchw, (0, 2, 3, 1)).astype(jnp.float32)
    w1k = jnp.transpose(w1, (2, 3, 1, 0)).reshape(9 * Cin, Cout).astype(matmul_dtype)
    w2k = jnp.transpose(w2, (2, 3, 1, 0)).reshape(9 * Cout, Cout).astype(matmul_dtype)
    row = lambda v: v.reshape(1, -1).astype(jnp.float32)

    inputs = (x, w1k, row(b1), row(g1), row(be1),
              t.astype(matmul_dtype), wt.astype(matmul_dtype), row(bt),
              w2k, row(b2), row(g2), row(be2))

    kernel = functools.partial(_block_kernel, eps=eps)
    out_cm = pl.pallas_call(
        kernel,
        out_shape=jax.ShapeDtypeStruct((Cout, N * H2 * W2), jnp.float32),
        in_specs=[_full_spec(a.shape) for a in inputs],
        out_specs=_full_spec((Cout, N * H2 * W2)),
        scratch_shapes=[
            pltpu.VMEM((N, H + 2, W + 2, Cin), jnp.float32),    # pad1
            pltpu.VMEM((N, H + 2, W + 2, Cout), jnp.float32),   # pad2
            pltpu.VMEM((N * H * W, 9 * Cin), matmul_dtype),     # col1
            pltpu.VMEM((N * H * W, 9 * Cout), matmul_dtype),    # col2
        ],
        compiler_params=pltpu.CompilerParams(
            vmem_limit_bytes=32 * 1024 * 1024),
    )(*inputs)

    # (Cout, N*H2*W2) channel-major -> (N, Cout, H2, W2)
    return jnp.transpose(out_cm.reshape(Cout, N, H2, W2), (1, 0, 2, 3))


def _block_reference(x, t, params, *, eps: float = 1e-5,
                     matmul_dtype=jnp.bfloat16):
    """Pure-JAX reference of the PyTorch Block forward (train-mode BatchNorm).

    Conv / linear operands are cast to `matmul_dtype` with f32 accumulation so
    the reference uses the same MXU operand precision as the kernel.
    """
    w1, b1, g1, be1, wt, bt, w2, b2, g2, be2 = params

    def conv(v, w, b):
        out = lax.conv_general_dilated(
            v.astype(matmul_dtype), w.astype(matmul_dtype),
            window_strides=(1, 1), padding=((1, 1), (1, 1)),
            dimension_numbers=("NCHW", "OIHW", "NCHW"),
            preferred_element_type=jnp.float32)
        return out + b[None, :, None, None]

    def bn(v, g, be):
        mean = jnp.mean(v, axis=(0, 2, 3), keepdims=True)
        var = jnp.mean((v - mean) ** 2, axis=(0, 2, 3), keepdims=True)
        inv = lax.rsqrt(var + eps)
        return (v - mean) * inv * g[None, :, None, None] + be[None, :, None, None]

    h = bn(jax.nn.relu(conv(x, w1, b1)), g1, be1)
    temb = jax.nn.relu(
        jnp.dot(t.astype(matmul_dtype), wt.astype(matmul_dtype),
                preferred_element_type=jnp.float32) + bt)
    h = h + temb[:, :, None, None]
    h = bn(jax.nn.relu(conv(h, w2, b2)), g2, be2)
    N, C, H, W = h.shape
    return h.reshape(N, C, H // 2, 2, W // 2, 2).max(axis=(3, 5))


if __name__ == "__main__":
    key = jax.random.PRNGKey(0)
    N, Cin, Cout, H, W, T = 2, 4, 8, 16, 16, 32
    ks = jax.random.split(key, 12)

    x = jax.random.normal(ks[0], (N, Cin, H, W), jnp.float32)
    t = jax.random.normal(ks[1], (N, T), jnp.float32)
    w1 = jax.random.normal(ks[2], (Cout, Cin, 3, 3), jnp.float32) / math.sqrt(Cin * 9)
    b1 = 0.1 * jax.random.normal(ks[3], (Cout,), jnp.float32)
    g1 = 1.0 + 0.1 * jax.random.normal(ks[4], (Cout,), jnp.float32)
    be1 = 0.1 * jax.random.normal(ks[5], (Cout,), jnp.float32)
    wt = jax.random.normal(ks[6], (T, Cout), jnp.float32) / math.sqrt(T)     # time_mlp.weight.T
    bt = 0.1 * jax.random.normal(ks[7], (Cout,), jnp.float32)
    w2 = jax.random.normal(ks[8], (Cout, Cout, 3, 3), jnp.float32) / math.sqrt(Cout * 9)
    b2 = 0.1 * jax.random.normal(ks[9], (Cout,), jnp.float32)
    g2 = 1.0 + 0.1 * jax.random.normal(ks[10], (Cout,), jnp.float32)
    be2 = 0.1 * jax.random.normal(ks[11], (Cout,), jnp.float32)
    params = (w1, b1, g1, be1, wt, bt, w2, b2, g2, be2)

    out = block_forward(x, t, params)
    out = jax.block_until_ready(out)

    ref = _block_reference(x, t, params)
    assert out.shape == (N, Cout, H // 2, W // 2), out.shape
    err = float(jnp.max(jnp.abs(out - ref)))
    # bf16 MXU operands (f32 accumulation) in both kernel and reference;
    # residual mismatch is accumulation-order / BN one-pass-vs-two-pass only.
    assert jnp.allclose(out, ref, atol=1e-2, rtol=1e-2), err
    print("KERNEL_OK")
</pallas_src>

<mosaic_0001>
module attributes {stable_mosaic.version = 11 : i64} {
  func.func @_block_kernel(%arg0: memref<2x16x16x4xf32, #tpu.memory_space<vmem>>, %arg1: memref<36x8xbf16, #tpu.memory_space<vmem>>, %arg2: memref<1x8xf32, #tpu.memory_space<vmem>>, %arg3: memref<1x8xf32, #tpu.memory_space<vmem>>, %arg4: memref<1x8xf32, #tpu.memory_space<vmem>>, %arg5: memref<2x32xbf16, #tpu.memory_space<vmem>>, %arg6: memref<32x8xbf16, #tpu.memory_space<vmem>>, %arg7: memref<1x8xf32, #tpu.memory_space<vmem>>, %arg8: memref<72x8xbf16, #tpu.memory_space<vmem>>, %arg9: memref<1x8xf32, #tpu.memory_space<vmem>>, %arg10: memref<1x8xf32, #tpu.memory_space<vmem>>, %arg11: memref<1x8xf32, #tpu.memory_space<vmem>>, %arg12: memref<8x128xf32, #tpu.memory_space<vmem>>, %arg13: memref<2x18x18x4xf32, #tpu.memory_space<vmem>>, %arg14: memref<2x18x18x8xf32, #tpu.memory_space<vmem>>, %arg15: memref<512x36xbf16, #tpu.memory_space<vmem>>, %arg16: memref<512x72xbf16, #tpu.memory_space<vmem>>) attributes {dimension_semantics = [], scalar_prefetch = 0 : i64, scratch_operands = 4 : i64, tpu.core_type = #tpu.core_type<tc>} {
    %cst = arith.constant 0.000000e+00 : f32
    %0 = vector.broadcast %cst : f32 to vector<2x18x18x4xf32>
    %c0 = arith.constant 0 : index
    %c0_0 = arith.constant 0 : index
    %c0_1 = arith.constant 0 : index
    %c0_2 = arith.constant 0 : index
    %1 = vector.load %arg13[%c0, %c0_0, %c0_1, %c0_2] : memref<2x18x18x4xf32, #tpu.memory_space<vmem>>, vector<2x18x18x4xf32>
    tpu.vector_store %arg13[%c0, %c0_0, %c0_1, %c0_2], %0 {strides = array<i32>} : memref<2x18x18x4xf32, #tpu.memory_space<vmem>>, vector<2x18x18x4xf32>,
    %c0_3 = arith.constant 0 : index
    %c0_4 = arith.constant 0 : index
    %c0_5 = arith.constant 0 : index
    %c0_6 = arith.constant 0 : index
    %2 = vector.load %arg0[%c0_3, %c0_4, %c0_5, %c0_6] : memref<2x16x16x4xf32, #tpu.memory_space<vmem>>, vector<2x16x16x4xf32>
    %c0_7 = arith.constant 0 : index
    %c1 = arith.constant 1 : index
    %c1_8 = arith.constant 1 : index
    %c0_9 = arith.constant 0 : index
    %3 = vector.load %arg13[%c0_7, %c1, %c1_8, %c0_9] : memref<2x18x18x4xf32, #tpu.memory_space<vmem>>, vector<2x16x16x4xf32>
    tpu.vector_store %arg13[%c0_7, %c1, %c1_8, %c0_9], %2 {strides = array<i32>} : memref<2x18x18x4xf32, #tpu.memory_space<vmem>>, vector<2x16x16x4xf32>,
    %c0_10 = arith.constant 0 : index
    %c0_11 = arith.constant 0 : index
    %c0_12 = arith.constant 0 : index
    %c0_13 = arith.constant 0 : index
    %4 = vector.load %arg13[%c0_10, %c0_11, %c0_12, %c0_13] : memref<2x18x18x4xf32, #tpu.memory_space<vmem>>, vector<2x16x16x4xf32>
    %5 = vector.shape_cast %4 : vector<2x16x16x4xf32> to vector<512x4xf32>
    %6 = arith.truncf %5 : vector<512x4xf32> to vector<512x4xbf16>
    %c0_14 = arith.constant 0 : index
    %c0_15 = arith.constant 0 : index
    %7 = vector.load %arg15[%c0_14, %c0_15] : memref<512x36xbf16, #tpu.memory_space<vmem>>, vector<512x4xbf16>
    tpu.vector_store %arg15[%c0_14, %c0_15], %6 {strides = array<i32>} : memref<512x36xbf16, #tpu.memory_space<vmem>>, vector<512x4xbf16>,
    %c0_16 = arith.constant 0 : index
    %c0_17 = arith.constant 0 : index
    %c1_18 = arith.constant 1 : index
    %c0_19 = arith.constant 0 : index
    %8 = vector.load %arg13[%c0_16, %c0_17, %c1_18, %c0_19] : memref<2x18x18x4xf32, #tpu.memory_space<vmem>>, vector<2x16x16x4xf32>
    %9 = vector.shape_cast %8 : vector<2x16x16x4xf32> to vector<512x4xf32>
    %10 = arith.truncf %9 : vector<512x4xf32> to vector<512x4xbf16>
    %c0_20 = arith.constant 0 : index
    %c4 = arith.constant 4 : index
    %11 = vector.load %arg15[%c0_20, %c4] : memref<512x36xbf16, #tpu.memory_space<vmem>>, vector<512x4xbf16>
    tpu.vector_store %arg15[%c0_20, %c4], %10 {strides = array<i32>} : memref<512x36xbf16, #tpu.memory_space<vmem>>, vector<512x4xbf16>,
    %c0_21 = arith.constant 0 : index
    %c0_22 = arith.constant 0 : index
    %c2 = arith.constant 2 : index
    %c0_23 = arith.constant 0 : index
    %12 = vector.load %arg13[%c0_21, %c0_22, %c2, %c0_23] : memref<2x18x18x4xf32, #tpu.memory_space<vmem>>, vector<2x16x16x4xf32>
    %13 = vector.shape_cast %12 : vector<2x16x16x4xf32> to vector<512x4xf32>
    %14 = arith.truncf %13 : vector<512x4xf32> to vector<512x4xbf16>
    %c0_24 = arith.constant 0 : index
    %c8 = arith.constant 8 : index
    %15 = vector.load %arg15[%c0_24, %c8] : memref<512x36xbf16, #tpu.memory_space<vmem>>, vector<512x4xbf16>
    tpu.vector_store %arg15[%c0_24, %c8], %14 {strides = array<i32>} : memref<512x36xbf16, #tpu.memory_space<vmem>>, vector<512x4xbf16>,
    %c0_25 = arith.constant 0 : index
    %c1_26 = arith.constant 1 : index
    %c0_27 = arith.constant 0 : index
    %c0_28 = arith.constant 0 : index
    %16 = vector.load %arg13[%c0_25, %c1_26, %c0_27, %c0_28] : memref<2x18x18x4xf32, #tpu.memory_space<vmem>>, vector<2x16x16x4xf32>
    %17 = vector.shape_cast %16 : vector<2x16x16x4xf32> to vector<512x4xf32>
    %18 = arith.truncf %17 : vector<512x4xf32> to vector<512x4xbf16>
    %c0_29 = arith.constant 0 : index
    %c12 = arith.constant 12 : index
    %19 = vector.load %arg15[%c0_29, %c12] : memref<512x36xbf16, #tpu.memory_space<vmem>>, vector<512x4xbf16>
    tpu.vector_store %arg15[%c0_29, %c12], %18 {strides = array<i32>} : memref<512x36xbf16, #tpu.memory_space<vmem>>, vector<512x4xbf16>,
    %c0_30 = arith.constant 0 : index
    %c1_31 = arith.constant 1 : index
    %c1_32 = arith.constant 1 : index
    %c0_33 = arith.constant 0 : index
    %20 = vector.load %arg13[%c0_30, %c1_31, %c1_32, %c0_33] : memref<2x18x18x4xf32, #tpu.memory_space<vmem>>, vector<2x16x16x4xf32>
    %21 = vector.shape_cast %20 : vector<2x16x16x4xf32> to vector<512x4xf32>
    %22 = arith.truncf %21 : vector<512x4xf32> to vector<512x4xbf16>
    %c0_34 = arith.constant 0 : index
    %c16 = arith.constant 16 : index
    %23 = vector.load %arg15[%c0_34, %c16] : memref<512x36xbf16, #tpu.memory_space<vmem>>, vector<512x4xbf16>
    tpu.vector_store %arg15[%c0_34, %c16], %22 {strides = array<i32>} : memref<512x36xbf16, #tpu.memory_space<vmem>>, vector<512x4xbf16>,
    %c0_35 = arith.constant 0 : index
    %c1_36 = arith.constant 1 : index
    %c2_37 = arith.constant 2 : index
    %c0_38 = arith.constant 0 : index
    %24 = vector.load %arg13[%c0_35, %c1_36, %c2_37, %c0_38] : memref<2x18x18x4xf32, #tpu.memory_space<vmem>>, vector<2x16x16x4xf32>
    %25 = vector.shape_cast %24 : vector<2x16x16x4xf32> to vector<512x4xf32>
    %26 = arith.truncf %25 : vector<512x4xf32> to vector<512x4xbf16>
    %c0_39 = arith.constant 0 : index
    %c20 = arith.constant 20 : index
    %27 = vector.load %arg15[%c0_39, %c20] : memref<512x36xbf16, #tpu.memory_space<vmem>>, vector<512x4xbf16>
    tpu.vector_store %arg15[%c0_39, %c20], %26 {strides = array<i32>} : memref<512x36xbf16, #tpu.memory_space<vmem>>, vector<512x4xbf16>,
    %c0_40 = arith.constant 0 : index
    %c2_41 = arith.constant 2 : index
    %c0_42 = arith.constant 0 : index
    %c0_43 = arith.constant 0 : index
    %28 = vector.load %arg13[%c0_40, %c2_41, %c0_42, %c0_43] : memref<2x18x18x4xf32, #tpu.memory_space<vmem>>, vector<2x16x16x4xf32>
    %29 = vector.shape_cast %28 : vector<2x16x16x4xf32> to vector<512x4xf32>
    %30 = arith.truncf %29 : vector<512x4xf32> to vector<512x4xbf16>
    %c0_44 = arith.constant 0 : index
    %c24 = arith.constant 24 : index
    %31 = vector.load %arg15[%c0_44, %c24] : memref<512x36xbf16, #tpu.memory_space<vmem>>, vector<512x4xbf16>
    tpu.vector_store %arg15[%c0_44, %c24], %30 {strides = array<i32>} : memref<512x36xbf16, #tpu.memory_space<vmem>>, vector<512x4xbf16>,
    %c0_45 = arith.constant 0 : index
    %c2_46 = arith.constant 2 : index
    %c1_47 = arith.constant 1 : index
    %c0_48 = arith.constant 0 : index
    %32 = vector.load %arg13[%c0_45, %c2_46, %c1_47, %c0_48] : memref<2x18x18x4xf32, #tpu.memory_space<vmem>>, vector<2x16x16x4xf32>
    %33 = vector.shape_cast %32 : vector<2x16x16x4xf32> to vector<512x4xf32>
    %34 = arith.truncf %33 : vector<512x4xf32> to vector<512x4xbf16>
    %c0_49 = arith.constant 0 : index
    %c28 = arith.constant 28 : index
    %35 = vector.load %arg15[%c0_49, %c28] : memref<512x36xbf16, #tpu.memory_space<vmem>>, vector<512x4xbf16>
    tpu.vector_store %arg15[%c0_49, %c28], %34 {strides = array<i32>} : memref<512x36xbf16, #tpu.memory_space<vmem>>, vector<512x4xbf16>,
    %c0_50 = arith.constant 0 : index
    %c2_51 = arith.constant 2 : index
    %c2_52 = arith.constant 2 : index
    %c0_53 = arith.constant 0 : index
    %36 = vector.load %arg13[%c0_50, %c2_51, %c2_52, %c0_53] : memref<2x18x18x4xf32, #tpu.memory_space<vmem>>, vector<2x16x16x4xf32>
    %37 = vector.shape_cast %36 : vector<2x16x16x4xf32> to vector<512x4xf32>
    %38 = arith.truncf %37 : vector<512x4xf32> to vector<512x4xbf16>
    %c0_54 = arith.constant 0 : index
    %c32 = arith.constant 32 : index
    %39 = vector.load %arg15[%c0_54, %c32] : memref<512x36xbf16, #tpu.memory_space<vmem>>, vector<512x4xbf16>
    tpu.vector_store %arg15[%c0_54, %c32], %38 {strides = array<i32>} : memref<512x36xbf16, #tpu.memory_space<vmem>>, vector<512x4xbf16>,
    %c0_55 = arith.constant 0 : index
    %c0_56 = arith.constant 0 : index
    %40 = vector.load %arg15[%c0_55, %c0_56] : memref<512x36xbf16, #tpu.memory_space<vmem>>, vector<512x36xbf16>
    %c0_57 = arith.constant 0 : index
    %c0_58 = arith.constant 0 : index
    %41 = vector.load %arg1[%c0_57, %c0_58] : memref<36x8xbf16, #tpu.memory_space<vmem>>, vector<36x8xbf16>
    %cst_59 = arith.constant dense<0.000000e+00> : vector<512x8xf32>
    %42 = tpu.matmul %40, %41, %cst_59 {dimension_numbers = #tpu.dot_dimension_numbers<[1], [0], [0], [1], [0, 0, 1, 1], [], []>} : vector<512x36xbf16>, vector<36x8xbf16>, vector<512x8xf32> -> vector<512x8xf32>
    %c0_60 = arith.constant 0 : index
    %c0_61 = arith.constant 0 : index
    %43 = vector.load %arg2[%c0_60, %c0_61] : memref<1x8xf32, #tpu.memory_space<vmem>>, vector<1x8xf32>
    %44 = vector.broadcast %43 : vector<1x8xf32> to vector<512x8xf32>
    %45 = arith.addf %42, %44 : vector<512x8xf32>
    %cst_62 = arith.constant 0.000000e+00 : f32
    %46 = vector.broadcast %cst_62 : f32 to vector<512x8xf32>
    %47 = arith.maximumf %45, %46 : vector<512x8xf32>
    %cst_63 = arith.constant dense<0.000000e+00> : vector<8xf32>
    %48 = vector.multi_reduction <add>, %47, %cst_63 [0] : vector<512x8xf32> to vector<8xf32>
    %49 = vector.shape_cast %48 : vector<8xf32> to vector<1x8xf32>
    %cst_64 = arith.constant 5.120000e+02 : f32
    %50 = vector.broadcast %cst_64 : f32 to vector<1x8xf32>
    %51 = arith.divf %49, %50 : vector<1x8xf32>
    %52 = arith.mulf %47, %47 : vector<512x8xf32>
    %cst_65 = arith.constant dense<0.000000e+00> : vector<8xf32>
    %53 = vector.multi_reduction <add>, %52, %cst_65 [0] : vector<512x8xf32> to vector<8xf32>
    %54 = vector.shape_cast %53 : vector<8xf32> to vector<1x8xf32>
    %cst_66 = arith.constant 5.120000e+02 : f32
    %55 = vector.broadcast %cst_66 : f32 to vector<1x8xf32>
    %56 = arith.divf %54, %55 : vector<1x8xf32>
    %57 = arith.mulf %51, %51 : vector<1x8xf32>
    %58 = arith.subf %56, %57 : vector<1x8xf32>
    %cst_67 = arith.constant 9.99999974E-6 : f32
    %59 = vector.broadcast %cst_67 : f32 to vector<1x8xf32>
    %60 = arith.addf %58, %59 : vector<1x8xf32>
    %61 = math.rsqrt %60 : vector<1x8xf32>
    %c0_68 = arith.constant 0 : index
    %c0_69 = arith.constant 0 : index
    %62 = vector.load %arg3[%c0_68, %c0_69] : memref<1x8xf32, #tpu.memory_space<vmem>>, vector<1x8xf32>
    %63 = arith.mulf %61, %62 : vector<1x8xf32>
    %c0_70 = arith.constant 0 : index
    %c0_71 = arith.constant 0 : index
    %64 = vector.load %arg4[%c0_70, %c0_71] : memref<1x8xf32, #tpu.memory_space<vmem>>, vector<1x8xf32>
    %65 = arith.mulf %51, %63 : vector<1x8xf32>
    %66 = arith.subf %64, %65 : vector<1x8xf32>
    %67 = vector.broadcast %63 : vector<1x8xf32> to vector<512x8xf32>
    %68 = arith.mulf %47, %67 : vector<512x8xf32>
    %69 = vector.broadcast %66 : vector<1x8xf32> to vector<512x8xf32>
    %70 = arith.addf %68, %69 : vector<512x8xf32>
    %c0_72 = arith.constant 0 : index
    %c0_73 = arith.constant 0 : index
    %71 = vector.load %arg5[%c0_72, %c0_73] : memref<2x32xbf16, #tpu.memory_space<vmem>>, vector<2x32xbf16>
    %c0_74 = arith.constant 0 : index
    %c0_75 = arith.constant 0 : index
    %72 = vector.load %arg6[%c0_74, %c0_75] : memref<32x8xbf16, #tpu.memory_space<vmem>>, vector<32x8xbf16>
    %cst_76 = arith.constant dense<0.000000e+00> : vector<2x8xf32>
    %73 = tpu.matmul %71, %72, %cst_76 {dimension_numbers = #tpu.dot_dimension_numbers<[1], [0], [0], [1], [0, 0, 1, 1], [], []>} : vector<2x32xbf16>, vector<32x8xbf16>, vector<2x8xf32> -> vector<2x8xf32>
    %c0_77 = arith.constant 0 : index
    %c0_78 = arith.constant 0 : index
    %74 = vector.load %arg7[%c0_77, %c0_78] : memref<1x8xf32, #tpu.memory_space<vmem>>, vector<1x8xf32>
    %75 = vector.broadcast %74 : vector<1x8xf32> to vector<2x8xf32>
    %76 = arith.addf %73, %75 : vector<2x8xf32>
    %cst_79 = arith.constant 0.000000e+00 : f32
    %77 = vector.broadcast %cst_79 : f32 to vector<2x8xf32>
    %78 = arith.maximumf %76, %77 : vector<2x8xf32>
    %79 = vector.shape_cast %70 : vector<512x8xf32> to vector<2x256x8xf32>
    %80 = vector.shape_cast %78 : vector<2x8xf32> to vector<2x1x8xf32>
    %81 = vector.broadcast %80 : vector<2x1x8xf32> to vector<2x256x8xf32>
    %82 = arith.addf %79, %81 : vector<2x256x8xf32>
    %83 = vector.shape_cast %82 : vector<2x256x8xf32> to vector<512x8xf32>
    %cst_80 = arith.constant 0.000000e+00 : f32
    %84 = vector.broadcast %cst_80 : f32 to vector<2x18x18x8xf32>
    %c0_81 = arith.constant 0 : index
    %c0_82 = arith.constant 0 : index
    %c0_83 = arith.constant 0 : index
    %c0_84 = arith.constant 0 : index
    %85 = vector.load %arg14[%c0_81, %c0_82, %c0_83, %c0_84] : memref<2x18x18x8xf32, #tpu.memory_space<vmem>>, vector<2x18x18x8xf32>
    tpu.vector_store %arg14[%c0_81, %c0_82, %c0_83, %c0_84], %84 {strides = array<i32>} : memref<2x18x18x8xf32, #tpu.memory_space<vmem>>, vector<2x18x18x8xf32>,
    %86 = vector.shape_cast %83 : vector<512x8xf32> to vector<2x16x16x8xf32>
    %c0_85 = arith.constant 0 : index
    %c1_86 = arith.constant 1 : index
    %c1_87 = arith.constant 1 : index
    %c0_88 = arith.constant 0 : index
    %87 = vector.load %arg14[%c0_85, %c1_86, %c1_87, %c0_88] : memref<2x18x18x8xf32, #tpu.memory_space<vmem>>, vector<2x16x16x8xf32>
    tpu.vector_store %arg14[%c0_85, %c1_86, %c1_87, %c0_88], %86 {strides = array<i32>} : memref<2x18x18x8xf32, #tpu.memory_space<vmem>>, vector<2x16x16x8xf32>,
    %c0_89 = arith.constant 0 : index
    %c0_90 = arith.constant 0 : index
    %c0_91 = arith.constant 0 : index
    %c0_92 = arith.constant 0 : index
    %88 = vector.load %arg14[%c0_89, %c0_90, %c0_91, %c0_92] : memref<2x18x18x8xf32, #tpu.memory_space<vmem>>, vector<2x16x16x8xf32>
    %89 = vector.shape_cast %88 : vector<2x16x16x8xf32> to vector<512x8xf32>
    %90 = arith.truncf %89 : vector<512x8xf32> to vector<512x8xbf16>
    %c0_93 = arith.constant 0 : index
    %c0_94 = arith.constant 0 : index
    %91 = vector.load %arg16[%c0_93, %c0_94] : memref<512x72xbf16, #tpu.memory_space<vmem>>, vector<512x8xbf16>
    tpu.vector_store %arg16[%c0_93, %c0_94], %90 {strides = array<i32>} : memref<512x72xbf16, #tpu.memory_space<vmem>>, vector<512x8xbf16>,
    %c0_95 = arith.constant 0 : index
    %c0_96 = arith.constant 0 : index
    %c1_97 = arith.constant 1 : index
    %c0_98 = arith.constant 0 : index
    %92 = vector.load %arg14[%c0_95, %c0_96, %c1_97, %c0_98] : memref<2x18x18x8xf32, #tpu.memory_space<vmem>>, vector<2x16x16x8xf32>
    %93 = vector.shape_cast %92 : vector<2x16x16x8xf32> to vector<512x8xf32>
    %94 = arith.truncf %93 : vector<512x8xf32> to vector<512x8xbf16>
    %c0_99 = arith.constant 0 : index
    %c8_100 = arith.constant 8 : index
    %95 = vector.load %arg16[%c0_99, %c8_100] : memref<512x72xbf16, #tpu.memory_space<vmem>>, vector<512x8xbf16>
    tpu.vector_store %arg16[%c0_99, %c8_100], %94 {strides = array<i32>} : memref<512x72xbf16, #tpu.memory_space<vmem>>, vector<512x8xbf16>,
    %c0_101 = arith.constant 0 : index
    %c0_102 = arith.constant 0 : index
    %c2_103 = arith.constant 2 : index
    %c0_104 = arith.constant 0 : index
    %96 = vector.load %arg14[%c0_101, %c0_102, %c2_103, %c0_104] : memref<2x18x18x8xf32, #tpu.memory_space<vmem>>, vector<2x16x16x8xf32>
    %97 = vector.shape_cast %96 : vector<2x16x16x8xf32> to vector<512x8xf32>
    %98 = arith.truncf %97 : vector<512x8xf32> to vector<512x8xbf16>
    %c0_105 = arith.constant 0 : index
    %c16_106 = arith.constant 16 : index
    %99 = vector.load %arg16[%c0_105, %c16_106] : memref<512x72xbf16, #tpu.memory_space<vmem>>, vector<512x8xbf16>
    tpu.vector_store %arg16[%c0_105, %c16_106], %98 {strides = array<i32>} : memref<512x72xbf16, #tpu.memory_space<vmem>>, vector<512x8xbf16>,
    %c0_107 = arith.constant 0 : index
    %c1_108 = arith.constant 1 : index
    %c0_109 = arith.constant 0 : index
    %c0_110 = arith.constant 0 : index
    %100 = vector.load %arg14[%c0_107, %c1_108, %c0_109, %c0_110] : memref<2x18x18x8xf32, #tpu.memory_space<vmem>>, vector<2x16x16x8xf32>
    %101 = vector.shape_cast %100 : vector<2x16x16x8xf32> to vector<512x8xf32>
    %102 = arith.truncf %101 : vector<512x8xf32> to vector<512x8xbf16>
    %c0_111 = arith.constant 0 : index
    %c24_112 = arith.constant 24 : index
    %103 = vector.load %arg16[%c0_111, %c24_112] : memref<512x72xbf16, #tpu.memory_space<vmem>>, vector<512x8xbf16>
    tpu.vector_store %arg16[%c0_111, %c24_112], %102 {strides = array<i32>} : memref<512x72xbf16, #tpu.memory_space<vmem>>, vector<512x8xbf16>,
    %c0_113 = arith.constant 0 : index
    %c1_114 = arith.constant 1 : index
    %c1_115 = arith.constant 1 : index
    %c0_116 = arith.constant 0 : index
    %104 = vector.load %arg14[%c0_113, %c1_114, %c1_115, %c0_116] : memref<2x18x18x8xf32, #tpu.memory_space<vmem>>, vector<2x16x16x8xf32>
    %105 = vector.shape_cast %104 : vector<2x16x16x8xf32> to vector<512x8xf32>
    %106 = arith.truncf %105 : vector<512x8xf32> to vector<512x8xbf16>
    %c0_117 = arith.constant 0 : index
    %c32_118 = arith.constant 32 : index
    %107 = vector.load %arg16[%c0_117, %c32_118] : memref<512x72xbf16, #tpu.memory_space<vmem>>, vector<512x8xbf16>
    tpu.vector_store %arg16[%c0_117, %c32_118], %106 {strides = array<i32>} : memref<512x72xbf16, #tpu.memory_space<vmem>>, vector<512x8xbf16>,
    %c0_119 = arith.constant 0 : index
    %c1_120 = arith.constant 1 : index
    %c2_121 = arith.constant 2 : index
    %c0_122 = arith.constant 0 : index
    %108 = vector.load %arg14[%c0_119, %c1_120, %c2_121, %c0_122] : memref<2x18x18x8xf32, #tpu.memory_space<vmem>>, vector<2x16x16x8xf32>
    %109 = vector.shape_cast %108 : vector<2x16x16x8xf32> to vector<512x8xf32>
    %110 = arith.truncf %109 : vector<512x8xf32> to vector<512x8xbf16>
    %c0_123 = arith.constant 0 : index
    %c40 = arith.constant 40 : index
    %111 = vector.load %arg16[%c0_123, %c40] : memref<512x72xbf16, #tpu.memory_space<vmem>>, vector<512x8xbf16>
    tpu.vector_store %arg16[%c0_123, %c40], %110 {strides = array<i32>} : memref<512x72xbf16, #tpu.memory_space<vmem>>, vector<512x8xbf16>,
    %c0_124 = arith.constant 0 : index
    %c2_125 = arith.constant 2 : index
    %c0_126 = arith.constant 0 : index
    %c0_127 = arith.constant 0 : index
    %112 = vector.load %arg14[%c0_124, %c2_125, %c0_126, %c0_127] : memref<2x18x18x8xf32, #tpu.memory_space<vmem>>, vector<2x16x16x8xf32>
    %113 = vector.shape_cast %112 : vector<2x16x16x8xf32> to vector<512x8xf32>
    %114 = arith.truncf %113 : vector<512x8xf32> to vector<512x8xbf16>
    %c0_128 = arith.constant 0 : index
    %c48 = arith.constant 48 : index
    %115 = vector.load %arg16[%c0_128, %c48] : memref<512x72xbf16, #tpu.memory_space<vmem>>, vector<512x8xbf16>
    tpu.vector_store %arg16[%c0_128, %c48], %114 {strides = array<i32>} : memref<512x72xbf16, #tpu.memory_space<vmem>>, vector<512x8xbf16>,
    %c0_129 = arith.constant 0 : index
    %c2_130 = arith.constant 2 : index
    %c1_131 = arith.constant 1 : index
    %c0_132 = arith.constant 0 : index
    %116 = vector.load %arg14[%c0_129, %c2_130, %c1_131, %c0_132] : memref<2x18x18x8xf32, #tpu.memory_space<vmem>>, vector<2x16x16x8xf32>
    %117 = vector.shape_cast %116 : vector<2x16x16x8xf32> to vector<512x8xf32>
    %118 = arith.truncf %117 : vector<512x8xf32> to vector<512x8xbf16>
    %c0_133 = arith.constant 0 : index
    %c56 = arith.constant 56 : index
    %119 = vector.load %arg16[%c0_133, %c56] : memref<512x72xbf16, #tpu.memory_space<vmem>>, vector<512x8xbf16>
    tpu.vector_store %arg16[%c0_133, %c56], %118 {strides = array<i32>} : memref<512x72xbf16, #tpu.memory_space<vmem>>, vector<512x8xbf16>,
    %c0_134 = arith.constant 0 : index
    %c2_135 = arith.constant 2 : index
    %c2_136 = arith.constant 2 : index
    %c0_137 = arith.constant 0 : index
    %120 = vector.load %arg14[%c0_134, %c2_135, %c2_136, %c0_137] : memref<2x18x18x8xf32, #tpu.memory_space<vmem>>, vector<2x16x16x8xf32>
    %121 = vector.shape_cast %120 : vector<2x16x16x8xf32> to vector<512x8xf32>
    %122 = arith.truncf %121 : vector<512x8xf32> to vector<512x8xbf16>
    %c0_138 = arith.constant 0 : index
    %c64 = arith.constant 64 : index
    %123 = vector.load %arg16[%c0_138, %c64] : memref<512x72xbf16, #tpu.memory_space<vmem>>, vector<512x8xbf16>
    tpu.vector_store %arg16[%c0_138, %c64], %122 {strides = array<i32>} : memref<512x72xbf16, #tpu.memory_space<vmem>>, vector<512x8xbf16>,
    %c0_139 = arith.constant 0 : index
    %c0_140 = arith.constant 0 : index
    %124 = vector.load %arg16[%c0_139, %c0_140] : memref<512x72xbf16, #tpu.memory_space<vmem>>, vector<512x72xbf16>
    %c0_141 = arith.constant 0 : index
    %c0_142 = arith.constant 0 : index
    %125 = vector.load %arg8[%c0_141, %c0_142] : memref<72x8xbf16, #tpu.memory_space<vmem>>, vector<72x8xbf16>
    %cst_143 = arith.constant dense<0.000000e+00> : vector<512x8xf32>
    %126 = tpu.matmul %124, %125, %cst_143 {dimension_numbers = #tpu.dot_dimension_numbers<[1], [0], [0], [1], [0, 0, 1, 1], [], []>} : vector<512x72xbf16>, vector<72x8xbf16>, vector<512x8xf32> -> vector<512x8xf32>
    %c0_144 = arith.constant 0 : index
    %c0_145 = arith.constant 0 : index
    %127 = vector.load %arg9[%c0_144, %c0_145] : memref<1x8xf32, #tpu.memory_space<vmem>>, vector<1x8xf32>
    %128 = vector.broadcast %127 : vector<1x8xf32> to vector<512x8xf32>
    %129 = arith.addf %126, %128 : vector<512x8xf32>
    %cst_146 = arith.constant 0.000000e+00 : f32
    %130 = vector.broadcast %cst_146 : f32 to vector<512x8xf32>
    %131 = arith.maximumf %129, %130 : vector<512x8xf32>
    %cst_147 = arith.constant dense<0.000000e+00> : vector<8xf32>
    %132 = vector.multi_reduction <add>, %131, %cst_147 [0] : vector<512x8xf32> to vector<8xf32>
    %133 = vector.shape_cast %132 : vector<8xf32> to vector<1x8xf32>
    %cst_148 = arith.constant 5.120000e+02 : f32
    %134 = vector.broadcast %cst_148 : f32 to vector<1x8xf32>
    %135 = arith.divf %133, %134 : vector<1x8xf32>
    %136 = arith.mulf %131, %131 : vector<512x8xf32>
    %cst_149 = arith.constant dense<0.000000e+00> : vector<8xf32>
    %137 = vector.multi_reduction <add>, %136, %cst_149 [0] : vector<512x8xf32> to vector<8xf32>
    %138 = vector.shape_cast %137 : vector<8xf32> to vector<1x8xf32>
    %cst_150 = arith.constant 5.120000e+02 : f32
    %139 = vector.broadcast %cst_150 : f32 to vector<1x8xf32>
    %140 = arith.divf %138, %139 : vector<1x8xf32>
    %141 = arith.mulf %135, %135 : vector<1x8xf32>
    %142 = arith.subf %140, %141 : vector<1x8xf32>
    %cst_151 = arith.constant 9.99999974E-6 : f32
    %143 = vector.broadcast %cst_151 : f32 to vector<1x8xf32>
    %144 = arith.addf %142, %143 : vector<1x8xf32>
    %145 = math.rsqrt %144 : vector<1x8xf32>
    %c0_152 = arith.constant 0 : index
    %c0_153 = arith.constant 0 : index
    %146 = vector.load %arg10[%c0_152, %c0_153] : memref<1x8xf32, #tpu.memory_space<vmem>>, vector<1x8xf32>
    %147 = arith.mulf %145, %146 : vector<1x8xf32>
    %c0_154 = arith.constant 0 : index
    %c0_155 = arith.constant 0 : index
    %148 = vector.load %arg11[%c0_154, %c0_155] : memref<1x8xf32, #tpu.memory_space<vmem>>, vector<1x8xf32>
    %149 = arith.mulf %135, %147 : vector<1x8xf32>
    %150 = arith.subf %148, %149 : vector<1x8xf32>
    %151 = vector.broadcast %147 : vector<1x8xf32> to vector<512x8xf32>
    %152 = arith.mulf %131, %151 : vector<512x8xf32>
    %153 = vector.broadcast %150 : vector<1x8xf32> to vector<512x8xf32>
    %154 = arith.addf %152, %153 : vector<512x8xf32>
    %155 = vector.shape_cast %154 : vector<512x8xf32> to vector<16x2x16x8xf32>
    %156 = vector.extract_strided_slice %155 {offsets = [0, 0, 0, 0], sizes = [16, 1, 16, 8], strides = [1, 1, 1, 1]} : vector<16x2x16x8xf32> to vector<16x1x16x8xf32>
    %157 = vector.shape_cast %156 : vector<16x1x16x8xf32> to vector<16x16x8xf32>
    %158 = vector.extract_strided_slice %155 {offsets = [0, 1, 0, 0], sizes = [16, 1, 16, 8], strides = [1, 1, 1, 1]} : vector<16x2x16x8xf32> to vector<16x1x16x8xf32>
    %159 = vector.shape_cast %158 : vector<16x1x16x8xf32> to vector<16x16x8xf32>
    %160 = arith.maximumf %157, %159 : vector<16x16x8xf32>
    %161 = vector.shape_cast %160 : vector<16x16x8xf32> to vector<256x8xf32>
    %162 = tpu.iota {dimensions = array<i32: 0>} : vector<256x128xi32>
    %163 = tpu.iota {dimensions = array<i32: 1>} : vector<256x128xi32>
    %c2_i32 = arith.constant 2 : i32
    %164 = vector.broadcast %c2_i32 : i32 to vector<256x128xi32>
    %165 = arith.muli %164, %163 : vector<256x128xi32>
    %166 = arith.cmpi eq, %162, %165 : vector<256x128xi32>
    %167 = arith.extui %166 : vector<256x128xi1> to vector<256x128xi32>
    %168 = arith.sitofp %167 : vector<256x128xi32> to vector<256x128xf32>
    %c2_i32_156 = arith.constant 2 : i32
    %169 = vector.broadcast %c2_i32_156 : i32 to vector<256x128xi32>
    %170 = arith.muli %169, %163 : vector<256x128xi32>
    %c1_i32 = arith.constant 1 : i32
    %171 = vector.broadcast %c1_i32 : i32 to vector<256x128xi32>
    %172 = arith.addi %170, %171 : vector<256x128xi32>
    %173 = arith.cmpi eq, %162, %172 : vector<256x128xi32>
    %174 = arith.extui %173 : vector<256x128xi1> to vector<256x128xi32>
    %175 = arith.sitofp %174 : vector<256x128xi32> to vector<256x128xf32>
    %cst_157 = arith.constant dense<0.000000e+00> : vector<8x128xf32>
    %176 = tpu.matmul %161, %168, %cst_157 {dimension_numbers = #tpu.dot_dimension_numbers<[0], [0], [1], [1], [0, 1, 1, 1], [], []>} : vector<256x8xf32>, vector<256x128xf32>, vector<8x128xf32> -> vector<8x128xf32>
    %cst_158 = arith.constant dense<0.000000e+00> : vector<8x128xf32>
    %177 = tpu.matmul %161, %175, %cst_158 {dimension_numbers = #tpu.dot_dimension_numbers<[0], [0], [1], [1], [0, 1, 1, 1], [], []>} : vector<256x8xf32>, vector<256x128xf32>, vector<8x128xf32> -> vector<8x128xf32>
    %178 = arith.maximumf %176, %177 : vector<8x128xf32>
    %c0_159 = arith.constant 0 : index
    %c0_160 = arith.constant 0 : index
    %179 = vector.load %arg12[%c0_159, %c0_160] : memref<8x128xf32, #tpu.memory_space<vmem>>, vector<8x128xf32>
    tpu.vector_store %arg12[%c0_159, %c0_160], %178 {strides = array<i32>} : memref<8x128xf32, #tpu.memory_space<vmem>>, vector<8x128xf32>,
    return
  }
}

</mosaic_0001>

<llo_original>
// kernel: tpu_custom_call.1
$region0: #{tpu_custom_call.1}
  #allocation0 [shape = 'u32[]', space=smem, size = 0x4, offset = 0x4, fixed_abs, tag = 'smem constant byte address 0x4 - core index']
  #allocation1 [shape = 'u32[72,128]{1,0:T(1,128)}', space=vmem, size = 0x9000, scoped, tag = 'internal scratch']
  #allocation2 [shape = 'f32[2,18,18,4]{3,2,1,0:T(8,128)}', space=vmem, size = 0x6c000, scoped, tag = 'scratch operand']
  #allocation3 [shape = 'f32[2,18,18,8]{3,2,1,0:T(8,128)}', space=vmem, size = 0x6c000, scoped, tag = 'scratch operand']
  #allocation4 [shape = 'bf16[512,36]{1,0:T(8,128)(2,1)}', space=vmem, size = 0x20000, scoped, tag = 'scratch operand']
  #allocation5 [shape = 'bf16[512,72]{1,0:T(8,128)(2,1)}', space=vmem, size = 0x20000, scoped, tag = 'scratch operand']
  %s0 = inlined_call_operand.vmem [shape: f32[2,16,16,4], index: 0, kind: input, shape index: {}]
  %s1 = inlined_call_operand.vmem [shape: bf16[36,8], index: 1, kind: input, shape index: {}]
  %s2 = inlined_call_operand.vmem [shape: f32[1,8], index: 2, kind: input, shape index: {}]
  %s3 = inlined_call_operand.vmem [shape: f32[1,8], index: 3, kind: input, shape index: {}]
  %s4 = inlined_call_operand.vmem [shape: f32[1,8], index: 4, kind: input, shape index: {}]
  %s5 = inlined_call_operand.vmem [shape: bf16[2,32], index: 5, kind: input, shape index: {}]
  %s6 = inlined_call_operand.vmem [shape: bf16[32,8], index: 6, kind: input, shape index: {}]
  %s7 = inlined_call_operand.vmem [shape: f32[1,8], index: 7, kind: input, shape index: {}]
  %s8 = inlined_call_operand.vmem [shape: bf16[72,8], index: 8, kind: input, shape index: {}]
  %s9 = inlined_call_operand.vmem [shape: f32[1,8], index: 9, kind: input, shape index: {}]
  %s10 = inlined_call_operand.vmem [shape: f32[1,8], index: 10, kind: input, shape index: {}]
  %s11 = inlined_call_operand.vmem [shape: f32[1,8], index: 11, kind: input, shape index: {}]
  %s12 = inlined_call_operand.hbm [shape: f32[8,128], index: 12, kind: output, shape index: {}]
  %s13 = sld [smem:[#allocation0]]
  $region58: #{tpu_custom_call.1} parent=0
    _
  %s15 = ssub.s32 1, %s13
  %s16 = scalar_select 0, %s15, %s13
  $region1: #{tpu_custom_call.1} parent=0
    #allocation6 [shape = 'u8[4096]{0}', space=vmem, size = 0x1000, scoped, tag = 'output window, operand 0, single buffered']
    #allocation7 [shape = 's32[1]{0}', space=sflag, size = 0x4, scoped, tag = 'scoped memory for tpu_custom_call.1']
    %17 = vsyncpa [#allocation7], 0
    // Predicated region
    $region2: #{tpu_custom_call.1} parent=1 // pred_check
      _
    $region3: #{tpu_custom_call.1} parent=1 // pred_check_branch
      %19 = sbr.rel (0) target = $region5
    $region4: #{tpu_custom_call.1} parent=1 // pred_region
      _
    $region5: #{tpu_custom_call.1} parent=1 // pred_fallthru
      _
    // Predicated region
    $region6: #{tpu_custom_call.1} parent=1 // pred_check
      _
    $region7: #{tpu_custom_call.1} parent=1 // pred_check_branch
      %21 = sbr.rel (0) target = $region9
    $region8: #{tpu_custom_call.1} parent=1 // pred_region
      _
    $region9: #{tpu_custom_call.1} parent=1 // pred_fallthru
      _
    // Predicated region
    $region10: #{tpu_custom_call.1} parent=1 // pred_check
      _
    $region11: #{tpu_custom_call.1} parent=1 // pred_check_branch
      %23 = sbr.rel (0) target = $region13
    $region12: #{tpu_custom_call.1} parent=1 // pred_region
      _
    $region13: #{tpu_custom_call.1} parent=1 // pred_fallthru
      _
    // Predicated region
    $region14: #{tpu_custom_call.1} parent=1 // pred_check
      _
    $region15: #{tpu_custom_call.1} parent=1 // pred_check_branch
      %25 = sbr.rel (0) target = $region17
    $region16: #{tpu_custom_call.1} parent=1 // pred_region
      _
    $region17: #{tpu_custom_call.1} parent=1 // pred_fallthru
      _
    // Predicated region
    $region18: #{tpu_custom_call.1} parent=1 // pred_check
      _
    $region19: #{tpu_custom_call.1} parent=1 // pred_check_branch
      %27 = sbr.rel (0) target = $region21
    $region20: #{tpu_custom_call.1} parent=1 // pred_region
      _
    $region21: #{tpu_custom_call.1} parent=1 // pred_fallthru
      _
    // Predicated region
    $region22: #{tpu_custom_call.1} parent=1 // pred_check
      _
    $region23: #{tpu_custom_call.1} parent=1 // pred_check_branch
      %29 = sbr.rel (0) target = $region25
    $region24: #{tpu_custom_call.1} parent=1 // pred_region
      _
    $region25: #{tpu_custom_call.1} parent=1 // pred_fallthru
      _
    // Predicated region
    $region26: #{tpu_custom_call.1} parent=1 // pred_check
      _
    $region27: #{tpu_custom_call.1} parent=1 // pred_check_branch
      %31 = sbr.rel (0) target = $region29
    $region28: #{tpu_custom_call.1} parent=1 // pred_region
      _
    $region29: #{tpu_custom_call.1} parent=1 // pred_fallthru
      _
    // Predicated region
    $region30: #{tpu_custom_call.1} parent=1 // pred_check
      _
    $region31: #{tpu_custom_call.1} parent=1 // pred_check_branch
      %33 = sbr.rel (0) target = $region33
    $region32: #{tpu_custom_call.1} parent=1 // pred_region
      _
    $region33: #{tpu_custom_call.1} parent=1 // pred_fallthru
      _
    // Predicated region
    $region34: #{tpu_custom_call.1} parent=1 // pred_check
      _
    $region35: #{tpu_custom_call.1} parent=1 // pred_check_branch
      %35 = sbr.rel (0) target = $region37
    $region36: #{tpu_custom_call.1} parent=1 // pred_region
      _
    $region37: #{tpu_custom_call.1} parent=1 // pred_fallthru
      _
    // Predicated region
    $region38: #{tpu_custom_call.1} parent=1 // pred_check
      _
    $region39: #{tpu_custom_call.1} parent=1 // pred_check_branch
      %37 = sbr.rel (0) target = $region41
    $region40: #{tpu_custom_call.1} parent=1 // pred_region
      _
    $region41: #{tpu_custom_call.1} parent=1 // pred_fallthru
      _
    // Predicated region
    $region42: #{tpu_custom_call.1} parent=1 // pred_check
      _
    $region43: #{tpu_custom_call.1} parent=1 // pred_check_branch
      %39 = sbr.rel (0) target = $region45
    $region44: #{tpu_custom_call.1} parent=1 // pred_region
      _
    $region45: #{tpu_custom_call.1} parent=1 // pred_fallthru
      _
    // Predicated region
    $region46: #{tpu_custom_call.1} parent=1 // pred_check
      _
    $region47: #{tpu_custom_call.1} parent=1 // pred_check_branch
      %41 = sbr.rel (0) target = $region49
    $region48: #{tpu_custom_call.1} parent=1 // pred_region
      _
    $region49: #{tpu_custom_call.1} parent=1 // pred_fallthru
      _
    %vm43 = vcmask 31744
    %44 = vst.msk [vmem:[#allocation2] sm:$0xff] %vm43, 0.0
    %45 = vst.msk [vmem:[#allocation2 + $0x8] sm:$0xff] %vm43, 0.0
    %vm46 = vcmask 25600
    %47 = vst.msk [vmem:[#allocation2 + $0x10] sm:$0x3] %vm46, 0.0
    %48 = vst.msk [vmem:[#allocation2 + $0x18] sm:$0xff] %vm43, 0.0
    %49 = vst.msk [vmem:[#allocation2 + $0x20] sm:$0xff] %vm43, 0.0
    %50 = vst.msk [vmem:[#allocation2 + $0x28] sm:$0x3] %vm46, 0.0
    %51 = vst.msk [vmem:[#allocation2 + $0x30] sm:$0xff] %vm43, 0.0
    %52 = vst.msk [vmem:[#allocation2 + $0x38] sm:$0xff] %vm43, 0.0
    %53 = vst.msk [vmem:[#allocation2 + $0x40] sm:$0x3] %vm46, 0.0
    %54 = vst.msk [vmem:[#allocation2 + $0x48] sm:$0xff] %vm43, 0.0
    %55 = vst.msk [vmem:[#allocation2 + $0x50] sm:$0xff] %vm43, 0.0
    %56 = vst.msk [vmem:[#allocation2 + $0x58] sm:$0x3] %vm46, 0.0
    %57 = vst.msk [vmem:[#allocation2 + $0x60] sm:$0xff] %vm43, 0.0
    %58 = vst.msk [vmem:[#allocation2 + $0x68] sm:$0xff] %vm43, 0.0
    %59 = vst.msk [vmem:[#allocation2 + $0x70] sm:$0x3] %vm46, 0.0
    %60 = vst.msk [vmem:[#allocation2 + $0x78] sm:$0xff] %vm43, 0.0
    %61 = vst.msk [vmem:[#allocation2 + $0x80] sm:$0xff] %vm43, 0.0
    %62 = vst.msk [vmem:[#allocation2 + $0x88] sm:$0x3] %vm46, 0.0
    %63 = vst.msk [vmem:[#allocation2 + $0x90] sm:$0xff] %vm43, 0.0
    %64 = vst.msk [vmem:[#allocation2 + $0x98] sm:$0xff] %vm43, 0.0
    %65 = vst.msk [vmem:[#allocation2 + $0xa0] sm:$0x3] %vm46, 0.0
    %66 = vst.msk [vmem:[#allocation2 + $0xa8] sm:$0xff] %vm43, 0.0
    %67 = vst.msk [vmem:[#allocation2 + $0xb0] sm:$0xff] %vm43, 0.0
    %68 = vst.msk [vmem:[#allocation2 + $0xb8] sm:$0x3] %vm46, 0.0
    %69 = vst.msk [vmem:[#allocation2 + $0xc0] sm:$0xff] %vm43, 0.0
    %70 = vst.msk [vmem:[#allocation2 + $0xc8] sm:$0xff] %vm43, 0.0
    %71 = vst.msk [vmem:[#allocation2 + $0xd0] sm:$0x3] %vm46, 0.0
    %72 = vst.msk [vmem:[#allocation2 + $0xd8] sm:$0xff] %vm43, 0.0
    %73 = vst.msk [vmem:[#allocation2 + $0xe0] sm:$0xff] %vm43, 0.0
    %74 = vst.msk [vmem:[#allocation2 + $0xe8] sm:$0x3] %vm46, 0.0
    %75 = vst.msk [vmem:[#allocation2 + $0xf0] sm:$0xff] %vm43, 0.0
    %76 = vst.msk [vmem:[#allocation2 + $0xf8] sm:$0xff] %vm43, 0.0
    %77 = vst.msk [vmem:[#allocation2 + $0x100] sm:$0x3] %vm46, 0.0
    %78 = vst.msk [vmem:[#allocation2 + $0x108] sm:$0xff] %vm43, 0.0
    %79 = vst.msk [vmem:[#allocation2 + $0x110] sm:$0xff] %vm43, 0.0
    %80 = vst.msk [vmem:[#allocation2 + $0x118] sm:$0x3] %vm46, 0.0
    %81 = vst.msk [vmem:[#allocation2 + $0x120] sm:$0xff] %vm43, 0.0
    %82 = vst.msk [vmem:[#allocation2 + $0x128] sm:$0xff] %vm43, 0.0
    %83 = vst.msk [vmem:[#allocation2 + $0x130] sm:$0x3] %vm46, 0.0
    %84 = vst.msk [vmem:[#allocation2 + $0x138] sm:$0xff] %vm43, 0.0
    %85 = vst.msk [vmem:[#allocation2 + $0x140] sm:$0xff] %vm43, 0.0
    %86 = vst.msk [vmem:[#allocation2 + $0x148] sm:$0x3] %vm46, 0.0
    %87 = vst.msk [vmem:[#allocation2 + $0x150] sm:$0xff] %vm43, 0.0
    %88 = vst.msk [vmem:[#allocation2 + $0x158] sm:$0xff] %vm43, 0.0
    %89 = vst.msk [vmem:[#allocation2 + $0x160] sm:$0x3] %vm46, 0.0
    %90 = vst.msk [vmem:[#allocation2 + $0x168] sm:$0xff] %vm43, 0.0
    %91 = vst.msk [vmem:[#allocation2 + $0x170] sm:$0xff] %vm43, 0.0
    %92 = vst.msk [vmem:[#allocation2 + $0x178] sm:$0x3] %vm46, 0.0
    %93 = vst.msk [vmem:[#allocation2 + $0x180] sm:$0xff] %vm43, 0.0
    %94 = vst.msk [vmem:[#allocation2 + $0x188] sm:$0xff] %vm43, 0.0
    %95 = vst.msk [vmem:[#allocation2 + $0x190] sm:$0x3] %vm46, 0.0
    %96 = vst.msk [vmem:[#allocation2 + $0x198] sm:$0xff] %vm43, 0.0
    %97 = vst.msk [vmem:[#allocation2 + $0x1a0] sm:$0xff] %vm43, 0.0
    %98 = vst.msk [vmem:[#allocation2 + $0x1a8] sm:$0x3] %vm46, 0.0
    %99 = vst.msk [vmem:[#allocation2 + $0x1b0] sm:$0xff] %vm43, 0.0
    %100 = vst.msk [vmem:[#allocation2 + $0x1b8] sm:$0xff] %vm43, 0.0
    %101 = vst.msk [vmem:[#allocation2 + $0x1c0] sm:$0x3] %vm46, 0.0
    %102 = vst.msk [vmem:[#allocation2 + $0x1c8] sm:$0xff] %vm43, 0.0
    %103 = vst.msk [vmem:[#allocation2 + $0x1d0] sm:$0xff] %vm43, 0.0
    %104 = vst.msk [vmem:[#allocation2 + $0x1d8] sm:$0x3] %vm46, 0.0
    %105 = vst.msk [vmem:[#allocation2 + $0x1e0] sm:$0xff] %vm43, 0.0
    %106 = vst.msk [vmem:[#allocation2 + $0x1e8] sm:$0xff] %vm43, 0.0
    %107 = vst.msk [vmem:[#allocation2 + $0x1f0] sm:$0x3] %vm46, 0.0
    %108 = vst.msk [vmem:[#allocation2 + $0x1f8] sm:$0xff] %vm43, 0.0
    %109 = vst.msk [vmem:[#allocation2 + $0x200] sm:$0xff] %vm43, 0.0
    %110 = vst.msk [vmem:[#allocation2 + $0x208] sm:$0x3] %vm46, 0.0
    %111 = vst.msk [vmem:[#allocation2 + $0x210] sm:$0xff] %vm43, 0.0
    %112 = vst.msk [vmem:[#allocation2 + $0x218] sm:$0xff] %vm43, 0.0
    %113 = vst.msk [vmem:[#allocation2 + $0x220] sm:$0x3] %vm46, 0.0
    %114 = vst.msk [vmem:[#allocation2 + $0x228] sm:$0xff] %vm43, 0.0
    %115 = vst.msk [vmem:[#allocation2 + $0x230] sm:$0xff] %vm43, 0.0
    %116 = vst.msk [vmem:[#allocation2 + $0x238] sm:$0x3] %vm46, 0.0
    %117 = vst.msk [vmem:[#allocation2 + $0x240] sm:$0xff] %vm43, 0.0
    %118 = vst.msk [vmem:[#allocation2 + $0x248] sm:$0xff] %vm43, 0.0
    %119 = vst.msk [vmem:[#allocation2 + $0x250] sm:$0x3] %vm46, 0.0
    %120 = vst.msk [vmem:[#allocation2 + $0x258] sm:$0xff] %vm43, 0.0
    %121 = vst.msk [vmem:[#allocation2 + $0x260] sm:$0xff] %vm43, 0.0
    %122 = vst.msk [vmem:[#allocation2 + $0x268] sm:$0x3] %vm46, 0.0
    %123 = vst.msk [vmem:[#allocation2 + $0x270] sm:$0xff] %vm43, 0.0
    %124 = vst.msk [vmem:[#allocation2 + $0x278] sm:$0xff] %vm43, 0.0
    %125 = vst.msk [vmem:[#allocation2 + $0x280] sm:$0x3] %vm46, 0.0
    %126 = vst.msk [vmem:[#allocation2 + $0x288] sm:$0xff] %vm43, 0.0
    %127 = vst.msk [vmem:[#allocation2 + $0x290] sm:$0xff] %vm43, 0.0
    %128 = vst.msk [vmem:[#allocation2 + $0x298] sm:$0x3] %vm46, 0.0
    %129 = vst.msk [vmem:[#allocation2 + $0x2a0] sm:$0xff] %vm43, 0.0
    %130 = vst.msk [vmem:[#allocation2 + $0x2a8] sm:$0xff] %vm43, 0.0
    %131 = vst.msk [vmem:[#allocation2 + $0x2b0] sm:$0x3] %vm46, 0.0
    %132 = vst.msk [vmem:[#allocation2 + $0x2b8] sm:$0xff] %vm43, 0.0
    %133 = vst.msk [vmem:[#allocation2 + $0x2c0] sm:$0xff] %vm43, 0.0
    %134 = vst.msk [vmem:[#allocation2 + $0x2c8] sm:$0x3] %vm46, 0.0
    %135 = vst.msk [vmem:[#allocation2 + $0x2d0] sm:$0xff] %vm43, 0.0
    %136 = vst.msk [vmem:[#allocation2 + $0x2d8] sm:$0xff] %vm43, 0.0
    %137 = vst.msk [vmem:[#allocation2 + $0x2e0] sm:$0x3] %vm46, 0.0
    %138 = vst.msk [vmem:[#allocation2 + $0x2e8] sm:$0xff] %vm43, 0.0
    %139 = vst.msk [vmem:[#allocation2 + $0x2f0] sm:$0xff] %vm43, 0.0
    %140 = vst.msk [vmem:[#allocation2 + $0x2f8] sm:$0x3] %vm46, 0.0
    %141 = vst.msk [vmem:[#allocation2 + $0x300] sm:$0xff] %vm43, 0.0
    %142 = vst.msk [vmem:[#allocation2 + $0x308] sm:$0xff] %vm43, 0.0
    %143 = vst.msk [vmem:[#allocation2 + $0x310] sm:$0x3] %vm46, 0.0
    %144 = vst.msk [vmem:[#allocation2 + $0x318] sm:$0xff] %vm43, 0.0
    %145 = vst.msk [vmem:[#allocation2 + $0x320] sm:$0xff] %vm43, 0.0
    %146 = vst.msk [vmem:[#allocation2 + $0x328] sm:$0x3] %vm46, 0.0
    %147 = vst.msk [vmem:[#allocation2 + $0x330] sm:$0xff] %vm43, 0.0
    %148 = vst.msk [vmem:[#allocation2 + $0x338] sm:$0xff] %vm43, 0.0
    %149 = vst.msk [vmem:[#allocation2 + $0x340] sm:$0x3] %vm46, 0.0
    %150 = vst.msk [vmem:[#allocation2 + $0x348] sm:$0xff] %vm43, 0.0
    %151 = vst.msk [vmem:[#allocation2 + $0x350] sm:$0xff] %vm43, 0.0
    %152 = vst.msk [vmem:[#allocation2 + $0x358] sm:$0x3] %vm46, 0.0
    %v153 = vld [vmem:[%s0] sm:$0xff]
    %v154 = vld [vmem:[%s0 + $0x8] sm:$0xff]
    %v155 = vld [vmem:[%s0 + $0x10] sm:$0xff]
    %v156 = vld [vmem:[%s0 + $0x18] sm:$0xff]
    %v157 = vld [vmem:[%s0 + $0x20] sm:$0xff]
    %v158 = vld [vmem:[%s0 + $0x28] sm:$0xff]
    %v159 = vld [vmem:[%s0 + $0x30] sm:$0xff]
    %v160 = vld [vmem:[%s0 + $0x38] sm:$0xff]
    %v161 = vld [vmem:[%s0 + $0x40] sm:$0xff]
    %v162 = vld [vmem:[%s0 + $0x48] sm:$0xff]
    %v163 = vld [vmem:[%s0 + $0x50] sm:$0xff]
    %v164 = vld [vmem:[%s0 + $0x58] sm:$0xff]
    %v165 = vld [vmem:[%s0 + $0x60] sm:$0xff]
    %v166 = vld [vmem:[%s0 + $0x68] sm:$0xff]
    %v167 = vld [vmem:[%s0 + $0x70] sm:$0xff]
    %v168 = vld [vmem:[%s0 + $0x78] sm:$0xff]
    %v169 = vld [vmem:[%s0 + $0x80] sm:$0xff]
    %v170 = vld [vmem:[%s0 + $0x88] sm:$0xff]
    %v171 = vld [vmem:[%s0 + $0x90] sm:$0xff]
    %v172 = vld [vmem:[%s0 + $0x98] sm:$0xff]
    %v173 = vld [vmem:[%s0 + $0xa0] sm:$0xff]
    %v174 = vld [vmem:[%s0 + $0xa8] sm:$0xff]
    %v175 = vld [vmem:[%s0 + $0xb0] sm:$0xff]
    %v176 = vld [vmem:[%s0 + $0xb8] sm:$0xff]
    %v177 = vld [vmem:[%s0 + $0xc0] sm:$0xff]
    %v178 = vld [vmem:[%s0 + $0xc8] sm:$0xff]
    %v179 = vld [vmem:[%s0 + $0xd0] sm:$0xff]
    %v180 = vld [vmem:[%s0 + $0xd8] sm:$0xff]
    %v181 = vld [vmem:[%s0 + $0xe0] sm:$0xff]
    %v182 = vld [vmem:[%s0 + $0xe8] sm:$0xff]
    %v183 = vld [vmem:[%s0 + $0xf0] sm:$0xff]
    %v184 = vld [vmem:[%s0 + $0xf8] sm:$0xff]
    %v185 = vld [vmem:[%s0 + $0x100] sm:$0xff]
    %v186 = vld [vmem:[%s0 + $0x108] sm:$0xff]
    %v187 = vld [vmem:[%s0 + $0x110] sm:$0xff]
    %v188 = vld [vmem:[%s0 + $0x118] sm:$0xff]
    %v189 = vld [vmem:[%s0 + $0x120] sm:$0xff]
    %v190 = vld [vmem:[%s0 + $0x128] sm:$0xff]
    %v191 = vld [vmem:[%s0 + $0x130] sm:$0xff]
    %v192 = vld [vmem:[%s0 + $0x138] sm:$0xff]
    %v193 = vld [vmem:[%s0 + $0x140] sm:$0xff]
    %v194 = vld [vmem:[%s0 + $0x148] sm:$0xff]
    %v195 = vld [vmem:[%s0 + $0x150] sm:$0xff]
    %v196 = vld [vmem:[%s0 + $0x158] sm:$0xff]
    %v197 = vld [vmem:[%s0 + $0x160] sm:$0xff]
    %v198 = vld [vmem:[%s0 + $0x168] sm:$0xff]
    %v199 = vld [vmem:[%s0 + $0x170] sm:$0xff]
    %v200 = vld [vmem:[%s0 + $0x178] sm:$0xff]
    %v201 = vld [vmem:[%s0 + $0x180] sm:$0xff]
    %v202 = vld [vmem:[%s0 + $0x188] sm:$0xff]
    %v203 = vld [vmem:[%s0 + $0x190] sm:$0xff]
    %v204 = vld [vmem:[%s0 + $0x198] sm:$0xff]
    %v205 = vld [vmem:[%s0 + $0x1a0] sm:$0xff]
    %v206 = vld [vmem:[%s0 + $0x1a8] sm:$0xff]
    %v207 = vld [vmem:[%s0 + $0x1b0] sm:$0xff]
    %v208 = vld [vmem:[%s0 + $0x1b8] sm:$0xff]
    %v209 = vld [vmem:[%s0 + $0x1c0] sm:$0xff]
    %v210 = vld [vmem:[%s0 + $0x1c8] sm:$0xff]
    %v211 = vld [vmem:[%s0 + $0x1d0] sm:$0xff]
    %v212 = vld [vmem:[%s0 + $0x1d8] sm:$0xff]
    %v213 = vld [vmem:[%s0 + $0x1e0] sm:$0xff]
    %v214 = vld [vmem:[%s0 + $0x1e8] sm:$0xff]
    %v215 = vld [vmem:[%s0 + $0x1f0] sm:$0xff]
    %v216 = vld [vmem:[%s0 + $0x1f8] sm:$0xff]
    %s217 = scalar_lea.vmem [#allocation2], 24
    %218 = vst.msk [vmem:[%s217 + $0x1] sm:$0xff] %vm43, %v153
    %219 = vst.msk [vmem:[%s217 + $0x9] sm:$0xff] %vm43, %v154
    %220 = vst.msk [vmem:[%s217 + $0x19] sm:$0xff] %vm43, %v155
    %221 = vst.msk [vmem:[%s217 + $0x21] sm:$0xff] %vm43, %v156
    %222 = vst.msk [vmem:[%s217 + $0x31] sm:$0xff] %vm43, %v157
    %223 = vst.msk [vmem:[%s217 + $0x39] sm:$0xff] %vm43, %v158
    %224 = vst.msk [vmem:[%s217 + $0x49] sm:$0xff] %vm43, %v159
    %225 = vst.msk [vmem:[%s217 + $0x51] sm:$0xff] %vm43, %v160
    %226 = vst.msk [vmem:[%s217 + $0x61] sm:$0xff] %vm43, %v161
    %227 = vst.msk [vmem:[%s217 + $0x69] sm:$0xff] %vm43, %v162
    %228 = vst.msk [vmem:[%s217 + $0x79] sm:$0xff] %vm43, %v163
    %229 = vst.msk [vmem:[%s217 + $0x81] sm:$0xff] %vm43, %v164
    %230 = vst.msk [vmem:[%s217 + $0x91] sm:$0xff] %vm43, %v165
    %231 = vst.msk [vmem:[%s217 + $0x99] sm:$0xff] %vm43, %v166
    %232 = vst.msk [vmem:[%s217 + $0xa9] sm:$0xff] %vm43, %v167
    %233 = vst.msk [vmem:[%s217 + $0xb1] sm:$0xff] %vm43, %v168
    %234 = vst.msk [vmem:[%s217 + $0xc1] sm:$0xff] %vm43, %v169
    %235 = vst.msk [vmem:[%s217 + $0xc9] sm:$0xff] %vm43, %v170
    %236 = vst.msk [vmem:[%s217 + $0xd9] sm:$0xff] %vm43, %v171
    %237 = vst.msk [vmem:[%s217 + $0xe1] sm:$0xff] %vm43, %v172
    %238 = vst.msk [vmem:[%s217 + $0xf1] sm:$0xff] %vm43, %v173
    %239 = vst.msk [vmem:[%s217 + $0xf9] sm:$0xff] %vm43, %v174
    %240 = vst.msk [vmem:[%s217 + $0x109] sm:$0xff] %vm43, %v175
    %241 = vst.msk [vmem:[%s217 + $0x111] sm:$0xff] %vm43, %v176
    %242 = vst.msk [vmem:[%s217 + $0x121] sm:$0xff] %vm43, %v177
    %243 = vst.msk [vmem:[%s217 + $0x129] sm:$0xff] %vm43, %v178
    %244 = vst.msk [vmem:[%s217 + $0x139] sm:$0xff] %vm43, %v179
    %245 = vst.msk [vmem:[%s217 + $0x141] sm:$0xff] %vm43, %v180
    %246 = vst.msk [vmem:[%s217 + $0x151] sm:$0xff] %vm43, %v181
    %247 = vst.msk [vmem:[%s217 + $0x159] sm:$0xff] %vm43, %v182
    %248 = vst.msk [vmem:[%s217 + $0x169] sm:$0xff] %vm43, %v183
    %249 = vst.msk [vmem:[%s217 + $0x171] sm:$0xff] %vm43, %v184
    %250 = vst.msk [vmem:[%s217 + $0x1b1] sm:$0xff] %vm43, %v185
    %251 = vst.msk [vmem:[%s217 + $0x1b9] sm:$0xff] %vm43, %v186
    %252 = vst.msk [vmem:[%s217 + $0x1c9] sm:$0xff] %vm43, %v187
    %253 = vst.msk [vmem:[%s217 + $0x1d1] sm:$0xff] %vm43, %v188
    %254 = vst.msk [vmem:[%s217 + $0x1e1] sm:$0xff] %vm43, %v189
    %255 = vst.msk [vmem:[%s217 + $0x1e9] sm:$0xff] %vm43, %v190
    %256 = vst.msk [vmem:[%s217 + $0x1f9] sm:$0xff] %vm43, %v191
    %257 = vst.msk [vmem:[%s217 + $0x201] sm:$0xff] %vm43, %v192
    %258 = vst.msk [vmem:[%s217 + $0x211] sm:$0xff] %vm43, %v193
    %259 = vst.msk [vmem:[%s217 + $0x219] sm:$0xff] %vm43, %v194
    %260 = vst.msk [vmem:[%s217 + $0x229] sm:$0xff] %vm43, %v195
    %261 = vst.msk [vmem:[%s217 + $0x231] sm:$0xff] %vm43, %v196
    %262 = vst.msk [vmem:[%s217 + $0x241] sm:$0xff] %vm43, %v197
    %263 = vst.msk [vmem:[%s217 + $0x249] sm:$0xff] %vm43, %v198
    %264 = vst.msk [vmem:[%s217 + $0x259] sm:$0xff] %vm43, %v199
    %265 = vst.msk [vmem:[%s217 + $0x261] sm:$0xff] %vm43, %v200
    %266 = vst.msk [vmem:[%s217 + $0x271] sm:$0xff] %vm43, %v201
    %267 = vst.msk [vmem:[%s217 + $0x279] sm:$0xff] %vm43, %v202
    %268 = vst.msk [vmem:[%s217 + $0x289] sm:$0xff] %vm43, %v203
    %269 = vst.msk [vmem:[%s217 + $0x291] sm:$0xff] %vm43, %v204
    %270 = vst.msk [vmem:[%s217 + $0x2a1] sm:$0xff] %vm43, %v205
    %271 = vst.msk [vmem:[%s217 + $0x2a9] sm:$0xff] %vm43, %v206
    %272 = vst.msk [vmem:[%s217 + $0x2b9] sm:$0xff] %vm43, %v207
    %273 = vst.msk [vmem:[%s217 + $0x2c1] sm:$0xff] %vm43, %v208
    %274 = vst.msk [vmem:[%s217 + $0x2d1] sm:$0xff] %vm43, %v209
    %275 = vst.msk [vmem:[%s217 + $0x2d9] sm:$0xff] %vm43, %v210
    %276 = vst.msk [vmem:[%s217 + $0x2e9] sm:$0xff] %vm43, %v211
    %277 = vst.msk [vmem:[%s217 + $0x2f1] sm:$0xff] %vm43, %v212
    %278 = vst.msk [vmem:[%s217 + $0x301] sm:$0xff] %vm43, %v213
    %279 = vst.msk [vmem:[%s217 + $0x309] sm:$0xff] %vm43, %v214
    %280 = vst.msk [vmem:[%s217 + $0x319] sm:$0xff] %vm43, %v215
    %281 = vst.msk [vmem:[%s217 + $0x321] sm:$0xff] %vm43, %v216
    %v282 = vld [vmem:[#allocation2] sm:$0xff]
    %v283 = vld [vmem:[#allocation2 + $0x8] sm:$0xff]
    %v284 = vld [vmem:[#allocation2 + $0x18] sm:$0xff]
    %v285 = vld [vmem:[#allocation2 + $0x20] sm:$0xff]
    %v286 = vld [vmem:[#allocation2 + $0x30] sm:$0xff]
    %v287 = vld [vmem:[#allocation2 + $0x38] sm:$0xff]
    %v288 = vld [vmem:[#allocation2 + $0x48] sm:$0xff]
    %v289 = vld [vmem:[#allocation2 + $0x50] sm:$0xff]
    %v290 = vld [vmem:[#allocation2 + $0x60] sm:$0xff]
    %v291 = vld [vmem:[#allocation2 + $0x68] sm:$0xff]
    %v292 = vld [vmem:[#allocation2 + $0x78] sm:$0xff]
    %v293 = vld [vmem:[#allocation2 + $0x80] sm:$0xff]
    %v294 = vld [vmem:[#allocation2 + $0x90] sm:$0xff]
    %v295 = vld [vmem:[#allocation2 + $0x98] sm:$0xff]
    %v296 = vld [vmem:[#allocation2 + $0xa8] sm:$0xff]
    %v297 = vld [vmem:[#allocation2 + $0xb0] sm:$0xff]
    %v298 = vld [vmem:[#allocation2 + $0xc0] sm:$0xff]
    %v299 = vld [vmem:[#allocation2 + $0xc8] sm:$0xff]
    %v300 = vld [vmem:[#allocation2 + $0xd8] sm:$0xff]
    %v301 = vld [vmem:[#allocation2 + $0xe0] sm:$0xff]
    %v302 = vld [vmem:[#allocation2 + $0xf0] sm:$0xff]
    %v303 = vld [vmem:[#allocation2 + $0xf8] sm:$0xff]
    %v304 = vld [vmem:[#allocation2 + $0x108] sm:$0xff]
    %v305 = vld [vmem:[#allocation2 + $0x110] sm:$0xff]
    %v306 = vld [vmem:[#allocation2 + $0x120] sm:$0xff]
    %v307 = vld [vmem:[#allocation2 + $0x128] sm:$0xff]
    %v308 = vld [vmem:[#allocation2 + $0x138] sm:$0xff]
    %v309 = vld [vmem:[#allocation2 + $0x140] sm:$0xff]
    %v310 = vld [vmem:[#allocation2 + $0x150] sm:$0xff]
    %v311 = vld [vmem:[#allocation2 + $0x158] sm:$0xff]
    %v312 = vld [vmem:[#allocation2 + $0x168] sm:$0xff]
    %v313 = vld [vmem:[#allocation2 + $0x170] sm:$0xff]
    %v314 = vld [vmem:[#allocation2 + $0x1b0] sm:$0xff]
    %v315 = vld [vmem:[#allocation2 + $0x1b8] sm:$0xff]
    %v316 = vld [vmem:[#allocation2 + $0x1c8] sm:$0xff]
    %v317 = vld [vmem:[#allocation2 + $0x1d0] sm:$0xff]
    %v318 = vld [vmem:[#allocation2 + $0x1e0] sm:$0xff]
    %v319 = vld [vmem:[#allocation2 + $0x1e8] sm:$0xff]
    %v320 = vld [vmem:[#allocation2 + $0x1f8] sm:$0xff]
    %v321 = vld [vmem:[#allocation2 + $0x200] sm:$0xff]
    %v322 = vld [vmem:[#allocation2 + $0x210] sm:$0xff]
    %v323 = vld [vmem:[#allocation2 + $0x218] sm:$0xff]
    %v324 = vld [vmem:[#allocation2 + $0x228] sm:$0xff]
    %v325 = vld [vmem:[#allocation2 + $0x230] sm:$0xff]
    %v326 = vld [vmem:[#allocation2 + $0x240] sm:$0xff]
    %v327 = vld [vmem:[#allocation2 + $0x248] sm:$0xff]
    %v328 = vld [vmem:[#allocation2 + $0x258] sm:$0xff]
    %v329 = vld [vmem:[#allocation2 + $0x260] sm:$0xff]
    %v330 = vld [vmem:[#allocation2 + $0x270] sm:$0xff]
    %v331 = vld [vmem:[#allocation2 + $0x278] sm:$0xff]
    %v332 = vld [vmem:[#allocation2 + $0x288] sm:$0xff]
    %v333 = vld [vmem:[#allocation2 + $0x290] sm:$0xff]
    %v334 = vld [vmem:[#allocation2 + $0x2a0] sm:$0xff]
    %v335 = vld [vmem:[#allocation2 + $0x2a8] sm:$0xff]
    %v336 = vld [vmem:[#allocation2 + $0x2b8] sm:$0xff]
    %v337 = vld [vmem:[#allocation2 + $0x2c0] sm:$0xff]
    %v338 = vld [vmem:[#allocation2 + $0x2d0] sm:$0xff]
    %v339 = vld [vmem:[#allocation2 + $0x2d8] sm:$0xff]
    %v340 = vld [vmem:[#allocation2 + $0x2e8] sm:$0xff]
    %v341 = vld [vmem:[#allocation2 + $0x2f0] sm:$0xff]
    %v342 = vld [vmem:[#allocation2 + $0x300] sm:$0xff]
    %v343 = vld [vmem:[#allocation2 + $0x308] sm:$0xff]
    %v344 = vld [vmem:[#allocation2 + $0x318] sm:$0xff]
    %v345 = vld [vmem:[#allocation2 + $0x320] sm:$0xff]
    %v346 = vpack.c.bf16 %v282, %v282
    %v347 = vpack.c.bf16 %v283, %v283
    %v348 = vpack.c.bf16 %v284, %v284
    %v349 = vpack.c.bf16 %v285, %v285
    %v350 = vpack.c.bf16 %v286, %v286
    %v351 = vpack.c.bf16 %v287, %v287
    %v352 = vpack.c.bf16 %v288, %v288
    %v353 = vpack.c.bf16 %v289, %v289
    %v354 = vpack.c.bf16 %v290, %v290
    %v355 = vpack.c.bf16 %v291, %v291
    %v356 = vpack.c.bf16 %v292, %v292
    %v357 = vpack.c.bf16 %v293, %v293
    %v358 = vpack.c.bf16 %v294, %v294
    %v359 = vpack.c.bf16 %v295, %v295
    %v360 = vpack.c.bf16 %v296, %v296
    %v361 = vpack.c.bf16 %v297, %v297
    %v362 = vpack.c.bf16 %v298, %v298
    %v363 = vpack.c.bf16 %v299, %v299
    %v364 = vpack.c.bf16 %v300, %v300
    %v365 = vpack.c.bf16 %v301, %v301
    %v366 = vpack.c.bf16 %v302, %v302
    %v367 = vpack.c.bf16 %v303, %v303
    %v368 = vpack.c.bf16 %v304, %v304
    %v369 = vpack.c.bf16 %v305, %v305
    %v370 = vpack.c.bf16 %v306, %v306
    %v371 = vpack.c.bf16 %v307, %v307
    %v372 = vpack.c.bf16 %v308, %v308
    %v373 = vpack.c.bf16 %v309, %v309
    %v374 = vpack.c.bf16 %v310, %v310
    %v375 = vpack.c.bf16 %v311, %v311
    %v376 = vpack.c.bf16 %v312, %v312
    %v377 = vpack.c.bf16 %v313, %v313
    %v378 = vpack.c.bf16 %v314, %v314
    %v379 = vpack.c.bf16 %v315, %v315
    %v380 = vpack.c.bf16 %v316, %v316
    %v381 = vpack.c.bf16 %v317, %v317
    %v382 = vpack.c.bf16 %v318, %v318
    %v383 = vpack.c.bf16 %v319, %v319
    %v384 = vpack.c.bf16 %v320, %v320
    %v385 = vpack.c.bf16 %v321, %v321
    %v386 = vpack.c.bf16 %v322, %v322
    %v387 = vpack.c.bf16 %v323, %v323
    %v388 = vpack.c.bf16 %v324, %v324
    %v389 = vpack.c.bf16 %v325, %v325
    %v390 = vpack.c.bf16 %v326, %v326
    %v391 = vpack.c.bf16 %v327, %v327
    %v392 = vpack.c.bf16 %v328, %v328
    %v393 = vpack.c.bf16 %v329, %v329
    %v394 = vpack.c.bf16 %v330, %v330
    %v395 = vpack.c.bf16 %v331, %v331
    %v396 = vpack.c.bf16 %v332, %v332
    %v397 = vpack.c.bf16 %v333, %v333
    %v398 = vpack.c.bf16 %v334, %v334
    %v399 = vpack.c.bf16 %v335, %v335
    %v400 = vpack.c.bf16 %v336, %v336
    %v401 = vpack.c.bf16 %v337, %v337
    %v402 = vpack.c.bf16 %v338, %v338
    %v403 = vpack.c.bf16 %v339, %v339
    %v404 = vpack.c.bf16 %v340, %v340
    %v405 = vpack.c.bf16 %v341, %v341
    %v406 = vpack.c.bf16 %v342, %v342
    %v407 = vpack.c.bf16 %v343, %v343
    %v408 = vpack.c.bf16 %v344, %v344
    %v409 = vpack.c.bf16 %v345, %v345
    %vm410 = vcmask 27648
    %411 = vst.msk [vmem:[#allocation4] sm:$0xf] %vm410, %v346
    %412 = vst.msk [vmem:[#allocation4 + $0x4] sm:$0xf] %vm410, %v347
    %413 = vst.msk [vmem:[#allocation4 + $0x8] sm:$0xf] %vm410, %v348
    %414 = vst.msk [vmem:[#allocation4 + $0xc] sm:$0xf] %vm410, %v349
    %415 = vst.msk [vmem:[#allocation4 + $0x10] sm:$0xf] %vm410, %v350
    %416 = vst.msk [vmem:[#allocation4 + $0x14] sm:$0xf] %vm410, %v351
    %417 = vst.msk [vmem:[#allocation4 + $0x18] sm:$0xf] %vm410, %v352
    %418 = vst.msk [vmem:[#allocation4 + $0x1c] sm:$0xf] %vm410, %v353
    %419 = vst.msk [vmem:[#allocation4 + $0x20] sm:$0xf] %vm410, %v354
    %420 = vst.msk [vmem:[#allocation4 + $0x24] sm:$0xf] %vm410, %v355
    %421 = vst.msk [vmem:[#allocation4 + $0x28] sm:$0xf] %vm410, %v356
    %422 = vst.msk [vmem:[#allocation4 + $0x2c] sm:$0xf] %vm410, %v357
    %423 = vst.msk [vmem:[#allocation4 + $0x30] sm:$0xf] %vm410, %v358
    %424 = vst.msk [vmem:[#allocation4 + $0x34] sm:$0xf] %vm410, %v359
    %425 = vst.msk [vmem:[#allocation4 + $0x38] sm:$0xf] %vm410, %v360
    %426 = vst.msk [vmem:[#allocation4 + $0x3c] sm:$0xf] %vm410, %v361
    %427 = vst.msk [vmem:[#allocation4 + $0x40] sm:$0xf] %vm410, %v362
    %428 = vst.msk [vmem:[#allocation4 + $0x44] sm:$0xf] %vm410, %v363
    %429 = vst.msk [vmem:[#allocation4 + $0x48] sm:$0xf] %vm410, %v364
    %430 = vst.msk [vmem:[#allocation4 + $0x4c] sm:$0xf] %vm410, %v365
    %431 = vst.msk [vmem:[#allocation4 + $0x50] sm:$0xf] %vm410, %v366
    %432 = vst.msk [vmem:[#allocation4 + $0x54] sm:$0xf] %vm410, %v367
    %433 = vst.msk [vmem:[#allocation4 + $0x58] sm:$0xf] %vm410, %v368
    %434 = vst.msk [vmem:[#allocation4 + $0x5c] sm:$0xf] %vm410, %v369
    %435 = vst.msk [vmem:[#allocation4 + $0x60] sm:$0xf] %vm410, %v370
    %436 = vst.msk [vmem:[#allocation4 + $0x64] sm:$0xf] %vm410, %v371
    %437 = vst.msk [vmem:[#allocation4 + $0x68] sm:$0xf] %vm410, %v372
    %438 = vst.msk [vmem:[#allocation4 + $0x6c] sm:$0xf] %vm410, %v373
    %439 = vst.msk [vmem:[#allocation4 + $0x70] sm:$0xf] %vm410, %v374
    %440 = vst.msk [vmem:[#allocation4 + $0x74] sm:$0xf] %vm410, %v375
    %441 = vst.msk [vmem:[#allocation4 + $0x78] sm:$0xf] %vm410, %v376
    %442 = vst.msk [vmem:[#allocation4 + $0x7c] sm:$0xf] %vm410, %v377
    %443 = vst.msk [vmem:[#allocation4 + $0x80] sm:$0xf] %vm410, %v378
    %444 = vst.msk [vmem:[#allocation4 + $0x84] sm:$0xf] %vm410, %v379
    %445 = vst.msk [vmem:[#allocation4 + $0x88] sm:$0xf] %vm410, %v380
    %446 = vst.msk [vmem:[#allocation4 + $0x8c] sm:$0xf] %vm410, %v381
    %447 = vst.msk [vmem:[#allocation4 + $0x90] sm:$0xf] %vm410, %v382
    %448 = vst.msk [vmem:[#allocation4 + $0x94] sm:$0xf] %vm410, %v383
    %449 = vst.msk [vmem:[#allocation4 + $0x98] sm:$0xf] %vm410, %v384
    %450 = vst.msk [vmem:[#allocation4 + $0x9c] sm:$0xf] %vm410, %v385
    %451 = vst.msk [vmem:[#allocation4 + $0xa0] sm:$0xf] %vm410, %v386
    %452 = vst.msk [vmem:[#allocation4 + $0xa4] sm:$0xf] %vm410, %v387
    %453 = vst.msk [vmem:[#allocation4 + $0xa8] sm:$0xf] %vm410, %v388
    %454 = vst.msk [vmem:[#allocation4 + $0xac] sm:$0xf] %vm410, %v389
    %455 = vst.msk [vmem:[#allocation4 + $0xb0] sm:$0xf] %vm410, %v390
    %456 = vst.msk [vmem:[#allocation4 + $0xb4] sm:$0xf] %vm410, %v391
    %457 = vst.msk [vmem:[#allocation4 + $0xb8] sm:$0xf] %vm410, %v392
    %458 = vst.msk [vmem:[#allocation4 + $0xbc] sm:$0xf] %vm410, %v393
    %459 = vst.msk [vmem:[#allocation4 + $0xc0] sm:$0xf] %vm410, %v394
    %460 = vst.msk [vmem:[#allocation4 + $0xc4] sm:$0xf] %vm410, %v395
    %461 = vst.msk [vmem:[#allocation4 + $0xc8] sm:$0xf] %vm410, %v396
    %462 = vst.msk [vmem:[#allocation4 + $0xcc] sm:$0xf] %vm410, %v397
    %463 = vst.msk [vmem:[#allocation4 + $0xd0] sm:$0xf] %vm410, %v398
    %464 = vst.msk [vmem:[#allocation4 + $0xd4] sm:$0xf] %vm410, %v399
    %465 = vst.msk [vmem:[#allocation4 + $0xd8] sm:$0xf] %vm410, %v400
    %466 = vst.msk [vmem:[#allocation4 + $0xdc] sm:$0xf] %vm410, %v401
    %467 = vst.msk [vmem:[#allocation4 + $0xe0] sm:$0xf] %vm410, %v402
    %468 = vst.msk [vmem:[#allocation4 + $0xe4] sm:$0xf] %vm410, %v403
    %469 = vst.msk [vmem:[#allocation4 + $0xe8] sm:$0xf] %vm410, %v404
    %470 = vst.msk [vmem:[#allocation4 + $0xec] sm:$0xf] %vm410, %v405
    %471 = vst.msk [vmem:[#allocation4 + $0xf0] sm:$0xf] %vm410, %v406
    %472 = vst.msk [vmem:[#allocation4 + $0xf4] sm:$0xf] %vm410, %v407
    %473 = vst.msk [vmem:[#allocation4 + $0xf8] sm:$0xf] %vm410, %v408
    %474 = vst.msk [vmem:[#allocation4 + $0xfc] sm:$0xf] %vm410, %v409
    %v475 = vld [vmem:[#allocation2 + $0x1] sm:$0xff]
    %v476 = vld [vmem:[#allocation2 + $0x9] sm:$0xff]
    %v477 = vld [vmem:[#allocation2 + $0x19] sm:$0xff]
    %v478 = vld [vmem:[#allocation2 + $0x21] sm:$0xff]
    %v479 = vld [vmem:[#allocation2 + $0x31] sm:$0xff]
    %v480 = vld [vmem:[#allocation2 + $0x39] sm:$0xff]
    %v481 = vld [vmem:[#allocation2 + $0x49] sm:$0xff]
    %v482 = vld [vmem:[#allocation2 + $0x51] sm:$0xff]
    %v483 = vld [vmem:[#allocation2 + $0x61] sm:$0xff]
    %v484 = vld [vmem:[#allocation2 + $0x69] sm:$0xff]
    %v485 = vld [vmem:[#allocation2 + $0x79] sm:$0xff]
    %v486 = vld [vmem:[#allocation2 + $0x81] sm:$0xff]
    %v487 = vld [vmem:[#allocation2 + $0x91] sm:$0xff]
    %v488 = vld [vmem:[#allocation2 + $0x99] sm:$0xff]
    %v489 = vld [vmem:[#allocation2 + $0xa9] sm:$0xff]
    %v490 = vld [vmem:[#allocation2 + $0xb1] sm:$0xff]
    %v491 = vld [vmem:[#allocation2 + $0xc1] sm:$0xff]
    %v492 = vld [vmem:[#allocation2 + $0xc9] sm:$0xff]
    %v493 = vld [vmem:[#allocation2 + $0xd9] sm:$0xff]
    %v494 = vld [vmem:[#allocation2 + $0xe1] sm:$0xff]
    %v495 = vld [vmem:[#allocation2 + $0xf1] sm:$0xff]
    %v496 = vld [vmem:[#allocation2 + $0xf9] sm:$0xff]
    %v497 = vld [vmem:[#allocation2 + $0x109] sm:$0xff]
    %v498 = vld [vmem:[#allocation2 + $0x111] sm:$0xff]
    %v499 = vld [vmem:[#allocation2 + $0x121] sm:$0xff]
    %v500 = vld [vmem:[#allocation2 + $0x129] sm:$0xff]
    %v501 = vld [vmem:[#allocation2 + $0x139] sm:$0xff]
    %v502 = vld [vmem:[#allocation2 + $0x141] sm:$0xff]
    %v503 = vld [vmem:[#allocation2 + $0x151] sm:$0xff]
    %v504 = vld [vmem:[#allocation2 + $0x159] sm:$0xff]
    %v505 = vld [vmem:[#allocation2 + $0x169] sm:$0xff]
    %v506 = vld [vmem:[#allocation2 + $0x171] sm:$0xff]
    %v507 = vld [vmem:[#allocation2 + $0x1b1] sm:$0xff]
    %v508 = vld [vmem:[#allocation2 + $0x1b9] sm:$0xff]
    %v509 = vld [vmem:[#allocation2 + $0x1c9] sm:$0xff]
    %v510 = vld [vmem:[#allocation2 + $0x1d1] sm:$0xff]
    %v511 = vld [vmem:[#allocation2 + $0x1e1] sm:$0xff]
    %v512 = vld [vmem:[#allocation2 + $0x1e9] sm:$0xff]
    %v513 = vld [vmem:[#allocation2 + $0x1f9] sm:$0xff]
    %v514 = vld [vmem:[#allocation2 + $0x201] sm:$0xff]
    %v515 = vld [vmem:[#allocation2 + $0x211] sm:$0xff]
    %v516 = vld [vmem:[#allocation2 + $0x219] sm:$0xff]
    %v517 = vld [vmem:[#allocation2 + $0x229] sm:$0xff]
    %v518 = vld [vmem:[#allocation2 + $0x231] sm:$0xff]
    %v519 = vld [vmem:[#allocation2 + $0x241] sm:$0xff]
    %v520 = vld [vmem:[#allocation2 + $0x249] sm:$0xff]
    %v521 = vld [vmem:[#allocation2 + $0x259] sm:$0xff]
    %v522 = vld [vmem:[#allocation2 + $0x261] sm:$0xff]
    %v523 = vld [vmem:[#allocation2 + $0x271] sm:$0xff]
    %v524 = vld [vmem:[#allocation2 + $0x279] sm:$0xff]
    %v525 = vld [vmem:[#allocation2 + $0x289] sm:$0xff]
    %v526 = vld [vmem:[#allocation2 + $0x291] sm:$0xff]
    %v527 = vld [vmem:[#allocation2 + $0x2a1] sm:$0xff]
    %v528 = vld [vmem:[#allocation2 + $0x2a9] sm:$0xff]
    %v529 = vld [vmem:[#allocation2 + $0x2b9] sm:$0xff]
    %v530 = vld [vmem:[#allocation2 + $0x2c1] sm:$0xff]
    %v531 = vld [vmem:[#allocation2 + $0x2d1] sm:$0xff]
    %v532 = vld [vmem:[#allocation2 + $0x2d9] sm:$0xff]
    %v533 = vld [vmem:[#allocation2 + $0x2e9] sm:$0xff]
    %v534 = vld [vmem:[#allocation2 + $0x2f1] sm:$0xff]
    %v535 = vld [vmem:[#allocation2 + $0x301] sm:$0xff]
    %v536 = vld [vmem:[#allocation2 + $0x309] sm:$0xff]
    %v537 = vld [vmem:[#allocation2 + $0x319] sm:$0xff]
    %v538 = vld [vmem:[#allocation2 + $0x321] sm:$0xff]
    %v539 = vpack.c.bf16 %v475, %v475
    %v540 = vpack.c.bf16 %v476, %v476
    %v541 = vpack.c.bf16 %v477, %v477
    %v542 = vpack.c.bf16 %v478, %v478
    %v543 = vpack.c.bf16 %v479, %v479
    %v544 = vpack.c.bf16 %v480, %v480
    %v545 = vpack.c.bf16 %v481, %v481
    %v546 = vpack.c.bf16 %v482, %v482
    %v547 = vpack.c.bf16 %v483, %v483
    %v548 = vpack.c.bf16 %v484, %v484
    %v549 = vpack.c.bf16 %v485, %v485
    %v550 = vpack.c.bf16 %v486, %v486
    %v551 = vpack.c.bf16 %v487, %v487
    %v552 = vpack.c.bf16 %v488, %v488
    %v553 = vpack.c.bf16 %v489, %v489
    %v554 = vpack.c.bf16 %v490, %v490
    %v555 = vpack.c.bf16 %v491, %v491
    %v556 = vpack.c.bf16 %v492, %v492
    %v557 = vpack.c.bf16 %v493, %v493
    %v558 = vpack.c.bf16 %v494, %v494
    %v559 = vpack.c.bf16 %v495, %v495
    %v560 = vpack.c.bf16 %v496, %v496
    %v561 = vpack.c.bf16 %v497, %v497
    %v562 = vpack.c.bf16 %v498, %v498
    %v563 = vpack.c.bf16 %v499, %v499
    %v564 = vpack.c.bf16 %v500, %v500
    %v565 = vpack.c.bf16 %v501, %v501
    %v566 = vpack.c.bf16 %v502, %v502
    %v567 = vpack.c.bf16 %v503, %v503
    %v568 = vpack.c.bf16 %v504, %v504
    %v569 = vpack.c.bf16 %v505, %v505
    %v570 = vpack.c.bf16 %v506, %v506
    %v571 = vpack.c.bf16 %v507, %v507
    %v572 = vpack.c.bf16 %v508, %v508
    %v573 = vpack.c.bf16 %v509, %v509
    %v574 = vpack.c.bf16 %v510, %v510
    %v575 = vpack.c.bf16 %v511, %v511
    %v576 = vpack.c.bf16 %v512, %v512
    %v577 = vpack.c.bf16 %v513, %v513
    %v578 = vpack.c.bf16 %v514, %v514
    %v579 = vpack.c.bf16 %v515, %v515
    %v580 = vpack.c.bf16 %v516, %v516
    %v581 = vpack.c.bf16 %v517, %v517
    %v582 = vpack.c.bf16 %v518, %v518
    %v583 = vpack.c.bf16 %v519, %v519
    %v584 = vpack.c.bf16 %v520, %v520
    %v585 = vpack.c.bf16 %v521, %v521
    %v586 = vpack.c.bf16 %v522, %v522
    %v587 = vpack.c.bf16 %v523, %v523
    %v588 = vpack.c.bf16 %v524, %v524
    %v589 = vpack.c.bf16 %v525, %v525
    %v590 = vpack.c.bf16 %v526, %v526
    %v591 = vpack.c.bf16 %v527, %v527
    %v592 = vpack.c.bf16 %v528, %v528
    %v593 = vpack.c.bf16 %v529, %v529
    %v594 = vpack.c.bf16 %v530, %v530
    %v595 = vpack.c.bf16 %v531, %v531
    %v596 = vpack.c.bf16 %v532, %v532
    %v597 = vpack.c.bf16 %v533, %v533
    %v598 = vpack.c.bf16 %v534, %v534
    %v599 = vpack.c.bf16 %v535, %v535
    %v600 = vpack.c.bf16 %v536, %v536
    %v601 = vpack.c.bf16 %v537, %v537
    %v602 = vpack.c.bf16 %v538, %v538
    %667 = vrot.lane.b32.xlu0 %v539, 4
    %v668 = vpop.permute.xlu0 %667
    %669 = vrot.lane.b32.xlu0 %v540, 4
    %v670 = vpop.permute.xlu0 %669
    %671 = vrot.lane.b32.xlu0 %v541, 4
    %v672 = vpop.permute.xlu0 %671
    %673 = vrot.lane.b32.xlu0 %v542, 4
    %v674 = vpop.permute.xlu0 %673
    %675 = vrot.lane.b32.xlu0 %v543, 4
    %v676 = vpop.permute.xlu0 %675
    %677 = vrot.lane.b32.xlu0 %v544, 4
    %v678 = vpop.permute.xlu0 %677
    %679 = vrot.lane.b32.xlu0 %v545, 4
    %v680 = vpop.permute.xlu0 %679
    %681 = vrot.lane.b32.xlu0 %v546, 4
    %v682 = vpop.permute.xlu0 %681
    %683 = vrot.lane.b32.xlu0 %v547, 4
    %v684 = vpop.permute.xlu0 %683
    %685 = vrot.lane.b32.xlu0 %v548, 4
    %v686 = vpop.permute.xlu0 %685
    %687 = vrot.lane.b32.xlu0 %v549, 4
    %v688 = vpop.permute.xlu0 %687
    %689 = vrot.lane.b32.xlu0 %v550, 4
    %v690 = vpop.permute.xlu0 %689
    %691 = vrot.lane.b32.xlu0 %v551, 4
    %v692 = vpop.permute.xlu0 %691
    %693 = vrot.lane.b32.xlu0 %v552, 4
    %v694 = vpop.permute.xlu0 %693
    %695 = vrot.lane.b32.xlu0 %v553, 4
    %v696 = vpop.permute.xlu0 %695
    %697 = vrot.lane.b32.xlu0 %v554, 4
    %v698 = vpop.permute.xlu0 %697
    %699 = vrot.lane.b32.xlu0 %v555, 4
    %v700 = vpop.permute.xlu0 %699
    %701 = vrot.lane.b32.xlu0 %v556, 4
    %v702 = vpop.permute.xlu0 %701
    %703 = vrot.lane.b32.xlu0 %v557, 4
    %v704 = vpop.permute.xlu0 %703
    %705 = vrot.lane.b32.xlu0 %v558, 4
    %v706 = vpop.permute.xlu0 %705
    %707 = vrot.lane.b32.xlu0 %v559, 4
    %v708 = vpop.permute.xlu0 %707
    %709 = vrot.lane.b32.xlu0 %v560, 4
    %v710 = vpop.permute.xlu0 %709
    %711 = vrot.lane.b32.xlu0 %v561, 4
    %v712 = vpop.permute.xlu0 %711
    %713 = vrot.lane.b32.xlu0 %v562, 4
    %v714 = vpop.permute.xlu0 %713
    %715 = vrot.lane.b32.xlu0 %v563, 4
    %v716 = vpop.permute.xlu0 %715
    %717 = vrot.lane.b32.xlu0 %v564, 4
    %v718 = vpop.permute.xlu0 %717
    %719 = vrot.lane.b32.xlu0 %v565, 4
    %v720 = vpop.permute.xlu0 %719
    %721 = vrot.lane.b32.xlu0 %v566, 4
    %v722 = vpop.permute.xlu0 %721
    %723 = vrot.lane.b32.xlu0 %v567, 4
    %v724 = vpop.permute.xlu0 %723
    %725 = vrot.lane.b32.xlu0 %v568, 4
    %v726 = vpop.permute.xlu0 %725
    %727 = vrot.lane.b32.xlu0 %v569, 4
    %v728 = vpop.permute.xlu0 %727
    %729 = vrot.lane.b32.xlu0 %v570, 4
    %v730 = vpop.permute.xlu0 %729
    %731 = vrot.lane.b32.xlu0 %v571, 4
    %v732 = vpop.permute.xlu0 %731
    %733 = vrot.lane.b32.xlu0 %v572, 4
    %v734 = vpop.permute.xlu0 %733
    %735 = vrot.lane.b32.xlu0 %v573, 4
    %v736 = vpop.permute.xlu0 %735
    %737 = vrot.lane.b32.xlu0 %v574, 4
    %v738 = vpop.permute.xlu0 %737
    %739 = vrot.lane.b32.xlu0 %v575, 4
    %v740 = vpop.permute.xlu0 %739
    %741 = vrot.lane.b32.xlu0 %v576, 4
    %v742 = vpop.permute.xlu0 %741
    %743 = vrot.lane.b32.xlu0 %v577, 4
    %v744 = vpop.permute.xlu0 %743
    %745 = vrot.lane.b32.xlu0 %v578, 4
    %v746 = vpop.permute.xlu0 %745
    %747 = vrot.lane.b32.xlu0 %v579, 4
    %v748 = vpop.permute.xlu0 %747
    %749 = vrot.lane.b32.xlu0 %v580, 4
    %v750 = vpop.permute.xlu0 %749
    %751 = vrot.lane.b32.xlu0 %v581, 4
    %v752 = vpop.permute.xlu0 %751
    %753 = vrot.lane.b32.xlu0 %v582, 4
    %v754 = vpop.permute.xlu0 %753
    %755 = vrot.lane.b32.xlu0 %v583, 4
    %v756 = vpop.permute.xlu0 %755
    %757 = vrot.lane.b32.xlu0 %v584, 4
    %v758 = vpop.permute.xlu0 %757
    %759 = vrot.lane.b32.xlu0 %v585, 4
    %v760 = vpop.permute.xlu0 %759
    %761 = vrot.lane.b32.xlu0 %v586, 4
    %v762 = vpop.permute.xlu0 %761
    %763 = vrot.lane.b32.xlu0 %v587, 4
    %v764 = vpop.permute.xlu0 %763
    %765 = vrot.lane.b32.xlu0 %v588, 4
    %v766 = vpop.permute.xlu0 %765
    %767 = vrot.lane.b32.xlu0 %v589, 4
    %v768 = vpop.permute.xlu0 %767
    %769 = vrot.lane.b32.xlu0 %v590, 4
    %v770 = vpop.permute.xlu0 %769
    %771 = vrot.lane.b32.xlu0 %v591, 4
    %v772 = vpop.permute.xlu0 %771
    %773 = vrot.lane.b32.xlu0 %v592, 4
    %v774 = vpop.permute.xlu0 %773
    %775 = vrot.lane.b32.xlu0 %v593, 4
    %v776 = vpop.permute.xlu0 %775
    %777 = vrot.lane.b32.xlu0 %v594, 4
    %v778 = vpop.permute.xlu0 %777
    %779 = vrot.lane.b32.xlu0 %v595, 4
    %v780 = vpop.permute.xlu0 %779
    %781 = vrot.lane.b32.xlu0 %v596, 4
    %v782 = vpop.permute.xlu0 %781
    %783 = vrot.lane.b32.xlu0 %v597, 4
    %v784 = vpop.permute.xlu0 %783
    %785 = vrot.lane.b32.xlu0 %v598, 4
    %v786 = vpop.permute.xlu0 %785
    %787 = vrot.lane.b32.xlu0 %v599, 4
    %v788 = vpop.permute.xlu0 %787
    %789 = vrot.lane.b32.xlu0 %v600, 4
    %v790 = vpop.permute.xlu0 %789
    %791 = vrot.lane.b32.xlu0 %v601, 4
    %v792 = vpop.permute.xlu0 %791
    %793 = vrot.lane.b32.xlu0 %v602, 4
    %v794 = vpop.permute.xlu0 %793
    %vm859 = vcmask 60448
    %860 = vst.msk [vmem:[#allocation4] sm:$0xf] %vm859, %v668
    %861 = vst.msk [vmem:[#allocation4 + $0x4] sm:$0xf] %vm859, %v670
    %862 = vst.msk [vmem:[#allocation4 + $0x8] sm:$0xf] %vm859, %v672
    %863 = vst.msk [vmem:[#allocation4 + $0xc] sm:$0xf] %vm859, %v674
    %864 = vst.msk [vmem:[#allocation4 + $0x10] sm:$0xf] %vm859, %v676
    %865 = vst.msk [vmem:[#allocation4 + $0x14] sm:$0xf] %vm859, %v678
    %866 = vst.msk [vmem:[#allocation4 + $0x18] sm:$0xf] %vm859, %v680
    %867 = vst.msk [vmem:[#allocation4 + $0x1c] sm:$0xf] %vm859, %v682
    %868 = vst.msk [vmem:[#allocation4 + $0x20] sm:$0xf] %vm859, %v684
    %869 = vst.msk [vmem:[#allocation4 + $0x24] sm:$0xf] %vm859, %v686
    %870 = vst.msk [vmem:[#allocation4 + $0x28] sm:$0xf] %vm859, %v688
    %871 = vst.msk [vmem:[#allocation4 + $0x2c] sm:$0xf] %vm859, %v690
    %872 = vst.msk [vmem:[#allocation4 + $0x30] sm:$0xf] %vm859, %v692
    %873 = vst.msk [vmem:[#allocation4 + $0x34] sm:$0xf] %vm859, %v694
    %874 = vst.msk [vmem:[#allocation4 + $0x38] sm:$0xf] %vm859, %v696
    %875 = vst.msk [vmem:[#allocation4 + $0x3c] sm:$0xf] %vm859, %v698
    %876 = vst.msk [vmem:[#allocation4 + $0x40] sm:$0xf] %vm859, %v700
    %877 = vst.msk [vmem:[#allocation4 + $0x44] sm:$0xf] %vm859, %v702
    %878 = vst.msk [vmem:[#allocation4 + $0x48] sm:$0xf] %vm859, %v704
    %879 = vst.msk [vmem:[#allocation4 + $0x4c] sm:$0xf] %vm859, %v706
    %880 = vst.msk [vmem:[#allocation4 + $0x50] sm:$0xf] %vm859, %v708
    %881 = vst.msk [vmem:[#allocation4 + $0x54] sm:$0xf] %vm859, %v710
    %882 = vst.msk [vmem:[#allocation4 + $0x58] sm:$0xf] %vm859, %v712
    %883 = vst.msk [vmem:[#allocation4 + $0x5c] sm:$0xf] %vm859, %v714
    %884 = vst.msk [vmem:[#allocation4 + $0x60] sm:$0xf] %vm859, %v716
    %885 = vst.msk [vmem:[#allocation4 + $0x64] sm:$0xf] %vm859, %v718
    %886 = vst.msk [vmem:[#allocation4 + $0x68] sm:$0xf] %vm859, %v720
    %887 = vst.msk [vmem:[#allocation4 + $0x6c] sm:$0xf] %vm859, %v722
    %888 = vst.msk [vmem:[#allocation4 + $0x70] sm:$0xf] %vm859, %v724
    %889 = vst.msk [vmem:[#allocation4 + $0x74] sm:$0xf] %vm859, %v726
    %890 = vst.msk [vmem:[#allocation4 + $0x78] sm:$0xf] %vm859, %v728
    %891 = vst.msk [vmem:[#allocation4 + $0x7c] sm:$0xf] %vm859, %v730
    %892 = vst.msk [vmem:[#allocation4 + $0x80] sm:$0xf] %vm859, %v732
    %893 = vst.msk [vmem:[#allocation4 + $0x84] sm:$0xf] %vm859, %v734
    %894 = vst.msk [vmem:[#allocation4 + $0x88] sm:$0xf] %vm859, %v736
    %895 = vst.msk [vmem:[#allocation4 + $0x8c] sm:$0xf] %vm859, %v738
    %896 = vst.msk [vmem:[#allocation4 + $0x90] sm:$0xf] %vm859, %v740
    %897 = vst.msk [vmem:[#allocation4 + $0x94] sm:$0xf] %vm859, %v742
    %898 = vst.msk [vmem:[#allocation4 + $0x98] sm:$0xf] %vm859, %v744
    %899 = vst.msk [vmem:[#allocation4 + $0x9c] sm:$0xf] %vm859, %v746
    %900 = vst.msk [vmem:[#allocation4 + $0xa0] sm:$0xf] %vm859, %v748
    %901 = vst.msk [vmem:[#allocation4 + $0xa4] sm:$0xf] %vm859, %v750
    %902 = vst.msk [vmem:[#allocation4 + $0xa8] sm:$0xf] %vm859, %v752
    %903 = vst.msk [vmem:[#allocation4 + $0xac] sm:$0xf] %vm859, %v754
    %904 = vst.msk [vmem:[#allocation4 + $0xb0] sm:$0xf] %vm859, %v756
    %905 = vst.msk [vmem:[#allocation4 + $0xb4] sm:$0xf] %vm859, %v758
    %906 = vst.msk [vmem:[#allocation4 + $0xb8] sm:$0xf] %vm859, %v760
    %907 = vst.msk [vmem:[#allocation4 + $0xbc] sm:$0xf] %vm859, %v762
    %908 = vst.msk [vmem:[#allocation4 + $0xc0] sm:$0xf] %vm859, %v764
    %909 = vst.msk [vmem:[#allocation4 + $0xc4] sm:$0xf] %vm859, %v766
    %910 = vst.msk [vmem:[#allocation4 + $0xc8] sm:$0xf] %vm859, %v768
    %911 = vst.msk [vmem:[#allocation4 + $0xcc] sm:$0xf] %vm859, %v770
    %912 = vst.msk [vmem:[#allocation4 + $0xd0] sm:$0xf] %vm859, %v772
    %913 = vst.msk [vmem:[#allocation4 + $0xd4] sm:$0xf] %vm859, %v774
    %914 = vst.msk [vmem:[#allocation4 + $0xd8] sm:$0xf] %vm859, %v776
    %915 = vst.msk [vmem:[#allocation4 + $0xdc] sm:$0xf] %vm859, %v778
    %916 = vst.msk [vmem:[#allocation4 + $0xe0] sm:$0xf] %vm859, %v780
    %917 = vst.msk [vmem:[#allocation4 + $0xe4] sm:$0xf] %vm859, %v782
    %918 = vst.msk [vmem:[#allocation4 + $0xe8] sm:$0xf] %vm859, %v784
    %919 = vst.msk [vmem:[#allocation4 + $0xec] sm:$0xf] %vm859, %v786
    %920 = vst.msk [vmem:[#allocation4 + $0xf0] sm:$0xf] %vm859, %v788
    %921 = vst.msk [vmem:[#allocation4 + $0xf4] sm:$0xf] %vm859, %v790
    %922 = vst.msk [vmem:[#allocation4 + $0xf8] sm:$0xf] %vm859, %v792
    %923 = vst.msk [vmem:[#allocation4 + $0xfc] sm:$0xf] %vm859, %v794
    %v924 = vld [vmem:[#allocation2 + $0x2] sm:$0xff]
    %v925 = vld [vmem:[#allocation2 + $0xa] sm:$0xff]
    %v926 = vld [vmem:[#allocation2 + $0x1a] sm:$0xff]
    %v927 = vld [vmem:[#allocation2 + $0x22] sm:$0xff]
    %v928 = vld [vmem:[#allocation2 + $0x32] sm:$0xff]
    %v929 = vld [vmem:[#allocation2 + $0x3a] sm:$0xff]
    %v930 = vld [vmem:[#allocation2 + $0x4a] sm:$0xff]
    %v931 = vld [vmem:[#allocation2 + $0x52] sm:$0xff]
    %v932 = vld [vmem:[#allocation2 + $0x62] sm:$0xff]
    %v933 = vld [vmem:[#allocation2 + $0x6a] sm:$0xff]
    %v934 = vld [vmem:[#allocation2 + $0x7a] sm:$0xff]
    %v935 = vld [vmem:[#allocation2 + $0x82] sm:$0xff]
    %v936 = vld [vmem:[#allocation2 + $0x92] sm:$0xff]
    %v937 = vld [vmem:[#allocation2 + $0x9a] sm:$0xff]
    %v938 = vld [vmem:[#allocation2 + $0xaa] sm:$0xff]
    %v939 = vld [vmem:[#allocation2 + $0xb2] sm:$0xff]
    %v940 = vld [vmem:[#allocation2 + $0xc2] sm:$0xff]
    %v941 = vld [vmem:[#allocation2 + $0xca] sm:$0xff]
    %v942 = vld [vmem:[#allocation2 + $0xda] sm:$0xff]
    %v943 = vld [vmem:[#allocation2 + $0xe2] sm:$0xff]
    %v944 = vld [vmem:[#allocation2 + $0xf2] sm:$0xff]
    %v945 = vld [vmem:[#allocation2 + $0xfa] sm:$0xff]
    %v946 = vld [vmem:[#allocation2 + $0x10a] sm:$0xff]
    %v947 = vld [vmem:[#allocation2 + $0x112] sm:$0xff]
    %v948 = vld [vmem:[#allocation2 + $0x122] sm:$0xff]
    %v949 = vld [vmem:[#allocation2 + $0x12a] sm:$0xff]
    %v950 = vld [vmem:[#allocation2 + $0x13a] sm:$0xff]
    %v951 = vld [vmem:[#allocation2 + $0x142] sm:$0xff]
    %v952 = vld [vmem:[#allocation2 + $0x152] sm:$0xff]
    %v953 = vld [vmem:[#allocation2 + $0x15a] sm:$0xff]
    %v954 = vld [vmem:[#allocation2 + $0x16a] sm:$0xff]
    %v955 = vld [vmem:[#allocation2 + $0x172] sm:$0xff]
    %v956 = vld [vmem:[#allocation2 + $0x1b2] sm:$0xff]
    %v957 = vld [vmem:[#allocation2 + $0x1ba] sm:$0xff]
    %v958 = vld [vmem:[#allocation2 + $0x1ca] sm:$0xff]
    %v959 = vld [vmem:[#allocation2 + $0x1d2] sm:$0xff]
    %v960 = vld [vmem:[#allocation2 + $0x1e2] sm:$0xff]
    %v961 = vld [vmem:[#allocation2 + $0x1ea] sm:$0xff]
    %v962 = vld [vmem:[#allocation2 + $0x1fa] sm:$0xff]
    %v963 = vld [vmem:[#allocation2 + $0x202] sm:$0xff]
    %v964 = vld [vmem:[#allocation2 + $0x212] sm:$0xff]
    %v965 = vld [vmem:[#allocation2 + $0x21a] sm:$0xff]
    %v966 = vld [vmem:[#allocation2 + $0x22a] sm:$0xff]
    %v967 = vld [vmem:[#allocation2 + $0x232] sm:$0xff]
    %v968 = vld [vmem:[#allocation2 + $0x242] sm:$0xff]
    %v969 = vld [vmem:[#allocation2 + $0x24a] sm:$0xff]
    %v970 = vld [vmem:[#allocation2 + $0x25a] sm:$0xff]
    %v971 = vld [vmem:[#allocation2 + $0x262] sm:$0xff]
    %v972 = vld [vmem:[#allocation2 + $0x272] sm:$0xff]
    %v973 = vld [vmem:[#allocation2 + $0x27a] sm:$0xff]
    %v974 = vld [vmem:[#allocation2 + $0x28a] sm:$0xff]
    %v975 = vld [vmem:[#allocation2 + $0x292] sm:$0xff]
    %v976 = vld [vmem:[#allocation2 + $0x2a2] sm:$0xff]
    %v977 = vld [vmem:[#allocation2 + $0x2aa] sm:$0xff]
    %v978 = vld [vmem:[#allocation2 + $0x2ba] sm:$0xff]
    %v979 = vld [vmem:[#allocation2 + $0x2c2] sm:$0xff]
    %v980 = vld [vmem:[#allocation2 + $0x2d2] sm:$0xff]
    %v981 = vld [vmem:[#allocation2 + $0x2da] sm:$0xff]
    %v982 = vld [vmem:[#allocation2 + $0x2ea] sm:$0xff]
    %v983 = vld [vmem:[#allocation2 + $0x2f2] sm:$0xff]
    %v984 = vld [vmem:[#allocation2 + $0x302] sm:$0xff]
    %v985 = vld [vmem:[#allocation2 + $0x30a] sm:$0xff]
    %v986 = vld [vmem:[#allocation2 + $0x31a] sm:$0xff]
    %v987 = vld [vmem:[#allocation2 + $0x322] sm:$0xff]
    %v988 = vpack.c.bf16 %v924, %v924
    %v989 = vpack.c.bf16 %v925, %v925
    %v990 = vpack.c.bf16 %v926, %v926
    %v991 = vpack.c.bf16 %v927, %v927
    %v992 = vpack.c.bf16 %v928, %v928
    %v993 = vpack.c.bf16 %v929, %v929
    %v994 = vpack.c.bf16 %v930, %v930
    %v995 = vpack.c.bf16 %v931, %v931
    %v996 = vpack.c.bf16 %v932, %v932
    %v997 = vpack.c.bf16 %v933, %v933
    %v998 = vpack.c.bf16 %v934, %v934
    %v999 = vpack.c.bf16 %v935, %v935
    %v1000 = vpack.c.bf16 %v936, %v936
    %v1001 = vpack.c.bf16 %v937, %v937
    %v1002 = vpack.c.bf16 %v938, %v938
    %v1003 = vpack.c.bf16 %v939, %v939
    %v1004 = vpack.c.bf16 %v940, %v940
    %v1005 = vpack.c.bf16 %v941, %v941
    %v1006 = vpack.c.bf16 %v942, %v942
    %v1007 = vpack.c.bf16 %v943, %v943
    %v1008 = vpack.c.bf16 %v944, %v944
    %v1009 = vpack.c.bf16 %v945, %v945
    %v1010 = vpack.c.bf16 %v946, %v946
    %v1011 = vpack.c.bf16 %v947, %v947
    %v1012 = vpack.c.bf16 %v948, %v948
    %v1013 = vpack.c.bf16 %v949, %v949
    %v1014 = vpack.c.bf16 %v950, %v950
    %v1015 = vpack.c.bf16 %v951, %v951
    %v1016 = vpack.c.bf16 %v952, %v952
    %v1017 = vpack.c.bf16 %v953, %v953
    %v1018 = vpack.c.bf16 %v954, %v954
    %v1019 = vpack.c.bf16 %v955, %v955
    %v1020 = vpack.c.bf16 %v956, %v956
    %v1021 = vpack.c.bf16 %v957, %v957
    %v1022 = vpack.c.bf16 %v958, %v958
    %v1023 = vpack.c.bf16 %v959, %v959
    %v1024 = vpack.c.bf16 %v960, %v960
    %v1025 = vpack.c.bf16 %v961, %v961
    %v1026 = vpack.c.bf16 %v962, %v962
    %v1027 = vpack.c.bf16 %v963, %v963
    %v1028 = vpack.c.bf16 %v964, %v964
    %v1029 = vpack.c.bf16 %v965, %v965
    %v1030 = vpack.c.bf16 %v966, %v966
    %v1031 = vpack.c.bf16 %v967, %v967
    %v1032 = vpack.c.bf16 %v968, %v968
    %v1033 = vpack.c.bf16 %v969, %v969
    %v1034 = vpack.c.bf16 %v970, %v970
    %v1035 = vpack.c.bf16 %v971, %v971
    %v1036 = vpack.c.bf16 %v972, %v972
    %v1037 = vpack.c.bf16 %v973, %v973
    %v1038 = vpack.c.bf16 %v974, %v974
    %v1039 = vpack.c.bf16 %v975, %v975
    %v1040 = vpack.c.bf16 %v976, %v976
    %v1041 = vpack.c.bf16 %v977, %v977
    %v1042 = vpack.c.bf16 %v978, %v978
    %v1043 = vpack.c.bf16 %v979, %v979
    %v1044 = vpack.c.bf16 %v980, %v980
    %v1045 = vpack.c.bf16 %v981, %v981
    %v1046 = vpack.c.bf16 %v982, %v982
    %v1047 = vpack.c.bf16 %v983, %v983
    %v1048 = vpack.c.bf16 %v984, %v984
    %v1049 = vpack.c.bf16 %v985, %v985
    %v1050 = vpack.c.bf16 %v986, %v986
    %v1051 = vpack.c.bf16 %v987, %v987
    %1116 = vrot.lane.b32.xlu0 %v988, 8
    %v1117 = vpop.permute.xlu0 %1116
    %1118 = vrot.lane.b32.xlu0 %v989, 8
    %v1119 = vpop.permute.xlu0 %1118
    %1120 = vrot.lane.b32.xlu0 %v990, 8
    %v1121 = vpop.permute.xlu0 %1120
    %1122 = vrot.lane.b32.xlu0 %v991, 8
    %v1123 = vpop.permute.xlu0 %1122
    %1124 = vrot.lane.b32.xlu0 %v992, 8
    %v1125 = vpop.permute.xlu0 %1124
    %1126 = vrot.lane.b32.xlu0 %v993, 8
    %v1127 = vpop.permute.xlu0 %1126
    %1128 = vrot.lane.b32.xlu0 %v994, 8
    %v1129 = vpop.permute.xlu0 %1128
    %1130 = vrot.lane.b32.xlu0 %v995, 8
    %v1131 = vpop.permute.xlu0 %1130
    %1132 = vrot.lane.b32.xlu0 %v996, 8
    %v1133 = vpop.permute.xlu0 %1132
    %1134 = vrot.lane.b32.xlu0 %v997, 8
    %v1135 = vpop.permute.xlu0 %1134
    %1136 = vrot.lane.b32.xlu0 %v998, 8
    %v1137 = vpop.permute.xlu0 %1136
    %1138 = vrot.lane.b32.xlu0 %v999, 8
    %v1139 = vpop.permute.xlu0 %1138
    %1140 = vrot.lane.b32.xlu0 %v1000, 8
    %v1141 = vpop.permute.xlu0 %1140
    %1142 = vrot.lane.b32.xlu0 %v1001, 8
    %v1143 = vpop.permute.xlu0 %1142
    %1144 = vrot.lane.b32.xlu0 %v1002, 8
    %v1145 = vpop.permute.xlu0 %1144
    %1146 = vrot.lane.b32.xlu0 %v1003, 8
    %v1147 = vpop.permute.xlu0 %1146
    %1148 = vrot.lane.b32.xlu0 %v1004, 8
    %v1149 = vpop.permute.xlu0 %1148
    %1150 = vrot.lane.b32.xlu0 %v1005, 8
    %v1151 = vpop.permute.xlu0 %1150
    %1152 = vrot.lane.b32.xlu0 %v1006, 8
    %v1153 = vpop.permute.xlu0 %1152
    %1154 = vrot.lane.b32.xlu0 %v1007, 8
    %v1155 = vpop.permute.xlu0 %1154
    %1156 = vrot.lane.b32.xlu0 %v1008, 8
    %v1157 = vpop.permute.xlu0 %1156
    %1158 = vrot.lane.b32.xlu0 %v1009, 8
    %v1159 = vpop.permute.xlu0 %1158
    %1160 = vrot.lane.b32.xlu0 %v1010, 8
    %v1161 = vpop.permute.xlu0 %1160
    %1162 = vrot.lane.b32.xlu0 %v1011, 8
    %v1163 = vpop.permute.xlu0 %1162
    %1164 = vrot.lane.b32.xlu0 %v1012, 8
    %v1165 = vpop.permute.xlu0 %1164
    %1166 = vrot.lane.b32.xlu0 %v1013, 8
    %v1167 = vpop.permute.xlu0 %1166
    %1168 = vrot.lane.b32.xlu0 %v1014, 8
    %v1169 = vpop.permute.xlu0 %1168
    %1170 = vrot.lane.b32.xlu0 %v1015, 8
    %v1171 = vpop.permute.xlu0 %1170
    %1172 = vrot.lane.b32.xlu0 %v1016, 8
    %v1173 = vpop.permute.xlu0 %1172
    %1174 = vrot.lane.b32.xlu0 %v1017, 8
    %v1175 = vpop.permute.xlu0 %1174
    %1176 = vrot.lane.b32.xlu0 %v1018, 8
    %v1177 = vpop.permute.xlu0 %1176
    %1178 = vrot.lane.b32.xlu0 %v1019, 8
    %v1179 = vpop.permute.xlu0 %1178
    %1180 = vrot.lane.b32.xlu0 %v1020, 8
    %v1181 = vpop.permute.xlu0 %1180
    %1182 = vrot.lane.b32.xlu0 %v1021, 8
    %v1183 = vpop.permute.xlu0 %1182
    %1184 = vrot.lane.b32.xlu0 %v1022, 8
    %v1185 = vpop.permute.xlu0 %1184
    %1186 = vrot.lane.b32.xlu0 %v1023, 8
    %v1187 = vpop.permute.xlu0 %1186
    %1188 = vrot.lane.b32.xlu0 %v1024, 8
    %v1189 = vpop.permute.xlu0 %1188
    %1190 = vrot.lane.b32.xlu0 %v1025, 8
    %v1191 = vpop.permute.xlu0 %1190
    %1192 = vrot.lane.b32.xlu0 %v1026, 8
    %v1193 = vpop.permute.xlu0 %1192
    %1194 = vrot.lane.b32.xlu0 %v1027, 8
    %v1195 = vpop.permute.xlu0 %1194
    %1196 = vrot.lane.b32.xlu0 %v1028, 8
    %v1197 = vpop.permute.xlu0 %1196
    %1198 = vrot.lane.b32.xlu0 %v1029, 8
    %v1199 = vpop.permute.xlu0 %1198
    %1200 = vrot.lane.b32.xlu0 %v1030, 8
    %v1201 = vpop.permute.xlu0 %1200
    %1202 = vrot.lane.b32.xlu0 %v1031, 8
    %v1203 = vpop.permute.xlu0 %1202
    %1204 = vrot.lane.b32.xlu0 %v1032, 8
    %v1205 = vpop.permute.xlu0 %1204
    %1206 = vrot.lane.b32.xlu0 %v1033, 8
    %v1207 = vpop.permute.xlu0 %1206
    %1208 = vrot.lane.b32.xlu0 %v1034, 8
    %v1209 = vpop.permute.xlu0 %1208
    %1210 = vrot.lane.b32.xlu0 %v1035, 8
    %v1211 = vpop.permute.xlu0 %1210
    %1212 = vrot.lane.b32.xlu0 %v1036, 8
    %v1213 = vpop.permute.xlu0 %1212
    %1214 = vrot.lane.b32.xlu0 %v1037, 8
    %v1215 = vpop.permute.xlu0 %1214
    %1216 = vrot.lane.b32.xlu0 %v1038, 8
    %v1217 = vpop.permute.xlu0 %1216
    %1218 = vrot.lane.b32.xlu0 %v1039, 8
    %v1219 = vpop.permute.xlu0 %1218
    %1220 = vrot.lane.b32.xlu0 %v1040, 8
    %v1221 = vpop.permute.xlu0 %1220
    %1222 = vrot.lane.b32.xlu0 %v1041, 8
    %v1223 = vpop.permute.xlu0 %1222
    %1224 = vrot.lane.b32.xlu0 %v1042, 8
    %v1225 = vpop.permute.xlu0 %1224
    %1226 = vrot.lane.b32.xlu0 %v1043, 8
    %v1227 = vpop.permute.xlu0 %1226
    %1228 = vrot.lane.b32.xlu0 %v1044, 8
    %v1229 = vpop.permute.xlu0 %1228
    %1230 = vrot.lane.b32.xlu0 %v1045, 8
    %v1231 = vpop.permute.xlu0 %1230
    %1232 = vrot.lane.b32.xlu0 %v1046, 8
    %v1233 = vpop.permute.xlu0 %1232
    %1234 = vrot.lane.b32.xlu0 %v1047, 8
    %v1235 = vpop.permute.xlu0 %1234
    %1236 = vrot.lane.b32.xlu0 %v1048, 8
    %v1237 = vpop.permute.xlu0 %1236
    %1238 = vrot.lane.b32.xlu0 %v1049, 8
    %v1239 = vpop.permute.xlu0 %1238
    %1240 = vrot.lane.b32.xlu0 %v1050, 8
    %v1241 = vpop.permute.xlu0 %1240
    %1242 = vrot.lane.b32.xlu0 %v1051, 8
    %v1243 = vpop.permute.xlu0 %1242
    %vm1308 = vcmask 93248
    %1309 = vst.msk [vmem:[#allocation4] sm:$0xf] %vm1308, %v1117
    %1310 = vst.msk [vmem:[#allocation4 + $0x4] sm:$0xf] %vm1308, %v1119
    %1311 = vst.msk [vmem:[#allocation4 + $0x8] sm:$0xf] %vm1308, %v1121
    %1312 = vst.msk [vmem:[#allocation4 + $0xc] sm:$0xf] %vm1308, %v1123
    %1313 = vst.msk [vmem:[#allocation4 + $0x10] sm:$0xf] %vm1308, %v1125
    %1314 = vst.msk [vmem:[#allocation4 + $0x14] sm:$0xf] %vm1308, %v1127
    %1315 = vst.msk [vmem:[#allocation4 + $0x18] sm:$0xf] %vm1308, %v1129
    %1316 = vst.msk [vmem:[#allocation4 + $0x1c] sm:$0xf] %vm1308, %v1131
    %1317 = vst.msk [vmem:[#allocation4 + $0x20] sm:$0xf] %vm1308, %v1133
    %1318 = vst.msk [vmem:[#allocation4 + $0x24] sm:$0xf] %vm1308, %v1135
    %1319 = vst.msk [vmem:[#allocation4 + $0x28] sm:$0xf] %vm1308, %v1137
    %1320 = vst.msk [vmem:[#allocation4 + $0x2c] sm:$0xf] %vm1308, %v1139
    %1321 = vst.msk [vmem:[#allocation4 + $0x30] sm:$0xf] %vm1308, %v1141
    %1322 = vst.msk [vmem:[#allocation4 + $0x34] sm:$0xf] %vm1308, %v1143
    %1323 = vst.msk [vmem:[#allocation4 + $0x38] sm:$0xf] %vm1308, %v1145
    %1324 = vst.msk [vmem:[#allocation4 + $0x3c] sm:$0xf] %vm1308, %v1147
    %1325 = vst.msk [vmem:[#allocation4 + $0x40] sm:$0xf] %vm1308, %v1149
    %1326 = vst.msk [vmem:[#allocation4 + $0x44] sm:$0xf] %vm1308, %v1151
    %1327 = vst.msk [vmem:[#allocation4 + $0x48] sm:$0xf] %vm1308, %v1153
    %1328 = vst.msk [vmem:[#allocation4 + $0x4c] sm:$0xf] %vm1308, %v1155
    %1329 = vst.msk [vmem:[#allocation4 + $0x50] sm:$0xf] %vm1308, %v1157
    %1330 = vst.msk [vmem:[#allocation4 + $0x54] sm:$0xf] %vm1308, %v1159
    %1331 = vst.msk [vmem:[#allocation4 + $0x58] sm:$0xf] %vm1308, %v1161
    %1332 = vst.msk [vmem:[#allocation4 + $0x5c] sm:$0xf] %vm1308, %v1163
    %1333 = vst.msk [vmem:[#allocation4 + $0x60] sm:$0xf] %vm1308, %v1165
    %1334 = vst.msk [vmem:[#allocation4 + $0x64] sm:$0xf] %vm1308, %v1167
    %1335 = vst.msk [vmem:[#allocation4 + $0x68] sm:$0xf] %vm1308, %v1169
    %1336 = vst.msk [vmem:[#allocation4 + $0x6c] sm:$0xf] %vm1308, %v1171
    %1337 = vst.msk [vmem:[#allocation4 + $0x70] sm:$0xf] %vm1308, %v1173
    %1338 = vst.msk [vmem:[#allocation4 + $0x74] sm:$0xf] %vm1308, %v1175
    %1339 = vst.msk [vmem:[#allocation4 + $0x78] sm:$0xf] %vm1308, %v1177
    %1340 = vst.msk [vmem:[#allocation4 + $0x7c] sm:$0xf] %vm1308, %v1179
    %1341 = vst.msk [vmem:[#allocation4 + $0x80] sm:$0xf] %vm1308, %v1181
    %1342 = vst.msk [vmem:[#allocation4 + $0x84] sm:$0xf] %vm1308, %v1183
    %1343 = vst.msk [vmem:[#allocation4 + $0x88] sm:$0xf] %vm1308, %v1185
    %1344 = vst.msk [vmem:[#allocation4 + $0x8c] sm:$0xf] %vm1308, %v1187
    %1345 = vst.msk [vmem:[#allocation4 + $0x90] sm:$0xf] %vm1308, %v1189
    %1346 = vst.msk [vmem:[#allocation4 + $0x94] sm:$0xf] %vm1308, %v1191
    %1347 = vst.msk [vmem:[#allocation4 + $0x98] sm:$0xf] %vm1308, %v1193
    %1348 = vst.msk [vmem:[#allocation4 + $0x9c] sm:$0xf] %vm1308, %v1195
    %1349 = vst.msk [vmem:[#allocation4 + $0xa0] sm:$0xf] %vm1308, %v1197
    %1350 = vst.msk [vmem:[#allocation4 + $0xa4] sm:$0xf] %vm1308, %v1199
    %1351 = vst.msk [vmem:[#allocation4 + $0xa8] sm:$0xf] %vm1308, %v1201
    %1352 = vst.msk [vmem:[#allocation4 + $0xac] sm:$0xf] %vm1308, %v1203
    %1353 = vst.msk [vmem:[#allocation4 + $0xb0] sm:$0xf] %vm1308, %v1205
    %1354 = vst.msk [vmem:[#allocation4 + $0xb4] sm:$0xf] %vm1308, %v1207
    %1355 = vst.msk [vmem:[#allocation4 + $0xb8] sm:$0xf] %vm1308, %v1209
    %1356 = vst.msk [vmem:[#allocation4 + $0xbc] sm:$0xf] %vm1308, %v1211
    %1357 = vst.msk [vmem:[#allocation4 + $0xc0] sm:$0xf] %vm1308, %v1213
    %1358 = vst.msk [vmem:[#allocation4 + $0xc4] sm:$0xf] %vm1308, %v1215
    %1359 = vst.msk [vmem:[#allocation4 + $0xc8] sm:$0xf] %vm1308, %v1217
    %1360 = vst.msk [vmem:[#allocation4 + $0xcc] sm:$0xf] %vm1308, %v1219
    %1361 = vst.msk [vmem:[#allocation4 + $0xd0] sm:$0xf] %vm1308, %v1221
    %1362 = vst.msk [vmem:[#allocation4 + $0xd4] sm:$0xf] %vm1308, %v1223
    %1363 = vst.msk [vmem:[#allocation4 + $0xd8] sm:$0xf] %vm1308, %v1225
    %1364 = vst.msk [vmem:[#allocation4 + $0xdc] sm:$0xf] %vm1308, %v1227
    %1365 = vst.msk [vmem:[#allocation4 + $0xe0] sm:$0xf] %vm1308, %v1229
    %1366 = vst.msk [vmem:[#allocation4 + $0xe4] sm:$0xf] %vm1308, %v1231
    %1367 = vst.msk [vmem:[#allocation4 + $0xe8] sm:$0xf] %vm1308, %v1233
    %1368 = vst.msk [vmem:[#allocation4 + $0xec] sm:$0xf] %vm1308, %v1235
    %1369 = vst.msk [vmem:[#allocation4 + $0xf0] sm:$0xf] %vm1308, %v1237
    %1370 = vst.msk [vmem:[#allocation4 + $0xf4] sm:$0xf] %vm1308, %v1239
    %1371 = vst.msk [vmem:[#allocation4 + $0xf8] sm:$0xf] %vm1308, %v1241
    %1372 = vst.msk [vmem:[#allocation4 + $0xfc] sm:$0xf] %vm1308, %v1243
    %v1373 = vld [vmem:[%s217] sm:$0xff]
    %v1374 = vld [vmem:[%s217 + $0x8] sm:$0xff]
    %v1375 = vld [vmem:[%s217 + $0x18] sm:$0xff]
    %v1376 = vld [vmem:[%s217 + $0x20] sm:$0xff]
    %v1377 = vld [vmem:[%s217 + $0x30] sm:$0xff]
    %v1378 = vld [vmem:[%s217 + $0x38] sm:$0xff]
    %v1379 = vld [vmem:[%s217 + $0x48] sm:$0xff]
    %v1380 = vld [vmem:[%s217 + $0x50] sm:$0xff]
    %v1381 = vld [vmem:[%s217 + $0x60] sm:$0xff]
    %v1382 = vld [vmem:[%s217 + $0x68] sm:$0xff]
    %v1383 = vld [vmem:[%s217 + $0x78] sm:$0xff]
    %v1384 = vld [vmem:[%s217 + $0x80] sm:$0xff]
    %v1385 = vld [vmem:[%s217 + $0x90] sm:$0xff]
    %v1386 = vld [vmem:[%s217 + $0x98] sm:$0xff]
    %v1387 = vld [vmem:[%s217 + $0xa8] sm:$0xff]
    %v1388 = vld [vmem:[%s217 + $0xb0] sm:$0xff]
    %v1389 = vld [vmem:[%s217 + $0xc0] sm:$0xff]
    %v1390 = vld [vmem:[%s217 + $0xc8] sm:$0xff]
    %v1391 = vld [vmem:[%s217 + $0xd8] sm:$0xff]
    %v1392 = vld [vmem:[%s217 + $0xe0] sm:$0xff]
    %v1393 = vld [vmem:[%s217 + $0xf0] sm:$0xff]
    %v1394 = vld [vmem:[%s217 + $0xf8] sm:$0xff]
    %v1395 = vld [vmem:[%s217 + $0x108] sm:$0xff]
    %v1396 = vld [vmem:[%s217 + $0x110] sm:$0xff]
    %v1397 = vld [vmem:[%s217 + $0x120] sm:$0xff]
    %v1398 = vld [vmem:[%s217 + $0x128] sm:$0xff]
    %v1399 = vld [vmem:[%s217 + $0x138] sm:$0xff]
    %v1400 = vld [vmem:[%s217 + $0x140] sm:$0xff]
    %v1401 = vld [vmem:[%s217 + $0x150] sm:$0xff]
    %v1402 = vld [vmem:[%s217 + $0x158] sm:$0xff]
    %v1403 = vld [vmem:[%s217 + $0x168] sm:$0xff]
    %v1404 = vld [vmem:[%s217 + $0x170] sm:$0xff]
    %v1405 = vld [vmem:[%s217 + $0x1b0] sm:$0xff]
    %v1406 = vld [vmem:[%s217 + $0x1b8] sm:$0xff]
    %v1407 = vld [vmem:[%s217 + $0x1c8] sm:$0xff]
    %v1408 = vld [vmem:[%s217 + $0x1d0] sm:$0xff]
    %v1409 = vld [vmem:[%s217 + $0x1e0] sm:$0xff]
    %v1410 = vld [vmem:[%s217 + $0x1e8] sm:$0xff]
    %v1411 = vld [vmem:[%s217 + $0x1f8] sm:$0xff]
    %v1412 = vld [vmem:[%s217 + $0x200] sm:$0xff]
    %v1413 = vld [vmem:[%s217 + $0x210] sm:$0xff]
    %v1414 = vld [vmem:[%s217 + $0x218] sm:$0xff]
    %v1415 = vld [vmem:[%s217 + $0x228] sm:$0xff]
    %v1416 = vld [vmem:[%s217 + $0x230] sm:$0xff]
    %v1417 = vld [vmem:[%s217 + $0x240] sm:$0xff]
    %v1418 = vld [vmem:[%s217 + $0x248] sm:$0xff]
    %v1419 = vld [vmem:[%s217 + $0x258] sm:$0xff]
    %v1420 = vld [vmem:[%s217 + $0x260] sm:$0xff]
    %v1421 = vld [vmem:[%s217 + $0x270] sm:$0xff]
    %v1422 = vld [vmem:[%s217 + $0x278] sm:$0xff]
    %v1423 = vld [vmem:[%s217 + $0x288] sm:$0xff]
    %v1424 = vld [vmem:[%s217 + $0x290] sm:$0xff]
    %v1425 = vld [vmem:[%s217 + $0x2a0] sm:$0xff]
    %v1426 = vld [vmem:[%s217 + $0x2a8] sm:$0xff]
    %v1427 = vld [vmem:[%s217 + $0x2b8] sm:$0xff]
    %v1428 = vld [vmem:[%s217 + $0x2c0] sm:$0xff]
    %v1429 = vld [vmem:[%s217 + $0x2d0] sm:$0xff]
    %v1430 = vld [vmem:[%s217 + $0x2d8] sm:$0xff]
    %v1431 = vld [vmem:[%s217 + $0x2e8] sm:$0xff]
    %v1432 = vld [vmem:[%s217 + $0x2f0] sm:$0xff]
    %v1433 = vld [vmem:[%s217 + $0x300] sm:$0xff]
    %v1434 = vld [vmem:[%s217 + $0x308] sm:$0xff]
    %v1435 = vld [vmem:[%s217 + $0x318] sm:$0xff]
    %v1436 = vld [vmem:[%s217 + $0x320] sm:$0xff]
    %v1437 = vpack.c.bf16 %v1373, %v1373
    %v1438 = vpack.c.bf16 %v1374, %v1374
    %v1439 = vpack.c.bf16 %v1375, %v1375
    %v1440 = vpack.c.bf16 %v1376, %v1376
    %v1441 = vpack.c.bf16 %v1377, %v1377
    %v1442 = vpack.c.bf16 %v1378, %v1378
    %v1443 = vpack.c.bf16 %v1379, %v1379
    %v1444 = vpack.c.bf16 %v1380, %v1380
    %v1445 = vpack.c.bf16 %v1381, %v1381
    %v1446 = vpack.c.bf16 %v1382, %v1382
    %v1447 = vpack.c.bf16 %v1383, %v1383
    %v1448 = vpack.c.bf16 %v1384, %v1384
    %v1449 = vpack.c.bf16 %v1385, %v1385
    %v1450 = vpack.c.bf16 %v1386, %v1386
    %v1451 = vpack.c.bf16 %v1387, %v1387
    %v1452 = vpack.c.bf16 %v1388, %v1388
    %v1453 = vpack.c.bf16 %v1389, %v1389
    %v1454 = vpack.c.bf16 %v1390, %v1390
    %v1455 = vpack.c.bf16 %v1391, %v1391
    %v1456 = vpack.c.bf16 %v1392, %v1392
    %v1457 = vpack.c.bf16 %v1393, %v1393
    %v1458 = vpack.c.bf16 %v1394, %v1394
    %v1459 = vpack.c.bf16 %v1395, %v1395
    %v1460 = vpack.c.bf16 %v1396, %v1396
    %v1461 = vpack.c.bf16 %v1397, %v1397
    %v1462 = vpack.c.bf16 %v1398, %v1398
    %v1463 = vpack.c.bf16 %v1399, %v1399
    %v1464 = vpack.c.bf16 %v1400, %v1400
    %v1465 = vpack.c.bf16 %v1401, %v1401
    %v1466 = vpack.c.bf16 %v1402, %v1402
    %v1467 = vpack.c.bf16 %v1403, %v1403
    %v1468 = vpack.c.bf16 %v1404, %v1404
    %v1469 = vpack.c.bf16 %v1405, %v1405
    %v1470 = vpack.c.bf16 %v1406, %v1406
    %v1471 = vpack.c.bf16 %v1407, %v1407
    %v1472 = vpack.c.bf16 %v1408, %v1408
    %v1473 = vpack.c.bf16 %v1409, %v1409
    %v1474 = vpack.c.bf16 %v1410, %v1410
    %v1475 = vpack.c.bf16 %v1411, %v1411
    %v1476 = vpack.c.bf16 %v1412, %v1412
    %v1477 = vpack.c.bf16 %v1413, %v1413
    %v1478 = vpack.c.bf16 %v1414, %v1414
    %v1479 = vpack.c.bf16 %v1415, %v1415
    %v1480 = vpack.c.bf16 %v1416, %v1416
    %v1481 = vpack.c.bf16 %v1417, %v1417
    %v1482 = vpack.c.bf16 %v1418, %v1418
    %v1483 = vpack.c.bf16 %v1419, %v1419
    %v1484 = vpack.c.bf16 %v1420, %v1420
    %v1485 = vpack.c.bf16 %v1421, %v1421
    %v1486 = vpack.c.bf16 %v1422, %v1422
    %v1487 = vpack.c.bf16 %v1423, %v1423
    %v1488 = vpack.c.bf16 %v1424, %v1424
    %v1489 = vpack.c.bf16 %v1425, %v1425
    %v1490 = vpack.c.bf16 %v1426, %v1426
    %v1491 = vpack.c.bf16 %v1427, %v1427
    %v1492 = vpack.c.bf16 %v1428, %v1428
    %v1493 = vpack.c.bf16 %v1429, %v1429
    %v1494 = vpack.c.bf16 %v1430, %v1430
    %v1495 = vpack.c.bf16 %v1431, %v1431
    %v1496 = vpack.c.bf16 %v1432, %v1432
    %v1497 = vpack.c.bf16 %v1433, %v1433
    %v1498 = vpack.c.bf16 %v1434, %v1434
    %v1499 = vpack.c.bf16 %v1435, %v1435
    %v1500 = vpack.c.bf16 %v1436, %v1436
    %1565 = vrot.lane.b32.xlu0 %v1437, 12
    %v1566 = vpop.permute.xlu0 %1565
    %1567 = vrot.lane.b32.xlu0 %v1438, 12
    %v1568 = vpop.permute.xlu0 %1567
    %1569 = vrot.lane.b32.xlu0 %v1439, 12
    %v1570 = vpop.permute.xlu0 %1569
    %1571 = vrot.lane.b32.xlu0 %v1440, 12
    %v1572 = vpop.permute.xlu0 %1571
    %1573 = vrot.lane.b32.xlu0 %v1441, 12
    %v1574 = vpop.permute.xlu0 %1573
    %1575 = vrot.lane.b32.xlu0 %v1442, 12
    %v1576 = vpop.permute.xlu0 %1575
    %1577 = vrot.lane.b32.xlu0 %v1443, 12
    %v1578 = vpop.permute.xlu0 %1577
    %1579 = vrot.lane.b32.xlu0 %v1444, 12
    %v1580 = vpop.permute.xlu0 %1579
    %1581 = vrot.lane.b32.xlu0 %v1445, 12
    %v1582 = vpop.permute.xlu0 %1581
    %1583 = vrot.lane.b32.xlu0 %v1446, 12
    %v1584 = vpop.permute.xlu0 %1583
    %1585 = vrot.lane.b32.xlu0 %v1447, 12
    %v1586 = vpop.permute.xlu0 %1585
    %1587 = vrot.lane.b32.xlu0 %v1448, 12
    %v1588 = vpop.permute.xlu0 %1587
    %1589 = vrot.lane.b32.xlu0 %v1449, 12
    %v1590 = vpop.permute.xlu0 %1589
    %1591 = vrot.lane.b32.xlu0 %v1450, 12
    %v1592 = vpop.permute.xlu0 %1591
    %1593 = vrot.lane.b32.xlu0 %v1451, 12
    %v1594 = vpop.permute.xlu0 %1593
    %1595 = vrot.lane.b32.xlu0 %v1452, 12
    %v1596 = vpop.permute.xlu0 %1595
    %1597 = vrot.lane.b32.xlu0 %v1453, 12
    %v1598 = vpop.permute.xlu0 %1597
    %1599 = vrot.lane.b32.xlu0 %v1454, 12
    %v1600 = vpop.permute.xlu0 %1599
    %1601 = vrot.lane.b32.xlu0 %v1455, 12
    %v1602 = vpop.permute.xlu0 %1601
    %1603 = vrot.lane.b32.xlu0 %v1456, 12
    %v1604 = vpop.permute.xlu0 %1603
    %1605 = vrot.lane.b32.xlu0 %v1457, 12
    %v1606 = vpop.permute.xlu0 %1605
    %1607 = vrot.lane.b32.xlu0 %v1458, 12
    %v1608 = vpop.permute.xlu0 %1607
    %1609 = vrot.lane.b32.xlu0 %v1459, 12
    %v1610 = vpop.permute.xlu0 %1609
    %1611 = vrot.lane.b32.xlu0 %v1460, 12
    %v1612 = vpop.permute.xlu0 %1611
    %1613 = vrot.lane.b32.xlu0 %v1461, 12
    %v1614 = vpop.permute.xlu0 %1613
    %1615 = vrot.lane.b32.xlu0 %v1462, 12
    %v1616 = vpop.permute.xlu0 %1615
    %1617 = vrot.lane.b32.xlu0 %v1463, 12
    %v1618 = vpop.permute.xlu0 %1617
    %1619 = vrot.lane.b32.xlu0 %v1464, 12
    %v1620 = vpop.permute.xlu0 %1619
    %1621 = vrot.lane.b32.xlu0 %v1465, 12
    %v1622 = vpop.permute.xlu0 %1621
    %1623 = vrot.lane.b32.xlu0 %v1466, 12
    %v1624 = vpop.permute.xlu0 %1623
    %1625 = vrot.lane.b32.xlu0 %v1467, 12
    %v1626 = vpop.permute.xlu0 %1625
    %1627 = vrot.lane.b32.xlu0 %v1468, 12
    %v1628 = vpop.permute.xlu0 %1627
    %1629 = vrot.lane.b32.xlu0 %v1469, 12
    %v1630 = vpop.permute.xlu0 %1629
    %1631 = vrot.lane.b32.xlu0 %v1470, 12
    %v1632 = vpop.permute.xlu0 %1631
    %1633 = vrot.lane.b32.xlu0 %v1471, 12
    %v1634 = vpop.permute.xlu0 %1633
    %1635 = vrot.lane.b32.xlu0 %v1472, 12
    %v1636 = vpop.permute.xlu0 %1635
    %1637 = vrot.lane.b32.xlu0 %v1473, 12
    %v1638 = vpop.permute.xlu0 %1637
    %1639 = vrot.lane.b32.xlu0 %v1474, 12
    %v1640 = vpop.permute.xlu0 %1639
    %1641 = vrot.lane.b32.xlu0 %v1475, 12
    %v1642 = vpop.permute.xlu0 %1641
    %1643 = vrot.lane.b32.xlu0 %v1476, 12
    %v1644 = vpop.permute.xlu0 %1643
    %1645 = vrot.lane.b32.xlu0 %v1477, 12
    %v1646 = vpop.permute.xlu0 %1645
    %1647 = vrot.lane.b32.xlu0 %v1478, 12
    %v1648 = vpop.permute.xlu0 %1647
    %1649 = vrot.lane.b32.xlu0 %v1479, 12
    %v1650 = vpop.permute.xlu0 %1649
    %1651 = vrot.lane.b32.xlu0 %v1480, 12
    %v1652 = vpop.permute.xlu0 %1651
    %1653 = vrot.lane.b32.xlu0 %v1481, 12
    %v1654 = vpop.permute.xlu0 %1653
    %1655 = vrot.lane.b32.xlu0 %v1482, 12
    %v1656 = vpop.permute.xlu0 %1655
    %1657 = vrot.lane.b32.xlu0 %v1483, 12
    %v1658 = vpop.permute.xlu0 %1657
    %1659 = vrot.lane.b32.xlu0 %v1484, 12
    %v1660 = vpop.permute.xlu0 %1659
    %1661 = vrot.lane.b32.xlu0 %v1485, 12
    %v1662 = vpop.permute.xlu0 %1661
    %1663 = vrot.lane.b32.xlu0 %v1486, 12
    %v1664 = vpop.permute.xlu0 %1663
    %1665 = vrot.lane.b32.xlu0 %v1487, 12
    %v1666 = vpop.permute.xlu0 %1665
    %1667 = vrot.lane.b32.xlu0 %v1488, 12
    %v1668 = vpop.permute.xlu0 %1667
    %1669 = vrot.lane.b32.xlu0 %v1489, 12
    %v1670 = vpop.permute.xlu0 %1669
    %1671 = vrot.lane.b32.xlu0 %v1490, 12
    %v1672 = vpop.permute.xlu0 %1671
    %1673 = vrot.lane.b32.xlu0 %v1491, 12
    %v1674 = vpop.permute.xlu0 %1673
    %1675 = vrot.lane.b32.xlu0 %v1492, 12
    %v1676 = vpop.permute.xlu0 %1675
    %1677 = vrot.lane.b32.xlu0 %v1493, 12
    %v1678 = vpop.permute.xlu0 %1677
    %1679 = vrot.lane.b32.xlu0 %v1494, 12
    %v1680 = vpop.permute.xlu0 %1679
    %1681 = vrot.lane.b32.xlu0 %v1495, 12
    %v1682 = vpop.permute.xlu0 %1681
    %1683 = vrot.lane.b32.xlu0 %v1496, 12
    %v1684 = vpop.permute.xlu0 %1683
    %1685 = vrot.lane.b32.xlu0 %v1497, 12
    %v1686 = vpop.permute.xlu0 %1685
    %1687 = vrot.lane.b32.xlu0 %v1498, 12
    %v1688 = vpop.permute.xlu0 %1687
    %1689 = vrot.lane.b32.xlu0 %v1499, 12
    %v1690 = vpop.permute.xlu0 %1689
    %1691 = vrot.lane.b32.xlu0 %v1500, 12
    %v1692 = vpop.permute.xlu0 %1691
    %vm1757 = vcmask 126048
    %1758 = vst.msk [vmem:[#allocation4] sm:$0xf] %vm1757, %v1566
    %1759 = vst.msk [vmem:[#allocation4 + $0x4] sm:$0xf] %vm1757, %v1568
    %1760 = vst.msk [vmem:[#allocation4 + $0x8] sm:$0xf] %vm1757, %v1570
    %1761 = vst.msk [vmem:[#allocation4 + $0xc] sm:$0xf] %vm1757, %v1572
    %1762 = vst.msk [vmem:[#allocation4 + $0x10] sm:$0xf] %vm1757, %v1574
    %1763 = vst.msk [vmem:[#allocation4 + $0x14] sm:$0xf] %vm1757, %v1576
    %1764 = vst.msk [vmem:[#allocation4 + $0x18] sm:$0xf] %vm1757, %v1578
    %1765 = vst.msk [vmem:[#allocation4 + $0x1c] sm:$0xf] %vm1757, %v1580
    %1766 = vst.msk [vmem:[#allocation4 + $0x20] sm:$0xf] %vm1757, %v1582
    %1767 = vst.msk [vmem:[#allocation4 + $0x24] sm:$0xf] %vm1757, %v1584
    %1768 = vst.msk [vmem:[#allocation4 + $0x28] sm:$0xf] %vm1757, %v1586
    %1769 = vst.msk [vmem:[#allocation4 + $0x2c] sm:$0xf] %vm1757, %v1588
    %1770 = vst.msk [vmem:[#allocation4 + $0x30] sm:$0xf] %vm1757, %v1590
    %1771 = vst.msk [vmem:[#allocation4 + $0x34] sm:$0xf] %vm1757, %v1592
    %1772 = vst.msk [vmem:[#allocation4 + $0x38] sm:$0xf] %vm1757, %v1594
    %1773 = vst.msk [vmem:[#allocation4 + $0x3c] sm:$0xf] %vm1757, %v1596
    %1774 = vst.msk [vmem:[#allocation4 + $0x40] sm:$0xf] %vm1757, %v1598
    %1775 = vst.msk [vmem:[#allocation4 + $0x44] sm:$0xf] %vm1757, %v1600
    %1776 = vst.msk [vmem:[#allocation4 + $0x48] sm:$0xf] %vm1757, %v1602
    %1777 = vst.msk [vmem:[#allocation4 + $0x4c] sm:$0xf] %vm1757, %v1604
    %1778 = vst.msk [vmem:[#allocation4 + $0x50] sm:$0xf] %vm1757, %v1606
    %1779 = vst.msk [vmem:[#allocation4 + $0x54] sm:$0xf] %vm1757, %v1608
    %1780 = vst.msk [vmem:[#allocation4 + $0x58] sm:$0xf] %vm1757, %v1610
    %1781 = vst.msk [vmem:[#allocation4 + $0x5c] sm:$0xf] %vm1757, %v1612
    %1782 = vst.msk [vmem:[#allocation4 + $0x60] sm:$0xf] %vm1757, %v1614
    %1783 = vst.msk [vmem:[#allocation4 + $0x64] sm:$0xf] %vm1757, %v1616
    %1784 = vst.msk [vmem:[#allocation4 + $0x68] sm:$0xf] %vm1757, %v1618
    %1785 = vst.msk [vmem:[#allocation4 + $0x6c] sm:$0xf] %vm1757, %v1620
    %1786 = vst.msk [vmem:[#allocation4 + $0x70] sm:$0xf] %vm1757, %v1622
    %1787 = vst.msk [vmem:[#allocation4 + $0x74] sm:$0xf] %vm1757, %v1624
    %1788 = vst.msk [vmem:[#allocation4 + $0x78] sm:$0xf] %vm1757, %v1626
    %1789 = vst.msk [vmem:[#allocation4 + $0x7c] sm:$0xf] %vm1757, %v1628
    %1790 = vst.msk [vmem:[#allocation4 + $0x80] sm:$0xf] %vm1757, %v1630
    %1791 = vst.msk [vmem:[#allocation4 + $0x84] sm:$0xf] %vm1757, %v1632
    %1792 = vst.msk [vmem:[#allocation4 + $0x88] sm:$0xf] %vm1757, %v1634
    %1793 = vst.msk [vmem:[#allocation4 + $0x8c] sm:$0xf] %vm1757, %v1636
    %1794 = vst.msk [vmem:[#allocation4 + $0x90] sm:$0xf] %vm1757, %v1638
    %1795 = vst.msk [vmem:[#allocation4 + $0x94] sm:$0xf] %vm1757, %v1640
    %1796 = vst.msk [vmem:[#allocation4 + $0x98] sm:$0xf] %vm1757, %v1642
    %1797 = vst.msk [vmem:[#allocation4 + $0x9c] sm:$0xf] %vm1757, %v1644
    %1798 = vst.msk [vmem:[#allocation4 + $0xa0] sm:$0xf] %vm1757, %v1646
    %1799 = vst.msk [vmem:[#allocation4 + $0xa4] sm:$0xf] %vm1757, %v1648
    %1800 = vst.msk [vmem:[#allocation4 + $0xa8] sm:$0xf] %vm1757, %v1650
    %1801 = vst.msk [vmem:[#allocation4 + $0xac] sm:$0xf] %vm1757, %v1652
    %1802 = vst.msk [vmem:[#allocation4 + $0xb0] sm:$0xf] %vm1757, %v1654
    %1803 = vst.msk [vmem:[#allocation4 + $0xb4] sm:$0xf] %vm1757, %v1656
    %1804 = vst.msk [vmem:[#allocation4 + $0xb8] sm:$0xf] %vm1757, %v1658
    %1805 = vst.msk [vmem:[#allocation4 + $0xbc] sm:$0xf] %vm1757, %v1660
    %1806 = vst.msk [vmem:[#allocation4 + $0xc0] sm:$0xf] %vm1757, %v1662
    %1807 = vst.msk [vmem:[#allocation4 + $0xc4] sm:$0xf] %vm1757, %v1664
    %1808 = vst.msk [vmem:[#allocation4 + $0xc8] sm:$0xf] %vm1757, %v1666
    %1809 = vst.msk [vmem:[#allocation4 + $0xcc] sm:$0xf] %vm1757, %v1668
    %1810 = vst.msk [vmem:[#allocation4 + $0xd0] sm:$0xf] %vm1757, %v1670
    %1811 = vst.msk [vmem:[#allocation4 + $0xd4] sm:$0xf] %vm1757, %v1672
    %1812 = vst.msk [vmem:[#allocation4 + $0xd8] sm:$0xf] %vm1757, %v1674
    %1813 = vst.msk [vmem:[#allocation4 + $0xdc] sm:$0xf] %vm1757, %v1676
    %1814 = vst.msk [vmem:[#allocation4 + $0xe0] sm:$0xf] %vm1757, %v1678
    %1815 = vst.msk [vmem:[#allocation4 + $0xe4] sm:$0xf] %vm1757, %v1680
    %1816 = vst.msk [vmem:[#allocation4 + $0xe8] sm:$0xf] %vm1757, %v1682
    %1817 = vst.msk [vmem:[#allocation4 + $0xec] sm:$0xf] %vm1757, %v1684
    %1818 = vst.msk [vmem:[#allocation4 + $0xf0] sm:$0xf] %vm1757, %v1686
    %1819 = vst.msk [vmem:[#allocation4 + $0xf4] sm:$0xf] %vm1757, %v1688
    %1820 = vst.msk [vmem:[#allocation4 + $0xf8] sm:$0xf] %vm1757, %v1690
    %1821 = vst.msk [vmem:[#allocation4 + $0xfc] sm:$0xf] %vm1757, %v1692
    %v1822 = vld [vmem:[%s217 + $0x1] sm:$0xff]
    %v1823 = vld [vmem:[%s217 + $0x9] sm:$0xff]
    %v1824 = vld [vmem:[%s217 + $0x19] sm:$0xff]
    %v1825 = vld [vmem:[%s217 + $0x21] sm:$0xff]
    %v1826 = vld [vmem:[%s217 + $0x31] sm:$0xff]
    %v1827 = vld [vmem:[%s217 + $0x39] sm:$0xff]
    %v1828 = vld [vmem:[%s217 + $0x49] sm:$0xff]
    %v1829 = vld [vmem:[%s217 + $0x51] sm:$0xff]
    %v1830 = vld [vmem:[%s217 + $0x61] sm:$0xff]
    %v1831 = vld [vmem:[%s217 + $0x69] sm:$0xff]
    %v1832 = vld [vmem:[%s217 + $0x79] sm:$0xff]
    %v1833 = vld [vmem:[%s217 + $0x81] sm:$0xff]
    %v1834 = vld [vmem:[%s217 + $0x91] sm:$0xff]
    %v1835 = vld [vmem:[%s217 + $0x99] sm:$0xff]
    %v1836 = vld [vmem:[%s217 + $0xa9] sm:$0xff]
    %v1837 = vld [vmem:[%s217 + $0xb1] sm:$0xff]
    %v1838 = vld [vmem:[%s217 + $0xc1] sm:$0xff]
    %v1839 = vld [vmem:[%s217 + $0xc9] sm:$0xff]
    %v1840 = vld [vmem:[%s217 + $0xd9] sm:$0xff]
    %v1841 = vld [vmem:[%s217 + $0xe1] sm:$0xff]
    %v1842 = vld [vmem:[%s217 + $0xf1] sm:$0xff]
    %v1843 = vld [vmem:[%s217 + $0xf9] sm:$0xff]
    %v1844 = vld [vmem:[%s217 + $0x109] sm:$0xff]
    %v1845 = vld [vmem:[%s217 + $0x111] sm:$0xff]
    %v1846 = vld [vmem:[%s217 + $0x121] sm:$0xff]
    %v1847 = vld [vmem:[%s217 + $0x129] sm:$0xff]
    %v1848 = vld [vmem:[%s217 + $0x139] sm:$0xff]
    %v1849 = vld [vmem:[%s217 + $0x141] sm:$0xff]
    %v1850 = vld [vmem:[%s217 + $0x151] sm:$0xff]
    %v1851 = vld [vmem:[%s217 + $0x159] sm:$0xff]
    %v1852 = vld [vmem:[%s217 + $0x169] sm:$0xff]
    %v1853 = vld [vmem:[%s217 + $0x171] sm:$0xff]
    %v1854 = vld [vmem:[%s217 + $0x1b1] sm:$0xff]
    %v1855 = vld [vmem:[%s217 + $0x1b9] sm:$0xff]
    %v1856 = vld [vmem:[%s217 + $0x1c9] sm:$0xff]
    %v1857 = vld [vmem:[%s217 + $0x1d1] sm:$0xff]
    %v1858 = vld [vmem:[%s217 + $0x1e1] sm:$0xff]
    %v1859 = vld [vmem:[%s217 + $0x1e9] sm:$0xff]
    %v1860 = vld [vmem:[%s217 + $0x1f9] sm:$0xff]
    %v1861 = vld [vmem:[%s217 + $0x201] sm:$0xff]
    %v1862 = vld [vmem:[%s217 + $0x211] sm:$0xff]
    %v1863 = vld [vmem:[%s217 + $0x219] sm:$0xff]
    %v1864 = vld [vmem:[%s217 + $0x229] sm:$0xff]
    %v1865 = vld [vmem:[%s217 + $0x231] sm:$0xff]
    %v1866 = vld [vmem:[%s217 + $0x241] sm:$0xff]
    %v1867 = vld [vmem:[%s217 + $0x249] sm:$0xff]
    %v1868 = vld [vmem:[%s217 + $0x259] sm:$0xff]
    %v1869 = vld [vmem:[%s217 + $0x261] sm:$0xff]
    %v1870 = vld [vmem:[%s217 + $0x271] sm:$0xff]
    %v1871 = vld [vmem:[%s217 + $0x279] sm:$0xff]
    %v1872 = vld [vmem:[%s217 + $0x289] sm:$0xff]
    %v1873 = vld [vmem:[%s217 + $0x291] sm:$0xff]
    %v1874 = vld [vmem:[%s217 + $0x2a1] sm:$0xff]
    %v1875 = vld [vmem:[%s217 + $0x2a9] sm:$0xff]
    %v1876 = vld [vmem:[%s217 + $0x2b9] sm:$0xff]
    %v1877 = vld [vmem:[%s217 + $0x2c1] sm:$0xff]
    %v1878 = vld [vmem:[%s217 + $0x2d1] sm:$0xff]
    %v1879 = vld [vmem:[%s217 + $0x2d9] sm:$0xff]
    %v1880 = vld [vmem:[%s217 + $0x2e9] sm:$0xff]
    %v1881 = vld [vmem:[%s217 + $0x2f1] sm:$0xff]
    %v1882 = vld [vmem:[%s217 + $0x301] sm:$0xff]
    %v1883 = vld [vmem:[%s217 + $0x309] sm:$0xff]
    %v1884 = vld [vmem:[%s217 + $0x319] sm:$0xff]
    %v1885 = vld [vmem:[%s217 + $0x321] sm:$0xff]
    %v1886 = vpack.c.bf16 %v1822, %v1822
    %v1887 = vpack.c.bf16 %v1823, %v1823
    %v1888 = vpack.c.bf16 %v1824, %v1824
    %v1889 = vpack.c.bf16 %v1825, %v1825
    %v1890 = vpack.c.bf16 %v1826, %v1826
    %v1891 = vpack.c.bf16 %v1827, %v1827
    %v1892 = vpack.c.bf16 %v1828, %v1828
    %v1893 = vpack.c.bf16 %v1829, %v1829
    %v1894 = vpack.c.bf16 %v1830, %v1830
    %v1895 = vpack.c.bf16 %v1831, %v1831
    %v1896 = vpack.c.bf16 %v1832, %v1832
    %v1897 = vpack.c.bf16 %v1833, %v1833
    %v1898 = vpack.c.bf16 %v1834, %v1834
    %v1899 = vpack.c.bf16 %v1835, %v1835
    %v1900 = vpack.c.bf16 %v1836, %v1836
    %v1901 = vpack.c.bf16 %v1837, %v1837
    %v1902 = vpack.c.bf16 %v1838, %v1838
    %v1903 = vpack.c.bf16 %v1839, %v1839
    %v1904 = vpack.c.bf16 %v1840, %v1840
    %v1905 = vpack.c.bf16 %v1841, %v1841
    %v1906 = vpack.c.bf16 %v1842, %v1842
    %v1907 = vpack.c.bf16 %v1843, %v1843
    %v1908 = vpack.c.bf16 %v1844, %v1844
    %v1909 = vpack.c.bf16 %v1845, %v1845
    %v1910 = vpack.c.bf16 %v1846, %v1846
    %v1911 = vpack.c.bf16 %v1847, %v1847
    %v1912 = vpack.c.bf16 %v1848, %v1848
    %v1913 = vpack.c.bf16 %v1849, %v1849
    %v1914 = vpack.c.bf16 %v1850, %v1850
    %v1915 = vpack.c.bf16 %v1851, %v1851
    %v1916 = vpack.c.bf16 %v1852, %v1852
    %v1917 = vpack.c.bf16 %v1853, %v1853
    %v1918 = vpack.c.bf16 %v1854, %v1854
    %v1919 = vpack.c.bf16 %v1855, %v1855
    %v1920 = vpack.c.bf16 %v1856, %v1856
    %v1921 = vpack.c.bf16 %v1857, %v1857
    %v1922 = vpack.c.bf16 %v1858, %v1858
    %v1923 = vpack.c.bf16 %v1859, %v1859
    %v1924 = vpack.c.bf16 %v1860, %v1860
    %v1925 = vpack.c.bf16 %v1861, %v1861
    %v1926 = vpack.c.bf16 %v1862, %v1862
    %v1927 = vpack.c.bf16 %v1863, %v1863
    %v1928 = vpack.c.bf16 %v1864, %v1864
    %v1929 = vpack.c.bf16 %v1865, %v1865
    %v1930 = vpack.c.bf16 %v1866, %v1866
    %v1931 = vpack.c.bf16 %v1867, %v1867
    %v1932 = vpack.c.bf16 %v1868, %v1868
    %v1933 = vpack.c.bf16 %v1869, %v1869
    %v1934 = vpack.c.bf16 %v1870, %v1870
    %v1935 = vpack.c.bf16 %v1871, %v1871
    %v1936 = vpack.c.bf16 %v1872, %v1872
    %v1937 = vpack.c.bf16 %v1873, %v1873
    %v1938 = vpack.c.bf16 %v1874, %v1874
    %v1939 = vpack.c.bf16 %v1875, %v1875
    %v1940 = vpack.c.bf16 %v1876, %v1876
    %v1941 = vpack.c.bf16 %v1877, %v1877
    %v1942 = vpack.c.bf16 %v1878, %v1878
    %v1943 = vpack.c.bf16 %v1879, %v1879
    %v1944 = vpack.c.bf16 %v1880, %v1880
    %v1945 = vpack.c.bf16 %v1881, %v1881
    %v1946 = vpack.c.bf16 %v1882, %v1882
    %v1947 = vpack.c.bf16 %v1883, %v1883
    %v1948 = vpack.c.bf16 %v1884, %v1884
    %v1949 = vpack.c.bf16 %v1885, %v1885
    %2014 = vrot.lane.b32.xlu0 %v1886, 16
    %v2015 = vpop.permute.xlu0 %2014
    %2016 = vrot.lane.b32.xlu0 %v1887, 16
    %v2017 = vpop.permute.xlu0 %2016
    %2018 = vrot.lane.b32.xlu0 %v1888, 16
    %v2019 = vpop.permute.xlu0 %2018
    %2020 = vrot.lane.b32.xlu0 %v1889, 16
    %v2021 = vpop.permute.xlu0 %2020
    %2022 = vrot.lane.b32.xlu0 %v1890, 16
    %v2023 = vpop.permute.xlu0 %2022
    %2024 = vrot.lane.b32.xlu0 %v1891, 16
    %v2025 = vpop.permute.xlu0 %2024
    %2026 = vrot.lane.b32.xlu0 %v1892, 16
    %v2027 = vpop.permute.xlu0 %2026
    %2028 = vrot.lane.b32.xlu0 %v1893, 16
    %v2029 = vpop.permute.xlu0 %2028
    %2030 = vrot.lane.b32.xlu0 %v1894, 16
    %v2031 = vpop.permute.xlu0 %2030
    %2032 = vrot.lane.b32.xlu0 %v1895, 16
    %v2033 = vpop.permute.xlu0 %2032
    %2034 = vrot.lane.b32.xlu0 %v1896, 16
    %v2035 = vpop.permute.xlu0 %2034
    %2036 = vrot.lane.b32.xlu0 %v1897, 16
    %v2037 = vpop.permute.xlu0 %2036
    %2038 = vrot.lane.b32.xlu0 %v1898, 16
    %v2039 = vpop.permute.xlu0 %2038
    %2040 = vrot.lane.b32.xlu0 %v1899, 16
    %v2041 = vpop.permute.xlu0 %2040
    %2042 = vrot.lane.b32.xlu0 %v1900, 16
    %v2043 = vpop.permute.xlu0 %2042
    %2044 = vrot.lane.b32.xlu0 %v1901, 16
    %v2045 = vpop.permute.xlu0 %2044
    %2046 = vrot.lane.b32.xlu0 %v1902, 16
    %v2047 = vpop.permute.xlu0 %2046
    %2048 = vrot.lane.b32.xlu0 %v1903, 16
    %v2049 = vpop.permute.xlu0 %2048
    %2050 = vrot.lane.b32.xlu0 %v1904, 16
    %v2051 = vpop.permute.xlu0 %2050
    %2052 = vrot.lane.b32.xlu0 %v1905, 16
    %v2053 = vpop.permute.xlu0 %2052
    %2054 = vrot.lane.b32.xlu0 %v1906, 16
    %v2055 = vpop.permute.xlu0 %2054
    %2056 = vrot.lane.b32.xlu0 %v1907, 16
    %v2057 = vpop.permute.xlu0 %2056
    %2058 = vrot.lane.b32.xlu0 %v1908, 16
    %v2059 = vpop.permute.xlu0 %2058
    %2060 = vrot.lane.b32.xlu0 %v1909, 16
    %v2061 = vpop.permute.xlu0 %2060
    %2062 = vrot.lane.b32.xlu0 %v1910, 16
    %v2063 = vpop.permute.xlu0 %2062
    %2064 = vrot.lane.b32.xlu0 %v1911, 16
    %v2065 = vpop.permute.xlu0 %2064
    %2066 = vrot.lane.b32.xlu0 %v1912, 16
    %v2067 = vpop.permute.xlu0 %2066
    %2068 = vrot.lane.b32.xlu0 %v1913, 16
    %v2069 = vpop.permute.xlu0 %2068
    %2070 = vrot.lane.b32.xlu0 %v1914, 16
    %v2071 = vpop.permute.xlu0 %2070
    %2072 = vrot.lane.b32.xlu0 %v1915, 16
    %v2073 = vpop.permute.xlu0 %2072
    %2074 = vrot.lane.b32.xlu0 %v1916, 16
    %v2075 = vpop.permute.xlu0 %2074
    %2076 = vrot.lane.b32.xlu0 %v1917, 16
    %v2077 = vpop.permute.xlu0 %2076
    %2078 = vrot.lane.b32.xlu0 %v1918, 16
    %v2079 = vpop.permute.xlu0 %2078
    %2080 = vrot.lane.b32.xlu0 %v1919, 16
    %v2081 = vpop.permute.xlu0 %2080
    %2082 = vrot.lane.b32.xlu0 %v1920, 16
    %v2083 = vpop.permute.xlu0 %2082
    %2084 = vrot.lane.b32.xlu0 %v1921, 16
    %v2085 = vpop.permute.xlu0 %2084
    %2086 = vrot.lane.b32.xlu0 %v1922, 16
    %v2087 = vpop.permute.xlu0 %2086
    %2088 = vrot.lane.b32.xlu0 %v1923, 16
    %v2089 = vpop.permute.xlu0 %2088
    %2090 = vrot.lane.b32.xlu0 %v1924, 16
    %v2091 = vpop.permute.xlu0 %2090
    %2092 = vrot.lane.b32.xlu0 %v1925, 16
    %v2093 = vpop.permute.xlu0 %2092
    %2094 = vrot.lane.b32.xlu0 %v1926, 16
    %v2095 = vpop.permute.xlu0 %2094
    %2096 = vrot.lane.b32.xlu0 %v1927, 16
    %v2097 = vpop.permute.xlu0 %2096
    %2098 = vrot.lane.b32.xlu0 %v1928, 16
    %v2099 = vpop.permute.xlu0 %2098
    %2100 = vrot.lane.b32.xlu0 %v1929, 16
    %v2101 = vpop.permute.xlu0 %2100
    %2102 = vrot.lane.b32.xlu0 %v1930, 16
    %v2103 = vpop.permute.xlu0 %2102
    %2104 = vrot.lane.b32.xlu0 %v1931, 16
    %v2105 = vpop.permute.xlu0 %2104
    %2106 = vrot.lane.b32.xlu0 %v1932, 16
    %v2107 = vpop.permute.xlu0 %2106
    %2108 = vrot.lane.b32.xlu0 %v1933, 16
    %v2109 = vpop.permute.xlu0 %2108
    %2110 = vrot.lane.b32.xlu0 %v1934, 16
    %v2111 = vpop.permute.xlu0 %2110
    %2112 = vrot.lane.b32.xlu0 %v1935, 16
    %v2113 = vpop.permute.xlu0 %2112
    %2114 = vrot.lane.b32.xlu0 %v1936, 16
    %v2115 = vpop.permute.xlu0 %2114
    %2116 = vrot.lane.b32.xlu0 %v1937, 16
    %v2117 = vpop.permute.xlu0 %2116
    %2118 = vrot.lane.b32.xlu0 %v1938, 16
    %v2119 = vpop.permute.xlu0 %2118
    %2120 = vrot.lane.b32.xlu0 %v1939, 16
    %v2121 = vpop.permute.xlu0 %2120
    %2122 = vrot.lane.b32.xlu0 %v1940, 16
    %v2123 = vpop.permute.xlu0 %2122
    %2124 = vrot.lane.b32.xlu0 %v1941, 16
    %v2125 = vpop.permute.xlu0 %2124
    %2126 = vrot.lane.b32.xlu0 %v1942, 16
    %v2127 = vpop.permute.xlu0 %2126
    %2128 = vrot.lane.b32.xlu0 %v1943, 16
    %v2129 = vpop.permute.xlu0 %2128
    %2130 = vrot.lane.b32.xlu0 %v1944, 16
    %v2131 = vpop.permute.xlu0 %2130
    %2132 = vrot.lane.b32.xlu0 %v1945, 16
    %v2133 = vpop.permute.xlu0 %2132
    %2134 = vrot.lane.b32.xlu0 %v1946, 16
    %v2135 = vpop.permute.xlu0 %2134
    %2136 = vrot.lane.b32.xlu0 %v1947, 16
    %v2137 = vpop.permute.xlu0 %2136
    %2138 = vrot.lane.b32.xlu0 %v1948, 16
    %v2139 = vpop.permute.xlu0 %2138
    %2140 = vrot.lane.b32.xlu0 %v1949, 16
    %v2141 = vpop.permute.xlu0 %2140
    %vm2206 = vcmask 158848
    %2207 = vst.msk [vmem:[#allocation4] sm:$0xf] %vm2206, %v2015
    %2208 = vst.msk [vmem:[#allocation4 + $0x4] sm:$0xf] %vm2206, %v2017
    %2209 = vst.msk [vmem:[#allocation4 + $0x8] sm:$0xf] %vm2206, %v2019
    %2210 = vst.msk [vmem:[#allocation4 + $0xc] sm:$0xf] %vm2206, %v2021
    %2211 = vst.msk [vmem:[#allocation4 + $0x10] sm:$0xf] %vm2206, %v2023
    %2212 = vst.msk [vmem:[#allocation4 + $0x14] sm:$0xf] %vm2206, %v2025
    %2213 = vst.msk [vmem:[#allocation4 + $0x18] sm:$0xf] %vm2206, %v2027
    %2214 = vst.msk [vmem:[#allocation4 + $0x1c] sm:$0xf] %vm2206, %v2029
    %2215 = vst.msk [vmem:[#allocation4 + $0x20] sm:$0xf] %vm2206, %v2031
    %2216 = vst.msk [vmem:[#allocation4 + $0x24] sm:$0xf] %vm2206, %v2033
    %2217 = vst.msk [vmem:[#allocation4 + $0x28] sm:$0xf] %vm2206, %v2035
    %2218 = vst.msk [vmem:[#allocation4 + $0x2c] sm:$0xf] %vm2206, %v2037
    %2219 = vst.msk [vmem:[#allocation4 + $0x30] sm:$0xf] %vm2206, %v2039
    %2220 = vst.msk [vmem:[#allocation4 + $0x34] sm:$0xf] %vm2206, %v2041
    %2221 = vst.msk [vmem:[#allocation4 + $0x38] sm:$0xf] %vm2206, %v2043
    %2222 = vst.msk [vmem:[#allocation4 + $0x3c] sm:$0xf] %vm2206, %v2045
    %2223 = vst.msk [vmem:[#allocation4 + $0x40] sm:$0xf] %vm2206, %v2047
    %2224 = vst.msk [vmem:[#allocation4 + $0x44] sm:$0xf] %vm2206, %v2049
    %2225 = vst.msk [vmem:[#allocation4 + $0x48] sm:$0xf] %vm2206, %v2051
    %2226 = vst.msk [vmem:[#allocation4 + $0x4c] sm:$0xf] %vm2206, %v2053
    %2227 = vst.msk [vmem:[#allocation4 + $0x50] sm:$0xf] %vm2206, %v2055
    %2228 = vst.msk [vmem:[#allocation4 + $0x54] sm:$0xf] %vm2206, %v2057
    %2229 = vst.msk [vmem:[#allocation4 + $0x58] sm:$0xf] %vm2206, %v2059
    %2230 = vst.msk [vmem:[#allocation4 + $0x5c] sm:$0xf] %vm2206, %v2061
    %2231 = vst.msk [vmem:[#allocation4 + $0x60] sm:$0xf] %vm2206, %v2063
    %2232 = vst.msk [vmem:[#allocation4 + $0x64] sm:$0xf] %vm2206, %v2065
    %2233 = vst.msk [vmem:[#allocation4 + $0x68] sm:$0xf] %vm2206, %v2067
    %2234 = vst.msk [vmem:[#allocation4 + $0x6c] sm:$0xf] %vm2206, %v2069
    %2235 = vst.msk [vmem:[#allocation4 + $0x70] sm:$0xf] %vm2206, %v2071
    %2236 = vst.msk [vmem:[#allocation4 + $0x74] sm:$0xf] %vm2206, %v2073
    %2237 = vst.msk [vmem:[#allocation4 + $0x78] sm:$0xf] %vm2206, %v2075
    %2238 = vst.msk [vmem:[#allocation4 + $0x7c] sm:$0xf] %vm2206, %v2077
    %2239 = vst.msk [vmem:[#allocation4 + $0x80] sm:$0xf] %vm2206, %v2079
    %2240 = vst.msk [vmem:[#allocation4 + $0x84] sm:$0xf] %vm2206, %v2081
    %2241 = vst.msk [vmem:[#allocation4 + $0x88] sm:$0xf] %vm2206, %v2083
    %2242 = vst.msk [vmem:[#allocation4 + $0x8c] sm:$0xf] %vm2206, %v2085
    %2243 = vst.msk [vmem:[#allocation4 + $0x90] sm:$0xf] %vm2206, %v2087
    %2244 = vst.msk [vmem:[#allocation4 + $0x94] sm:$0xf] %vm2206, %v2089
    %2245 = vst.msk [vmem:[#allocation4 + $0x98] sm:$0xf] %vm2206, %v2091
    %2246 = vst.msk [vmem:[#allocation4 + $0x9c] sm:$0xf] %vm2206, %v2093
    %2247 = vst.msk [vmem:[#allocation4 + $0xa0] sm:$0xf] %vm2206, %v2095
    %2248 = vst.msk [vmem:[#allocation4 + $0xa4] sm:$0xf] %vm2206, %v2097
    %2249 = vst.msk [vmem:[#allocation4 + $0xa8] sm:$0xf] %vm2206, %v2099
    %2250 = vst.msk [vmem:[#allocation4 + $0xac] sm:$0xf] %vm2206, %v2101
    %2251 = vst.msk [vmem:[#allocation4 + $0xb0] sm:$0xf] %vm2206, %v2103
    %2252 = vst.msk [vmem:[#allocation4 + $0xb4] sm:$0xf] %vm2206, %v2105
    %2253 = vst.msk [vmem:[#allocation4 + $0xb8] sm:$0xf] %vm2206, %v2107
    %2254 = vst.msk [vmem:[#allocation4 + $0xbc] sm:$0xf] %vm2206, %v2109
    %2255 = vst.msk [vmem:[#allocation4 + $0xc0] sm:$0xf] %vm2206, %v2111
    %2256 = vst.msk [vmem:[#allocation4 + $0xc4] sm:$0xf] %vm2206, %v2113
    %2257 = vst.msk [vmem:[#allocation4 + $0xc8] sm:$0xf] %vm2206, %v2115
    %2258 = vst.msk [vmem:[#allocation4 + $0xcc] sm:$0xf] %vm2206, %v2117
    %2259 = vst.msk [vmem:[#allocation4 + $0xd0] sm:$0xf] %vm2206, %v2119
    %2260 = vst.msk [vmem:[#allocation4 + $0xd4] sm:$0xf] %vm2206, %v2121
    %2261 = vst.msk [vmem:[#allocation4 + $0xd8] sm:$0xf] %vm2206, %v2123
    %2262 = vst.msk [vmem:[#allocation4 + $0xdc] sm:$0xf] %vm2206, %v2125
    %2263 = vst.msk [vmem:[#allocation4 + $0xe0] sm:$0xf] %vm2206, %v2127
    %2264 = vst.msk [vmem:[#allocation4 + $0xe4] sm:$0xf] %vm2206, %v2129
    %2265 = vst.msk [vmem:[#allocation4 + $0xe8] sm:$0xf] %vm2206, %v2131
    %2266 = vst.msk [vmem:[#allocation4 + $0xec] sm:$0xf] %vm2206, %v2133
    %2267 = vst.msk [vmem:[#allocation4 + $0xf0] sm:$0xf] %vm2206, %v2135
    %2268 = vst.msk [vmem:[#allocation4 + $0xf4] sm:$0xf] %vm2206, %v2137
    %2269 = vst.msk [vmem:[#allocation4 + $0xf8] sm:$0xf] %vm2206, %v2139
    %2270 = vst.msk [vmem:[#allocation4 + $0xfc] sm:$0xf] %vm2206, %v2141
    %v2271 = vld [vmem:[%s217 + $0x2] sm:$0xff]
    %v2272 = vld [vmem:[%s217 + $0xa] sm:$0xff]
    %v2273 = vld [vmem:[%s217 + $0x1a] sm:$0xff]
    %v2274 = vld [vmem:[%s217 + $0x22] sm:$0xff]
    %v2275 = vld [vmem:[%s217 + $0x32] sm:$0xff]
    %v2276 = vld [vmem:[%s217 + $0x3a] sm:$0xff]
    %v2277 = vld [vmem:[%s217 + $0x4a] sm:$0xff]
    %v2278 = vld [vmem:[%s217 + $0x52] sm:$0xff]
    %v2279 = vld [vmem:[%s217 + $0x62] sm:$0xff]
    %v2280 = vld [vmem:[%s217 + $0x6a] sm:$0xff]
    %v2281 = vld [vmem:[%s217 + $0x7a] sm:$0xff]
    %v2282 = vld [vmem:[%s217 + $0x82] sm:$0xff]
    %v2283 = vld [vmem:[%s217 + $0x92] sm:$0xff]
    %v2284 = vld [vmem:[%s217 + $0x9a] sm:$0xff]
    %v2285 = vld [vmem:[%s217 + $0xaa] sm:$0xff]
    %v2286 = vld [vmem:[%s217 + $0xb2] sm:$0xff]
    %v2287 = vld [vmem:[%s217 + $0xc2] sm:$0xff]
    %v2288 = vld [vmem:[%s217 + $0xca] sm:$0xff]
    %v2289 = vld [vmem:[%s217 + $0xda] sm:$0xff]
    %v2290 = vld [vmem:[%s217 + $0xe2] sm:$0xff]
    %v2291 = vld [vmem:[%s217 + $0xf2] sm:$0xff]
    %v2292 = vld [vmem:[%s217 + $0xfa] sm:$0xff]
    %v2293 = vld [vmem:[%s217 + $0x10a] sm:$0xff]
    %v2294 = vld [vmem:[%s217 + $0x112] sm:$0xff]
    %v2295 = vld [vmem:[%s217 + $0x122] sm:$0xff]
    %v2296 = vld [vmem:[%s217 + $0x12a] sm:$0xff]
    %v2297 = vld [vmem:[%s217 + $0x13a] sm:$0xff]
    %v2298 = vld [vmem:[%s217 + $0x142] sm:$0xff]
    %v2299 = vld [vmem:[%s217 + $0x152] sm:$0xff]
    %v2300 = vld [vmem:[%s217 + $0x15a] sm:$0xff]
    %v2301 = vld [vmem:[%s217 + $0x16a] sm:$0xff]
    %v2302 = vld [vmem:[%s217 + $0x172] sm:$0xff]
    %v2303 = vld [vmem:[%s217 + $0x1b2] sm:$0xff]
    %v2304 = vld [vmem:[%s217 + $0x1ba] sm:$0xff]
    %v2305 = vld [vmem:[%s217 + $0x1ca] sm:$0xff]
    %v2306 = vld [vmem:[%s217 + $0x1d2] sm:$0xff]
    %v2307 = vld [vmem:[%s217 + $0x1e2] sm:$0xff]
    %v2308 = vld [vmem:[%s217 + $0x1ea] sm:$0xff]
    %v2309 = vld [vmem:[%s217 + $0x1fa] sm:$0xff]
    %v2310 = vld [vmem:[%s217 + $0x202] sm:$0xff]
    %v2311 = vld [vmem:[%s217 + $0x212] sm:$0xff]
    %v2312 = vld [vmem:[%s217 + $0x21a] sm:$0xff]
    %v2313 = vld [vmem:[%s217 + $0x22a] sm:$0xff]
    %v2314 = vld [vmem:[%s217 + $0x232] sm:$0xff]
    %v2315 = vld [vmem:[%s217 + $0x242] sm:$0xff]
    %v2316 = vld [vmem:[%s217 + $0x24a] sm:$0xff]
    %v2317 = vld [vmem:[%s217 + $0x25a] sm:$0xff]
    %v2318 = vld [vmem:[%s217 + $0x262] sm:$0xff]
    %v2319 = vld [vmem:[%s217 + $0x272] sm:$0xff]
    %v2320 = vld [vmem:[%s217 + $0x27a] sm:$0xff]
    %v2321 = vld [vmem:[%s217 + $0x28a] sm:$0xff]
    %v2322 = vld [vmem:[%s217 + $0x292] sm:$0xff]
    %v2323 = vld [vmem:[%s217 + $0x2a2] sm:$0xff]
    %v2324 = vld [vmem:[%s217 + $0x2aa] sm:$0xff]
    %v2325 = vld [vmem:[%s217 + $0x2ba] sm:$0xff]
    %v2326 = vld [vmem:[%s217 + $0x2c2] sm:$0xff]
    %v2327 = vld [vmem:[%s217 + $0x2d2] sm:$0xff]
    %v2328 = vld [vmem:[%s217 + $0x2da] sm:$0xff]
    %v2329 = vld [vmem:[%s217 + $0x2ea] sm:$0xff]
    %v2330 = vld [vmem:[%s217 + $0x2f2] sm:$0xff]
    %v2331 = vld [vmem:[%s217 + $0x302] sm:$0xff]
    %v2332 = vld [vmem:[%s217 + $0x30a] sm:$0xff]
    %v2333 = vld [vmem:[%s217 + $0x31a] sm:$0xff]
    %v2334 = vld [vmem:[%s217 + $0x322] sm:$0xff]
    %v2335 = vpack.c.bf16 %v2271, %v2271
    %v2336 = vpack.c.bf16 %v2272, %v2272
    %v2337 = vpack.c.bf16 %v2273, %v2273
    %v2338 = vpack.c.bf16 %v2274, %v2274
    %v2339 = vpack.c.bf16 %v2275, %v2275
    %v2340 = vpack.c.bf16 %v2276, %v2276
    %v2341 = vpack.c.bf16 %v2277, %v2277
    %v2342 = vpack.c.bf16 %v2278, %v2278
    %v2343 = vpack.c.bf16 %v2279, %v2279
    %v2344 = vpack.c.bf16 %v2280, %v2280
    %v2345 = vpack.c.bf16 %v2281, %v2281
    %v2346 = vpack.c.bf16 %v2282, %v2282
    %v2347 = vpack.c.bf16 %v2283, %v2283
    %v2348 = vpack.c.bf16 %v2284, %v2284
    %v2349 = vpack.c.bf16 %v2285, %v2285
    %v2350 = vpack.c.bf16 %v2286, %v2286
    %v2351 = vpack.c.bf16 %v2287, %v2287
    %v2352 = vpack.c.bf16 %v2288, %v2288
    %v2353 = vpack.c.bf16 %v2289, %v2289
    %v2354 = vpack.c.bf16 %v2290, %v2290
    %v2355 = vpack.c.bf16 %v2291, %v2291
    %v2356 = vpack.c.bf16 %v2292, %v2292
    %v2357 = vpack.c.bf16 %v2293, %v2293
    %v2358 = vpack.c.bf16 %v2294, %v2294
    %v2359 = vpack.c.bf16 %v2295, %v2295
    %v2360 = vpack.c.bf16 %v2296, %v2296
    %v2361 = vpack.c.bf16 %v2297, %v2297
    %v2362 = vpack.c.bf16 %v2298, %v2298
    %v2363 = vpack.c.bf16 %v2299, %v2299
    %v2364 = vpack.c.bf16 %v2300, %v2300
    %v2365 = vpack.c.bf16 %v2301, %v2301
    %v2366 = vpack.c.bf16 %v2302, %v2302
    %v2367 = vpack.c.bf16 %v2303, %v2303
    %v2368 = vpack.c.bf16 %v2304, %v2304
    %v2369 = vpack.c.bf16 %v2305, %v2305
    %v2370 = vpack.c.bf16 %v2306, %v2306
    %v2371 = vpack.c.bf16 %v2307, %v2307
    %v2372 = vpack.c.bf16 %v2308, %v2308
    %v2373 = vpack.c.bf16 %v2309, %v2309
    %v2374 = vpack.c.bf16 %v2310, %v2310
    %v2375 = vpack.c.bf16 %v2311, %v2311
    %v2376 = vpack.c.bf16 %v2312, %v2312
    %v2377 = vpack.c.bf16 %v2313, %v2313
    %v2378 = vpack.c.bf16 %v2314, %v2314
    %v2379 = vpack.c.bf16 %v2315, %v2315
    %v2380 = vpack.c.bf16 %v2316, %v2316
    %v2381 = vpack.c.bf16 %v2317, %v2317
    %v2382 = vpack.c.bf16 %v2318, %v2318
    %v2383 = vpack.c.bf16 %v2319, %v2319
    %v2384 = vpack.c.bf16 %v2320, %v2320
    %v2385 = vpack.c.bf16 %v2321, %v2321
    %v2386 = vpack.c.bf16 %v2322, %v2322
    %v2387 = vpack.c.bf16 %v2323, %v2323
    %v2388 = vpack.c.bf16 %v2324, %v2324
    %v2389 = vpack.c.bf16 %v2325, %v2325
    %v2390 = vpack.c.bf16 %v2326, %v2326
    %v2391 = vpack.c.bf16 %v2327, %v2327
    %v2392 = vpack.c.bf16 %v2328, %v2328
    %v2393 = vpack.c.bf16 %v2329, %v2329
    %v2394 = vpack.c.bf16 %v2330, %v2330
    %v2395 = vpack.c.bf16 %v2331, %v2331
    %v2396 = vpack.c.bf16 %v2332, %v2332
    %v2397 = vpack.c.bf16 %v2333, %v2333
    %v2398 = vpack.c.bf16 %v2334, %v2334
    %2463 = vrot.lane.b32.xlu0 %v2335, 20
    %v2464 = vpop.permute.xlu0 %2463
    %2465 = vrot.lane.b32.xlu0 %v2336, 20
    %v2466 = vpop.permute.xlu0 %2465
    %2467 = vrot.lane.b32.xlu0 %v2337, 20
    %v2468 = vpop.permute.xlu0 %2467
    %2469 = vrot.lane.b32.xlu0 %v2338, 20
    %v2470 = vpop.permute.xlu0 %2469
    %2471 = vrot.lane.b32.xlu0 %v2339, 20
    %v2472 = vpop.permute.xlu0 %2471
    %2473 = vrot.lane.b32.xlu0 %v2340, 20
    %v2474 = vpop.permute.xlu0 %2473
    %2475 = vrot.lane.b32.xlu0 %v2341, 20
    %v2476 = vpop.permute.xlu0 %2475
    %2477 = vrot.lane.b32.xlu0 %v2342, 20
    %v2478 = vpop.permute.xlu0 %2477
    %2479 = vrot.lane.b32.xlu0 %v2343, 20
    %v2480 = vpop.permute.xlu0 %2479
    %2481 = vrot.lane.b32.xlu0 %v2344, 20
    %v2482 = vpop.permute.xlu0 %2481
    %2483 = vrot.lane.b32.xlu0 %v2345, 20
    %v2484 = vpop.permute.xlu0 %2483
    %2485 = vrot.lane.b32.xlu0 %v2346, 20
    %v2486 = vpop.permute.xlu0 %2485
    %2487 = vrot.lane.b32.xlu0 %v2347, 20
    %v2488 = vpop.permute.xlu0 %2487
    %2489 = vrot.lane.b32.xlu0 %v2348, 20
    %v2490 = vpop.permute.xlu0 %2489
    %2491 = vrot.lane.b32.xlu0 %v2349, 20
    %v2492 = vpop.permute.xlu0 %2491
    %2493 = vrot.lane.b32.xlu0 %v2350, 20
    %v2494 = vpop.permute.xlu0 %2493
    %2495 = vrot.lane.b32.xlu0 %v2351, 20
    %v2496 = vpop.permute.xlu0 %2495
    %2497 = vrot.lane.b32.xlu0 %v2352, 20
    %v2498 = vpop.permute.xlu0 %2497
    %2499 = vrot.lane.b32.xlu0 %v2353, 20
    %v2500 = vpop.permute.xlu0 %2499
    %2501 = vrot.lane.b32.xlu0 %v2354, 20
    %v2502 = vpop.permute.xlu0 %2501
    %2503 = vrot.lane.b32.xlu0 %v2355, 20
    %v2504 = vpop.permute.xlu0 %2503
    %2505 = vrot.lane.b32.xlu0 %v2356, 20
    %v2506 = vpop.permute.xlu0 %2505
    %2507 = vrot.lane.b32.xlu0 %v2357, 20
    %v2508 = vpop.permute.xlu0 %2507
    %2509 = vrot.lane.b32.xlu0 %v2358, 20
    %v2510 = vpop.permute.xlu0 %2509
    %2511 = vrot.lane.b32.xlu0 %v2359, 20
    %v2512 = vpop.permute.xlu0 %2511
    %2513 = vrot.lane.b32.xlu0 %v2360, 20
    %v2514 = vpop.permute.xlu0 %2513
    %2515 = vrot.lane.b32.xlu0 %v2361, 20
    %v2516 = vpop.permute.xlu0 %2515
    %2517 = vrot.lane.b32.xlu0 %v2362, 20
    %v2518 = vpop.permute.xlu0 %2517
    %2519 = vrot.lane.b32.xlu0 %v2363, 20
    %v2520 = vpop.permute.xlu0 %2519
    %2521 = vrot.lane.b32.xlu0 %v2364, 20
    %v2522 = vpop.permute.xlu0 %2521
    %2523 = vrot.lane.b32.xlu0 %v2365, 20
    %v2524 = vpop.permute.xlu0 %2523
    %2525 = vrot.lane.b32.xlu0 %v2366, 20
    %v2526 = vpop.permute.xlu0 %2525
    %2527 = vrot.lane.b32.xlu0 %v2367, 20
    %v2528 = vpop.permute.xlu0 %2527
    %2529 = vrot.lane.b32.xlu0 %v2368, 20
    %v2530 = vpop.permute.xlu0 %2529
    %2531 = vrot.lane.b32.xlu0 %v2369, 20
    %v2532 = vpop.permute.xlu0 %2531
    %2533 = vrot.lane.b32.xlu0 %v2370, 20
    %v2534 = vpop.permute.xlu0 %2533
    %2535 = vrot.lane.b32.xlu0 %v2371, 20
    %v2536 = vpop.permute.xlu0 %2535
    %2537 = vrot.lane.b32.xlu0 %v2372, 20
    %v2538 = vpop.permute.xlu0 %2537
    %2539 = vrot.lane.b32.xlu0 %v2373, 20
    %v2540 = vpop.permute.xlu0 %2539
    %2541 = vrot.lane.b32.xlu0 %v2374, 20
    %v2542 = vpop.permute.xlu0 %2541
    %2543 = vrot.lane.b32.xlu0 %v2375, 20
    %v2544 = vpop.permute.xlu0 %2543
    %2545 = vrot.lane.b32.xlu0 %v2376, 20
    %v2546 = vpop.permute.xlu0 %2545
    %2547 = vrot.lane.b32.xlu0 %v2377, 20
    %v2548 = vpop.permute.xlu0 %2547
    %2549 = vrot.lane.b32.xlu0 %v2378, 20
    %v2550 = vpop.permute.xlu0 %2549
    %2551 = vrot.lane.b32.xlu0 %v2379, 20
    %v2552 = vpop.permute.xlu0 %2551
    %2553 = vrot.lane.b32.xlu0 %v2380, 20
    %v2554 = vpop.permute.xlu0 %2553
    %2555 = vrot.lane.b32.xlu0 %v2381, 20
    %v2556 = vpop.permute.xlu0 %2555
    %2557 = vrot.lane.b32.xlu0 %v2382, 20
    %v2558 = vpop.permute.xlu0 %2557
    %2559 = vrot.lane.b32.xlu0 %v2383, 20
    %v2560 = vpop.permute.xlu0 %2559
    %2561 = vrot.lane.b32.xlu0 %v2384, 20
    %v2562 = vpop.permute.xlu0 %2561
    %2563 = vrot.lane.b32.xlu0 %v2385, 20
    %v2564 = vpop.permute.xlu0 %2563
    %2565 = vrot.lane.b32.xlu0 %v2386, 20
    %v2566 = vpop.permute.xlu0 %2565
    %2567 = vrot.lane.b32.xlu0 %v2387, 20
    %v2568 = vpop.permute.xlu0 %2567
    %2569 = vrot.lane.b32.xlu0 %v2388, 20
    %v2570 = vpop.permute.xlu0 %2569
    %2571 = vrot.lane.b32.xlu0 %v2389, 20
    %v2572 = vpop.permute.xlu0 %2571
    %2573 = vrot.lane.b32.xlu0 %v2390, 20
    %v2574 = vpop.permute.xlu0 %2573
    %2575 = vrot.lane.b32.xlu0 %v2391, 20
    %v2576 = vpop.permute.xlu0 %2575
    %2577 = vrot.lane.b32.xlu0 %v2392, 20
    %v2578 = vpop.permute.xlu0 %2577
    %2579 = vrot.lane.b32.xlu0 %v2393, 20
    %v2580 = vpop.permute.xlu0 %2579
    %2581 = vrot.lane.b32.xlu0 %v2394, 20
    %v2582 = vpop.permute.xlu0 %2581
    %2583 = vrot.lane.b32.xlu0 %v2395, 20
    %v2584 = vpop.permute.xlu0 %2583
    %2585 = vrot.lane.b32.xlu0 %v2396, 20
    %v2586 = vpop.permute.xlu0 %2585
    %2587 = vrot.lane.b32.xlu0 %v2397, 20
    %v2588 = vpop.permute.xlu0 %2587
    %2589 = vrot.lane.b32.xlu0 %v2398, 20
    %v2590 = vpop.permute.xlu0 %2589
    %vm2655 = vcmask 191648
    %2656 = vst.msk [vmem:[#allocation4] sm:$0xf] %vm2655, %v2464
    %2657 = vst.msk [vmem:[#allocation4 + $0x4] sm:$0xf] %vm2655, %v2466
    %2658 = vst.msk [vmem:[#allocation4 + $0x8] sm:$0xf] %vm2655, %v2468
    %2659 = vst.msk [vmem:[#allocation4 + $0xc] sm:$0xf] %vm2655, %v2470
    %2660 = vst.msk [vmem:[#allocation4 + $0x10] sm:$0xf] %vm2655, %v2472
    %2661 = vst.msk [vmem:[#allocation4 + $0x14] sm:$0xf] %vm2655, %v2474
    %2662 = vst.msk [vmem:[#allocation4 + $0x18] sm:$0xf] %vm2655, %v2476
    %2663 = vst.msk [vmem:[#allocation4 + $0x1c] sm:$0xf] %vm2655, %v2478
    %2664 = vst.msk [vmem:[#allocation4 + $0x20] sm:$0xf] %vm2655, %v2480
    %2665 = vst.msk [vmem:[#allocation4 + $0x24] sm:$0xf] %vm2655, %v2482
    %2666 = vst.msk [vmem:[#allocation4 + $0x28] sm:$0xf] %vm2655, %v2484
    %2667 = vst.msk [vmem:[#allocation4 + $0x2c] sm:$0xf] %vm2655, %v2486
    %2668 = vst.msk [vmem:[#allocation4 + $0x30] sm:$0xf] %vm2655, %v2488
    %2669 = vst.msk [vmem:[#allocation4 + $0x34] sm:$0xf] %vm2655, %v2490
    %2670 = vst.msk [vmem:[#allocation4 + $0x38] sm:$0xf] %vm2655, %v2492
    %2671 = vst.msk [vmem:[#allocation4 + $0x3c] sm:$0xf] %vm2655, %v2494
    %2672 = vst.msk [vmem:[#allocation4 + $0x40] sm:$0xf] %vm2655, %v2496
    %2673 = vst.msk [vmem:[#allocation4 + $0x44] sm:$0xf] %vm2655, %v2498
    %2674 = vst.msk [vmem:[#allocation4 + $0x48] sm:$0xf] %vm2655, %v2500
    %2675 = vst.msk [vmem:[#allocation4 + $0x4c] sm:$0xf] %vm2655, %v2502
    %2676 = vst.msk [vmem:[#allocation4 + $0x50] sm:$0xf] %vm2655, %v2504
    %2677 = vst.msk [vmem:[#allocation4 + $0x54] sm:$0xf] %vm2655, %v2506
    %2678 = vst.msk [vmem:[#allocation4 + $0x58] sm:$0xf] %vm2655, %v2508
    %2679 = vst.msk [vmem:[#allocation4 + $0x5c] sm:$0xf] %vm2655, %v2510
    %2680 = vst.msk [vmem:[#allocation4 + $0x60] sm:$0xf] %vm2655, %v2512
    %2681 = vst.msk [vmem:[#allocation4 + $0x64] sm:$0xf] %vm2655, %v2514
    %2682 = vst.msk [vmem:[#allocation4 + $0x68] sm:$0xf] %vm2655, %v2516
    %2683 = vst.msk [vmem:[#allocation4 + $0x6c] sm:$0xf] %vm2655, %v2518
    %2684 = vst.msk [vmem:[#allocation4 + $0x70] sm:$0xf] %vm2655, %v2520
    %2685 = vst.msk [vmem:[#allocation4 + $0x74] sm:$0xf] %vm2655, %v2522
    %2686 = vst.msk [vmem:[#allocation4 + $0x78] sm:$0xf] %vm2655, %v2524
    %2687 = vst.msk [vmem:[#allocation4 + $0x7c] sm:$0xf] %vm2655, %v2526
    %2688 = vst.msk [vmem:[#allocation4 + $0x80] sm:$0xf] %vm2655, %v2528
    %2689 = vst.msk [vmem:[#allocation4 + $0x84] sm:$0xf] %vm2655, %v2530
    %2690 = vst.msk [vmem:[#allocation4 + $0x88] sm:$0xf] %vm2655, %v2532
    %2691 = vst.msk [vmem:[#allocation4 + $0x8c] sm:$0xf] %vm2655, %v2534
    %2692 = vst.msk [vmem:[#allocation4 + $0x90] sm:$0xf] %vm2655, %v2536
    %2693 = vst.msk [vmem:[#allocation4 + $0x94] sm:$0xf] %vm2655, %v2538
    %2694 = vst.msk [vmem:[#allocation4 + $0x98] sm:$0xf] %vm2655, %v2540
    %2695 = vst.msk [vmem:[#allocation4 + $0x9c] sm:$0xf] %vm2655, %v2542
    %2696 = vst.msk [vmem:[#allocation4 + $0xa0] sm:$0xf] %vm2655, %v2544
    %2697 = vst.msk [vmem:[#allocation4 + $0xa4] sm:$0xf] %vm2655, %v2546
    %2698 = vst.msk [vmem:[#allocation4 + $0xa8] sm:$0xf] %vm2655, %v2548
    %2699 = vst.msk [vmem:[#allocation4 + $0xac] sm:$0xf] %vm2655, %v2550
    %2700 = vst.msk [vmem:[#allocation4 + $0xb0] sm:$0xf] %vm2655, %v2552
    %2701 = vst.msk [vmem:[#allocation4 + $0xb4] sm:$0xf] %vm2655, %v2554
    %2702 = vst.msk [vmem:[#allocation4 + $0xb8] sm:$0xf] %vm2655, %v2556
    %2703 = vst.msk [vmem:[#allocation4 + $0xbc] sm:$0xf] %vm2655, %v2558
    %2704 = vst.msk [vmem:[#allocation4 + $0xc0] sm:$0xf] %vm2655, %v2560
    %2705 = vst.msk [vmem:[#allocation4 + $0xc4] sm:$0xf] %vm2655, %v2562
    %2706 = vst.msk [vmem:[#allocation4 + $0xc8] sm:$0xf] %vm2655, %v2564
    %2707 = vst.msk [vmem:[#allocation4 + $0xcc] sm:$0xf] %vm2655, %v2566
    %2708 = vst.msk [vmem:[#allocation4 + $0xd0] sm:$0xf] %vm2655, %v2568
    %2709 = vst.msk [vmem:[#allocation4 + $0xd4] sm:$0xf] %vm2655, %v2570
    %2710 = vst.msk [vmem:[#allocation4 + $0xd8] sm:$0xf] %vm2655, %v2572
    %2711 = vst.msk [vmem:[#allocation4 + $0xdc] sm:$0xf] %vm2655, %v2574
    %2712 = vst.msk [vmem:[#allocation4 + $0xe0] sm:$0xf] %vm2655, %v2576
    %2713 = vst.msk [vmem:[#allocation4 + $0xe4] sm:$0xf] %vm2655, %v2578
    %2714 = vst.msk [vmem:[#allocation4 + $0xe8] sm:$0xf] %vm2655, %v2580
    %2715 = vst.msk [vmem:[#allocation4 + $0xec] sm:$0xf] %vm2655, %v2582
    %2716 = vst.msk [vmem:[#allocation4 + $0xf0] sm:$0xf] %vm2655, %v2584
    %2717 = vst.msk [vmem:[#allocation4 + $0xf4] sm:$0xf] %vm2655, %v2586
    %2718 = vst.msk [vmem:[#allocation4 + $0xf8] sm:$0xf] %vm2655, %v2588
    %2719 = vst.msk [vmem:[#allocation4 + $0xfc] sm:$0xf] %vm2655, %v2590
    %s2720 = scalar_lea.vmem [#allocation2], 48
    %v2721 = vld [vmem:[%s2720] sm:$0xff]
    %v2722 = vld [vmem:[%s2720 + $0x8] sm:$0xff]
    %v2723 = vld [vmem:[%s2720 + $0x18] sm:$0xff]
    %v2724 = vld [vmem:[%s2720 + $0x20] sm:$0xff]
    %v2725 = vld [vmem:[%s2720 + $0x30] sm:$0xff]
    %v2726 = vld [vmem:[%s2720 + $0x38] sm:$0xff]
    %v2727 = vld [vmem:[%s2720 + $0x48] sm:$0xff]
    %v2728 = vld [vmem:[%s2720 + $0x50] sm:$0xff]
    %v2729 = vld [vmem:[%s2720 + $0x60] sm:$0xff]
    %v2730 = vld [vmem:[%s2720 + $0x68] sm:$0xff]
    %v2731 = vld [vmem:[%s2720 + $0x78] sm:$0xff]
    %v2732 = vld [vmem:[%s2720 + $0x80] sm:$0xff]
    %v2733 = vld [vmem:[%s2720 + $0x90] sm:$0xff]
    %v2734 = vld [vmem:[%s2720 + $0x98] sm:$0xff]
    %v2735 = vld [vmem:[%s2720 + $0xa8] sm:$0xff]
    %v2736 = vld [vmem:[%s2720 + $0xb0] sm:$0xff]
    %v2737 = vld [vmem:[%s2720 + $0xc0] sm:$0xff]
    %v2738 = vld [vmem:[%s2720 + $0xc8] sm:$0xff]
    %v2739 = vld [vmem:[%s2720 + $0xd8] sm:$0xff]
    %v2740 = vld [vmem:[%s2720 + $0xe0] sm:$0xff]
    %v2741 = vld [vmem:[%s2720 + $0xf0] sm:$0xff]
    %v2742 = vld [vmem:[%s2720 + $0xf8] sm:$0xff]
    %v2743 = vld [vmem:[%s2720 + $0x108] sm:$0xff]
    %v2744 = vld [vmem:[%s2720 + $0x110] sm:$0xff]
    %v2745 = vld [vmem:[%s2720 + $0x120] sm:$0xff]
    %v2746 = vld [vmem:[%s2720 + $0x128] sm:$0xff]
    %v2747 = vld [vmem:[%s2720 + $0x138] sm:$0xff]
    %v2748 = vld [vmem:[%s2720 + $0x140] sm:$0xff]
    %v2749 = vld [vmem:[%s2720 + $0x150] sm:$0xff]
    %v2750 = vld [vmem:[%s2720 + $0x158] sm:$0xff]
    %v2751 = vld [vmem:[%s2720 + $0x168] sm:$0xff]
    %v2752 = vld [vmem:[%s2720 + $0x170] sm:$0xff]
    %v2753 = vld [vmem:[%s2720 + $0x1b0] sm:$0xff]
    %v2754 = vld [vmem:[%s2720 + $0x1b8] sm:$0xff]
    %v2755 = vld [vmem:[%s2720 + $0x1c8] sm:$0xff]
    %v2756 = vld [vmem:[%s2720 + $0x1d0] sm:$0xff]
    %v2757 = vld [vmem:[%s2720 + $0x1e0] sm:$0xff]
    %v2758 = vld [vmem:[%s2720 + $0x1e8] sm:$0xff]
    %v2759 = vld [vmem:[%s2720 + $0x1f8] sm:$0xff]
    %v2760 = vld [vmem:[%s2720 + $0x200] sm:$0xff]
    %v2761 = vld [vmem:[%s2720 + $0x210] sm:$0xff]
    %v2762 = vld [vmem:[%s2720 + $0x218] sm:$0xff]
    %v2763 = vld [vmem:[%s2720 + $0x228] sm:$0xff]
    %v2764 = vld [vmem:[%s2720 + $0x230] sm:$0xff]
    %v2765 = vld [vmem:[%s2720 + $0x240] sm:$0xff]
    %v2766 = vld [vmem:[%s2720 + $0x248] sm:$0xff]
    %v2767 = vld [vmem:[%s2720 + $0x258] sm:$0xff]
    %v2768 = vld [vmem:[%s2720 + $0x260] sm:$0xff]
    %v2769 = vld [vmem:[%s2720 + $0x270] sm:$0xff]
    %v2770 = vld [vmem:[%s2720 + $0x278] sm:$0xff]
    %v2771 = vld [vmem:[%s2720 + $0x288] sm:$0xff]
    %v2772 = vld [vmem:[%s2720 + $0x290] sm:$0xff]
    %v2773 = vld [vmem:[%s2720 + $0x2a0] sm:$0xff]
    %v2774 = vld [vmem:[%s2720 + $0x2a8] sm:$0xff]
    %v2775 = vld [vmem:[%s2720 + $0x2b8] sm:$0xff]
    %v2776 = vld [vmem:[%s2720 + $0x2c0] sm:$0xff]
    %v2777 = vld [vmem:[%s2720 + $0x2d0] sm:$0xff]
    %v2778 = vld [vmem:[%s2720 + $0x2d8] sm:$0xff]
    %v2779 = vld [vmem:[%s2720 + $0x2e8] sm:$0xff]
    %v2780 = vld [vmem:[%s2720 + $0x2f0] sm:$0xff]
    %v2781 = vld [vmem:[%s2720 + $0x300] sm:$0xff]
    %v2782 = vld [vmem:[%s2720 + $0x308] sm:$0xff]
    %v2783 = vld [vmem:[%s2720 + $0x318] sm:$0xff]
    %v2784 = vld [vmem:[%s2720 + $0x320] sm:$0xff]
    %v2785 = vpack.c.bf16 %v2721, %v2721
    %v2786 = vpack.c.bf16 %v2722, %v2722
    %v2787 = vpack.c.bf16 %v2723, %v2723
    %v2788 = vpack.c.bf16 %v2724, %v2724
    %v2789 = vpack.c.bf16 %v2725, %v2725
    %v2790 = vpack.c.bf16 %v2726, %v2726
    %v2791 = vpack.c.bf16 %v2727, %v2727
    %v2792 = vpack.c.bf16 %v2728, %v2728
    %v2793 = vpack.c.bf16 %v2729, %v2729
    %v2794 = vpack.c.bf16 %v2730, %v2730
    %v2795 = vpack.c.bf16 %v2731, %v2731
    %v2796 = vpack.c.bf16 %v2732, %v2732
    %v2797 = vpack.c.bf16 %v2733, %v2733
    %v2798 = vpack.c.bf16 %v2734, %v2734
    %v2799 = vpack.c.bf16 %v2735, %v2735
    %v2800 = vpack.c.bf16 %v2736, %v2736
    %v2801 = vpack.c.bf16 %v2737, %v2737
    %v2802 = vpack.c.bf16 %v2738, %v2738
    %v2803 = vpack.c.bf16 %v2739, %v2739
    %v2804 = vpack.c.bf16 %v2740, %v2740
    %v2805 = vpack.c.bf16 %v2741, %v2741
    %v2806 = vpack.c.bf16 %v2742, %v2742
    %v2807 = vpack.c.bf16 %v2743, %v2743
    %v2808 = vpack.c.bf16 %v2744, %v2744
    %v2809 = vpack.c.bf16 %v2745, %v2745
    %v2810 = vpack.c.bf16 %v2746, %v2746
    %v2811 = vpack.c.bf16 %v2747, %v2747
    %v2812 = vpack.c.bf16 %v2748, %v2748
    %v2813 = vpack.c.bf16 %v2749, %v2749
    %v2814 = vpack.c.bf16 %v2750, %v2750
    %v2815 = vpack.c.bf16 %v2751, %v2751
    %v2816 = vpack.c.bf16 %v2752, %v2752
    %v2817 = vpack.c.bf16 %v2753, %v2753
    %v2818 = vpack.c.bf16 %v2754, %v2754
    %v2819 = vpack.c.bf16 %v2755, %v2755
    %v2820 = vpack.c.bf16 %v2756, %v2756
    %v2821 = vpack.c.bf16 %v2757, %v2757
    %v2822 = vpack.c.bf16 %v2758, %v2758
    %v2823 = vpack.c.bf16 %v2759, %v2759
    %v2824 = vpack.c.bf16 %v2760, %v2760
    %v2825 = vpack.c.bf16 %v2761, %v2761
    %v2826 = vpack.c.bf16 %v2762, %v2762
    %v2827 = vpack.c.bf16 %v2763, %v2763
    %v2828 = vpack.c.bf16 %v2764, %v2764
    %v2829 = vpack.c.bf16 %v2765, %v2765
    %v2830 = vpack.c.bf16 %v2766, %v2766
    %v2831 = vpack.c.bf16 %v2767, %v2767
    %v2832 = vpack.c.bf16 %v2768, %v2768
    %v2833 = vpack.c.bf16 %v2769, %v2769
    %v2834 = vpack.c.bf16 %v2770, %v2770
    %v2835 = vpack.c.bf16 %v2771, %v2771
    %v2836 = vpack.c.bf16 %v2772, %v2772
    %v2837 = vpack.c.bf16 %v2773, %v2773
    %v2838 = vpack.c.bf16 %v2774, %v2774
    %v2839 = vpack.c.bf16 %v2775, %v2775
    %v2840 = vpack.c.bf16 %v2776, %v2776
    %v2841 = vpack.c.bf16 %v2777, %v2777
    %v2842 = vpack.c.bf16 %v2778, %v2778
    %v2843 = vpack.c.bf16 %v2779, %v2779
    %v2844 = vpack.c.bf16 %v2780, %v2780
    %v2845 = vpack.c.bf16 %v2781, %v2781
    %v2846 = vpack.c.bf16 %v2782, %v2782
    %v2847 = vpack.c.bf16 %v2783, %v2783
    %v2848 = vpack.c.bf16 %v2784, %v2784
    %2913 = vrot.lane.b32.xlu0 %v2785, 24
    %v2914 = vpop.permute.xlu0 %2913
    %2915 = vrot.lane.b32.xlu0 %v2786, 24
    %v2916 = vpop.permute.xlu0 %2915
    %2917 = vrot.lane.b32.xlu0 %v2787, 24
    %v2918 = vpop.permute.xlu0 %2917
    %2919 = vrot.lane.b32.xlu0 %v2788, 24
    %v2920 = vpop.permute.xlu0 %2919
    %2921 = vrot.lane.b32.xlu0 %v2789, 24
    %v2922 = vpop.permute.xlu0 %2921
    %2923 = vrot.lane.b32.xlu0 %v2790, 24
    %v2924 = vpop.permute.xlu0 %2923
    %2925 = vrot.lane.b32.xlu0 %v2791, 24
    %v2926 = vpop.permute.xlu0 %2925
    %2927 = vrot.lane.b32.xlu0 %v2792, 24
    %v2928 = vpop.permute.xlu0 %2927
    %2929 = vrot.lane.b32.xlu0 %v2793, 24
    %v2930 = vpop.permute.xlu0 %2929
    %2931 = vrot.lane.b32.xlu0 %v2794, 24
    %v2932 = vpop.permute.xlu0 %2931
    %2933 = vrot.lane.b32.xlu0 %v2795, 24
    %v2934 = vpop.permute.xlu0 %2933
    %2935 = vrot.lane.b32.xlu0 %v2796, 24
    %v2936 = vpop.permute.xlu0 %2935
    %2937 = vrot.lane.b32.xlu0 %v2797, 24
    %v2938 = vpop.permute.xlu0 %2937
    %2939 = vrot.lane.b32.xlu0 %v2798, 24
    %v2940 = vpop.permute.xlu0 %2939
    %2941 = vrot.lane.b32.xlu0 %v2799, 24
    %v2942 = vpop.permute.xlu0 %2941
    %2943 = vrot.lane.b32.xlu0 %v2800, 24
    %v2944 = vpop.permute.xlu0 %2943
    %2945 = vrot.lane.b32.xlu0 %v2801, 24
    %v2946 = vpop.permute.xlu0 %2945
    %2947 = vrot.lane.b32.xlu0 %v2802, 24
    %v2948 = vpop.permute.xlu0 %2947
    %2949 = vrot.lane.b32.xlu0 %v2803, 24
    %v2950 = vpop.permute.xlu0 %2949
    %2951 = vrot.lane.b32.xlu0 %v2804, 24
    %v2952 = vpop.permute.xlu0 %2951
    %2953 = vrot.lane.b32.xlu0 %v2805, 24
    %v2954 = vpop.permute.xlu0 %2953
    %2955 = vrot.lane.b32.xlu0 %v2806, 24
    %v2956 = vpop.permute.xlu0 %2955
    %2957 = vrot.lane.b32.xlu0 %v2807, 24
    %v2958 = vpop.permute.xlu0 %2957
    %2959 = vrot.lane.b32.xlu0 %v2808, 24
    %v2960 = vpop.permute.xlu0 %2959
    %2961 = vrot.lane.b32.xlu0 %v2809, 24
    %v2962 = vpop.permute.xlu0 %2961
    %2963 = vrot.lane.b32.xlu0 %v2810, 24
    %v2964 = vpop.permute.xlu0 %2963
    %2965 = vrot.lane.b32.xlu0 %v2811, 24
    %v2966 = vpop.permute.xlu0 %2965
    %2967 = vrot.lane.b32.xlu0 %v2812, 24
    %v2968 = vpop.permute.xlu0 %2967
    %2969 = vrot.lane.b32.xlu0 %v2813, 24
    %v2970 = vpop.permute.xlu0 %2969
    %2971 = vrot.lane.b32.xlu0 %v2814, 24
    %v2972 = vpop.permute.xlu0 %2971
    %2973 = vrot.lane.b32.xlu0 %v2815, 24
    %v2974 = vpop.permute.xlu0 %2973
    %2975 = vrot.lane.b32.xlu0 %v2816, 24
    %v2976 = vpop.permute.xlu0 %2975
    %2977 = vrot.lane.b32.xlu0 %v2817, 24
    %v2978 = vpop.permute.xlu0 %2977
    %2979 = vrot.lane.b32.xlu0 %v2818, 24
    %v2980 = vpop.permute.xlu0 %2979
    %2981 = vrot.lane.b32.xlu0 %v2819, 24
    %v2982 = vpop.permute.xlu0 %2981
    %2983 = vrot.lane.b32.xlu0 %v2820, 24
    %v2984 = vpop.permute.xlu0 %2983
    %2985 = vrot.lane.b32.xlu0 %v2821, 24
    %v2986 = vpop.permute.xlu0 %2985
    %2987 = vrot.lane.b32.xlu0 %v2822, 24
    %v2988 = vpop.permute.xlu0 %2987
    %2989 = vrot.lane.b32.xlu0 %v2823, 24
    %v2990 = vpop.permute.xlu0 %2989
    %2991 = vrot.lane.b32.xlu0 %v2824, 24
    %v2992 = vpop.permute.xlu0 %2991
    %2993 = vrot.lane.b32.xlu0 %v2825, 24
    %v2994 = vpop.permute.xlu0 %2993
    %2995 = vrot.lane.b32.xlu0 %v2826, 24
    %v2996 = vpop.permute.xlu0 %2995
    %2997 = vrot.lane.b32.xlu0 %v2827, 24
    %v2998 = vpop.permute.xlu0 %2997
    %2999 = vrot.lane.b32.xlu0 %v2828, 24
    %v3000 = vpop.permute.xlu0 %2999
    %3001 = vrot.lane.b32.xlu0 %v2829, 24
    %v3002 = vpop.permute.xlu0 %3001
    %3003 = vrot.lane.b32.xlu0 %v2830, 24
    %v3004 = vpop.permute.xlu0 %3003
    %3005 = vrot.lane.b32.xlu0 %v2831, 24
    %v3006 = vpop.permute.xlu0 %3005
    %3007 = vrot.lane.b32.xlu0 %v2832, 24
    %v3008 = vpop.permute.xlu0 %3007
    %3009 = vrot.lane.b32.xlu0 %v2833, 24
    %v3010 = vpop.permute.xlu0 %3009
    %3011 = vrot.lane.b32.xlu0 %v2834, 24
    %v3012 = vpop.permute.xlu0 %3011
    %3013 = vrot.lane.b32.xlu0 %v2835, 24
    %v3014 = vpop.permute.xlu0 %3013
    %3015 = vrot.lane.b32.xlu0 %v2836, 24
    %v3016 = vpop.permute.xlu0 %3015
    %3017 = vrot.lane.b32.xlu0 %v2837, 24
    %v3018 = vpop.permute.xlu0 %3017
    %3019 = vrot.lane.b32.xlu0 %v2838, 24
    %v3020 = vpop.permute.xlu0 %3019
    %3021 = vrot.lane.b32.xlu0 %v2839, 24
    %v3022 = vpop.permute.xlu0 %3021
    %3023 = vrot.lane.b32.xlu0 %v2840, 24
    %v3024 = vpop.permute.xlu0 %3023
    %3025 = vrot.lane.b32.xlu0 %v2841, 24
    %v3026 = vpop.permute.xlu0 %3025
    %3027 = vrot.lane.b32.xlu0 %v2842, 24
    %v3028 = vpop.permute.xlu0 %3027
    %3029 = vrot.lane.b32.xlu0 %v2843, 24
    %v3030 = vpop.permute.xlu0 %3029
    %3031 = vrot.lane.b32.xlu0 %v2844, 24
    %v3032 = vpop.permute.xlu0 %3031
    %3033 = vrot.lane.b32.xlu0 %v2845, 24
    %v3034 = vpop.permute.xlu0 %3033
    %3035 = vrot.lane.b32.xlu0 %v2846, 24
    %v3036 = vpop.permute.xlu0 %3035
    %3037 = vrot.lane.b32.xlu0 %v2847, 24
    %v3038 = vpop.permute.xlu0 %3037
    %3039 = vrot.lane.b32.xlu0 %v2848, 24
    %v3040 = vpop.permute.xlu0 %3039
    %vm3105 = vcmask 224448
    %3106 = vst.msk [vmem:[#allocation4] sm:$0xf] %vm3105, %v2914
    %3107 = vst.msk [vmem:[#allocation4 + $0x4] sm:$0xf] %vm3105, %v2916
    %3108 = vst.msk [vmem:[#allocation4 + $0x8] sm:$0xf] %vm3105, %v2918
    %3109 = vst.msk [vmem:[#allocation4 + $0xc] sm:$0xf] %vm3105, %v2920
    %3110 = vst.msk [vmem:[#allocation4 + $0x10] sm:$0xf] %vm3105, %v2922
    %3111 = vst.msk [vmem:[#allocation4 + $0x14] sm:$0xf] %vm3105, %v2924
    %3112 = vst.msk [vmem:[#allocation4 + $0x18] sm:$0xf] %vm3105, %v2926
    %3113 = vst.msk [vmem:[#allocation4 + $0x1c] sm:$0xf] %vm3105, %v2928
    %3114 = vst.msk [vmem:[#allocation4 + $0x20] sm:$0xf] %vm3105, %v2930
    %3115 = vst.msk [vmem:[#allocation4 + $0x24] sm:$0xf] %vm3105, %v2932
    %3116 = vst.msk [vmem:[#allocation4 + $0x28] sm:$0xf] %vm3105, %v2934
    %3117 = vst.msk [vmem:[#allocation4 + $0x2c] sm:$0xf] %vm3105, %v2936
    %3118 = vst.msk [vmem:[#allocation4 + $0x30] sm:$0xf] %vm3105, %v2938
    %3119 = vst.msk [vmem:[#allocation4 + $0x34] sm:$0xf] %vm3105, %v2940
    %3120 = vst.msk [vmem:[#allocation4 + $0x38] sm:$0xf] %vm3105, %v2942
    %3121 = vst.msk [vmem:[#allocation4 + $0x3c] sm:$0xf] %vm3105, %v2944
    %3122 = vst.msk [vmem:[#allocation4 + $0x40] sm:$0xf] %vm3105, %v2946
    %3123 = vst.msk [vmem:[#allocation4 + $0x44] sm:$0xf] %vm3105, %v2948
    %3124 = vst.msk [vmem:[#allocation4 + $0x48] sm:$0xf] %vm3105, %v2950
    %3125 = vst.msk [vmem:[#allocation4 + $0x4c] sm:$0xf] %vm3105, %v2952
    %3126 = vst.msk [vmem:[#allocation4 + $0x50] sm:$0xf] %vm3105, %v2954
    %3127 = vst.msk [vmem:[#allocation4 + $0x54] sm:$0xf] %vm3105, %v2956
    %3128 = vst.msk [vmem:[#allocation4 + $0x58] sm:$0xf] %vm3105, %v2958
    %3129 = vst.msk [vmem:[#allocation4 + $0x5c] sm:$0xf] %vm3105, %v2960
    %3130 = vst.msk [vmem:[#allocation4 + $0x60] sm:$0xf] %vm3105, %v2962
    %3131 = vst.msk [vmem:[#allocation4 + $0x64] sm:$0xf] %vm3105, %v2964
    %3132 = vst.msk [vmem:[#allocation4 + $0x68] sm:$0xf] %vm3105, %v2966
    %3133 = vst.msk [vmem:[#allocation4 + $0x6c] sm:$0xf] %vm3105, %v2968
    %3134 = vst.msk [vmem:[#allocation4 + $0x70] sm:$0xf] %vm3105, %v2970
    %3135 = vst.msk [vmem:[#allocation4 + $0x74] sm:$0xf] %vm3105, %v2972
    %3136 = vst.msk [vmem:[#allocation4 + $0x78] sm:$0xf] %vm3105, %v2974
    %3137 = vst.msk [vmem:[#allocation4 + $0x7c] sm:$0xf] %vm3105, %v2976
    %3138 = vst.msk [vmem:[#allocation4 + $0x80] sm:$0xf] %vm3105, %v2978
    %3139 = vst.msk [vmem:[#allocation4 + $0x84] sm:$0xf] %vm3105, %v2980
    %3140 = vst.msk [vmem:[#allocation4 + $0x88] sm:$0xf] %vm3105, %v2982
    %3141 = vst.msk [vmem:[#allocation4 + $0x8c] sm:$0xf] %vm3105, %v2984
    %3142 = vst.msk [vmem:[#allocation4 + $0x90] sm:$0xf] %vm3105, %v2986
    %3143 = vst.msk [vmem:[#allocation4 + $0x94] sm:$0xf] %vm3105, %v2988
    %3144 = vst.msk [vmem:[#allocation4 + $0x98] sm:$0xf] %vm3105, %v2990
    %3145 = vst.msk [vmem:[#allocation4 + $0x9c] sm:$0xf] %vm3105, %v2992
    %3146 = vst.msk [vmem:[#allocation4 + $0xa0] sm:$0xf] %vm3105, %v2994
    %3147 = vst.msk [vmem:[#allocation4 + $0xa4] sm:$0xf] %vm3105, %v2996
    %3148 = vst.msk [vmem:[#allocation4 + $0xa8] sm:$0xf] %vm3105, %v2998
    %3149 = vst.msk [vmem:[#allocation4 + $0xac] sm:$0xf] %vm3105, %v3000
    %3150 = vst.msk [vmem:[#allocation4 + $0xb0] sm:$0xf] %vm3105, %v3002
    %3151 = vst.msk [vmem:[#allocation4 + $0xb4] sm:$0xf] %vm3105, %v3004
    %3152 = vst.msk [vmem:[#allocation4 + $0xb8] sm:$0xf] %vm3105, %v3006
    %3153 = vst.msk [vmem:[#allocation4 + $0xbc] sm:$0xf] %vm3105, %v3008
    %3154 = vst.msk [vmem:[#allocation4 + $0xc0] sm:$0xf] %vm3105, %v3010
    %3155 = vst.msk [vmem:[#allocation4 + $0xc4] sm:$0xf] %vm3105, %v3012
    %3156 = vst.msk [vmem:[#allocation4 + $0xc8] sm:$0xf] %vm3105, %v3014
    %3157 = vst.msk [vmem:[#allocation4 + $0xcc] sm:$0xf] %vm3105, %v3016
    %3158 = vst.msk [vmem:[#allocation4 + $0xd0] sm:$0xf] %vm3105, %v3018
    %3159 = vst.msk [vmem:[#allocation4 + $0xd4] sm:$0xf] %vm3105, %v3020
    %3160 = vst.msk [vmem:[#allocation4 + $0xd8] sm:$0xf] %vm3105, %v3022
    %3161 = vst.msk [vmem:[#allocation4 + $0xdc] sm:$0xf] %vm3105, %v3024
    %3162 = vst.msk [vmem:[#allocation4 + $0xe0] sm:$0xf] %vm3105, %v3026
    %3163 = vst.msk [vmem:[#allocation4 + $0xe4] sm:$0xf] %vm3105, %v3028
    %3164 = vst.msk [vmem:[#allocation4 + $0xe8] sm:$0xf] %vm3105, %v3030
    %3165 = vst.msk [vmem:[#allocation4 + $0xec] sm:$0xf] %vm3105, %v3032
    %3166 = vst.msk [vmem:[#allocation4 + $0xf0] sm:$0xf] %vm3105, %v3034
    %3167 = vst.msk [vmem:[#allocation4 + $0xf4] sm:$0xf] %vm3105, %v3036
    %3168 = vst.msk [vmem:[#allocation4 + $0xf8] sm:$0xf] %vm3105, %v3038
    %3169 = vst.msk [vmem:[#allocation4 + $0xfc] sm:$0xf] %vm3105, %v3040
    %v3170 = vld [vmem:[%s2720 + $0x1] sm:$0xff]
    %v3171 = vld [vmem:[%s2720 + $0x9] sm:$0xff]
    %v3172 = vld [vmem:[%s2720 + $0x19] sm:$0xff]
    %v3173 = vld [vmem:[%s2720 + $0x21] sm:$0xff]
    %v3174 = vld [vmem:[%s2720 + $0x31] sm:$0xff]
    %v3175 = vld [vmem:[%s2720 + $0x39] sm:$0xff]
    %v3176 = vld [vmem:[%s2720 + $0x49] sm:$0xff]
    %v3177 = vld [vmem:[%s2720 + $0x51] sm:$0xff]
    %v3178 = vld [vmem:[%s2720 + $0x61] sm:$0xff]
    %v3179 = vld [vmem:[%s2720 + $0x69] sm:$0xff]
    %v3180 = vld [vmem:[%s2720 + $0x79] sm:$0xff]
    %v3181 = vld [vmem:[%s2720 + $0x81] sm:$0xff]
    %v3182 = vld [vmem:[%s2720 + $0x91] sm:$0xff]
    %v3183 = vld [vmem:[%s2720 + $0x99] sm:$0xff]
    %v3184 = vld [vmem:[%s2720 + $0xa9] sm:$0xff]
    %v3185 = vld [vmem:[%s2720 + $0xb1] sm:$0xff]
    %v3186 = vld [vmem:[%s2720 + $0xc1] sm:$0xff]
    %v3187 = vld [vmem:[%s2720 + $0xc9] sm:$0xff]
    %v3188 = vld [vmem:[%s2720 + $0xd9] sm:$0xff]
    %v3189 = vld [vmem:[%s2720 + $0xe1] sm:$0xff]
    %v3190 = vld [vmem:[%s2720 + $0xf1] sm:$0xff]
    %v3191 = vld [vmem:[%s2720 + $0xf9] sm:$0xff]
    %v3192 = vld [vmem:[%s2720 + $0x109] sm:$0xff]
    %v3193 = vld [vmem:[%s2720 + $0x111] sm:$0xff]
    %v3194 = vld [vmem:[%s2720 + $0x121] sm:$0xff]
    %v3195 = vld [vmem:[%s2720 + $0x129] sm:$0xff]
    %v3196 = vld [vmem:[%s2720 + $0x139] sm:$0xff]
    %v3197 = vld [vmem:[%s2720 + $0x141] sm:$0xff]
    %v3198 = vld [vmem:[%s2720 + $0x151] sm:$0xff]
    %v3199 = vld [vmem:[%s2720 + $0x159] sm:$0xff]
    %v3200 = vld [vmem:[%s2720 + $0x169] sm:$0xff]
    %v3201 = vld [vmem:[%s2720 + $0x171] sm:$0xff]
    %v3202 = vld [vmem:[%s2720 + $0x1b1] sm:$0xff]
    %v3203 = vld [vmem:[%s2720 + $0x1b9] sm:$0xff]
    %v3204 = vld [vmem:[%s2720 + $0x1c9] sm:$0xff]
    %v3205 = vld [vmem:[%s2720 + $0x1d1] sm:$0xff]
    %v3206 = vld [vmem:[%s2720 + $0x1e1] sm:$0xff]
    %v3207 = vld [vmem:[%s2720 + $0x1e9] sm:$0xff]
    %v3208 = vld [vmem:[%s2720 + $0x1f9] sm:$0xff]
    %v3209 = vld [vmem:[%s2720 + $0x201] sm:$0xff]
    %v3210 = vld [vmem:[%s2720 + $0x211] sm:$0xff]
    %v3211 = vld [vmem:[%s2720 + $0x219] sm:$0xff]
    %v3212 = vld [vmem:[%s2720 + $0x229] sm:$0xff]
    %v3213 = vld [vmem:[%s2720 + $0x231] sm:$0xff]
    %v3214 = vld [vmem:[%s2720 + $0x241] sm:$0xff]
    %v3215 = vld [vmem:[%s2720 + $0x249] sm:$0xff]
    %v3216 = vld [vmem:[%s2720 + $0x259] sm:$0xff]
    %v3217 = vld [vmem:[%s2720 + $0x261] sm:$0xff]
    %v3218 = vld [vmem:[%s2720 + $0x271] sm:$0xff]
    %v3219 = vld [vmem:[%s2720 + $0x279] sm:$0xff]
    %v3220 = vld [vmem:[%s2720 + $0x289] sm:$0xff]
    %v3221 = vld [vmem:[%s2720 + $0x291] sm:$0xff]
    %v3222 = vld [vmem:[%s2720 + $0x2a1] sm:$0xff]
    %v3223 = vld [vmem:[%s2720 + $0x2a9] sm:$0xff]
    %v3224 = vld [vmem:[%s2720 + $0x2b9] sm:$0xff]
    %v3225 = vld [vmem:[%s2720 + $0x2c1] sm:$0xff]
    %v3226 = vld [vmem:[%s2720 + $0x2d1] sm:$0xff]
    %v3227 = vld [vmem:[%s2720 + $0x2d9] sm:$0xff]
    %v3228 = vld [vmem:[%s2720 + $0x2e9] sm:$0xff]
    %v3229 = vld [vmem:[%s2720 + $0x2f1] sm:$0xff]
    %v3230 = vld [vmem:[%s2720 + $0x301] sm:$0xff]
    %v3231 = vld [vmem:[%s2720 + $0x309] sm:$0xff]
    %v3232 = vld [vmem:[%s2720 + $0x319] sm:$0xff]
    %v3233 = vld [vmem:[%s2720 + $0x321] sm:$0xff]
    %v3234 = vpack.c.bf16 %v3170, %v3170
    %v3235 = vpack.c.bf16 %v3171, %v3171
    %v3236 = vpack.c.bf16 %v3172, %v3172
    %v3237 = vpack.c.bf16 %v3173, %v3173
    %v3238 = vpack.c.bf16 %v3174, %v3174
    %v3239 = vpack.c.bf16 %v3175, %v3175
    %v3240 = vpack.c.bf16 %v3176, %v3176
    %v3241 = vpack.c.bf16 %v3177, %v3177
    %v3242 = vpack.c.bf16 %v3178, %v3178
    %v3243 = vpack.c.bf16 %v3179, %v3179
    %v3244 = vpack.c.bf16 %v3180, %v3180
    %v3245 = vpack.c.bf16 %v3181, %v3181
    %v3246 = vpack.c.bf16 %v3182, %v3182
    %v3247 = vpack.c.bf16 %v3183, %v3183
    %v3248 = vpack.c.bf16 %v3184, %v3184
    %v3249 = vpack.c.bf16 %v3185, %v3185
    %v3250 = vpack.c.bf16 %v3186, %v3186
    %v3251 = vpack.c.bf16 %v3187, %v3187
    %v3252 = vpack.c.bf16 %v3188, %v3188
    %v3253 = vpack.c.bf16 %v3189, %v3189
    %v3254 = vpack.c.bf16 %v3190, %v3190
    %v3255 = vpack.c.bf16 %v3191, %v3191
    %v3256 = vpack.c.bf16 %v3192, %v3192
    %v3257 = vpack.c.bf16 %v3193, %v3193
    %v3258 = vpack.c.bf16 %v3194, %v3194
    %v3259 = vpack.c.bf16 %v3195, %v3195
    %v3260 = vpack.c.bf16 %v3196, %v3196
    %v3261 = vpack.c.bf16 %v3197, %v3197
    %v3262 = vpack.c.bf16 %v3198, %v3198
    %v3263 = vpack.c.bf16 %v3199, %v3199
    %v3264 = vpack.c.bf16 %v3200, %v3200
    %v3265 = vpack.c.bf16 %v3201, %v3201
    %v3266 = vpack.c.bf16 %v3202, %v3202
    %v3267 = vpack.c.bf16 %v3203, %v3203
    %v3268 = vpack.c.bf16 %v3204, %v3204
    %v3269 = vpack.c.bf16 %v3205, %v3205
    %v3270 = vpack.c.bf16 %v3206, %v3206
    %v3271 = vpack.c.bf16 %v3207, %v3207
    %v3272 = vpack.c.bf16 %v3208, %v3208
    %v3273 = vpack.c.bf16 %v3209, %v3209
    %v3274 = vpack.c.bf16 %v3210, %v3210
    %v3275 = vpack.c.bf16 %v3211, %v3211
    %v3276 = vpack.c.bf16 %v3212, %v3212
    %v3277 = vpack.c.bf16 %v3213, %v3213
    %v3278 = vpack.c.bf16 %v3214, %v3214
    %v3279 = vpack.c.bf16 %v3215, %v3215
    %v3280 = vpack.c.bf16 %v3216, %v3216
    %v3281 = vpack.c.bf16 %v3217, %v3217
    %v3282 = vpack.c.bf16 %v3218, %v3218
    %v3283 = vpack.c.bf16 %v3219, %v3219
    %v3284 = vpack.c.bf16 %v3220, %v3220
    %v3285 = vpack.c.bf16 %v3221, %v3221
    %v3286 = vpack.c.bf16 %v3222, %v3222
    %v3287 = vpack.c.bf16 %v3223, %v3223
    %v3288 = vpack.c.bf16 %v3224, %v3224
    %v3289 = vpack.c.bf16 %v3225, %v3225
    %v3290 = vpack.c.bf16 %v3226, %v3226
    %v3291 = vpack.c.bf16 %v3227, %v3227
    %v3292 = vpack.c.bf16 %v3228, %v3228
    %v3293 = vpack.c.bf16 %v3229, %v3229
    %v3294 = vpack.c.bf16 %v3230, %v3230
    %v3295 = vpack.c.bf16 %v3231, %v3231
    %v3296 = vpack.c.bf16 %v3232, %v3232
    %v3297 = vpack.c.bf16 %v3233, %v3233
    %3362 = vrot.lane.b32.xlu0 %v3234, 28
    %v3363 = vpop.permute.xlu0 %3362
    %3364 = vrot.lane.b32.xlu0 %v3235, 28
    %v3365 = vpop.permute.xlu0 %3364
    %3366 = vrot.lane.b32.xlu0 %v3236, 28
    %v3367 = vpop.permute.xlu0 %3366
    %3368 = vrot.lane.b32.xlu0 %v3237, 28
    %v3369 = vpop.permute.xlu0 %3368
    %3370 = vrot.lane.b32.xlu0 %v3238, 28
    %v3371 = vpop.permute.xlu0 %3370
    %3372 = vrot.lane.b32.xlu0 %v3239, 28
    %v3373 = vpop.permute.xlu0 %3372
    %3374 = vrot.lane.b32.xlu0 %v3240, 28
    %v3375 = vpop.permute.xlu0 %3374
    %3376 = vrot.lane.b32.xlu0 %v3241, 28
    %v3377 = vpop.permute.xlu0 %3376
    %3378 = vrot.lane.b32.xlu0 %v3242, 28
    %v3379 = vpop.permute.xlu0 %3378
    %3380 = vrot.lane.b32.xlu0 %v3243, 28
    %v3381 = vpop.permute.xlu0 %3380
    %3382 = vrot.lane.b32.xlu0 %v3244, 28
    %v3383 = vpop.permute.xlu0 %3382
    %3384 = vrot.lane.b32.xlu0 %v3245, 28
    %v3385 = vpop.permute.xlu0 %3384
    %3386 = vrot.lane.b32.xlu0 %v3246, 28
    %v3387 = vpop.permute.xlu0 %3386
    %3388 = vrot.lane.b32.xlu0 %v3247, 28
    %v3389 = vpop.permute.xlu0 %3388
    %3390 = vrot.lane.b32.xlu0 %v3248, 28
    %v3391 = vpop.permute.xlu0 %3390
    %3392 = vrot.lane.b32.xlu0 %v3249, 28
    %v3393 = vpop.permute.xlu0 %3392
    %3394 = vrot.lane.b32.xlu0 %v3250, 28
    %v3395 = vpop.permute.xlu0 %3394
    %3396 = vrot.lane.b32.xlu0 %v3251, 28
    %v3397 = vpop.permute.xlu0 %3396
    %3398 = vrot.lane.b32.xlu0 %v3252, 28
    %v3399 = vpop.permute.xlu0 %3398
    %3400 = vrot.lane.b32.xlu0 %v3253, 28
    %v3401 = vpop.permute.xlu0 %3400
    %3402 = vrot.lane.b32.xlu0 %v3254, 28
    %v3403 = vpop.permute.xlu0 %3402
    %3404 = vrot.lane.b32.xlu0 %v3255, 28
    %v3405 = vpop.permute.xlu0 %3404
    %3406 = vrot.lane.b32.xlu0 %v3256, 28
    %v3407 = vpop.permute.xlu0 %3406
    %3408 = vrot.lane.b32.xlu0 %v3257, 28
    %v3409 = vpop.permute.xlu0 %3408
    %3410 = vrot.lane.b32.xlu0 %v3258, 28
    %v3411 = vpop.permute.xlu0 %3410
    %3412 = vrot.lane.b32.xlu0 %v3259, 28
    %v3413 = vpop.permute.xlu0 %3412
    %3414 = vrot.lane.b32.xlu0 %v3260, 28
    %v3415 = vpop.permute.xlu0 %3414
    %3416 = vrot.lane.b32.xlu0 %v3261, 28
    %v3417 = vpop.permute.xlu0 %3416
    %3418 = vrot.lane.b32.xlu0 %v3262, 28
    %v3419 = vpop.permute.xlu0 %3418
    %3420 = vrot.lane.b32.xlu0 %v3263, 28
    %v3421 = vpop.permute.xlu0 %3420
    %3422 = vrot.lane.b32.xlu0 %v3264, 28
    %v3423 = vpop.permute.xlu0 %3422
    %3424 = vrot.lane.b32.xlu0 %v3265, 28
    %v3425 = vpop.permute.xlu0 %3424
    %3426 = vrot.lane.b32.xlu0 %v3266, 28
    %v3427 = vpop.permute.xlu0 %3426
    %3428 = vrot.lane.b32.xlu0 %v3267, 28
    %v3429 = vpop.permute.xlu0 %3428
    %3430 = vrot.lane.b32.xlu0 %v3268, 28
    %v3431 = vpop.permute.xlu0 %3430
    %3432 = vrot.lane.b32.xlu0 %v3269, 28
    %v3433 = vpop.permute.xlu0 %3432
    %3434 = vrot.lane.b32.xlu0 %v3270, 28
    %v3435 = vpop.permute.xlu0 %3434
    %3436 = vrot.lane.b32.xlu0 %v3271, 28
    %v3437 = vpop.permute.xlu0 %3436
    %3438 = vrot.lane.b32.xlu0 %v3272, 28
    %v3439 = vpop.permute.xlu0 %3438
    %3440 = vrot.lane.b32.xlu0 %v3273, 28
    %v3441 = vpop.permute.xlu0 %3440
    %3442 = vrot.lane.b32.xlu0 %v3274, 28
    %v3443 = vpop.permute.xlu0 %3442
    %3444 = vrot.lane.b32.xlu0 %v3275, 28
    %v3445 = vpop.permute.xlu0 %3444
    %3446 = vrot.lane.b32.xlu0 %v3276, 28
    %v3447 = vpop.permute.xlu0 %3446
    %3448 = vrot.lane.b32.xlu0 %v3277, 28
    %v3449 = vpop.permute.xlu0 %3448
    %3450 = vrot.lane.b32.xlu0 %v3278, 28
    %v3451 = vpop.permute.xlu0 %3450
    %3452 = vrot.lane.b32.xlu0 %v3279, 28
    %v3453 = vpop.permute.xlu0 %3452
    %3454 = vrot.lane.b32.xlu0 %v3280, 28
    %v3455 = vpop.permute.xlu0 %3454
    %3456 = vrot.lane.b32.xlu0 %v3281, 28
    %v3457 = vpop.permute.xlu0 %3456
    %3458 = vrot.lane.b32.xlu0 %v3282, 28
    %v3459 = vpop.permute.xlu0 %3458
    %3460 = vrot.lane.b32.xlu0 %v3283, 28
    %v3461 = vpop.permute.xlu0 %3460
    %3462 = vrot.lane.b32.xlu0 %v3284, 28
    %v3463 = vpop.permute.xlu0 %3462
    %3464 = vrot.lane.b32.xlu0 %v3285, 28
    %v3465 = vpop.permute.xlu0 %3464
    %3466 = vrot.lane.b32.xlu0 %v3286, 28
    %v3467 = vpop.permute.xlu0 %3466
    %3468 = vrot.lane.b32.xlu0 %v3287, 28
    %v3469 = vpop.permute.xlu0 %3468
    %3470 = vrot.lane.b32.xlu0 %v3288, 28
    %v3471 = vpop.permute.xlu0 %3470
    %3472 = vrot.lane.b32.xlu0 %v3289, 28
    %v3473 = vpop.permute.xlu0 %3472
    %3474 = vrot.lane.b32.xlu0 %v3290, 28
    %v3475 = vpop.permute.xlu0 %3474
    %3476 = vrot.lane.b32.xlu0 %v3291, 28
    %v3477 = vpop.permute.xlu0 %3476
    %3478 = vrot.lane.b32.xlu0 %v3292, 28
    %v3479 = vpop.permute.xlu0 %3478
    %3480 = vrot.lane.b32.xlu0 %v3293, 28
    %v3481 = vpop.permute.xlu0 %3480
    %3482 = vrot.lane.b32.xlu0 %v3294, 28
    %v3483 = vpop.permute.xlu0 %3482
    %3484 = vrot.lane.b32.xlu0 %v3295, 28
    %v3485 = vpop.permute.xlu0 %3484
    %3486 = vrot.lane.b32.xlu0 %v3296, 28
    %v3487 = vpop.permute.xlu0 %3486
    %3488 = vrot.lane.b32.xlu0 %v3297, 28
    %v3489 = vpop.permute.xlu0 %3488
    %vm3554 = vcmask 257248
    %3555 = vst.msk [vmem:[#allocation4] sm:$0xf] %vm3554, %v3363
    %3556 = vst.msk [vmem:[#allocation4 + $0x4] sm:$0xf] %vm3554, %v3365
    %3557 = vst.msk [vmem:[#allocation4 + $0x8] sm:$0xf] %vm3554, %v3367
    %3558 = vst.msk [vmem:[#allocation4 + $0xc] sm:$0xf] %vm3554, %v3369
    %3559 = vst.msk [vmem:[#allocation4 + $0x10] sm:$0xf] %vm3554, %v3371
    %3560 = vst.msk [vmem:[#allocation4 + $0x14] sm:$0xf] %vm3554, %v3373
    %3561 = vst.msk [vmem:[#allocation4 + $0x18] sm:$0xf] %vm3554, %v3375
    %3562 = vst.msk [vmem:[#allocation4 + $0x1c] sm:$0xf] %vm3554, %v3377
    %3563 = vst.msk [vmem:[#allocation4 + $0x20] sm:$0xf] %vm3554, %v3379
    %3564 = vst.msk [vmem:[#allocation4 + $0x24] sm:$0xf] %vm3554, %v3381
    %3565 = vst.msk [vmem:[#allocation4 + $0x28] sm:$0xf] %vm3554, %v3383
    %3566 = vst.msk [vmem:[#allocation4 + $0x2c] sm:$0xf] %vm3554, %v3385
    %3567 = vst.msk [vmem:[#allocation4 + $0x30] sm:$0xf] %vm3554, %v3387
    %3568 = vst.msk [vmem:[#allocation4 + $0x34] sm:$0xf] %vm3554, %v3389
    %3569 = vst.msk [vmem:[#allocation4 + $0x38] sm:$0xf] %vm3554, %v3391
    %3570 = vst.msk [vmem:[#allocation4 + $0x3c] sm:$0xf] %vm3554, %v3393
    %3571 = vst.msk [vmem:[#allocation4 + $0x40] sm:$0xf] %vm3554, %v3395
    %3572 = vst.msk [vmem:[#allocation4 + $0x44] sm:$0xf] %vm3554, %v3397
    %3573 = vst.msk [vmem:[#allocation4 + $0x48] sm:$0xf] %vm3554, %v3399
    %3574 = vst.msk [vmem:[#allocation4 + $0x4c] sm:$0xf] %vm3554, %v3401
    %3575 = vst.msk [vmem:[#allocation4 + $0x50] sm:$0xf] %vm3554, %v3403
    %3576 = vst.msk [vmem:[#allocation4 + $0x54] sm:$0xf] %vm3554, %v3405
    %3577 = vst.msk [vmem:[#allocation4 + $0x58] sm:$0xf] %vm3554, %v3407
    %3578 = vst.msk [vmem:[#allocation4 + $0x5c] sm:$0xf] %vm3554, %v3409
    %3579 = vst.msk [vmem:[#allocation4 + $0x60] sm:$0xf] %vm3554, %v3411
    %3580 = vst.msk [vmem:[#allocation4 + $0x64] sm:$0xf] %vm3554, %v3413
    %3581 = vst.msk [vmem:[#allocation4 + $0x68] sm:$0xf] %vm3554, %v3415
    %3582 = vst.msk [vmem:[#allocation4 + $0x6c] sm:$0xf] %vm3554, %v3417
    %3583 = vst.msk [vmem:[#allocation4 + $0x70] sm:$0xf] %vm3554, %v3419
    %3584 = vst.msk [vmem:[#allocation4 + $0x74] sm:$0xf] %vm3554, %v3421
    %3585 = vst.msk [vmem:[#allocation4 + $0x78] sm:$0xf] %vm3554, %v3423
    %3586 = vst.msk [vmem:[#allocation4 + $0x7c] sm:$0xf] %vm3554, %v3425
    %3587 = vst.msk [vmem:[#allocation4 + $0x80] sm:$0xf] %vm3554, %v3427
    %3588 = vst.msk [vmem:[#allocation4 + $0x84] sm:$0xf] %vm3554, %v3429
    %3589 = vst.msk [vmem:[#allocation4 + $0x88] sm:$0xf] %vm3554, %v3431
    %3590 = vst.msk [vmem:[#allocation4 + $0x8c] sm:$0xf] %vm3554, %v3433
    %3591 = vst.msk [vmem:[#allocation4 + $0x90] sm:$0xf] %vm3554, %v3435
    %3592 = vst.msk [vmem:[#allocation4 + $0x94] sm:$0xf] %vm3554, %v3437
    %3593 = vst.msk [vmem:[#allocation4 + $0x98] sm:$0xf] %vm3554, %v3439
    %3594 = vst.msk [vmem:[#allocation4 + $0x9c] sm:$0xf] %vm3554, %v3441
    %3595 = vst.msk [vmem:[#allocation4 + $0xa0] sm:$0xf] %vm3554, %v3443
    %3596 = vst.msk [vmem:[#allocation4 + $0xa4] sm:$0xf] %vm3554, %v3445
    %3597 = vst.msk [vmem:[#allocation4 + $0xa8] sm:$0xf] %vm3554, %v3447
    %3598 = vst.msk [vmem:[#allocation4 + $0xac] sm:$0xf] %vm3554, %v3449
    %3599 = vst.msk [vmem:[#allocation4 + $0xb0] sm:$0xf] %vm3554, %v3451
    %3600 = vst.msk [vmem:[#allocation4 + $0xb4] sm:$0xf] %vm3554, %v3453
    %3601 = vst.msk [vmem:[#allocation4 + $0xb8] sm:$0xf] %vm3554, %v3455
    %3602 = vst.msk [vmem:[#allocation4 + $0xbc] sm:$0xf] %vm3554, %v3457
    %3603 = vst.msk [vmem:[#allocation4 + $0xc0] sm:$0xf] %vm3554, %v3459
    %3604 = vst.msk [vmem:[#allocation4 + $0xc4] sm:$0xf] %vm3554, %v3461
    %3605 = vst.msk [vmem:[#allocation4 + $0xc8] sm:$0xf] %vm3554, %v3463
    %3606 = vst.msk [vmem:[#allocation4 + $0xcc] sm:$0xf] %vm3554, %v3465
    %3607 = vst.msk [vmem:[#allocation4 + $0xd0] sm:$0xf] %vm3554, %v3467
    %3608 = vst.msk [vmem:[#allocation4 + $0xd4] sm:$0xf] %vm3554, %v3469
    %3609 = vst.msk [vmem:[#allocation4 + $0xd8] sm:$0xf] %vm3554, %v3471
    %3610 = vst.msk [vmem:[#allocation4 + $0xdc] sm:$0xf] %vm3554, %v3473
    %3611 = vst.msk [vmem:[#allocation4 + $0xe0] sm:$0xf] %vm3554, %v3475
    %3612 = vst.msk [vmem:[#allocation4 + $0xe4] sm:$0xf] %vm3554, %v3477
    %3613 = vst.msk [vmem:[#allocation4 + $0xe8] sm:$0xf] %vm3554, %v3479
    %3614 = vst.msk [vmem:[#allocation4 + $0xec] sm:$0xf] %vm3554, %v3481
    %3615 = vst.msk [vmem:[#allocation4 + $0xf0] sm:$0xf] %vm3554, %v3483
    %3616 = vst.msk [vmem:[#allocation4 + $0xf4] sm:$0xf] %vm3554, %v3485
    %3617 = vst.msk [vmem:[#allocation4 + $0xf8] sm:$0xf] %vm3554, %v3487
    %3618 = vst.msk [vmem:[#allocation4 + $0xfc] sm:$0xf] %vm3554, %v3489
    %v3619 = vld [vmem:[%s2720 + $0x2] sm:$0xff]
    %v3620 = vld [vmem:[%s2720 + $0xa] sm:$0xff]
    %v3621 = vld [vmem:[%s2720 + $0x1a] sm:$0xff]
    %v3622 = vld [vmem:[%s2720 + $0x22] sm:$0xff]
    %v3623 = vld [vmem:[%s2720 + $0x32] sm:$0xff]
    %v3624 = vld [vmem:[%s2720 + $0x3a] sm:$0xff]
    %v3625 = vld [vmem:[%s2720 + $0x4a] sm:$0xff]
    %v3626 = vld [vmem:[%s2720 + $0x52] sm:$0xff]
    %v3627 = vld [vmem:[%s2720 + $0x62] sm:$0xff]
    %v3628 = vld [vmem:[%s2720 + $0x6a] sm:$0xff]
    %v3629 = vld [vmem:[%s2720 + $0x7a] sm:$0xff]
    %v3630 = vld [vmem:[%s2720 + $0x82] sm:$0xff]
    %v3631 = vld [vmem:[%s2720 + $0x92] sm:$0xff]
    %v3632 = vld [vmem:[%s2720 + $0x9a] sm:$0xff]
    %v3633 = vld [vmem:[%s2720 + $0xaa] sm:$0xff]
    %v3634 = vld [vmem:[%s2720 + $0xb2] sm:$0xff]
    %v3635 = vld [vmem:[%s2720 + $0xc2] sm:$0xff]
    %v3636 = vld [vmem:[%s2720 + $0xca] sm:$0xff]
    %v3637 = vld [vmem:[%s2720 + $0xda] sm:$0xff]
    %v3638 = vld [vmem:[%s2720 + $0xe2] sm:$0xff]
    %v3639 = vld [vmem:[%s2720 + $0xf2] sm:$0xff]
    %v3640 = vld [vmem:[%s2720 + $0xfa] sm:$0xff]
    %v3641 = vld [vmem:[%s2720 + $0x10a] sm:$0xff]
    %v3642 = vld [vmem:[%s2720 + $0x112] sm:$0xff]
    %v3643 = vld [vmem:[%s2720 + $0x122] sm:$0xff]
    %v3644 = vld [vmem:[%s2720 + $0x12a] sm:$0xff]
    %v3645 = vld [vmem:[%s2720 + $0x13a] sm:$0xff]
    %v3646 = vld [vmem:[%s2720 + $0x142] sm:$0xff]
    %v3647 = vld [vmem:[%s2720 + $0x152] sm:$0xff]
    %v3648 = vld [vmem:[%s2720 + $0x15a] sm:$0xff]
    %v3649 = vld [vmem:[%s2720 + $0x16a] sm:$0xff]
    %v3650 = vld [vmem:[%s2720 + $0x172] sm:$0xff]
    %v3651 = vld [vmem:[%s2720 + $0x1b2] sm:$0xff]
    %v3652 = vld [vmem:[%s2720 + $0x1ba] sm:$0xff]
    %v3653 = vld [vmem:[%s2720 + $0x1ca] sm:$0xff]
    %v3654 = vld [vmem:[%s2720 + $0x1d2] sm:$0xff]
    %v3655 = vld [vmem:[%s2720 + $0x1e2] sm:$0xff]
    %v3656 = vld [vmem:[%s2720 + $0x1ea] sm:$0xff]
    %v3657 = vld [vmem:[%s2720 + $0x1fa] sm:$0xff]
    %v3658 = vld [vmem:[%s2720 + $0x202] sm:$0xff]
    %v3659 = vld [vmem:[%s2720 + $0x212] sm:$0xff]
    %v3660 = vld [vmem:[%s2720 + $0x21a] sm:$0xff]
    %v3661 = vld [vmem:[%s2720 + $0x22a] sm:$0xff]
    %v3662 = vld [vmem:[%s2720 + $0x232] sm:$0xff]
    %v3663 = vld [vmem:[%s2720 + $0x242] sm:$0xff]
    %v3664 = vld [vmem:[%s2720 + $0x24a] sm:$0xff]
    %v3665 = vld [vmem:[%s2720 + $0x25a] sm:$0xff]
    %v3666 = vld [vmem:[%s2720 + $0x262] sm:$0xff]
    %v3667 = vld [vmem:[%s2720 + $0x272] sm:$0xff]
    %v3668 = vld [vmem:[%s2720 + $0x27a] sm:$0xff]
    %v3669 = vld [vmem:[%s2720 + $0x28a] sm:$0xff]
    %v3670 = vld [vmem:[%s2720 + $0x292] sm:$0xff]
    %v3671 = vld [vmem:[%s2720 + $0x2a2] sm:$0xff]
    %v3672 = vld [vmem:[%s2720 + $0x2aa] sm:$0xff]
    %v3673 = vld [vmem:[%s2720 + $0x2ba] sm:$0xff]
    %v3674 = vld [vmem:[%s2720 + $0x2c2] sm:$0xff]
    %v3675 = vld [vmem:[%s2720 + $0x2d2] sm:$0xff]
    %v3676 = vld [vmem:[%s2720 + $0x2da] sm:$0xff]
    %v3677 = vld [vmem:[%s2720 + $0x2ea] sm:$0xff]
    %v3678 = vld [vmem:[%s2720 + $0x2f2] sm:$0xff]
    %v3679 = vld [vmem:[%s2720 + $0x302] sm:$0xff]
    %v3680 = vld [vmem:[%s2720 + $0x30a] sm:$0xff]
    %v3681 = vld [vmem:[%s2720 + $0x31a] sm:$0xff]
    %v3682 = vld [vmem:[%s2720 + $0x322] sm:$0xff]
    %v3683 = vpack.c.bf16 %v3619, %v3619
    %v3684 = vpack.c.bf16 %v3620, %v3620
    %v3685 = vpack.c.bf16 %v3621, %v3621
    %v3686 = vpack.c.bf16 %v3622, %v3622
    %v3687 = vpack.c.bf16 %v3623, %v3623
    %v3688 = vpack.c.bf16 %v3624, %v3624
    %v3689 = vpack.c.bf16 %v3625, %v3625
    %v3690 = vpack.c.bf16 %v3626, %v3626
    %v3691 = vpack.c.bf16 %v3627, %v3627
    %v3692 = vpack.c.bf16 %v3628, %v3628
    %v3693 = vpack.c.bf16 %v3629, %v3629
    %v3694 = vpack.c.bf16 %v3630, %v3630
    %v3695 = vpack.c.bf16 %v3631, %v3631
    %v3696 = vpack.c.bf16 %v3632, %v3632
    %v3697 = vpack.c.bf16 %v3633, %v3633
    %v3698 = vpack.c.bf16 %v3634, %v3634
    %v3699 = vpack.c.bf16 %v3635, %v3635
    %v3700 = vpack.c.bf16 %v3636, %v3636
    %v3701 = vpack.c.bf16 %v3637, %v3637
    %v3702 = vpack.c.bf16 %v3638, %v3638
    %v3703 = vpack.c.bf16 %v3639, %v3639
    %v3704 = vpack.c.bf16 %v3640, %v3640
    %v3705 = vpack.c.bf16 %v3641, %v3641
    %v3706 = vpack.c.bf16 %v3642, %v3642
    %v3707 = vpack.c.bf16 %v3643, %v3643
    %v3708 = vpack.c.bf16 %v3644, %v3644
    %v3709 = vpack.c.bf16 %v3645, %v3645
    %v3710 = vpack.c.bf16 %v3646, %v3646
    %v3711 = vpack.c.bf16 %v3647, %v3647
    %v3712 = vpack.c.bf16 %v3648, %v3648
    %v3713 = vpack.c.bf16 %v3649, %v3649
    %v3714 = vpack.c.bf16 %v3650, %v3650
    %v3715 = vpack.c.bf16 %v3651, %v3651
    %v3716 = vpack.c.bf16 %v3652, %v3652
    %v3717 = vpack.c.bf16 %v3653, %v3653
    %v3718 = vpack.c.bf16 %v3654, %v3654
    %v3719 = vpack.c.bf16 %v3655, %v3655
    %v3720 = vpack.c.bf16 %v3656, %v3656
    %v3721 = vpack.c.bf16 %v3657, %v3657
    %v3722 = vpack.c.bf16 %v3658, %v3658
    %v3723 = vpack.c.bf16 %v3659, %v3659
    %v3724 = vpack.c.bf16 %v3660, %v3660
    %v3725 = vpack.c.bf16 %v3661, %v3661
    %v3726 = vpack.c.bf16 %v3662, %v3662
    %v3727 = vpack.c.bf16 %v3663, %v3663
    %v3728 = vpack.c.bf16 %v3664, %v3664
    %v3729 = vpack.c.bf16 %v3665, %v3665
    %v3730 = vpack.c.bf16 %v3666, %v3666
    %v3731 = vpack.c.bf16 %v3667, %v3667
    %v3732 = vpack.c.bf16 %v3668, %v3668
    %v3733 = vpack.c.bf16 %v3669, %v3669
    %v3734 = vpack.c.bf16 %v3670, %v3670
    %v3735 = vpack.c.bf16 %v3671, %v3671
    %v3736 = vpack.c.bf16 %v3672, %v3672
    %v3737 = vpack.c.bf16 %v3673, %v3673
    %v3738 = vpack.c.bf16 %v3674, %v3674
    %v3739 = vpack.c.bf16 %v3675, %v3675
    %v3740 = vpack.c.bf16 %v3676, %v3676
    %v3741 = vpack.c.bf16 %v3677, %v3677
    %v3742 = vpack.c.bf16 %v3678, %v3678
    %v3743 = vpack.c.bf16 %v3679, %v3679
    %v3744 = vpack.c.bf16 %v3680, %v3680
    %v3745 = vpack.c.bf16 %v3681, %v3681
    %v3746 = vpack.c.bf16 %v3682, %v3682
    %3811 = vrot.lane.b32.xlu0 %v3683, 32
    %v3812 = vpop.permute.xlu0 %3811
    %3813 = vrot.lane.b32.xlu0 %v3684, 32
    %v3814 = vpop.permute.xlu0 %3813
    %3815 = vrot.lane.b32.xlu0 %v3685, 32
    %v3816 = vpop.permute.xlu0 %3815
    %3817 = vrot.lane.b32.xlu0 %v3686, 32
    %v3818 = vpop.permute.xlu0 %3817
    %3819 = vrot.lane.b32.xlu0 %v3687, 32
    %v3820 = vpop.permute.xlu0 %3819
    %3821 = vrot.lane.b32.xlu0 %v3688, 32
    %v3822 = vpop.permute.xlu0 %3821
    %3823 = vrot.lane.b32.xlu0 %v3689, 32
    %v3824 = vpop.permute.xlu0 %3823
    %3825 = vrot.lane.b32.xlu0 %v3690, 32
    %v3826 = vpop.permute.xlu0 %3825
    %3827 = vrot.lane.b32.xlu0 %v3691, 32
    %v3828 = vpop.permute.xlu0 %3827
    %3829 = vrot.lane.b32.xlu0 %v3692, 32
    %v3830 = vpop.permute.xlu0 %3829
    %3831 = vrot.lane.b32.xlu0 %v3693, 32
    %v3832 = vpop.permute.xlu0 %3831
    %3833 = vrot.lane.b32.xlu0 %v3694, 32
    %v3834 = vpop.permute.xlu0 %3833
    %3835 = vrot.lane.b32.xlu0 %v3695, 32
    %v3836 = vpop.permute.xlu0 %3835
    %3837 = vrot.lane.b32.xlu0 %v3696, 32
    %v3838 = vpop.permute.xlu0 %3837
    %3839 = vrot.lane.b32.xlu0 %v3697, 32
    %v3840 = vpop.permute.xlu0 %3839
    %3841 = vrot.lane.b32.xlu0 %v3698, 32
    %v3842 = vpop.permute.xlu0 %3841
    %3843 = vrot.lane.b32.xlu0 %v3699, 32
    %v3844 = vpop.permute.xlu0 %3843
    %3845 = vrot.lane.b32.xlu0 %v3700, 32
    %v3846 = vpop.permute.xlu0 %3845
    %3847 = vrot.lane.b32.xlu0 %v3701, 32
    %v3848 = vpop.permute.xlu0 %3847
    %3849 = vrot.lane.b32.xlu0 %v3702, 32
    %v3850 = vpop.permute.xlu0 %3849
    %3851 = vrot.lane.b32.xlu0 %v3703, 32
    %v3852 = vpop.permute.xlu0 %3851
    %3853 = vrot.lane.b32.xlu0 %v3704, 32
    %v3854 = vpop.permute.xlu0 %3853
    %3855 = vrot.lane.b32.xlu0 %v3705, 32
    %v3856 = vpop.permute.xlu0 %3855
    %3857 = vrot.lane.b32.xlu0 %v3706, 32
    %v3858 = vpop.permute.xlu0 %3857
    %3859 = vrot.lane.b32.xlu0 %v3707, 32
    %v3860 = vpop.permute.xlu0 %3859
    %3861 = vrot.lane.b32.xlu0 %v3708, 32
    %v3862 = vpop.permute.xlu0 %3861
    %3863 = vrot.lane.b32.xlu0 %v3709, 32
    %v3864 = vpop.permute.xlu0 %3863
    %3865 = vrot.lane.b32.xlu0 %v3710, 32
    %v3866 = vpop.permute.xlu0 %3865
    %3867 = vrot.lane.b32.xlu0 %v3711, 32
    %v3868 = vpop.permute.xlu0 %3867
    %3869 = vrot.lane.b32.xlu0 %v3712, 32
    %v3870 = vpop.permute.xlu0 %3869
    %3871 = vrot.lane.b32.xlu0 %v3713, 32
    %v3872 = vpop.permute.xlu0 %3871
    %3873 = vrot.lane.b32.xlu0 %v3714, 32
    %v3874 = vpop.permute.xlu0 %3873
    %3875 = vrot.lane.b32.xlu0 %v3715, 32
    %v3876 = vpop.permute.xlu0 %3875
    %3877 = vrot.lane.b32.xlu0 %v3716, 32
    %v3878 = vpop.permute.xlu0 %3877
    %3879 = vrot.lane.b32.xlu0 %v3717, 32
    %v3880 = vpop.permute.xlu0 %3879
    %3881 = vrot.lane.b32.xlu0 %v3718, 32
    %v3882 = vpop.permute.xlu0 %3881
    %3883 = vrot.lane.b32.xlu0 %v3719, 32
    %v3884 = vpop.permute.xlu0 %3883
    %3885 = vrot.lane.b32.xlu0 %v3720, 32
    %v3886 = vpop.permute.xlu0 %3885
    %3887 = vrot.lane.b32.xlu0 %v3721, 32
    %v3888 = vpop.permute.xlu0 %3887
    %3889 = vrot.lane.b32.xlu0 %v3722, 32
    %v3890 = vpop.permute.xlu0 %3889
    %3891 = vrot.lane.b32.xlu0 %v3723, 32
    %v3892 = vpop.permute.xlu0 %3891
    %3893 = vrot.lane.b32.xlu0 %v3724, 32
    %v3894 = vpop.permute.xlu0 %3893
    %3895 = vrot.lane.b32.xlu0 %v3725, 32
    %v3896 = vpop.permute.xlu0 %3895
    %3897 = vrot.lane.b32.xlu0 %v3726, 32
    %v3898 = vpop.permute.xlu0 %3897
    %3899 = vrot.lane.b32.xlu0 %v3727, 32
    %v3900 = vpop.permute.xlu0 %3899
    %3901 = vrot.lane.b32.xlu0 %v3728, 32
    %v3902 = vpop.permute.xlu0 %3901
    %3903 = vrot.lane.b32.xlu0 %v3729, 32
    %v3904 = vpop.permute.xlu0 %3903
    %3905 = vrot.lane.b32.xlu0 %v3730, 32
    %v3906 = vpop.permute.xlu0 %3905
    %3907 = vrot.lane.b32.xlu0 %v3731, 32
    %v3908 = vpop.permute.xlu0 %3907
    %3909 = vrot.lane.b32.xlu0 %v3732, 32
    %v3910 = vpop.permute.xlu0 %3909
    %3911 = vrot.lane.b32.xlu0 %v3733, 32
    %v3912 = vpop.permute.xlu0 %3911
    %3913 = vrot.lane.b32.xlu0 %v3734, 32
    %v3914 = vpop.permute.xlu0 %3913
    %3915 = vrot.lane.b32.xlu0 %v3735, 32
    %v3916 = vpop.permute.xlu0 %3915
    %3917 = vrot.lane.b32.xlu0 %v3736, 32
    %v3918 = vpop.permute.xlu0 %3917
    %3919 = vrot.lane.b32.xlu0 %v3737, 32
    %v3920 = vpop.permute.xlu0 %3919
    %3921 = vrot.lane.b32.xlu0 %v3738, 32
    %v3922 = vpop.permute.xlu0 %3921
    %3923 = vrot.lane.b32.xlu0 %v3739, 32
    %v3924 = vpop.permute.xlu0 %3923
    %3925 = vrot.lane.b32.xlu0 %v3740, 32
    %v3926 = vpop.permute.xlu0 %3925
    %3927 = vrot.lane.b32.xlu0 %v3741, 32
    %v3928 = vpop.permute.xlu0 %3927
    %3929 = vrot.lane.b32.xlu0 %v3742, 32
    %v3930 = vpop.permute.xlu0 %3929
    %3931 = vrot.lane.b32.xlu0 %v3743, 32
    %v3932 = vpop.permute.xlu0 %3931
    %3933 = vrot.lane.b32.xlu0 %v3744, 32
    %v3934 = vpop.permute.xlu0 %3933
    %3935 = vrot.lane.b32.xlu0 %v3745, 32
    %v3936 = vpop.permute.xlu0 %3935
    %3937 = vrot.lane.b32.xlu0 %v3746, 32
    %v3938 = vpop.permute.xlu0 %3937
    %vm4003 = vcmask 290048
    %4004 = vst.msk [vmem:[#allocation4] sm:$0xf] %vm4003, %v3812
    %4005 = vst.msk [vmem:[#allocation4 + $0x4] sm:$0xf] %vm4003, %v3814
    %4006 = vst.msk [vmem:[#allocation4 + $0x8] sm:$0xf] %vm4003, %v3816
    %4007 = vst.msk [vmem:[#allocation4 + $0xc] sm:$0xf] %vm4003, %v3818
    %4008 = vst.msk [vmem:[#allocation4 + $0x10] sm:$0xf] %vm4003, %v3820
    %4009 = vst.msk [vmem:[#allocation4 + $0x14] sm:$0xf] %vm4003, %v3822
    %4010 = vst.msk [vmem:[#allocation4 + $0x18] sm:$0xf] %vm4003, %v3824
    %4011 = vst.msk [vmem:[#allocation4 + $0x1c] sm:$0xf] %vm4003, %v3826
    %4012 = vst.msk [vmem:[#allocation4 + $0x20] sm:$0xf] %vm4003, %v3828
    %4013 = vst.msk [vmem:[#allocation4 + $0x24] sm:$0xf] %vm4003, %v3830
    %4014 = vst.msk [vmem:[#allocation4 + $0x28] sm:$0xf] %vm4003, %v3832
    %4015 = vst.msk [vmem:[#allocation4 + $0x2c] sm:$0xf] %vm4003, %v3834
    %4016 = vst.msk [vmem:[#allocation4 + $0x30] sm:$0xf] %vm4003, %v3836
    %4017 = vst.msk [vmem:[#allocation4 + $0x34] sm:$0xf] %vm4003, %v3838
    %4018 = vst.msk [vmem:[#allocation4 + $0x38] sm:$0xf] %vm4003, %v3840
    %4019 = vst.msk [vmem:[#allocation4 + $0x3c] sm:$0xf] %vm4003, %v3842
    %4020 = vst.msk [vmem:[#allocation4 + $0x40] sm:$0xf] %vm4003, %v3844
    %4021 = vst.msk [vmem:[#allocation4 + $0x44] sm:$0xf] %vm4003, %v3846
    %4022 = vst.msk [vmem:[#allocation4 + $0x48] sm:$0xf] %vm4003, %v3848
    %4023 = vst.msk [vmem:[#allocation4 + $0x4c] sm:$0xf] %vm4003, %v3850
    %4024 = vst.msk [vmem:[#allocation4 + $0x50] sm:$0xf] %vm4003, %v3852
    %4025 = vst.msk [vmem:[#allocation4 + $0x54] sm:$0xf] %vm4003, %v3854
    %4026 = vst.msk [vmem:[#allocation4 + $0x58] sm:$0xf] %vm4003, %v3856
    %4027 = vst.msk [vmem:[#allocation4 + $0x5c] sm:$0xf] %vm4003, %v3858
    %4028 = vst.msk [vmem:[#allocation4 + $0x60] sm:$0xf] %vm4003, %v3860
    %4029 = vst.msk [vmem:[#allocation4 + $0x64] sm:$0xf] %vm4003, %v3862
    %4030 = vst.msk [vmem:[#allocation4 + $0x68] sm:$0xf] %vm4003, %v3864
    %4031 = vst.msk [vmem:[#allocation4 + $0x6c] sm:$0xf] %vm4003, %v3866
    %4032 = vst.msk [vmem:[#allocation4 + $0x70] sm:$0xf] %vm4003, %v3868
    %4033 = vst.msk [vmem:[#allocation4 + $0x74] sm:$0xf] %vm4003, %v3870
    %4034 = vst.msk [vmem:[#allocation4 + $0x78] sm:$0xf] %vm4003, %v3872
    %4035 = vst.msk [vmem:[#allocation4 + $0x7c] sm:$0xf] %vm4003, %v3874
    %4036 = vst.msk [vmem:[#allocation4 + $0x80] sm:$0xf] %vm4003, %v3876
    %4037 = vst.msk [vmem:[#allocation4 + $0x84] sm:$0xf] %vm4003, %v3878
    %4038 = vst.msk [vmem:[#allocation4 + $0x88] sm:$0xf] %vm4003, %v3880
    %4039 = vst.msk [vmem:[#allocation4 + $0x8c] sm:$0xf] %vm4003, %v3882
    %4040 = vst.msk [vmem:[#allocation4 + $0x90] sm:$0xf] %vm4003, %v3884
    %4041 = vst.msk [vmem:[#allocation4 + $0x94] sm:$0xf] %vm4003, %v3886
    %4042 = vst.msk [vmem:[#allocation4 + $0x98] sm:$0xf] %vm4003, %v3888
    %4043 = vst.msk [vmem:[#allocation4 + $0x9c] sm:$0xf] %vm4003, %v3890
    %4044 = vst.msk [vmem:[#allocation4 + $0xa0] sm:$0xf] %vm4003, %v3892
    %4045 = vst.msk [vmem:[#allocation4 + $0xa4] sm:$0xf] %vm4003, %v3894
    %4046 = vst.msk [vmem:[#allocation4 + $0xa8] sm:$0xf] %vm4003, %v3896
    %4047 = vst.msk [vmem:[#allocation4 + $0xac] sm:$0xf] %vm4003, %v3898
    %4048 = vst.msk [vmem:[#allocation4 + $0xb0] sm:$0xf] %vm4003, %v3900
    %4049 = vst.msk [vmem:[#allocation4 + $0xb4] sm:$0xf] %vm4003, %v3902
    %4050 = vst.msk [vmem:[#allocation4 + $0xb8] sm:$0xf] %vm4003, %v3904
    %4051 = vst.msk [vmem:[#allocation4 + $0xbc] sm:$0xf] %vm4003, %v3906
    %4052 = vst.msk [vmem:[#allocation4 + $0xc0] sm:$0xf] %vm4003, %v3908
    %4053 = vst.msk [vmem:[#allocation4 + $0xc4] sm:$0xf] %vm4003, %v3910
    %4054 = vst.msk [vmem:[#allocation4 + $0xc8] sm:$0xf] %vm4003, %v3912
    %4055 = vst.msk [vmem:[#allocation4 + $0xcc] sm:$0xf] %vm4003, %v3914
    %4056 = vst.msk [vmem:[#allocation4 + $0xd0] sm:$0xf] %vm4003, %v3916
    %4057 = vst.msk [vmem:[#allocation4 + $0xd4] sm:$0xf] %vm4003, %v3918
    %4058 = vst.msk [vmem:[#allocation4 + $0xd8] sm:$0xf] %vm4003, %v3920
    %4059 = vst.msk [vmem:[#allocation4 + $0xdc] sm:$0xf] %vm4003, %v3922
    %4060 = vst.msk [vmem:[#allocation4 + $0xe0] sm:$0xf] %vm4003, %v3924
    %4061 = vst.msk [vmem:[#allocation4 + $0xe4] sm:$0xf] %vm4003, %v3926
    %4062 = vst.msk [vmem:[#allocation4 + $0xe8] sm:$0xf] %vm4003, %v3928
    %4063 = vst.msk [vmem:[#allocation4 + $0xec] sm:$0xf] %vm4003, %v3930
    %4064 = vst.msk [vmem:[#allocation4 + $0xf0] sm:$0xf] %vm4003, %v3932
    %4065 = vst.msk [vmem:[#allocation4 + $0xf4] sm:$0xf] %vm4003, %v3934
    %4066 = vst.msk [vmem:[#allocation4 + $0xf8] sm:$0xf] %vm4003, %v3936
    %4067 = vst.msk [vmem:[#allocation4 + $0xfc] sm:$0xf] %vm4003, %v3938
    %v4068 = vld [vmem:[#allocation4] sm:$0xf]
    %v4069 = vld [vmem:[#allocation4 + $0x4] sm:$0xf]
    %v4070 = vld [vmem:[#allocation4 + $0x8] sm:$0xf]
    %v4071 = vld [vmem:[#allocation4 + $0xc] sm:$0xf]
    %v4072 = vld [vmem:[#allocation4 + $0x10] sm:$0xf]
    %v4073 = vld [vmem:[#allocation4 + $0x14] sm:$0xf]
    %v4074 = vld [vmem:[#allocation4 + $0x18] sm:$0xf]
    %v4075 = vld [vmem:[#allocation4 + $0x1c] sm:$0xf]
    %v4076 = vld [vmem:[#allocation4 + $0x20] sm:$0xf]
    %v4077 = vld [vmem:[#allocation4 + $0x24] sm:$0xf]
    %v4078 = vld [vmem:[#allocation4 + $0x28] sm:$0xf]
    %v4079 = vld [vmem:[#allocation4 + $0x2c] sm:$0xf]
    %v4080 = vld [vmem:[#allocation4 + $0x30] sm:$0xf]
    %v4081 = vld [vmem:[#allocation4 + $0x34] sm:$0xf]
    %v4082 = vld [vmem:[#allocation4 + $0x38] sm:$0xf]
    %v4083 = vld [vmem:[#allocation4 + $0x3c] sm:$0xf]
    %v4084 = vld [vmem:[#allocation4 + $0x40] sm:$0xf]
    %v4085 = vld [vmem:[#allocation4 + $0x44] sm:$0xf]
    %v4086 = vld [vmem:[#allocation4 + $0x48] sm:$0xf]
    %v4087 = vld [vmem:[#allocation4 + $0x4c] sm:$0xf]
    %v4088 = vld [vmem:[#allocation4 + $0x50] sm:$0xf]
    %v4089 = vld [vmem:[#allocation4 + $0x54] sm:$0xf]
    %v4090 = vld [vmem:[#allocation4 + $0x58] sm:$0xf]
    %v4091 = vld [vmem:[#allocation4 + $0x5c] sm:$0xf]
    %v4092 = vld [vmem:[#allocation4 + $0x60] sm:$0xf]
    %v4093 = vld [vmem:[#allocation4 + $0x64] sm:$0xf]
    %v4094 = vld [vmem:[#allocation4 + $0x68] sm:$0xf]
    %v4095 = vld [vmem:[#allocation4 + $0x6c] sm:$0xf]
    %v4096 = vld [vmem:[#allocation4 + $0x70] sm:$0xf]
    %v4097 = vld [vmem:[#allocation4 + $0x74] sm:$0xf]
    %v4098 = vld [vmem:[#allocation4 + $0x78] sm:$0xf]
    %v4099 = vld [vmem:[#allocation4 + $0x7c] sm:$0xf]
    %v4100 = vld [vmem:[#allocation4 + $0x80] sm:$0xf]
    %v4101 = vld [vmem:[#allocation4 + $0x84] sm:$0xf]
    %v4102 = vld [vmem:[#allocation4 + $0x88] sm:$0xf]
    %v4103 = vld [vmem:[#allocation4 + $0x8c] sm:$0xf]
    %v4104 = vld [vmem:[#allocation4 + $0x90] sm:$0xf]
    %v4105 = vld [vmem:[#allocation4 + $0x94] sm:$0xf]
    %v4106 = vld [vmem:[#allocation4 + $0x98] sm:$0xf]
    %v4107 = vld [vmem:[#allocation4 + $0x9c] sm:$0xf]
    %v4108 = vld [vmem:[#allocation4 + $0xa0] sm:$0xf]
    %v4109 = vld [vmem:[#allocation4 + $0xa4] sm:$0xf]
    %v4110 = vld [vmem:[#allocation4 + $0xa8] sm:$0xf]
    %v4111 = vld [vmem:[#allocation4 + $0xac] sm:$0xf]
    %v4112 = vld [vmem:[#allocation4 + $0xb0] sm:$0xf]
    %v4113 = vld [vmem:[#allocation4 + $0xb4] sm:$0xf]
    %v4114 = vld [vmem:[#allocation4 + $0xb8] sm:$0xf]
    %v4115 = vld [vmem:[#allocation4 + $0xbc] sm:$0xf]
    %v4116 = vld [vmem:[#allocation4 + $0xc0] sm:$0xf]
    %v4117 = vld [vmem:[#allocation4 + $0xc4] sm:$0xf]
    %v4118 = vld [vmem:[#allocation4 + $0xc8] sm:$0xf]
    %v4119 = vld [vmem:[#allocation4 + $0xcc] sm:$0xf]
    %v4120 = vld [vmem:[#allocation4 + $0xd0] sm:$0xf]
    %v4121 = vld [vmem:[#allocation4 + $0xd4] sm:$0xf]
    %v4122 = vld [vmem:[#allocation4 + $0xd8] sm:$0xf]
    %v4123 = vld [vmem:[#allocation4 + $0xdc] sm:$0xf]
    %v4124 = vld [vmem:[#allocation4 + $0xe0] sm:$0xf]
    %v4125 = vld [vmem:[#allocation4 + $0xe4] sm:$0xf]
    %v4126 = vld [vmem:[#allocation4 + $0xe8] sm:$0xf]
    %v4127 = vld [vmem:[#allocation4 + $0xec] sm:$0xf]
    %v4128 = vld [vmem:[#allocation4 + $0xf0] sm:$0xf]
    %v4129 = vld [vmem:[#allocation4 + $0xf4] sm:$0xf]
    %v4130 = vld [vmem:[#allocation4 + $0xf8] sm:$0xf]
    %v4131 = vld [vmem:[#allocation4 + $0xfc] sm:$0xf]
    %v4132 = vld [vmem:[%s1] sm:$0xf]
    %v4133 = vld [vmem:[%s1 + $0x4] sm:$0xf]
    %v4134 = vld [vmem:[%s1 + $0x8] sm:$0xf]
    %v4135 = vld [vmem:[%s1 + $0xc] sm:$0xf]
    %v4136 = vld [vmem:[%s1 + $0x10] sm:$0x3]
    %v4137 = vld [vmem:[%s2] sm:$0x1]
    %v4139 = vperm.slane %v4137, 0
    %v4205 = vunpack.c.l.b16 %v4068
    %v4206 = vunpack.c.l.b16 %v4069
    %v4207 = vunpack.c.l.b16 %v4070
    %v4208 = vunpack.c.l.b16 %v4071
    %v4209 = vunpack.c.l.b16 %v4072
    %v4210 = vunpack.c.l.b16 %v4073
    %v4211 = vunpack.c.l.b16 %v4074
    %v4212 = vunpack.c.l.b16 %v4075
    %v4213 = vunpack.c.l.b16 %v4076
    %v4214 = vunpack.c.l.b16 %v4077
    %v4215 = vunpack.c.l.b16 %v4078
    %v4216 = vunpack.c.l.b16 %v4079
    %v4217 = vunpack.c.l.b16 %v4080
    %v4218 = vunpack.c.l.b16 %v4081
    %v4219 = vunpack.c.l.b16 %v4082
    %v4220 = vunpack.c.l.b16 %v4083
    %v4221 = vunpack.c.l.b16 %v4084
    %v4222 = vunpack.c.l.b16 %v4085
    %v4223 = vunpack.c.l.b16 %v4086
    %v4224 = vunpack.c.l.b16 %v4087
    %v4225 = vunpack.c.l.b16 %v4088
    %v4226 = vunpack.c.l.b16 %v4089
    %v4227 = vunpack.c.l.b16 %v4090
    %v4228 = vunpack.c.l.b16 %v4091
    %v4229 = vunpack.c.l.b16 %v4092
    %v4230 = vunpack.c.l.b16 %v4093
    %v4231 = vunpack.c.l.b16 %v4094
    %v4232 = vunpack.c.l.b16 %v4095
    %v4233 = vunpack.c.l.b16 %v4096
    %v4234 = vunpack.c.l.b16 %v4097
    %v4235 = vunpack.c.l.b16 %v4098
    %v4236 = vunpack.c.l.b16 %v4099
    %v4237 = vunpack.c.l.b16 %v4100
    %v4238 = vunpack.c.l.b16 %v4101
    %v4239 = vunpack.c.l.b16 %v4102
    %v4240 = vunpack.c.l.b16 %v4103
    %v4241 = vunpack.c.l.b16 %v4104
    %v4242 = vunpack.c.l.b16 %v4105
    %v4243 = vunpack.c.l.b16 %v4106
    %v4244 = vunpack.c.l.b16 %v4107
    %v4245 = vunpack.c.l.b16 %v4108
    %v4246 = vunpack.c.l.b16 %v4109
    %v4247 = vunpack.c.l.b16 %v4110
    %v4248 = vunpack.c.l.b16 %v4111
    %v4249 = vunpack.c.l.b16 %v4112
    %v4250 = vunpack.c.l.b16 %v4113
    %v4251 = vunpack.c.l.b16 %v4114
    %v4252 = vunpack.c.l.b16 %v4115
    %v4253 = vunpack.c.l.b16 %v4116
    %v4254 = vunpack.c.l.b16 %v4117
    %v4255 = vunpack.c.l.b16 %v4118
    %v4256 = vunpack.c.l.b16 %v4119
    %v4257 = vunpack.c.l.b16 %v4120
    %v4258 = vunpack.c.l.b16 %v4121
    %v4259 = vunpack.c.l.b16 %v4122
    %v4260 = vunpack.c.l.b16 %v4123
    %v4261 = vunpack.c.l.b16 %v4124
    %v4262 = vunpack.c.l.b16 %v4125
    %v4263 = vunpack.c.l.b16 %v4126
    %v4264 = vunpack.c.l.b16 %v4127
    %v4265 = vunpack.c.l.b16 %v4128
    %v4266 = vunpack.c.l.b16 %v4129
    %v4267 = vunpack.c.l.b16 %v4130
    %v4268 = vunpack.c.l.b16 %v4131
    %v4269 = vpack.c.b16 %v4206, %v4205
    %v4270 = vpack.c.b16 %v4208, %v4207
    %v4271 = vpack.c.b16 %v4210, %v4209
    %v4272 = vpack.c.b16 %v4212, %v4211
    %v4273 = vpack.c.b16 %v4214, %v4213
    %v4274 = vpack.c.b16 %v4216, %v4215
    %v4275 = vpack.c.b16 %v4218, %v4217
    %v4276 = vpack.c.b16 %v4220, %v4219
    %v4277 = vpack.c.b16 %v4222, %v4221
    %v4278 = vpack.c.b16 %v4224, %v4223
    %v4279 = vpack.c.b16 %v4226, %v4225
    %v4280 = vpack.c.b16 %v4228, %v4227
    %v4281 = vpack.c.b16 %v4230, %v4229
    %v4282 = vpack.c.b16 %v4232, %v4231
    %v4283 = vpack.c.b16 %v4234, %v4233
    %v4284 = vpack.c.b16 %v4236, %v4235
    %v4285 = vpack.c.b16 %v4238, %v4237
    %v4286 = vpack.c.b16 %v4240, %v4239
    %v4287 = vpack.c.b16 %v4242, %v4241
    %v4288 = vpack.c.b16 %v4244, %v4243
    %v4289 = vpack.c.b16 %v4246, %v4245
    %v4290 = vpack.c.b16 %v4248, %v4247
    %v4291 = vpack.c.b16 %v4250, %v4249
    %v4292 = vpack.c.b16 %v4252, %v4251
    %v4293 = vpack.c.b16 %v4254, %v4253
    %v4294 = vpack.c.b16 %v4256, %v4255
    %v4295 = vpack.c.b16 %v4258, %v4257
    %v4296 = vpack.c.b16 %v4260, %v4259
    %v4297 = vpack.c.b16 %v4262, %v4261
    %v4298 = vpack.c.b16 %v4264, %v4263
    %v4299 = vpack.c.b16 %v4266, %v4265
    %v4300 = vpack.c.b16 %v4268, %v4267
    %v4306 = vunpack.c.l.b16 %v4132
    %v4307 = vunpack.c.l.b16 %v4133
    %v4308 = vunpack.c.l.b16 %v4134
    %v4309 = vunpack.c.l.b16 %v4135
    %v4310 = vunpack.c.l.b16 %v4136
    %v4311 = vpack.c.b16 %v4307, %v4306
    %v4312 = vpack.c.b16 %v4309, %v4308
    %v4313 = vpack.c.b16 %v4310, %v4310
    %vm4316 = vcmask 293888
    %v4318 = vsel %vm4316, %v4269, 0
    %v4321 = vsel %vm4316, %v4270, 0
    %v4324 = vsel %vm4316, %v4271, 0
    %v4327 = vsel %vm4316, %v4272, 0
    %v4330 = vsel %vm4316, %v4273, 0
    %v4333 = vsel %vm4316, %v4274, 0
    %v4336 = vsel %vm4316, %v4275, 0
    %v4339 = vsel %vm4316, %v4276, 0
    %v4342 = vsel %vm4316, %v4277, 0
    %v4345 = vsel %vm4316, %v4278, 0
    %v4348 = vsel %vm4316, %v4279, 0
    %v4351 = vsel %vm4316, %v4280, 0
    %v4354 = vsel %vm4316, %v4281, 0
    %v4357 = vsel %vm4316, %v4282, 0
    %v4360 = vsel %vm4316, %v4283, 0
    %v4363 = vsel %vm4316, %v4284, 0
    %v4366 = vsel %vm4316, %v4285, 0
    %v4369 = vsel %vm4316, %v4286, 0
    %v4372 = vsel %vm4316, %v4287, 0
    %v4375 = vsel %vm4316, %v4288, 0
    %v4378 = vsel %vm4316, %v4289, 0
    %v4381 = vsel %vm4316, %v4290, 0
    %v4384 = vsel %vm4316, %v4291, 0
    %v4387 = vsel %vm4316, %v4292, 0
    %v4390 = vsel %vm4316, %v4293, 0
    %v4393 = vsel %vm4316, %v4294, 0
    %v4396 = vsel %vm4316, %v4295, 0
    %v4399 = vsel %vm4316, %v4296, 0
    %v4402 = vsel %vm4316, %v4297, 0
    %v4405 = vsel %vm4316, %v4298, 0
    %v4408 = vsel %vm4316, %v4299, 0
    %v4411 = vsel %vm4316, %v4300, 0
    %vm4413 = vcmask 1041408
    %v4415 = vsel %vm4413, %v4313, 0
    %4417 = vmatpush.bf16.msra.mxu0 0
    %4418 = vmatpush.bf16.msra.mxu0 0
    %4419 = vmatpush.bf16.msra.mxu0 0
    %4420 = vmatpush.bf16.msra.mxu0 0
    %4421 = vmatpush.bf16.msra.mxu0 0
    %4422 = vmatpush.bf16.msra.mxu0 %v4415
    %4423 = vmatpush.bf16.msra.mxu0 %v4312
    %4424 = vmatpush.bf16.msra.mxu0 %v4311
    %4425 = vmatmul.bf16.gmra.mxu0 %v4318
    %v4426 = vpop.f32.mrf.mxu0
    %v4427 = vadd.f32 %v4139, %v4426
    %v4428 = vpop.f32.mrf.mxu0
    %v4429 = vadd.f32 %v4139, %v4428
    %4430 = vmatmul.bf16.gmra.mxu0 %v4321
    %v4431 = vpop.f32.mrf.mxu0
    %v4432 = vadd.f32 %v4139, %v4431
    %v4433 = vpop.f32.mrf.mxu0
    %v4434 = vadd.f32 %v4139, %v4433
    %4435 = vmatmul.bf16.gmra.mxu0 %v4324
    %v4436 = vpop.f32.mrf.mxu0
    %v4437 = vadd.f32 %v4139, %v4436
    %v4438 = vpop.f32.mrf.mxu0
    %v4439 = vadd.f32 %v4139, %v4438
    %4440 = vmatmul.bf16.gmra.mxu0 %v4327
    %v4441 = vpop.f32.mrf.mxu0
    %v4442 = vadd.f32 %v4139, %v4441
    %v4443 = vpop.f32.mrf.mxu0
    %v4444 = vadd.f32 %v4139, %v4443
    %4445 = vmatmul.bf16.gmra.mxu0 %v4330
    %v4446 = vpop.f32.mrf.mxu0
    %v4447 = vadd.f32 %v4139, %v4446
    %v4448 = vpop.f32.mrf.mxu0
    %v4449 = vadd.f32 %v4139, %v4448
    %4450 = vmatmul.bf16.gmra.mxu0 %v4333
    %v4451 = vpop.f32.mrf.mxu0
    %v4452 = vadd.f32 %v4139, %v4451
    %v4453 = vpop.f32.mrf.mxu0
    %v4454 = vadd.f32 %v4139, %v4453
    %4455 = vmatmul.bf16.gmra.mxu0 %v4336
    %v4456 = vpop.f32.mrf.mxu0
    %v4457 = vadd.f32 %v4139, %v4456
    %v4458 = vpop.f32.mrf.mxu0
    %v4459 = vadd.f32 %v4139, %v4458
    %4460 = vmatmul.bf16.gmra.mxu0 %v4339
    %v4461 = vpop.f32.mrf.mxu0
    %v4462 = vadd.f32 %v4139, %v4461
    %v4463 = vpop.f32.mrf.mxu0
    %v4464 = vadd.f32 %v4139, %v4463
    %4465 = vmatmul.bf16.gmra.mxu0 %v4342
    %v4466 = vpop.f32.mrf.mxu0
    %v4467 = vadd.f32 %v4139, %v4466
    %v4468 = vpop.f32.mrf.mxu0
    %v4469 = vadd.f32 %v4139, %v4468
    %4470 = vmatmul.bf16.gmra.mxu0 %v4345
    %v4471 = vpop.f32.mrf.mxu0
    %v4472 = vadd.f32 %v4139, %v4471
    %v4473 = vpop.f32.mrf.mxu0
    %v4474 = vadd.f32 %v4139, %v4473
    %4475 = vmatmul.bf16.gmra.mxu0 %v4348
    %v4476 = vpop.f32.mrf.mxu0
    %v4477 = vadd.f32 %v4139, %v4476
    %v4478 = vpop.f32.mrf.mxu0
    %v4479 = vadd.f32 %v4139, %v4478
    %4480 = vmatmul.bf16.gmra.mxu0 %v4351
    %v4481 = vpop.f32.mrf.mxu0
    %v4482 = vadd.f32 %v4139, %v4481
    %v4483 = vpop.f32.mrf.mxu0
    %v4484 = vadd.f32 %v4139, %v4483
    %4485 = vmatmul.bf16.gmra.mxu0 %v4354
    %v4486 = vpop.f32.mrf.mxu0
    %v4487 = vadd.f32 %v4139, %v4486
    %v4488 = vpop.f32.mrf.mxu0
    %v4489 = vadd.f32 %v4139, %v4488
    %4490 = vmatmul.bf16.gmra.mxu0 %v4357
    %v4491 = vpop.f32.mrf.mxu0
    %v4492 = vadd.f32 %v4139, %v4491
    %v4493 = vpop.f32.mrf.mxu0
    %v4494 = vadd.f32 %v4139, %v4493
    %4495 = vmatmul.bf16.gmra.mxu0 %v4360
    %v4496 = vpop.f32.mrf.mxu0
    %v4497 = vadd.f32 %v4139, %v4496
    %v4498 = vpop.f32.mrf.mxu0
    %v4499 = vadd.f32 %v4139, %v4498
    %4500 = vmatmul.bf16.gmra.mxu0 %v4363
    %v4501 = vpop.f32.mrf.mxu0
    %v4502 = vadd.f32 %v4139, %v4501
    %v4503 = vpop.f32.mrf.mxu0
    %v4504 = vadd.f32 %v4139, %v4503
    %4505 = vmatmul.bf16.gmra.mxu0 %v4366
    %v4506 = vpop.f32.mrf.mxu0
    %v4507 = vadd.f32 %v4139, %v4506
    %v4508 = vpop.f32.mrf.mxu0
    %v4509 = vadd.f32 %v4139, %v4508
    %4510 = vmatmul.bf16.gmra.mxu0 %v4369
    %v4511 = vpop.f32.mrf.mxu0
    %v4512 = vadd.f32 %v4139, %v4511
    %v4513 = vpop.f32.mrf.mxu0
    %v4514 = vadd.f32 %v4139, %v4513
    %4515 = vmatmul.bf16.gmra.mxu0 %v4372
    %v4516 = vpop.f32.mrf.mxu0
    %v4517 = vadd.f32 %v4139, %v4516
    %v4518 = vpop.f32.mrf.mxu0
    %v4519 = vadd.f32 %v4139, %v4518
    %4520 = vmatmul.bf16.gmra.mxu0 %v4375
    %v4521 = vpop.f32.mrf.mxu0
    %v4522 = vadd.f32 %v4139, %v4521
    %v4523 = vpop.f32.mrf.mxu0
    %v4524 = vadd.f32 %v4139, %v4523
    %4525 = vmatmul.bf16.gmra.mxu0 %v4378
    %v4526 = vpop.f32.mrf.mxu0
    %v4527 = vadd.f32 %v4139, %v4526
    %v4528 = vpop.f32.mrf.mxu0
    %v4529 = vadd.f32 %v4139, %v4528
    %4530 = vmatmul.bf16.gmra.mxu0 %v4381
    %v4531 = vpop.f32.mrf.mxu0
    %v4532 = vadd.f32 %v4139, %v4531
    %v4533 = vpop.f32.mrf.mxu0
    %v4534 = vadd.f32 %v4139, %v4533
    %4535 = vmatmul.bf16.gmra.mxu0 %v4384
    %v4536 = vpop.f32.mrf.mxu0
    %v4537 = vadd.f32 %v4139, %v4536
    %v4538 = vpop.f32.mrf.mxu0
    %v4539 = vadd.f32 %v4139, %v4538
    %4540 = vmatmul.bf16.gmra.mxu0 %v4387
    %v4541 = vpop.f32.mrf.mxu0
    %v4542 = vadd.f32 %v4139, %v4541
    %v4543 = vpop.f32.mrf.mxu0
    %v4544 = vadd.f32 %v4139, %v4543
    %4545 = vmatmul.bf16.gmra.mxu0 %v4390
    %v4546 = vpop.f32.mrf.mxu0
    %v4547 = vadd.f32 %v4139, %v4546
    %v4548 = vpop.f32.mrf.mxu0
    %v4549 = vadd.f32 %v4139, %v4548
    %4550 = vmatmul.bf16.gmra.mxu0 %v4393
    %v4551 = vpop.f32.mrf.mxu0
    %v4552 = vadd.f32 %v4139, %v4551
    %v4553 = vpop.f32.mrf.mxu0
    %v4554 = vadd.f32 %v4139, %v4553
    %4555 = vmatmul.bf16.gmra.mxu0 %v4396
    %v4556 = vpop.f32.mrf.mxu0
    %v4557 = vadd.f32 %v4139, %v4556
    %v4558 = vpop.f32.mrf.mxu0
    %v4559 = vadd.f32 %v4139, %v4558
    %4560 = vmatmul.bf16.gmra.mxu0 %v4399
    %v4561 = vpop.f32.mrf.mxu0
    %v4562 = vadd.f32 %v4139, %v4561
    %v4563 = vpop.f32.mrf.mxu0
    %v4564 = vadd.f32 %v4139, %v4563
    %4565 = vmatmul.bf16.gmra.mxu0 %v4402
    %v4566 = vpop.f32.mrf.mxu0
    %v4567 = vadd.f32 %v4139, %v4566
    %v4568 = vpop.f32.mrf.mxu0
    %v4569 = vadd.f32 %v4139, %v4568
    %4570 = vmatmul.bf16.gmra.mxu0 %v4405
    %v4571 = vpop.f32.mrf.mxu0
    %v4572 = vadd.f32 %v4139, %v4571
    %v4573 = vpop.f32.mrf.mxu0
    %v4574 = vadd.f32 %v4139, %v4573
    %4575 = vmatmul.bf16.gmra.mxu0 %v4408
    %v4576 = vpop.f32.mrf.mxu0
    %v4577 = vadd.f32 %v4139, %v4576
    %v4578 = vpop.f32.mrf.mxu0
    %v4579 = vadd.f32 %v4139, %v4578
    %4580 = vmatmul.bf16.gmra.mxu0 %v4411
    %v4581 = vpop.f32.mrf.mxu0
    %v4582 = vadd.f32 %v4139, %v4581
    %v4583 = vpop.f32.mrf.mxu0
    %v4584 = vadd.f32 %v4139, %v4583
    %4585 = vdwg.mxu0
    %v4586 = vmax.f32 %v4427, 0.0
    %v4587 = vmax.f32 %v4429, 0.0
    %v4588 = vmax.f32 %v4432, 0.0
    %v4589 = vmax.f32 %v4434, 0.0
    %v4590 = vmax.f32 %v4437, 0.0
    %v4591 = vmax.f32 %v4439, 0.0
    %v4592 = vmax.f32 %v4442, 0.0
    %v4593 = vmax.f32 %v4444, 0.0
    %v4594 = vmax.f32 %v4447, 0.0
    %v4595 = vmax.f32 %v4449, 0.0
    %v4596 = vmax.f32 %v4452, 0.0
    %v4597 = vmax.f32 %v4454, 0.0
    %v4598 = vmax.f32 %v4457, 0.0
    %v4599 = vmax.f32 %v4459, 0.0
    %v4600 = vmax.f32 %v4462, 0.0
    %v4601 = vmax.f32 %v4464, 0.0
    %v4602 = vmax.f32 %v4467, 0.0
    %v4603 = vmax.f32 %v4469, 0.0
    %v4604 = vmax.f32 %v4472, 0.0
    %v4605 = vmax.f32 %v4474, 0.0
    %v4606 = vmax.f32 %v4477, 0.0
    %v4607 = vmax.f32 %v4479, 0.0
    %v4608 = vmax.f32 %v4482, 0.0
    %v4609 = vmax.f32 %v4484, 0.0
    %v4610 = vmax.f32 %v4487, 0.0
    %v4611 = vmax.f32 %v4489, 0.0
    %v4612 = vmax.f32 %v4492, 0.0
    %v4613 = vmax.f32 %v4494, 0.0
    %v4614 = vmax.f32 %v4497, 0.0
    %v4615 = vmax.f32 %v4499, 0.0
    %v4616 = vmax.f32 %v4502, 0.0
    %v4617 = vmax.f32 %v4504, 0.0
    %v4618 = vmax.f32 %v4507, 0.0
    %v4619 = vmax.f32 %v4509, 0.0
    %v4620 = vmax.f32 %v4512, 0.0
    %v4621 = vmax.f32 %v4514, 0.0
    %v4622 = vmax.f32 %v4517, 0.0
    %v4623 = vmax.f32 %v4519, 0.0
    %v4624 = vmax.f32 %v4522, 0.0
    %v4625 = vmax.f32 %v4524, 0.0
    %v4626 = vmax.f32 %v4527, 0.0
    %v4627 = vmax.f32 %v4529, 0.0
    %v4628 = vmax.f32 %v4532, 0.0
    %v4629 = vmax.f32 %v4534, 0.0
    %v4630 = vmax.f32 %v4537, 0.0
    %v4631 = vmax.f32 %v4539, 0.0
    %v4632 = vmax.f32 %v4542, 0.0
    %v4633 = vmax.f32 %v4544, 0.0
    %v4634 = vmax.f32 %v4547, 0.0
    %v4635 = vmax.f32 %v4549, 0.0
    %v4636 = vmax.f32 %v4552, 0.0
    %v4637 = vmax.f32 %v4554, 0.0
    %v4638 = vmax.f32 %v4557, 0.0
    %v4639 = vmax.f32 %v4559, 0.0
    %v4640 = vmax.f32 %v4562, 0.0
    %v4641 = vmax.f32 %v4564, 0.0
    %v4642 = vmax.f32 %v4567, 0.0
    %v4643 = vmax.f32 %v4569, 0.0
    %v4644 = vmax.f32 %v4572, 0.0
    %v4645 = vmax.f32 %v4574, 0.0
    %v4646 = vmax.f32 %v4577, 0.0
    %v4647 = vmax.f32 %v4579, 0.0
    %v4648 = vmax.f32 %v4582, 0.0
    %v4649 = vmax.f32 %v4584, 0.0
    %vm4650 = vcmask 64512
    %v4651 = vsel %vm4650, %v4586, 0.0
    %v4652 = vsel %vm4650, %v4587, 0.0
    %v4653 = vadd.f32 %v4651, %v4652
    %v4654 = vsel %vm4650, %v4588, 0.0
    %v4655 = vadd.f32 %v4653, %v4654
    %v4656 = vsel %vm4650, %v4589, 0.0
    %v4657 = vadd.f32 %v4655, %v4656
    %v4658 = vsel %vm4650, %v4590, 0.0
    %v4659 = vadd.f32 %v4657, %v4658
    %v4660 = vsel %vm4650, %v4591, 0.0
    %v4661 = vadd.f32 %v4659, %v4660
    %v4662 = vsel %vm4650, %v4592, 0.0
    %v4663 = vadd.f32 %v4661, %v4662
    %v4664 = vsel %vm4650, %v4593, 0.0
    %v4665 = vadd.f32 %v4663, %v4664
    %v4666 = vsel %vm4650, %v4594, 0.0
    %v4667 = vadd.f32 %v4665, %v4666
    %v4668 = vsel %vm4650, %v4595, 0.0
    %v4669 = vadd.f32 %v4667, %v4668
    %v4670 = vsel %vm4650, %v4596, 0.0
    %v4671 = vadd.f32 %v4669, %v4670
    %v4672 = vsel %vm4650, %v4597, 0.0
    %v4673 = vadd.f32 %v4671, %v4672
    %v4674 = vsel %vm4650, %v4598, 0.0
    %v4675 = vadd.f32 %v4673, %v4674
    %v4676 = vsel %vm4650, %v4599, 0.0
    %v4677 = vadd.f32 %v4675, %v4676
    %v4678 = vsel %vm4650, %v4600, 0.0
    %v4679 = vadd.f32 %v4677, %v4678
    %v4680 = vsel %vm4650, %v4601, 0.0
    %v4681 = vadd.f32 %v4679, %v4680
    %v4682 = vsel %vm4650, %v4602, 0.0
    %v4683 = vadd.f32 %v4681, %v4682
    %v4684 = vsel %vm4650, %v4603, 0.0
    %v4685 = vadd.f32 %v4683, %v4684
    %v4686 = vsel %vm4650, %v4604, 0.0
    %v4687 = vadd.f32 %v4685, %v4686
    %v4688 = vsel %vm4650, %v4605, 0.0
    %v4689 = vadd.f32 %v4687, %v4688
    %v4690 = vsel %vm4650, %v4606, 0.0
    %v4691 = vadd.f32 %v4689, %v4690
    %v4692 = vsel %vm4650, %v4607, 0.0
    %v4693 = vadd.f32 %v4691, %v4692
    %v4694 = vsel %vm4650, %v4608, 0.0
    %v4695 = vadd.f32 %v4693, %v4694
    %v4696 = vsel %vm4650, %v4609, 0.0
    %v4697 = vadd.f32 %v4695, %v4696
    %v4698 = vsel %vm4650, %v4610, 0.0
    %v4699 = vadd.f32 %v4697, %v4698
    %v4700 = vsel %vm4650, %v4611, 0.0
    %v4701 = vadd.f32 %v4699, %v4700
    %v4702 = vsel %vm4650, %v4612, 0.0
    %v4703 = vadd.f32 %v4701, %v4702
    %v4704 = vsel %vm4650, %v4613, 0.0
    %v4705 = vadd.f32 %v4703, %v4704
    %v4706 = vsel %vm4650, %v4614, 0.0
    %v4707 = vadd.f32 %v4705, %v4706
    %v4708 = vsel %vm4650, %v4615, 0.0
    %v4709 = vadd.f32 %v4707, %v4708
    %v4710 = vsel %vm4650, %v4616, 0.0
    %v4711 = vadd.f32 %v4709, %v4710
    %v4712 = vsel %vm4650, %v4617, 0.0
    %v4713 = vadd.f32 %v4711, %v4712
    %v4714 = vsel %vm4650, %v4618, 0.0
    %v4715 = vadd.f32 %v4713, %v4714
    %v4716 = vsel %vm4650, %v4619, 0.0
    %v4717 = vadd.f32 %v4715, %v4716
    %v4718 = vsel %vm4650, %v4620, 0.0
    %v4719 = vadd.f32 %v4717, %v4718
    %v4720 = vsel %vm4650, %v4621, 0.0
    %v4721 = vadd.f32 %v4719, %v4720
    %v4722 = vsel %vm4650, %v4622, 0.0
    %v4723 = vadd.f32 %v4721, %v4722
    %v4724 = vsel %vm4650, %v4623, 0.0
    %v4725 = vadd.f32 %v4723, %v4724
    %v4726 = vsel %vm4650, %v4624, 0.0
    %v4727 = vadd.f32 %v4725, %v4726
    %v4728 = vsel %vm4650, %v4625, 0.0
    %v4729 = vadd.f32 %v4727, %v4728
    %v4730 = vsel %vm4650, %v4626, 0.0
    %v4731 = vadd.f32 %v4729, %v4730
    %v4732 = vsel %vm4650, %v4627, 0.0
    %v4733 = vadd.f32 %v4731, %v4732
    %v4734 = vsel %vm4650, %v4628, 0.0
    %v4735 = vadd.f32 %v4733, %v4734
    %v4736 = vsel %vm4650, %v4629, 0.0
    %v4737 = vadd.f32 %v4735, %v4736
    %v4738 = vsel %vm4650, %v4630, 0.0
    %v4739 = vadd.f32 %v4737, %v4738
    %v4740 = vsel %vm4650, %v4631, 0.0
    %v4741 = vadd.f32 %v4739, %v4740
    %v4742 = vsel %vm4650, %v4632, 0.0
    %v4743 = vadd.f32 %v4741, %v4742
    %v4744 = vsel %vm4650, %v4633, 0.0
    %v4745 = vadd.f32 %v4743, %v4744
    %v4746 = vsel %vm4650, %v4634, 0.0
    %v4747 = vadd.f32 %v4745, %v4746
    %v4748 = vsel %vm4650, %v4635, 0.0
    %v4749 = vadd.f32 %v4747, %v4748
    %v4750 = vsel %vm4650, %v4636, 0.0
    %v4751 = vadd.f32 %v4749, %v4750
    %v4752 = vsel %vm4650, %v4637, 0.0
    %v4753 = vadd.f32 %v4751, %v4752
    %v4754 = vsel %vm4650, %v4638, 0.0
    %v4755 = vadd.f32 %v4753, %v4754
    %v4756 = vsel %vm4650, %v4639, 0.0
    %v4757 = vadd.f32 %v4755, %v4756
    %v4758 = vsel %vm4650, %v4640, 0.0
    %v4759 = vadd.f32 %v4757, %v4758
    %v4760 = vsel %vm4650, %v4641, 0.0
    %v4761 = vadd.f32 %v4759, %v4760
    %v4762 = vsel %vm4650, %v4642, 0.0
    %v4763 = vadd.f32 %v4761, %v4762
    %v4764 = vsel %vm4650, %v4643, 0.0
    %v4765 = vadd.f32 %v4763, %v4764
    %v4766 = vsel %vm4650, %v4644, 0.0
    %v4767 = vadd.f32 %v4765, %v4766
    %v4768 = vsel %vm4650, %v4645, 0.0
    %v4769 = vadd.f32 %v4767, %v4768
    %v4770 = vsel %vm4650, %v4646, 0.0
    %v4771 = vadd.f32 %v4769, %v4770
    %v4772 = vsel %vm4650, %v4647, 0.0
    %v4773 = vadd.f32 %v4771, %v4772
    %v4774 = vsel %vm4650, %v4648, 0.0
    %v4775 = vadd.f32 %v4773, %v4774
    %v4776 = vsel %vm4650, %v4649, 0.0
    %v4777 = vadd.f32 %v4775, %v4776
    %v4778 = vrot.slane %v4777, 4
    %v4779 = vadd.f32 %v4777, %v4778
    %v4780 = vrot.slane %v4779, 2
    %v4781 = vadd.f32 %v4779, %v4780
    %v4782 = vrot.slane %v4781, 1
    %v4783 = vadd.f32 %v4781, %v4782
    %v4784 = vrcp.pop 512.0
    %v4785 = vmul.f32 512.0, %v4784
    %v4786 = vsub.f32 1.0, %v4785
    %v4787 = vmul.f32 %v4784, %v4786
    %v4788 = vadd.f32 %v4784, %v4787
    %vm4789 = vweird.f32 %v4784
    %v4790 = vsel %vm4789, %v4784, %v4788
    %v4791 = vmul.f32 %v4783, %v4790
    %v4792 = vmul.f32 %v4586, %v4586
    %v4793 = vmul.f32 %v4587, %v4587
    %v4794 = vmul.f32 %v4588, %v4588
    %v4795 = vmul.f32 %v4589, %v4589
    %v4796 = vmul.f32 %v4590, %v4590
    %v4797 = vmul.f32 %v4591, %v4591
    %v4798 = vmul.f32 %v4592, %v4592
    %v4799 = vmul.f32 %v4593, %v4593
    %v4800 = vmul.f32 %v4594, %v4594
    %v4801 = vmul.f32 %v4595, %v4595
    %v4802 = vmul.f32 %v4596, %v4596
    %v4803 = vmul.f32 %v4597, %v4597
    %v4804 = vmul.f32 %v4598, %v4598
    %v4805 = vmul.f32 %v4599, %v4599
    %v4806 = vmul.f32 %v4600, %v4600
    %v4807 = vmul.f32 %v4601, %v4601
    %v4808 = vmul.f32 %v4602, %v4602
    %v4809 = vmul.f32 %v4603, %v4603
    %v4810 = vmul.f32 %v4604, %v4604
    %v4811 = vmul.f32 %v4605, %v4605
    %v4812 = vmul.f32 %v4606, %v4606
    %v4813 = vmul.f32 %v4607, %v4607
    %v4814 = vmul.f32 %v4608, %v4608
    %v4815 = vmul.f32 %v4609, %v4609
    %v4816 = vmul.f32 %v4610, %v4610
    %v4817 = vmul.f32 %v4611, %v4611
    %v4818 = vmul.f32 %v4612, %v4612
    %v4819 = vmul.f32 %v4613, %v4613
    %v4820 = vmul.f32 %v4614, %v4614
    %v4821 = vmul.f32 %v4615, %v4615
    %v4822 = vmul.f32 %v4616, %v4616
    %v4823 = vmul.f32 %v4617, %v4617
    %v4824 = vmul.f32 %v4618, %v4618
    %v4825 = vmul.f32 %v4619, %v4619
    %v4826 = vmul.f32 %v4620, %v4620
    %v4827 = vmul.f32 %v4621, %v4621
    %v4828 = vmul.f32 %v4622, %v4622
    %v4829 = vmul.f32 %v4623, %v4623
    %v4830 = vmul.f32 %v4624, %v4624
    %v4831 = vmul.f32 %v4625, %v4625
    %v4832 = vmul.f32 %v4626, %v4626
    %v4833 = vmul.f32 %v4627, %v4627
    %v4834 = vmul.f32 %v4628, %v4628
    %v4835 = vmul.f32 %v4629, %v4629
    %v4836 = vmul.f32 %v4630, %v4630
    %v4837 = vmul.f32 %v4631, %v4631
    %v4838 = vmul.f32 %v4632, %v4632
    %v4839 = vmul.f32 %v4633, %v4633
    %v4840 = vmul.f32 %v4634, %v4634
    %v4841 = vmul.f32 %v4635, %v4635
    %v4842 = vmul.f32 %v4636, %v4636
    %v4843 = vmul.f32 %v4637, %v4637
    %v4844 = vmul.f32 %v4638, %v4638
    %v4845 = vmul.f32 %v4639, %v4639
    %v4846 = vmul.f32 %v4640, %v4640
    %v4847 = vmul.f32 %v4641, %v4641
    %v4848 = vmul.f32 %v4642, %v4642
    %v4849 = vmul.f32 %v4643, %v4643
    %v4850 = vmul.f32 %v4644, %v4644
    %v4851 = vmul.f32 %v4645, %v4645
    %v4852 = vmul.f32 %v4646, %v4646
    %v4853 = vmul.f32 %v4647, %v4647
    %v4854 = vmul.f32 %v4648, %v4648
    %v4855 = vmul.f32 %v4649, %v4649
    %v4856 = vsel %vm4650, %v4792, 0.0
    %v4857 = vsel %vm4650, %v4793, 0.0
    %v4858 = vadd.f32 %v4856, %v4857
    %v4859 = vsel %vm4650, %v4794, 0.0
    %v4860 = vadd.f32 %v4858, %v4859
    %v4861 = vsel %vm4650, %v4795, 0.0
    %v4862 = vadd.f32 %v4860, %v4861
    %v4863 = vsel %vm4650, %v4796, 0.0
    %v4864 = vadd.f32 %v4862, %v4863
    %v4865 = vsel %vm4650, %v4797, 0.0
    %v4866 = vadd.f32 %v4864, %v4865
    %v4867 = vsel %vm4650, %v4798, 0.0
    %v4868 = vadd.f32 %v4866, %v4867
    %v4869 = vsel %vm4650, %v4799, 0.0
    %v4870 = vadd.f32 %v4868, %v4869
    %v4871 = vsel %vm4650, %v4800, 0.0
    %v4872 = vadd.f32 %v4870, %v4871
    %v4873 = vsel %vm4650, %v4801, 0.0
    %v4874 = vadd.f32 %v4872, %v4873
    %v4875 = vsel %vm4650, %v4802, 0.0
    %v4876 = vadd.f32 %v4874, %v4875
    %v4877 = vsel %vm4650, %v4803, 0.0
    %v4878 = vadd.f32 %v4876, %v4877
    %v4879 = vsel %vm4650, %v4804, 0.0
    %v4880 = vadd.f32 %v4878, %v4879
    %v4881 = vsel %vm4650, %v4805, 0.0
    %v4882 = vadd.f32 %v4880, %v4881
    %v4883 = vsel %vm4650, %v4806, 0.0
    %v4884 = vadd.f32 %v4882, %v4883
    %v4885 = vsel %vm4650, %v4807, 0.0
    %v4886 = vadd.f32 %v4884, %v4885
    %v4887 = vsel %vm4650, %v4808, 0.0
    %v4888 = vadd.f32 %v4886, %v4887
    %v4889 = vsel %vm4650, %v4809, 0.0
    %v4890 = vadd.f32 %v4888, %v4889
    %v4891 = vsel %vm4650, %v4810, 0.0
    %v4892 = vadd.f32 %v4890, %v4891
    %v4893 = vsel %vm4650, %v4811, 0.0
    %v4894 = vadd.f32 %v4892, %v4893
    %v4895 = vsel %vm4650, %v4812, 0.0
    %v4896 = vadd.f32 %v4894, %v4895
    %v4897 = vsel %vm4650, %v4813, 0.0
    %v4898 = vadd.f32 %v4896, %v4897
    %v4899 = vsel %vm4650, %v4814, 0.0
    %v4900 = vadd.f32 %v4898, %v4899
    %v4901 = vsel %vm4650, %v4815, 0.0
    %v4902 = vadd.f32 %v4900, %v4901
    %v4903 = vsel %vm4650, %v4816, 0.0
    %v4904 = vadd.f32 %v4902, %v4903
    %v4905 = vsel %vm4650, %v4817, 0.0
    %v4906 = vadd.f32 %v4904, %v4905
    %v4907 = vsel %vm4650, %v4818, 0.0
    %v4908 = vadd.f32 %v4906, %v4907
    %v4909 = vsel %vm4650, %v4819, 0.0
    %v4910 = vadd.f32 %v4908, %v4909
    %v4911 = vsel %vm4650, %v4820, 0.0
    %v4912 = vadd.f32 %v4910, %v4911
    %v4913 = vsel %vm4650, %v4821, 0.0
    %v4914 = vadd.f32 %v4912, %v4913
    %v4915 = vsel %vm4650, %v4822, 0.0
    %v4916 = vadd.f32 %v4914, %v4915
    %v4917 = vsel %vm4650, %v4823, 0.0
    %v4918 = vadd.f32 %v4916, %v4917
    %v4919 = vsel %vm4650, %v4824, 0.0
    %v4920 = vadd.f32 %v4918, %v4919
    %v4921 = vsel %vm4650, %v4825, 0.0
    %v4922 = vadd.f32 %v4920, %v4921
    %v4923 = vsel %vm4650, %v4826, 0.0
    %v4924 = vadd.f32 %v4922, %v4923
    %v4925 = vsel %vm4650, %v4827, 0.0
    %v4926 = vadd.f32 %v4924, %v4925
    %v4927 = vsel %vm4650, %v4828, 0.0
    %v4928 = vadd.f32 %v4926, %v4927
    %v4929 = vsel %vm4650, %v4829, 0.0
    %v4930 = vadd.f32 %v4928, %v4929
    %v4931 = vsel %vm4650, %v4830, 0.0
    %v4932 = vadd.f32 %v4930, %v4931
    %v4933 = vsel %vm4650, %v4831, 0.0
    %v4934 = vadd.f32 %v4932, %v4933
    %v4935 = vsel %vm4650, %v4832, 0.0
    %v4936 = vadd.f32 %v4934, %v4935
    %v4937 = vsel %vm4650, %v4833, 0.0
    %v4938 = vadd.f32 %v4936, %v4937
    %v4939 = vsel %vm4650, %v4834, 0.0
    %v4940 = vadd.f32 %v4938, %v4939
    %v4941 = vsel %vm4650, %v4835, 0.0
    %v4942 = vadd.f32 %v4940, %v4941
    %v4943 = vsel %vm4650, %v4836, 0.0
    %v4944 = vadd.f32 %v4942, %v4943
    %v4945 = vsel %vm4650, %v4837, 0.0
    %v4946 = vadd.f32 %v4944, %v4945
    %v4947 = vsel %vm4650, %v4838, 0.0
    %v4948 = vadd.f32 %v4946, %v4947
    %v4949 = vsel %vm4650, %v4839, 0.0
    %v4950 = vadd.f32 %v4948, %v4949
    %v4951 = vsel %vm4650, %v4840, 0.0
    %v4952 = vadd.f32 %v4950, %v4951
    %v4953 = vsel %vm4650, %v4841, 0.0
    %v4954 = vadd.f32 %v4952, %v4953
    %v4955 = vsel %vm4650, %v4842, 0.0
    %v4956 = vadd.f32 %v4954, %v4955
    %v4957 = vsel %vm4650, %v4843, 0.0
    %v4958 = vadd.f32 %v4956, %v4957
    %v4959 = vsel %vm4650, %v4844, 0.0
    %v4960 = vadd.f32 %v4958, %v4959
    %v4961 = vsel %vm4650, %v4845, 0.0
    %v4962 = vadd.f32 %v4960, %v4961
    %v4963 = vsel %vm4650, %v4846, 0.0
    %v4964 = vadd.f32 %v4962, %v4963
    %v4965 = vsel %vm4650, %v4847, 0.0
    %v4966 = vadd.f32 %v4964, %v4965
    %v4967 = vsel %vm4650, %v4848, 0.0
    %v4968 = vadd.f32 %v4966, %v4967
    %v4969 = vsel %vm4650, %v4849, 0.0
    %v4970 = vadd.f32 %v4968, %v4969
    %v4971 = vsel %vm4650, %v4850, 0.0
    %v4972 = vadd.f32 %v4970, %v4971
    %v4973 = vsel %vm4650, %v4851, 0.0
    %v4974 = vadd.f32 %v4972, %v4973
    %v4975 = vsel %vm4650, %v4852, 0.0
    %v4976 = vadd.f32 %v4974, %v4975
    %v4977 = vsel %vm4650, %v4853, 0.0
    %v4978 = vadd.f32 %v4976, %v4977
    %v4979 = vsel %vm4650, %v4854, 0.0
    %v4980 = vadd.f32 %v4978, %v4979
    %v4981 = vsel %vm4650, %v4855, 0.0
    %v4982 = vadd.f32 %v4980, %v4981
    %v4983 = vrot.slane %v4982, 4
    %v4984 = vadd.f32 %v4982, %v4983
    %v4985 = vrot.slane %v4984, 2
    %v4986 = vadd.f32 %v4984, %v4985
    %v4987 = vrot.slane %v4986, 1
    %v4988 = vadd.f32 %v4986, %v4987
    %v4989 = vmul.f32 %v4988, %v4790
    %v4990 = vmul.f32 %v4791, %v4791
    %v4991 = vsub.f32 %v4989, %v4990
    %v4992 = vadd.f32 %v4991, 1e-05
    %v4993 = vrsqrt.pop %v4992
    %v4994 = vmul.f32 %v4993, %v4992
    %v4995 = vmul.f32 %v4994, %v4993
    %v4996 = vmul.f32 0.5, %v4995
    %v4997 = vsub.f32 1.5, %v4996
    %v4998 = vmul.f32 %v4993, %v4997
    %vm4999 = vweird.f32 %v4992
    %vm5000 = vweird.f32 %v4993
    %vm5001 = vmor %vm4999, %vm5000
    %v5002 = vsel %vm5001, %v4993, %v4998
    %v5003 = vld [vmem:[%s3] sm:$0x1]
    %v5004 = vmul.f32 %v5002, %v5003
    %v5005 = vld [vmem:[%s4] sm:$0x1]
    %v5006 = vmul.f32 %v4791, %v5004
    %v5007 = vsub.f32 %v5005, %v5006
    %v5008 = vperm.slane %v5004, 0
    %v5009 = vmul.f32 %v4586, %v5008
    %v5010 = vmul.f32 %v4587, %v5008
    %v5011 = vmul.f32 %v4588, %v5008
    %v5012 = vmul.f32 %v4589, %v5008
    %v5013 = vmul.f32 %v4590, %v5008
    %v5014 = vmul.f32 %v4591, %v5008
    %v5015 = vmul.f32 %v4592, %v5008
    %v5016 = vmul.f32 %v4593, %v5008
    %v5017 = vmul.f32 %v4594, %v5008
    %v5018 = vmul.f32 %v4595, %v5008
    %v5019 = vmul.f32 %v4596, %v5008
    %v5020 = vmul.f32 %v4597, %v5008
    %v5021 = vmul.f32 %v4598, %v5008
    %v5022 = vmul.f32 %v4599, %v5008
    %v5023 = vmul.f32 %v4600, %v5008
    %v5024 = vmul.f32 %v4601, %v5008
    %v5025 = vmul.f32 %v4602, %v5008
    %v5026 = vmul.f32 %v4603, %v5008
    %v5027 = vmul.f32 %v4604, %v5008
    %v5028 = vmul.f32 %v4605, %v5008
    %v5029 = vmul.f32 %v4606, %v5008
    %v5030 = vmul.f32 %v4607, %v5008
    %v5031 = vmul.f32 %v4608, %v5008
    %v5032 = vmul.f32 %v4609, %v5008
    %v5033 = vmul.f32 %v4610, %v5008
    %v5034 = vmul.f32 %v4611, %v5008
    %v5035 = vmul.f32 %v4612, %v5008
    %v5036 = vmul.f32 %v4613, %v5008
    %v5037 = vmul.f32 %v4614, %v5008
    %v5038 = vmul.f32 %v4615, %v5008
    %v5039 = vmul.f32 %v4616, %v5008
    %v5040 = vmul.f32 %v4617, %v5008
    %v5041 = vmul.f32 %v4618, %v5008
    %v5042 = vmul.f32 %v4619, %v5008
    %v5043 = vmul.f32 %v4620, %v5008
    %v5044 = vmul.f32 %v4621, %v5008
    %v5045 = vmul.f32 %v4622, %v5008
    %v5046 = vmul.f32 %v4623, %v5008
    %v5047 = vmul.f32 %v4624, %v5008
    %v5048 = vmul.f32 %v4625, %v5008
    %v5049 = vmul.f32 %v4626, %v5008
    %v5050 = vmul.f32 %v4627, %v5008
    %v5051 = vmul.f32 %v4628, %v5008
    %v5052 = vmul.f32 %v4629, %v5008
    %v5053 = vmul.f32 %v4630, %v5008
    %v5054 = vmul.f32 %v4631, %v5008
    %v5055 = vmul.f32 %v4632, %v5008
    %v5056 = vmul.f32 %v4633, %v5008
    %v5057 = vmul.f32 %v4634, %v5008
    %v5058 = vmul.f32 %v4635, %v5008
    %v5059 = vmul.f32 %v4636, %v5008
    %v5060 = vmul.f32 %v4637, %v5008
    %v5061 = vmul.f32 %v4638, %v5008
    %v5062 = vmul.f32 %v4639, %v5008
    %v5063 = vmul.f32 %v4640, %v5008
    %v5064 = vmul.f32 %v4641, %v5008
    %v5065 = vmul.f32 %v4642, %v5008
    %v5066 = vmul.f32 %v4643, %v5008
    %v5067 = vmul.f32 %v4644, %v5008
    %v5068 = vmul.f32 %v4645, %v5008
    %v5069 = vmul.f32 %v4646, %v5008
    %v5070 = vmul.f32 %v4647, %v5008
    %v5071 = vmul.f32 %v4648, %v5008
    %v5072 = vmul.f32 %v4649, %v5008
    %v5074 = vperm.slane %v5007, 0
    %v5076 = vadd.f32 %v5009, %v5074
    %v5077 = vadd.f32 %v5010, %v5074
    %v5078 = vadd.f32 %v5011, %v5074
    %v5079 = vadd.f32 %v5012, %v5074
    %v5080 = vadd.f32 %v5013, %v5074
    %v5081 = vadd.f32 %v5014, %v5074
    %v5082 = vadd.f32 %v5015, %v5074
    %v5083 = vadd.f32 %v5016, %v5074
    %v5084 = vadd.f32 %v5017, %v5074
    %v5085 = vadd.f32 %v5018, %v5074
    %v5086 = vadd.f32 %v5019, %v5074
    %v5087 = vadd.f32 %v5020, %v5074
    %v5088 = vadd.f32 %v5021, %v5074
    %v5089 = vadd.f32 %v5022, %v5074
    %v5090 = vadd.f32 %v5023, %v5074
    %v5091 = vadd.f32 %v5024, %v5074
    %v5092 = vadd.f32 %v5025, %v5074
    %v5093 = vadd.f32 %v5026, %v5074
    %v5094 = vadd.f32 %v5027, %v5074
    %v5095 = vadd.f32 %v5028, %v5074
    %v5096 = vadd.f32 %v5029, %v5074
    %v5097 = vadd.f32 %v5030, %v5074
    %v5098 = vadd.f32 %v5031, %v5074
    %v5099 = vadd.f32 %v5032, %v5074
    %v5100 = vadd.f32 %v5033, %v5074
    %v5101 = vadd.f32 %v5034, %v5074
    %v5102 = vadd.f32 %v5035, %v5074
    %v5103 = vadd.f32 %v5036, %v5074
    %v5104 = vadd.f32 %v5037, %v5074
    %v5105 = vadd.f32 %v5038, %v5074
    %v5106 = vadd.f32 %v5039, %v5074
    %v5107 = vadd.f32 %v5040, %v5074
    %v5108 = vadd.f32 %v5041, %v5074
    %v5109 = vadd.f32 %v5042, %v5074
    %v5110 = vadd.f32 %v5043, %v5074
    %v5111 = vadd.f32 %v5044, %v5074
    %v5112 = vadd.f32 %v5045, %v5074
    %v5113 = vadd.f32 %v5046, %v5074
    %v5114 = vadd.f32 %v5047, %v5074
    %v5115 = vadd.f32 %v5048, %v5074
    %v5116 = vadd.f32 %v5049, %v5074
    %v5117 = vadd.f32 %v5050, %v5074
    %v5118 = vadd.f32 %v5051, %v5074
    %v5119 = vadd.f32 %v5052, %v5074
    %v5120 = vadd.f32 %v5053, %v5074
    %v5121 = vadd.f32 %v5054, %v5074
    %v5122 = vadd.f32 %v5055, %v5074
    %v5123 = vadd.f32 %v5056, %v5074
    %v5124 = vadd.f32 %v5057, %v5074
    %v5125 = vadd.f32 %v5058, %v5074
    %v5126 = vadd.f32 %v5059, %v5074
    %v5127 = vadd.f32 %v5060, %v5074
    %v5128 = vadd.f32 %v5061, %v5074
    %v5129 = vadd.f32 %v5062, %v5074
    %v5130 = vadd.f32 %v5063, %v5074
    %v5131 = vadd.f32 %v5064, %v5074
    %v5132 = vadd.f32 %v5065, %v5074
    %v5133 = vadd.f32 %v5066, %v5074
    %v5134 = vadd.f32 %v5067, %v5074
    %v5135 = vadd.f32 %v5068, %v5074
    %v5136 = vadd.f32 %v5069, %v5074
    %v5137 = vadd.f32 %v5070, %v5074
    %v5138 = vadd.f32 %v5071, %v5074
    %v5139 = vadd.f32 %v5072, %v5074
    %v5140 = vld [vmem:[%s5] sm:$0x1]
    %v5141 = vld [vmem:[%s6] sm:$0xf]
    %v5142 = vld [vmem:[%s6 + $0x4] sm:$0xf]
    %v5143 = vld [vmem:[%s6 + $0x8] sm:$0xf]
    %v5144 = vld [vmem:[%s6 + $0xc] sm:$0xf]
    %v5145 = vld [vmem:[%s7] sm:$0x1]
    %v5147 = vperm.slane %v5145, 0
    %v5153 = vunpack.c.l.b16 %v5141
    %v5154 = vunpack.c.l.b16 %v5142
    %v5155 = vunpack.c.l.b16 %v5143
    %v5156 = vunpack.c.l.b16 %v5144
    %v5157 = vpack.c.b16 %v5154, %v5153
    %v5158 = vpack.c.b16 %v5156, %v5155
    %vm5161 = vcmask 261120
    %v5163 = vsel %vm5161, %v5140, 0
    %5165 = vmatpush.bf16.msra.mxu0 0
    %5166 = vmatpush.bf16.msra.mxu0 0
    %5167 = vmatpush.bf16.msra.mxu0 0
    %5168 = vmatpush.bf16.msra.mxu0 0
    %5169 = vmatpush.bf16.msra.mxu0 0
    %5170 = vmatpush.bf16.msra.mxu0 0
    %5171 = vmatpush.bf16.msra.mxu0 %v5158
    %5172 = vmatpush.bf16.msra.mxu0 %v5157
    %5173 = vmatmul.bf16.gmra.mxu0 %v5163
    %v5174 = vpop.f32.mrf.mxu0
    %v5175 = vadd.f32 %v5147, %v5174
    %v5176 = vpop.f32.mrf.mxu0
    %5177 = vdwg.mxu0
    %v5178 = vmax.f32 %v5175, 0.0
    %v5180 = vrot.slane %v5178, 1
    %v5181 = vperm.slane %v5178, 0
    %v5182 = vperm.slane %v5180, 0
    %v5185 = vadd.f32 %v5076, %v5181
    %v5186 = vadd.f32 %v5077, %v5181
    %v5187 = vadd.f32 %v5078, %v5181
    %v5188 = vadd.f32 %v5079, %v5181
    %v5189 = vadd.f32 %v5080, %v5181
    %v5190 = vadd.f32 %v5081, %v5181
    %v5191 = vadd.f32 %v5082, %v5181
    %v5192 = vadd.f32 %v5083, %v5181
    %v5193 = vadd.f32 %v5084, %v5181
    %v5194 = vadd.f32 %v5085, %v5181
    %v5195 = vadd.f32 %v5086, %v5181
    %v5196 = vadd.f32 %v5087, %v5181
    %v5197 = vadd.f32 %v5088, %v5181
    %v5198 = vadd.f32 %v5089, %v5181
    %v5199 = vadd.f32 %v5090, %v5181
    %v5200 = vadd.f32 %v5091, %v5181
    %v5201 = vadd.f32 %v5092, %v5181
    %v5202 = vadd.f32 %v5093, %v5181
    %v5203 = vadd.f32 %v5094, %v5181
    %v5204 = vadd.f32 %v5095, %v5181
    %v5205 = vadd.f32 %v5096, %v5181
    %v5206 = vadd.f32 %v5097, %v5181
    %v5207 = vadd.f32 %v5098, %v5181
    %v5208 = vadd.f32 %v5099, %v5181
    %v5209 = vadd.f32 %v5100, %v5181
    %v5210 = vadd.f32 %v5101, %v5181
    %v5211 = vadd.f32 %v5102, %v5181
    %v5212 = vadd.f32 %v5103, %v5181
    %v5213 = vadd.f32 %v5104, %v5181
    %v5214 = vadd.f32 %v5105, %v5181
    %v5215 = vadd.f32 %v5106, %v5181
    %v5216 = vadd.f32 %v5107, %v5181
    %v5217 = vadd.f32 %v5108, %v5182
    %v5218 = vadd.f32 %v5109, %v5182
    %v5219 = vadd.f32 %v5110, %v5182
    %v5220 = vadd.f32 %v5111, %v5182
    %v5221 = vadd.f32 %v5112, %v5182
    %v5222 = vadd.f32 %v5113, %v5182
    %v5223 = vadd.f32 %v5114, %v5182
    %v5224 = vadd.f32 %v5115, %v5182
    %v5225 = vadd.f32 %v5116, %v5182
    %v5226 = vadd.f32 %v5117, %v5182
    %v5227 = vadd.f32 %v5118, %v5182
    %v5228 = vadd.f32 %v5119, %v5182
    %v5229 = vadd.f32 %v5120, %v5182
    %v5230 = vadd.f32 %v5121, %v5182
    %v5231 = vadd.f32 %v5122, %v5182
    %v5232 = vadd.f32 %v5123, %v5182
    %v5233 = vadd.f32 %v5124, %v5182
    %v5234 = vadd.f32 %v5125, %v5182
    %v5235 = vadd.f32 %v5126, %v5182
    %v5236 = vadd.f32 %v5127, %v5182
    %v5237 = vadd.f32 %v5128, %v5182
    %v5238 = vadd.f32 %v5129, %v5182
    %v5239 = vadd.f32 %v5130, %v5182
    %v5240 = vadd.f32 %v5131, %v5182
    %v5241 = vadd.f32 %v5132, %v5182
    %v5242 = vadd.f32 %v5133, %v5182
    %v5243 = vadd.f32 %v5134, %v5182
    %v5244 = vadd.f32 %v5135, %v5182
    %v5245 = vadd.f32 %v5136, %v5182
    %v5246 = vadd.f32 %v5137, %v5182
    %v5247 = vadd.f32 %v5138, %v5182
    %v5248 = vadd.f32 %v5139, %v5182
    %5249 = vst.msk [vmem:[#allocation3] sm:$0xff] %vm4650, 0.0
    %5250 = vst.msk [vmem:[#allocation3 + $0x8] sm:$0xff] %vm4650, 0.0
    %vm5251 = vcmask 58368
    %5252 = vst.msk [vmem:[#allocation3 + $0x10] sm:$0x3] %vm5251, 0.0
    %5253 = vst.msk [vmem:[#allocation3 + $0x18] sm:$0xff] %vm4650, 0.0
    %5254 = vst.msk [vmem:[#allocation3 + $0x20] sm:$0xff] %vm4650, 0.0
    %5255 = vst.msk [vmem:[#allocation3 + $0x28] sm:$0x3] %vm5251, 0.0
    %5256 = vst.msk [vmem:[#allocation3 + $0x30] sm:$0xff] %vm4650, 0.0
    %5257 = vst.msk [vmem:[#allocation3 + $0x38] sm:$0xff] %vm4650, 0.0
    %5258 = vst.msk [vmem:[#allocation3 + $0x40] sm:$0x3] %vm5251, 0.0
    %5259 = vst.msk [vmem:[#allocation3 + $0x48] sm:$0xff] %vm4650, 0.0
    %5260 = vst.msk [vmem:[#allocation3 + $0x50] sm:$0xff] %vm4650, 0.0
    %5261 = vst.msk [vmem:[#allocation3 + $0x58] sm:$0x3] %vm5251, 0.0
    %5262 = vst.msk [vmem:[#allocation3 + $0x60] sm:$0xff] %vm4650, 0.0
    %5263 = vst.msk [vmem:[#allocation3 + $0x68] sm:$0xff] %vm4650, 0.0
    %5264 = vst.msk [vmem:[#allocation3 + $0x70] sm:$0x3] %vm5251, 0.0
    %5265 = vst.msk [vmem:[#allocation3 + $0x78] sm:$0xff] %vm4650, 0.0
    %5266 = vst.msk [vmem:[#allocation3 + $0x80] sm:$0xff] %vm4650, 0.0
    %5267 = vst.msk [vmem:[#allocation3 + $0x88] sm:$0x3] %vm5251, 0.0
    %5268 = vst.msk [vmem:[#allocation3 + $0x90] sm:$0xff] %vm4650, 0.0
    %5269 = vst.msk [vmem:[#allocation3 + $0x98] sm:$0xff] %vm4650, 0.0
    %5270 = vst.msk [vmem:[#allocation3 + $0xa0] sm:$0x3] %vm5251, 0.0
    %5271 = vst.msk [vmem:[#allocation3 + $0xa8] sm:$0xff] %vm4650, 0.0
    %5272 = vst.msk [vmem:[#allocation3 + $0xb0] sm:$0xff] %vm4650, 0.0
    %5273 = vst.msk [vmem:[#allocation3 + $0xb8] sm:$0x3] %vm5251, 0.0
    %5274 = vst.msk [vmem:[#allocation3 + $0xc0] sm:$0xff] %vm4650, 0.0
    %5275 = vst.msk [vmem:[#allocation3 + $0xc8] sm:$0xff] %vm4650, 0.0
    %5276 = vst.msk [vmem:[#allocation3 + $0xd0] sm:$0x3] %vm5251, 0.0
    %5277 = vst.msk [vmem:[#allocation3 + $0xd8] sm:$0xff] %vm4650, 0.0
    %5278 = vst.msk [vmem:[#allocation3 + $0xe0] sm:$0xff] %vm4650, 0.0
    %5279 = vst.msk [vmem:[#allocation3 + $0xe8] sm:$0x3] %vm5251, 0.0
    %5280 = vst.msk [vmem:[#allocation3 + $0xf0] sm:$0xff] %vm4650, 0.0
    %5281 = vst.msk [vmem:[#allocation3 + $0xf8] sm:$0xff] %vm4650, 0.0
    %5282 = vst.msk [vmem:[#allocation3 + $0x100] sm:$0x3] %vm5251, 0.0
    %5283 = vst.msk [vmem:[#allocation3 + $0x108] sm:$0xff] %vm4650, 0.0
    %5284 = vst.msk [vmem:[#allocation3 + $0x110] sm:$0xff] %vm4650, 0.0
    %5285 = vst.msk [vmem:[#allocation3 + $0x118] sm:$0x3] %vm5251, 0.0
    %5286 = vst.msk [vmem:[#allocation3 + $0x120] sm:$0xff] %vm4650, 0.0
    %5287 = vst.msk [vmem:[#allocation3 + $0x128] sm:$0xff] %vm4650, 0.0
    %5288 = vst.msk [vmem:[#allocation3 + $0x130] sm:$0x3] %vm5251, 0.0
    %5289 = vst.msk [vmem:[#allocation3 + $0x138] sm:$0xff] %vm4650, 0.0
    %5290 = vst.msk [vmem:[#allocation3 + $0x140] sm:$0xff] %vm4650, 0.0
    %5291 = vst.msk [vmem:[#allocation3 + $0x148] sm:$0x3] %vm5251, 0.0
    %5292 = vst.msk [vmem:[#allocation3 + $0x150] sm:$0xff] %vm4650, 0.0
    %5293 = vst.msk [vmem:[#allocation3 + $0x158] sm:$0xff] %vm4650, 0.0
    %5294 = vst.msk [vmem:[#allocation3 + $0x160] sm:$0x3] %vm5251, 0.0
    %5295 = vst.msk [vmem:[#allocation3 + $0x168] sm:$0xff] %vm4650, 0.0
    %5296 = vst.msk [vmem:[#allocation3 + $0x170] sm:$0xff] %vm4650, 0.0
    %5297 = vst.msk [vmem:[#allocation3 + $0x178] sm:$0x3] %vm5251, 0.0
    %5298 = vst.msk [vmem:[#allocation3 + $0x180] sm:$0xff] %vm4650, 0.0
    %5299 = vst.msk [vmem:[#allocation3 + $0x188] sm:$0xff] %vm4650, 0.0
    %5300 = vst.msk [vmem:[#allocation3 + $0x190] sm:$0x3] %vm5251, 0.0
    %5301 = vst.msk [vmem:[#allocation3 + $0x198] sm:$0xff] %vm4650, 0.0
    %5302 = vst.msk [vmem:[#allocation3 + $0x1a0] sm:$0xff] %vm4650, 0.0
    %5303 = vst.msk [vmem:[#allocation3 + $0x1a8] sm:$0x3] %vm5251, 0.0
    %5304 = vst.msk [vmem:[#allocation3 + $0x1b0] sm:$0xff] %vm4650, 0.0
    %5305 = vst.msk [vmem:[#allocation3 + $0x1b8] sm:$0xff] %vm4650, 0.0
    %5306 = vst.msk [vmem:[#allocation3 + $0x1c0] sm:$0x3] %vm5251, 0.0
    %5307 = vst.msk [vmem:[#allocation3 + $0x1c8] sm:$0xff] %vm4650, 0.0
    %5308 = vst.msk [vmem:[#allocation3 + $0x1d0] sm:$0xff] %vm4650, 0.0
    %5309 = vst.msk [vmem:[#allocation3 + $0x1d8] sm:$0x3] %vm5251, 0.0
    %5310 = vst.msk [vmem:[#allocation3 + $0x1e0] sm:$0xff] %vm4650, 0.0
    %5311 = vst.msk [vmem:[#allocation3 + $0x1e8] sm:$0xff] %vm4650, 0.0
    %5312 = vst.msk [vmem:[#allocation3 + $0x1f0] sm:$0x3] %vm5251, 0.0
    %5313 = vst.msk [vmem:[#allocation3 + $0x1f8] sm:$0xff] %vm4650, 0.0
    %5314 = vst.msk [vmem:[#allocation3 + $0x200] sm:$0xff] %vm4650, 0.0
    %5315 = vst.msk [vmem:[#allocation3 + $0x208] sm:$0x3] %vm5251, 0.0
    %5316 = vst.msk [vmem:[#allocation3 + $0x210] sm:$0xff] %vm4650, 0.0
    %5317 = vst.msk [vmem:[#allocation3 + $0x218] sm:$0xff] %vm4650, 0.0
    %5318 = vst.msk [vmem:[#allocation3 + $0x220] sm:$0x3] %vm5251, 0.0
    %5319 = vst.msk [vmem:[#allocation3 + $0x228] sm:$0xff] %vm4650, 0.0
    %5320 = vst.msk [vmem:[#allocation3 + $0x230] sm:$0xff] %vm4650, 0.0
    %5321 = vst.msk [vmem:[#allocation3 + $0x238] sm:$0x3] %vm5251, 0.0
    %5322 = vst.msk [vmem:[#allocation3 + $0x240] sm:$0xff] %vm4650, 0.0
    %5323 = vst.msk [vmem:[#allocation3 + $0x248] sm:$0xff] %vm4650, 0.0
    %5324 = vst.msk [vmem:[#allocation3 + $0x250] sm:$0x3] %vm5251, 0.0
    %5325 = vst.msk [vmem:[#allocation3 + $0x258] sm:$0xff] %vm4650, 0.0
    %5326 = vst.msk [vmem:[#allocation3 + $0x260] sm:$0xff] %vm4650, 0.0
    %5327 = vst.msk [vmem:[#allocation3 + $0x268] sm:$0x3] %vm5251, 0.0
    %5328 = vst.msk [vmem:[#allocation3 + $0x270] sm:$0xff] %vm4650, 0.0
    %5329 = vst.msk [vmem:[#allocation3 + $0x278] sm:$0xff] %vm4650, 0.0
    %5330 = vst.msk [vmem:[#allocation3 + $0x280] sm:$0x3] %vm5251, 0.0
    %5331 = vst.msk [vmem:[#allocation3 + $0x288] sm:$0xff] %vm4650, 0.0
    %5332 = vst.msk [vmem:[#allocation3 + $0x290] sm:$0xff] %vm4650, 0.0
    %5333 = vst.msk [vmem:[#allocation3 + $0x298] sm:$0x3] %vm5251, 0.0
    %5334 = vst.msk [vmem:[#allocation3 + $0x2a0] sm:$0xff] %vm4650, 0.0
    %5335 = vst.msk [vmem:[#allocation3 + $0x2a8] sm:$0xff] %vm4650, 0.0
    %5336 = vst.msk [vmem:[#allocation3 + $0x2b0] sm:$0x3] %vm5251, 0.0
    %5337 = vst.msk [vmem:[#allocation3 + $0x2b8] sm:$0xff] %vm4650, 0.0
    %5338 = vst.msk [vmem:[#allocation3 + $0x2c0] sm:$0xff] %vm4650, 0.0
    %5339 = vst.msk [vmem:[#allocation3 + $0x2c8] sm:$0x3] %vm5251, 0.0
    %5340 = vst.msk [vmem:[#allocation3 + $0x2d0] sm:$0xff] %vm4650, 0.0
    %5341 = vst.msk [vmem:[#allocation3 + $0x2d8] sm:$0xff] %vm4650, 0.0
    %5342 = vst.msk [vmem:[#allocation3 + $0x2e0] sm:$0x3] %vm5251, 0.0
    %5343 = vst.msk [vmem:[#allocation3 + $0x2e8] sm:$0xff] %vm4650, 0.0
    %5344 = vst.msk [vmem:[#allocation3 + $0x2f0] sm:$0xff] %vm4650, 0.0
    %5345 = vst.msk [vmem:[#allocation3 + $0x2f8] sm:$0x3] %vm5251, 0.0
    %5346 = vst.msk [vmem:[#allocation3 + $0x300] sm:$0xff] %vm4650, 0.0
    %5347 = vst.msk [vmem:[#allocation3 + $0x308] sm:$0xff] %vm4650, 0.0
    %5348 = vst.msk [vmem:[#allocation3 + $0x310] sm:$0x3] %vm5251, 0.0
    %5349 = vst.msk [vmem:[#allocation3 + $0x318] sm:$0xff] %vm4650, 0.0
    %5350 = vst.msk [vmem:[#allocation3 + $0x320] sm:$0xff] %vm4650, 0.0
    %5351 = vst.msk [vmem:[#allocation3 + $0x328] sm:$0x3] %vm5251, 0.0
    %5352 = vst.msk [vmem:[#allocation3 + $0x330] sm:$0xff] %vm4650, 0.0
    %5353 = vst.msk [vmem:[#allocation3 + $0x338] sm:$0xff] %vm4650, 0.0
    %5354 = vst.msk [vmem:[#allocation3 + $0x340] sm:$0x3] %vm5251, 0.0
    %5355 = vst.msk [vmem:[#allocation3 + $0x348] sm:$0xff] %vm4650, 0.0
    %5356 = vst.msk [vmem:[#allocation3 + $0x350] sm:$0xff] %vm4650, 0.0
    %5357 = vst.msk [vmem:[#allocation3 + $0x358] sm:$0x3] %vm5251, 0.0
    %s5358 = scalar_lea.vmem [#allocation3], 24
    %5359 = vst.msk [vmem:[%s5358 + $0x1] sm:$0xff] %vm4650, %v5185
    %5360 = vst.msk [vmem:[%s5358 + $0x9] sm:$0xff] %vm4650, %v5186
    %5361 = vst.msk [vmem:[%s5358 + $0x19] sm:$0xff] %vm4650, %v5187
    %5362 = vst.msk [vmem:[%s5358 + $0x21] sm:$0xff] %vm4650, %v5188
    %5363 = vst.msk [vmem:[%s5358 + $0x31] sm:$0xff] %vm4650, %v5189
    %5364 = vst.msk [vmem:[%s5358 + $0x39] sm:$0xff] %vm4650, %v5190
    %5365 = vst.msk [vmem:[%s5358 + $0x49] sm:$0xff] %vm4650, %v5191
    %5366 = vst.msk [vmem:[%s5358 + $0x51] sm:$0xff] %vm4650, %v5192
    %5367 = vst.msk [vmem:[%s5358 + $0x61] sm:$0xff] %vm4650, %v5193
    %5368 = vst.msk [vmem:[%s5358 + $0x69] sm:$0xff] %vm4650, %v5194
    %5369 = vst.msk [vmem:[%s5358 + $0x79] sm:$0xff] %vm4650, %v5195
    %5370 = vst.msk [vmem:[%s5358 + $0x81] sm:$0xff] %vm4650, %v5196
    %5371 = vst.msk [vmem:[%s5358 + $0x91] sm:$0xff] %vm4650, %v5197
    %5372 = vst.msk [vmem:[%s5358 + $0x99] sm:$0xff] %vm4650, %v5198
    %5373 = vst.msk [vmem:[%s5358 + $0xa9] sm:$0xff] %vm4650, %v5199
    %5374 = vst.msk [vmem:[%s5358 + $0xb1] sm:$0xff] %vm4650, %v5200
    %5375 = vst.msk [vmem:[%s5358 + $0xc1] sm:$0xff] %vm4650, %v5201
    %5376 = vst.msk [vmem:[%s5358 + $0xc9] sm:$0xff] %vm4650, %v5202
    %5377 = vst.msk [vmem:[%s5358 + $0xd9] sm:$0xff] %vm4650, %v5203
    %5378 = vst.msk [vmem:[%s5358 + $0xe1] sm:$0xff] %vm4650, %v5204
    %5379 = vst.msk [vmem:[%s5358 + $0xf1] sm:$0xff] %vm4650, %v5205
    %5380 = vst.msk [vmem:[%s5358 + $0xf9] sm:$0xff] %vm4650, %v5206
    %5381 = vst.msk [vmem:[%s5358 + $0x109] sm:$0xff] %vm4650, %v5207
    %5382 = vst.msk [vmem:[%s5358 + $0x111] sm:$0xff] %vm4650, %v5208
    %5383 = vst.msk [vmem:[%s5358 + $0x121] sm:$0xff] %vm4650, %v5209
    %5384 = vst.msk [vmem:[%s5358 + $0x129] sm:$0xff] %vm4650, %v5210
    %5385 = vst.msk [vmem:[%s5358 + $0x139] sm:$0xff] %vm4650, %v5211
    %5386 = vst.msk [vmem:[%s5358 + $0x141] sm:$0xff] %vm4650, %v5212
    %5387 = vst.msk [vmem:[%s5358 + $0x151] sm:$0xff] %vm4650, %v5213
    %5388 = vst.msk [vmem:[%s5358 + $0x159] sm:$0xff] %vm4650, %v5214
    %5389 = vst.msk [vmem:[%s5358 + $0x169] sm:$0xff] %vm4650, %v5215
    %5390 = vst.msk [vmem:[%s5358 + $0x171] sm:$0xff] %vm4650, %v5216
    %5391 = vst.msk [vmem:[%s5358 + $0x1b1] sm:$0xff] %vm4650, %v5217
    %5392 = vst.msk [vmem:[%s5358 + $0x1b9] sm:$0xff] %vm4650, %v5218
    %5393 = vst.msk [vmem:[%s5358 + $0x1c9] sm:$0xff] %vm4650, %v5219
    %5394 = vst.msk [vmem:[%s5358 + $0x1d1] sm:$0xff] %vm4650, %v5220
    %5395 = vst.msk [vmem:[%s5358 + $0x1e1] sm:$0xff] %vm4650, %v5221
    %5396 = vst.msk [vmem:[%s5358 + $0x1e9] sm:$0xff] %vm4650, %v5222
    %5397 = vst.msk [vmem:[%s5358 + $0x1f9] sm:$0xff] %vm4650, %v5223
    %5398 = vst.msk [vmem:[%s5358 + $0x201] sm:$0xff] %vm4650, %v5224
    %5399 = vst.msk [vmem:[%s5358 + $0x211] sm:$0xff] %vm4650, %v5225
    %5400 = vst.msk [vmem:[%s5358 + $0x219] sm:$0xff] %vm4650, %v5226
    %5401 = vst.msk [vmem:[%s5358 + $0x229] sm:$0xff] %vm4650, %v5227
    %5402 = vst.msk [vmem:[%s5358 + $0x231] sm:$0xff] %vm4650, %v5228
    %5403 = vst.msk [vmem:[%s5358 + $0x241] sm:$0xff] %vm4650, %v5229
    %5404 = vst.msk [vmem:[%s5358 + $0x249] sm:$0xff] %vm4650, %v5230
    %5405 = vst.msk [vmem:[%s5358 + $0x259] sm:$0xff] %vm4650, %v5231
    %5406 = vst.msk [vmem:[%s5358 + $0x261] sm:$0xff] %vm4650, %v5232
    %5407 = vst.msk [vmem:[%s5358 + $0x271] sm:$0xff] %vm4650, %v5233
    %5408 = vst.msk [vmem:[%s5358 + $0x279] sm:$0xff] %vm4650, %v5234
    %5409 = vst.msk [vmem:[%s5358 + $0x289] sm:$0xff] %vm4650, %v5235
    %5410 = vst.msk [vmem:[%s5358 + $0x291] sm:$0xff] %vm4650, %v5236
    %5411 = vst.msk [vmem:[%s5358 + $0x2a1] sm:$0xff] %vm4650, %v5237
    %5412 = vst.msk [vmem:[%s5358 + $0x2a9] sm:$0xff] %vm4650, %v5238
    %5413 = vst.msk [vmem:[%s5358 + $0x2b9] sm:$0xff] %vm4650, %v5239
    %5414 = vst.msk [vmem:[%s5358 + $0x2c1] sm:$0xff] %vm4650, %v5240
    %5415 = vst.msk [vmem:[%s5358 + $0x2d1] sm:$0xff] %vm4650, %v5241
    %5416 = vst.msk [vmem:[%s5358 + $0x2d9] sm:$0xff] %vm4650, %v5242
    %5417 = vst.msk [vmem:[%s5358 + $0x2e9] sm:$0xff] %vm4650, %v5243
    %5418 = vst.msk [vmem:[%s5358 + $0x2f1] sm:$0xff] %vm4650, %v5244
    %5419 = vst.msk [vmem:[%s5358 + $0x301] sm:$0xff] %vm4650, %v5245
    %5420 = vst.msk [vmem:[%s5358 + $0x309] sm:$0xff] %vm4650, %v5246
    %5421 = vst.msk [vmem:[%s5358 + $0x319] sm:$0xff] %vm4650, %v5247
    %5422 = vst.msk [vmem:[%s5358 + $0x321] sm:$0xff] %vm4650, %v5248
    %v5423 = vld [vmem:[#allocation3] sm:$0xff]
    %v5424 = vld [vmem:[#allocation3 + $0x8] sm:$0xff]
    %v5425 = vld [vmem:[#allocation3 + $0x18] sm:$0xff]
    %v5426 = vld [vmem:[#allocation3 + $0x20] sm:$0xff]
    %v5427 = vld [vmem:[#allocation3 + $0x30] sm:$0xff]
    %v5428 = vld [vmem:[#allocation3 + $0x38] sm:$0xff]
    %v5429 = vld [vmem:[#allocation3 + $0x48] sm:$0xff]
    %v5430 = vld [vmem:[#allocation3 + $0x50] sm:$0xff]
    %v5431 = vld [vmem:[#allocation3 + $0x60] sm:$0xff]
    %v5432 = vld [vmem:[#allocation3 + $0x68] sm:$0xff]
    %v5433 = vld [vmem:[#allocation3 + $0x78] sm:$0xff]
    %v5434 = vld [vmem:[#allocation3 + $0x80] sm:$0xff]
    %v5435 = vld [vmem:[#allocation3 + $0x90] sm:$0xff]
    %v5436 = vld [vmem:[#allocation3 + $0x98] sm:$0xff]
    %v5437 = vld [vmem:[#allocation3 + $0xa8] sm:$0xff]
    %v5438 = vld [vmem:[#allocation3 + $0xb0] sm:$0xff]
    %v5439 = vld [vmem:[#allocation3 + $0xc0] sm:$0xff]
    %v5440 = vld [vmem:[#allocation3 + $0xc8] sm:$0xff]
    %v5441 = vld [vmem:[#allocation3 + $0xd8] sm:$0xff]
    %v5442 = vld [vmem:[#allocation3 + $0xe0] sm:$0xff]
    %v5443 = vld [vmem:[#allocation3 + $0xf0] sm:$0xff]
    %v5444 = vld [vmem:[#allocation3 + $0xf8] sm:$0xff]
    %v5445 = vld [vmem:[#allocation3 + $0x108] sm:$0xff]
    %v5446 = vld [vmem:[#allocation3 + $0x110] sm:$0xff]
    %v5447 = vld [vmem:[#allocation3 + $0x120] sm:$0xff]
    %v5448 = vld [vmem:[#allocation3 + $0x128] sm:$0xff]
    %v5449 = vld [vmem:[#allocation3 + $0x138] sm:$0xff]
    %v5450 = vld [vmem:[#allocation3 + $0x140] sm:$0xff]
    %v5451 = vld [vmem:[#allocation3 + $0x150] sm:$0xff]
    %v5452 = vld [vmem:[#allocation3 + $0x158] sm:$0xff]
    %v5453 = vld [vmem:[#allocation3 + $0x168] sm:$0xff]
    %v5454 = vld [vmem:[#allocation3 + $0x170] sm:$0xff]
    %v5455 = vld [vmem:[#allocation3 + $0x1b0] sm:$0xff]
    %v5456 = vld [vmem:[#allocation3 + $0x1b8] sm:$0xff]
    %v5457 = vld [vmem:[#allocation3 + $0x1c8] sm:$0xff]
    %v5458 = vld [vmem:[#allocation3 + $0x1d0] sm:$0xff]
    %v5459 = vld [vmem:[#allocation3 + $0x1e0] sm:$0xff]
    %v5460 = vld [vmem:[#allocation3 + $0x1e8] sm:$0xff]
    %v5461 = vld [vmem:[#allocation3 + $0x1f8] sm:$0xff]
    %v5462 = vld [vmem:[#allocation3 + $0x200] sm:$0xff]
    %v5463 = vld [vmem:[#allocation3 + $0x210] sm:$0xff]
    %v5464 = vld [vmem:[#allocation3 + $0x218] sm:$0xff]
    %v5465 = vld [vmem:[#allocation3 + $0x228] sm:$0xff]
    %v5466 = vld [vmem:[#allocation3 + $0x230] sm:$0xff]
    %v5467 = vld [vmem:[#allocation3 + $0x240] sm:$0xff]
    %v5468 = vld [vmem:[#allocation3 + $0x248] sm:$0xff]
    %v5469 = vld [vmem:[#allocation3 + $0x258] sm:$0xff]
    %v5470 = vld [vmem:[#allocation3 + $0x260] sm:$0xff]
    %v5471 = vld [vmem:[#allocation3 + $0x270] sm:$0xff]
    %v5472 = vld [vmem:[#allocation3 + $0x278] sm:$0xff]
    %v5473 = vld [vmem:[#allocation3 + $0x288] sm:$0xff]
    %v5474 = vld [vmem:[#allocation3 + $0x290] sm:$0xff]
    %v5475 = vld [vmem:[#allocation3 + $0x2a0] sm:$0xff]
    %v5476 = vld [vmem:[#allocation3 + $0x2a8] sm:$0xff]
    %v5477 = vld [vmem:[#allocation3 + $0x2b8] sm:$0xff]
    %v5478 = vld [vmem:[#allocation3 + $0x2c0] sm:$0xff]
    %v5479 = vld [vmem:[#allocation3 + $0x2d0] sm:$0xff]
    %v5480 = vld [vmem:[#allocation3 + $0x2d8] sm:$0xff]
    %v5481 = vld [vmem:[#allocation3 + $0x2e8] sm:$0xff]
    %v5482 = vld [vmem:[#allocation3 + $0x2f0] sm:$0xff]
    %v5483 = vld [vmem:[#allocation3 + $0x300] sm:$0xff]
    %v5484 = vld [vmem:[#allocation3 + $0x308] sm:$0xff]
    %v5485 = vld [vmem:[#allocation3 + $0x318] sm:$0xff]
    %v5486 = vld [vmem:[#allocation3 + $0x320] sm:$0xff]
    %v5487 = vpack.c.bf16 %v5423, %v5423
    %v5488 = vpack.c.bf16 %v5424, %v5424
    %v5489 = vpack.c.bf16 %v5425, %v5425
    %v5490 = vpack.c.bf16 %v5426, %v5426
    %v5491 = vpack.c.bf16 %v5427, %v5427
    %v5492 = vpack.c.bf16 %v5428, %v5428
    %v5493 = vpack.c.bf16 %v5429, %v5429
    %v5494 = vpack.c.bf16 %v5430, %v5430
    %v5495 = vpack.c.bf16 %v5431, %v5431
    %v5496 = vpack.c.bf16 %v5432, %v5432
    %v5497 = vpack.c.bf16 %v5433, %v5433
    %v5498 = vpack.c.bf16 %v5434, %v5434
    %v5499 = vpack.c.bf16 %v5435, %v5435
    %v5500 = vpack.c.bf16 %v5436, %v5436
    %v5501 = vpack.c.bf16 %v5437, %v5437
    %v5502 = vpack.c.bf16 %v5438, %v5438
    %v5503 = vpack.c.bf16 %v5439, %v5439
    %v5504 = vpack.c.bf16 %v5440, %v5440
    %v5505 = vpack.c.bf16 %v5441, %v5441
    %v5506 = vpack.c.bf16 %v5442, %v5442
    %v5507 = vpack.c.bf16 %v5443, %v5443
    %v5508 = vpack.c.bf16 %v5444, %v5444
    %v5509 = vpack.c.bf16 %v5445, %v5445
    %v5510 = vpack.c.bf16 %v5446, %v5446
    %v5511 = vpack.c.bf16 %v5447, %v5447
    %v5512 = vpack.c.bf16 %v5448, %v5448
    %v5513 = vpack.c.bf16 %v5449, %v5449
    %v5514 = vpack.c.bf16 %v5450, %v5450
    %v5515 = vpack.c.bf16 %v5451, %v5451
    %v5516 = vpack.c.bf16 %v5452, %v5452
    %v5517 = vpack.c.bf16 %v5453, %v5453
    %v5518 = vpack.c.bf16 %v5454, %v5454
    %v5519 = vpack.c.bf16 %v5455, %v5455
    %v5520 = vpack.c.bf16 %v5456, %v5456
    %v5521 = vpack.c.bf16 %v5457, %v5457
    %v5522 = vpack.c.bf16 %v5458, %v5458
    %v5523 = vpack.c.bf16 %v5459, %v5459
    %v5524 = vpack.c.bf16 %v5460, %v5460
    %v5525 = vpack.c.bf16 %v5461, %v5461
    %v5526 = vpack.c.bf16 %v5462, %v5462
    %v5527 = vpack.c.bf16 %v5463, %v5463
    %v5528 = vpack.c.bf16 %v5464, %v5464
    %v5529 = vpack.c.bf16 %v5465, %v5465
    %v5530 = vpack.c.bf16 %v5466, %v5466
    %v5531 = vpack.c.bf16 %v5467, %v5467
    %v5532 = vpack.c.bf16 %v5468, %v5468
    %v5533 = vpack.c.bf16 %v5469, %v5469
    %v5534 = vpack.c.bf16 %v5470, %v5470
    %v5535 = vpack.c.bf16 %v5471, %v5471
    %v5536 = vpack.c.bf16 %v5472, %v5472
    %v5537 = vpack.c.bf16 %v5473, %v5473
    %v5538 = vpack.c.bf16 %v5474, %v5474
    %v5539 = vpack.c.bf16 %v5475, %v5475
    %v5540 = vpack.c.bf16 %v5476, %v5476
    %v5541 = vpack.c.bf16 %v5477, %v5477
    %v5542 = vpack.c.bf16 %v5478, %v5478
    %v5543 = vpack.c.bf16 %v5479, %v5479
    %v5544 = vpack.c.bf16 %v5480, %v5480
    %v5545 = vpack.c.bf16 %v5481, %v5481
    %v5546 = vpack.c.bf16 %v5482, %v5482
    %v5547 = vpack.c.bf16 %v5483, %v5483
    %v5548 = vpack.c.bf16 %v5484, %v5484
    %v5549 = vpack.c.bf16 %v5485, %v5485
    %v5550 = vpack.c.bf16 %v5486, %v5486
    %vm5551 = vcmask 60416
    %5552 = vst.msk [vmem:[#allocation5] sm:$0xf] %vm5551, %v5487
    %5553 = vst.msk [vmem:[#allocation5 + $0x4] sm:$0xf] %vm5551, %v5488
    %5554 = vst.msk [vmem:[#allocation5 + $0x8] sm:$0xf] %vm5551, %v5489
    %5555 = vst.msk [vmem:[#allocation5 + $0xc] sm:$0xf] %vm5551, %v5490
    %5556 = vst.msk [vmem:[#allocation5 + $0x10] sm:$0xf] %vm5551, %v5491
    %5557 = vst.msk [vmem:[#allocation5 + $0x14] sm:$0xf] %vm5551, %v5492
    %5558 = vst.msk [vmem:[#allocation5 + $0x18] sm:$0xf] %vm5551, %v5493
    %5559 = vst.msk [vmem:[#allocation5 + $0x1c] sm:$0xf] %vm5551, %v5494
    %5560 = vst.msk [vmem:[#allocation5 + $0x20] sm:$0xf] %vm5551, %v5495
    %5561 = vst.msk [vmem:[#allocation5 + $0x24] sm:$0xf] %vm5551, %v5496
    %5562 = vst.msk [vmem:[#allocation5 + $0x28] sm:$0xf] %vm5551, %v5497
    %5563 = vst.msk [vmem:[#allocation5 + $0x2c] sm:$0xf] %vm5551, %v5498
    %5564 = vst.msk [vmem:[#allocation5 + $0x30] sm:$0xf] %vm5551, %v5499
    %5565 = vst.msk [vmem:[#allocation5 + $0x34] sm:$0xf] %vm5551, %v5500
    %5566 = vst.msk [vmem:[#allocation5 + $0x38] sm:$0xf] %vm5551, %v5501
    %5567 = vst.msk [vmem:[#allocation5 + $0x3c] sm:$0xf] %vm5551, %v5502
    %5568 = vst.msk [vmem:[#allocation5 + $0x40] sm:$0xf] %vm5551, %v5503
    %5569 = vst.msk [vmem:[#allocation5 + $0x44] sm:$0xf] %vm5551, %v5504
    %5570 = vst.msk [vmem:[#allocation5 + $0x48] sm:$0xf] %vm5551, %v5505
    %5571 = vst.msk [vmem:[#allocation5 + $0x4c] sm:$0xf] %vm5551, %v5506
    %5572 = vst.msk [vmem:[#allocation5 + $0x50] sm:$0xf] %vm5551, %v5507
    %5573 = vst.msk [vmem:[#allocation5 + $0x54] sm:$0xf] %vm5551, %v5508
    %5574 = vst.msk [vmem:[#allocation5 + $0x58] sm:$0xf] %vm5551, %v5509
    %5575 = vst.msk [vmem:[#allocation5 + $0x5c] sm:$0xf] %vm5551, %v5510
    %5576 = vst.msk [vmem:[#allocation5 + $0x60] sm:$0xf] %vm5551, %v5511
    %5577 = vst.msk [vmem:[#allocation5 + $0x64] sm:$0xf] %vm5551, %v5512
    %5578 = vst.msk [vmem:[#allocation5 + $0x68] sm:$0xf] %vm5551, %v5513
    %5579 = vst.msk [vmem:[#allocation5 + $0x6c] sm:$0xf] %vm5551, %v5514
    %5580 = vst.msk [vmem:[#allocation5 + $0x70] sm:$0xf] %vm5551, %v5515
    %5581 = vst.msk [vmem:[#allocation5 + $0x74] sm:$0xf] %vm5551, %v5516
    %5582 = vst.msk [vmem:[#allocation5 + $0x78] sm:$0xf] %vm5551, %v5517
    %5583 = vst.msk [vmem:[#allocation5 + $0x7c] sm:$0xf] %vm5551, %v5518
    %5584 = vst.msk [vmem:[#allocation5 + $0x80] sm:$0xf] %vm5551, %v5519
    %5585 = vst.msk [vmem:[#allocation5 + $0x84] sm:$0xf] %vm5551, %v5520
    %5586 = vst.msk [vmem:[#allocation5 + $0x88] sm:$0xf] %vm5551, %v5521
    %5587 = vst.msk [vmem:[#allocation5 + $0x8c] sm:$0xf] %vm5551, %v5522
    %5588 = vst.msk [vmem:[#allocation5 + $0x90] sm:$0xf] %vm5551, %v5523
    %5589 = vst.msk [vmem:[#allocation5 + $0x94] sm:$0xf] %vm5551, %v5524
    %5590 = vst.msk [vmem:[#allocation5 + $0x98] sm:$0xf] %vm5551, %v5525
    %5591 = vst.msk [vmem:[#allocation5 + $0x9c] sm:$0xf] %vm5551, %v5526
    %5592 = vst.msk [vmem:[#allocation5 + $0xa0] sm:$0xf] %vm5551, %v5527
    %5593 = vst.msk [vmem:[#allocation5 + $0xa4] sm:$0xf] %vm5551, %v5528
    %5594 = vst.msk [vmem:[#allocation5 + $0xa8] sm:$0xf] %vm5551, %v5529
    %5595 = vst.msk [vmem:[#allocation5 + $0xac] sm:$0xf] %vm5551, %v5530
    %5596 = vst.msk [vmem:[#allocation5 + $0xb0] sm:$0xf] %vm5551, %v5531
    %5597 = vst.msk [vmem:[#allocation5 + $0xb4] sm:$0xf] %vm5551, %v5532
    %5598 = vst.msk [vmem:[#allocation5 + $0xb8] sm:$0xf] %vm5551, %v5533
    %5599 = vst.msk [vmem:[#allocation5 + $0xbc] sm:$0xf] %vm5551, %v5534
    %5600 = vst.msk [vmem:[#allocation5 + $0xc0] sm:$0xf] %vm5551, %v5535
    %5601 = vst.msk [vmem:[#allocation5 + $0xc4] sm:$0xf] %vm5551, %v5536
    %5602 = vst.msk [vmem:[#allocation5 + $0xc8] sm:$0xf] %vm5551, %v5537
    %5603 = vst.msk [vmem:[#allocation5 + $0xcc] sm:$0xf] %vm5551, %v5538
    %5604 = vst.msk [vmem:[#allocation5 + $0xd0] sm:$0xf] %vm5551, %v5539
    %5605 = vst.msk [vmem:[#allocation5 + $0xd4] sm:$0xf] %vm5551, %v5540
    %5606 = vst.msk [vmem:[#allocation5 + $0xd8] sm:$0xf] %vm5551, %v5541
    %5607 = vst.msk [vmem:[#allocation5 + $0xdc] sm:$0xf] %vm5551, %v5542
    %5608 = vst.msk [vmem:[#allocation5 + $0xe0] sm:$0xf] %vm5551, %v5543
    %5609 = vst.msk [vmem:[#allocation5 + $0xe4] sm:$0xf] %vm5551, %v5544
    %5610 = vst.msk [vmem:[#allocation5 + $0xe8] sm:$0xf] %vm5551, %v5545
    %5611 = vst.msk [vmem:[#allocation5 + $0xec] sm:$0xf] %vm5551, %v5546
    %5612 = vst.msk [vmem:[#allocation5 + $0xf0] sm:$0xf] %vm5551, %v5547
    %5613 = vst.msk [vmem:[#allocation5 + $0xf4] sm:$0xf] %vm5551, %v5548
    %5614 = vst.msk [vmem:[#allocation5 + $0xf8] sm:$0xf] %vm5551, %v5549
    %5615 = vst.msk [vmem:[#allocation5 + $0xfc] sm:$0xf] %vm5551, %v5550
    %v5616 = vld [vmem:[#allocation3 + $0x1] sm:$0xff]
    %v5617 = vld [vmem:[#allocation3 + $0x9] sm:$0xff]
    %v5618 = vld [vmem:[#allocation3 + $0x19] sm:$0xff]
    %v5619 = vld [vmem:[#allocation3 + $0x21] sm:$0xff]
    %v5620 = vld [vmem:[#allocation3 + $0x31] sm:$0xff]
    %v5621 = vld [vmem:[#allocation3 + $0x39] sm:$0xff]
    %v5622 = vld [vmem:[#allocation3 + $0x49] sm:$0xff]
    %v5623 = vld [vmem:[#allocation3 + $0x51] sm:$0xff]
    %v5624 = vld [vmem:[#allocation3 + $0x61] sm:$0xff]
    %v5625 = vld [vmem:[#allocation3 + $0x69] sm:$0xff]
    %v5626 = vld [vmem:[#allocation3 + $0x79] sm:$0xff]
    %v5627 = vld [vmem:[#allocation3 + $0x81] sm:$0xff]
    %v5628 = vld [vmem:[#allocation3 + $0x91] sm:$0xff]
    %v5629 = vld [vmem:[#allocation3 + $0x99] sm:$0xff]
    %v5630 = vld [vmem:[#allocation3 + $0xa9] sm:$0xff]
    %v5631 = vld [vmem:[#allocation3 + $0xb1] sm:$0xff]
    %v5632 = vld [vmem:[#allocation3 + $0xc1] sm:$0xff]
    %v5633 = vld [vmem:[#allocation3 + $0xc9] sm:$0xff]
    %v5634 = vld [vmem:[#allocation3 + $0xd9] sm:$0xff]
    %v5635 = vld [vmem:[#allocation3 + $0xe1] sm:$0xff]
    %v5636 = vld [vmem:[#allocation3 + $0xf1] sm:$0xff]
    %v5637 = vld [vmem:[#allocation3 + $0xf9] sm:$0xff]
    %v5638 = vld [vmem:[#allocation3 + $0x109] sm:$0xff]
    %v5639 = vld [vmem:[#allocation3 + $0x111] sm:$0xff]
    %v5640 = vld [vmem:[#allocation3 + $0x121] sm:$0xff]
    %v5641 = vld [vmem:[#allocation3 + $0x129] sm:$0xff]
    %v5642 = vld [vmem:[#allocation3 + $0x139] sm:$0xff]
    %v5643 = vld [vmem:[#allocation3 + $0x141] sm:$0xff]
    %v5644 = vld [vmem:[#allocation3 + $0x151] sm:$0xff]
    %v5645 = vld [vmem:[#allocation3 + $0x159] sm:$0xff]
    %v5646 = vld [vmem:[#allocation3 + $0x169] sm:$0xff]
    %v5647 = vld [vmem:[#allocation3 + $0x171] sm:$0xff]
    %v5648 = vld [vmem:[#allocation3 + $0x1b1] sm:$0xff]
    %v5649 = vld [vmem:[#allocation3 + $0x1b9] sm:$0xff]
    %v5650 = vld [vmem:[#allocation3 + $0x1c9] sm:$0xff]
    %v5651 = vld [vmem:[#allocation3 + $0x1d1] sm:$0xff]
    %v5652 = vld [vmem:[#allocation3 + $0x1e1] sm:$0xff]
    %v5653 = vld [vmem:[#allocation3 + $0x1e9] sm:$0xff]
    %v5654 = vld [vmem:[#allocation3 + $0x1f9] sm:$0xff]
    %v5655 = vld [vmem:[#allocation3 + $0x201] sm:$0xff]
    %v5656 = vld [vmem:[#allocation3 + $0x211] sm:$0xff]
    %v5657 = vld [vmem:[#allocation3 + $0x219] sm:$0xff]
    %v5658 = vld [vmem:[#allocation3 + $0x229] sm:$0xff]
    %v5659 = vld [vmem:[#allocation3 + $0x231] sm:$0xff]
    %v5660 = vld [vmem:[#allocation3 + $0x241] sm:$0xff]
    %v5661 = vld [vmem:[#allocation3 + $0x249] sm:$0xff]
    %v5662 = vld [vmem:[#allocation3 + $0x259] sm:$0xff]
    %v5663 = vld [vmem:[#allocation3 + $0x261] sm:$0xff]
    %v5664 = vld [vmem:[#allocation3 + $0x271] sm:$0xff]
    %v5665 = vld [vmem:[#allocation3 + $0x279] sm:$0xff]
    %v5666 = vld [vmem:[#allocation3 + $0x289] sm:$0xff]
    %v5667 = vld [vmem:[#allocation3 + $0x291] sm:$0xff]
    %v5668 = vld [vmem:[#allocation3 + $0x2a1] sm:$0xff]
    %v5669 = vld [vmem:[#allocation3 + $0x2a9] sm:$0xff]
    %v5670 = vld [vmem:[#allocation3 + $0x2b9] sm:$0xff]
    %v5671 = vld [vmem:[#allocation3 + $0x2c1] sm:$0xff]
    %v5672 = vld [vmem:[#allocation3 + $0x2d1] sm:$0xff]
    %v5673 = vld [vmem:[#allocation3 + $0x2d9] sm:$0xff]
    %v5674 = vld [vmem:[#allocation3 + $0x2e9] sm:$0xff]
    %v5675 = vld [vmem:[#allocation3 + $0x2f1] sm:$0xff]
    %v5676 = vld [vmem:[#allocation3 + $0x301] sm:$0xff]
    %v5677 = vld [vmem:[#allocation3 + $0x309] sm:$0xff]
    %v5678 = vld [vmem:[#allocation3 + $0x319] sm:$0xff]
    %v5679 = vld [vmem:[#allocation3 + $0x321] sm:$0xff]
    %v5680 = vpack.c.bf16 %v5616, %v5616
    %v5681 = vpack.c.bf16 %v5617, %v5617
    %v5682 = vpack.c.bf16 %v5618, %v5618
    %v5683 = vpack.c.bf16 %v5619, %v5619
    %v5684 = vpack.c.bf16 %v5620, %v5620
    %v5685 = vpack.c.bf16 %v5621, %v5621
    %v5686 = vpack.c.bf16 %v5622, %v5622
    %v5687 = vpack.c.bf16 %v5623, %v5623
    %v5688 = vpack.c.bf16 %v5624, %v5624
    %v5689 = vpack.c.bf16 %v5625, %v5625
    %v5690 = vpack.c.bf16 %v5626, %v5626
    %v5691 = vpack.c.bf16 %v5627, %v5627
    %v5692 = vpack.c.bf16 %v5628, %v5628
    %v5693 = vpack.c.bf16 %v5629, %v5629
    %v5694 = vpack.c.bf16 %v5630, %v5630
    %v5695 = vpack.c.bf16 %v5631, %v5631
    %v5696 = vpack.c.bf16 %v5632, %v5632
    %v5697 = vpack.c.bf16 %v5633, %v5633
    %v5698 = vpack.c.bf16 %v5634, %v5634
    %v5699 = vpack.c.bf16 %v5635, %v5635
    %v5700 = vpack.c.bf16 %v5636, %v5636
    %v5701 = vpack.c.bf16 %v5637, %v5637
    %v5702 = vpack.c.bf16 %v5638, %v5638
    %v5703 = vpack.c.bf16 %v5639, %v5639
    %v5704 = vpack.c.bf16 %v5640, %v5640
    %v5705 = vpack.c.bf16 %v5641, %v5641
    %v5706 = vpack.c.bf16 %v5642, %v5642
    %v5707 = vpack.c.bf16 %v5643, %v5643
    %v5708 = vpack.c.bf16 %v5644, %v5644
    %v5709 = vpack.c.bf16 %v5645, %v5645
    %v5710 = vpack.c.bf16 %v5646, %v5646
    %v5711 = vpack.c.bf16 %v5647, %v5647
    %v5712 = vpack.c.bf16 %v5648, %v5648
    %v5713 = vpack.c.bf16 %v5649, %v5649
    %v5714 = vpack.c.bf16 %v5650, %v5650
    %v5715 = vpack.c.bf16 %v5651, %v5651
    %v5716 = vpack.c.bf16 %v5652, %v5652
    %v5717 = vpack.c.bf16 %v5653, %v5653
    %v5718 = vpack.c.bf16 %v5654, %v5654
    %v5719 = vpack.c.bf16 %v5655, %v5655
    %v5720 = vpack.c.bf16 %v5656, %v5656
    %v5721 = vpack.c.bf16 %v5657, %v5657
    %v5722 = vpack.c.bf16 %v5658, %v5658
    %v5723 = vpack.c.bf16 %v5659, %v5659
    %v5724 = vpack.c.bf16 %v5660, %v5660
    %v5725 = vpack.c.bf16 %v5661, %v5661
    %v5726 = vpack.c.bf16 %v5662, %v5662
    %v5727 = vpack.c.bf16 %v5663, %v5663
    %v5728 = vpack.c.bf16 %v5664, %v5664
    %v5729 = vpack.c.bf16 %v5665, %v5665
    %v5730 = vpack.c.bf16 %v5666, %v5666
    %v5731 = vpack.c.bf16 %v5667, %v5667
    %v5732 = vpack.c.bf16 %v5668, %v5668
    %v5733 = vpack.c.bf16 %v5669, %v5669
    %v5734 = vpack.c.bf16 %v5670, %v5670
    %v5735 = vpack.c.bf16 %v5671, %v5671
    %v5736 = vpack.c.bf16 %v5672, %v5672
    %v5737 = vpack.c.bf16 %v5673, %v5673
    %v5738 = vpack.c.bf16 %v5674, %v5674
    %v5739 = vpack.c.bf16 %v5675, %v5675
    %v5740 = vpack.c.bf16 %v5676, %v5676
    %v5741 = vpack.c.bf16 %v5677, %v5677
    %v5742 = vpack.c.bf16 %v5678, %v5678
    %v5743 = vpack.c.bf16 %v5679, %v5679
    %5808 = vrot.lane.b32.xlu0 %v5680, 8
    %v5809 = vpop.permute.xlu0 %5808
    %5810 = vrot.lane.b32.xlu0 %v5681, 8
    %v5811 = vpop.permute.xlu0 %5810
    %5812 = vrot.lane.b32.xlu0 %v5682, 8
    %v5813 = vpop.permute.xlu0 %5812
    %5814 = vrot.lane.b32.xlu0 %v5683, 8
    %v5815 = vpop.permute.xlu0 %5814
    %5816 = vrot.lane.b32.xlu0 %v5684, 8
    %v5817 = vpop.permute.xlu0 %5816
    %5818 = vrot.lane.b32.xlu0 %v5685, 8
    %v5819 = vpop.permute.xlu0 %5818
    %5820 = vrot.lane.b32.xlu0 %v5686, 8
    %v5821 = vpop.permute.xlu0 %5820
    %5822 = vrot.lane.b32.xlu0 %v5687, 8
    %v5823 = vpop.permute.xlu0 %5822
    %5824 = vrot.lane.b32.xlu0 %v5688, 8
    %v5825 = vpop.permute.xlu0 %5824
    %5826 = vrot.lane.b32.xlu0 %v5689, 8
    %v5827 = vpop.permute.xlu0 %5826
    %5828 = vrot.lane.b32.xlu0 %v5690, 8
    %v5829 = vpop.permute.xlu0 %5828
    %5830 = vrot.lane.b32.xlu0 %v5691, 8
    %v5831 = vpop.permute.xlu0 %5830
    %5832 = vrot.lane.b32.xlu0 %v5692, 8
    %v5833 = vpop.permute.xlu0 %5832
    %5834 = vrot.lane.b32.xlu0 %v5693, 8
    %v5835 = vpop.permute.xlu0 %5834
    %5836 = vrot.lane.b32.xlu0 %v5694, 8
    %v5837 = vpop.permute.xlu0 %5836
    %5838 = vrot.lane.b32.xlu0 %v5695, 8
    %v5839 = vpop.permute.xlu0 %5838
    %5840 = vrot.lane.b32.xlu0 %v5696, 8
    %v5841 = vpop.permute.xlu0 %5840
    %5842 = vrot.lane.b32.xlu0 %v5697, 8
    %v5843 = vpop.permute.xlu0 %5842
    %5844 = vrot.lane.b32.xlu0 %v5698, 8
    %v5845 = vpop.permute.xlu0 %5844
    %5846 = vrot.lane.b32.xlu0 %v5699, 8
    %v5847 = vpop.permute.xlu0 %5846
    %5848 = vrot.lane.b32.xlu0 %v5700, 8
    %v5849 = vpop.permute.xlu0 %5848
    %5850 = vrot.lane.b32.xlu0 %v5701, 8
    %v5851 = vpop.permute.xlu0 %5850
    %5852 = vrot.lane.b32.xlu0 %v5702, 8
    %v5853 = vpop.permute.xlu0 %5852
    %5854 = vrot.lane.b32.xlu0 %v5703, 8
    %v5855 = vpop.permute.xlu0 %5854
    %5856 = vrot.lane.b32.xlu0 %v5704, 8
    %v5857 = vpop.permute.xlu0 %5856
    %5858 = vrot.lane.b32.xlu0 %v5705, 8
    %v5859 = vpop.permute.xlu0 %5858
    %5860 = vrot.lane.b32.xlu0 %v5706, 8
    %v5861 = vpop.permute.xlu0 %5860
    %5862 = vrot.lane.b32.xlu0 %v5707, 8
    %v5863 = vpop.permute.xlu0 %5862
    %5864 = vrot.lane.b32.xlu0 %v5708, 8
    %v5865 = vpop.permute.xlu0 %5864
    %5866 = vrot.lane.b32.xlu0 %v5709, 8
    %v5867 = vpop.permute.xlu0 %5866
    %5868 = vrot.lane.b32.xlu0 %v5710, 8
    %v5869 = vpop.permute.xlu0 %5868
    %5870 = vrot.lane.b32.xlu0 %v5711, 8
    %v5871 = vpop.permute.xlu0 %5870
    %5872 = vrot.lane.b32.xlu0 %v5712, 8
    %v5873 = vpop.permute.xlu0 %5872
    %5874 = vrot.lane.b32.xlu0 %v5713, 8
    %v5875 = vpop.permute.xlu0 %5874
    %5876 = vrot.lane.b32.xlu0 %v5714, 8
    %v5877 = vpop.permute.xlu0 %5876
    %5878 = vrot.lane.b32.xlu0 %v5715, 8
    %v5879 = vpop.permute.xlu0 %5878
    %5880 = vrot.lane.b32.xlu0 %v5716, 8
    %v5881 = vpop.permute.xlu0 %5880
    %5882 = vrot.lane.b32.xlu0 %v5717, 8
    %v5883 = vpop.permute.xlu0 %5882
    %5884 = vrot.lane.b32.xlu0 %v5718, 8
    %v5885 = vpop.permute.xlu0 %5884
    %5886 = vrot.lane.b32.xlu0 %v5719, 8
    %v5887 = vpop.permute.xlu0 %5886
    %5888 = vrot.lane.b32.xlu0 %v5720, 8
    %v5889 = vpop.permute.xlu0 %5888
    %5890 = vrot.lane.b32.xlu0 %v5721, 8
    %v5891 = vpop.permute.xlu0 %5890
    %5892 = vrot.lane.b32.xlu0 %v5722, 8
    %v5893 = vpop.permute.xlu0 %5892
    %5894 = vrot.lane.b32.xlu0 %v5723, 8
    %v5895 = vpop.permute.xlu0 %5894
    %5896 = vrot.lane.b32.xlu0 %v5724, 8
    %v5897 = vpop.permute.xlu0 %5896
    %5898 = vrot.lane.b32.xlu0 %v5725, 8
    %v5899 = vpop.permute.xlu0 %5898
    %5900 = vrot.lane.b32.xlu0 %v5726, 8
    %v5901 = vpop.permute.xlu0 %5900
    %5902 = vrot.lane.b32.xlu0 %v5727, 8
    %v5903 = vpop.permute.xlu0 %5902
    %5904 = vrot.lane.b32.xlu0 %v5728, 8
    %v5905 = vpop.permute.xlu0 %5904
    %5906 = vrot.lane.b32.xlu0 %v5729, 8
    %v5907 = vpop.permute.xlu0 %5906
    %5908 = vrot.lane.b32.xlu0 %v5730, 8
    %v5909 = vpop.permute.xlu0 %5908
    %5910 = vrot.lane.b32.xlu0 %v5731, 8
    %v5911 = vpop.permute.xlu0 %5910
    %5912 = vrot.lane.b32.xlu0 %v5732, 8
    %v5913 = vpop.permute.xlu0 %5912
    %5914 = vrot.lane.b32.xlu0 %v5733, 8
    %v5915 = vpop.permute.xlu0 %5914
    %5916 = vrot.lane.b32.xlu0 %v5734, 8
    %v5917 = vpop.permute.xlu0 %5916
    %5918 = vrot.lane.b32.xlu0 %v5735, 8
    %v5919 = vpop.permute.xlu0 %5918
    %5920 = vrot.lane.b32.xlu0 %v5736, 8
    %v5921 = vpop.permute.xlu0 %5920
    %5922 = vrot.lane.b32.xlu0 %v5737, 8
    %v5923 = vpop.permute.xlu0 %5922
    %5924 = vrot.lane.b32.xlu0 %v5738, 8
    %v5925 = vpop.permute.xlu0 %5924
    %5926 = vrot.lane.b32.xlu0 %v5739, 8
    %v5927 = vpop.permute.xlu0 %5926
    %5928 = vrot.lane.b32.xlu0 %v5740, 8
    %v5929 = vpop.permute.xlu0 %5928
    %5930 = vrot.lane.b32.xlu0 %v5741, 8
    %v5931 = vpop.permute.xlu0 %5930
    %5932 = vrot.lane.b32.xlu0 %v5742, 8
    %v5933 = vpop.permute.xlu0 %5932
    %5934 = vrot.lane.b32.xlu0 %v5743, 8
    %v5935 = vpop.permute.xlu0 %5934
    %vm6000 = vcmask 126016
    %6001 = vst.msk [vmem:[#allocation5] sm:$0xf] %vm6000, %v5809
    %6002 = vst.msk [vmem:[#allocation5 + $0x4] sm:$0xf] %vm6000, %v5811
    %6003 = vst.msk [vmem:[#allocation5 + $0x8] sm:$0xf] %vm6000, %v5813
    %6004 = vst.msk [vmem:[#allocation5 + $0xc] sm:$0xf] %vm6000, %v5815
    %6005 = vst.msk [vmem:[#allocation5 + $0x10] sm:$0xf] %vm6000, %v5817
    %6006 = vst.msk [vmem:[#allocation5 + $0x14] sm:$0xf] %vm6000, %v5819
    %6007 = vst.msk [vmem:[#allocation5 + $0x18] sm:$0xf] %vm6000, %v5821
    %6008 = vst.msk [vmem:[#allocation5 + $0x1c] sm:$0xf] %vm6000, %v5823
    %6009 = vst.msk [vmem:[#allocation5 + $0x20] sm:$0xf] %vm6000, %v5825
    %6010 = vst.msk [vmem:[#allocation5 + $0x24] sm:$0xf] %vm6000, %v5827
    %6011 = vst.msk [vmem:[#allocation5 + $0x28] sm:$0xf] %vm6000, %v5829
    %6012 = vst.msk [vmem:[#allocation5 + $0x2c] sm:$0xf] %vm6000, %v5831
    %6013 = vst.msk [vmem:[#allocation5 + $0x30] sm:$0xf] %vm6000, %v5833
    %6014 = vst.msk [vmem:[#allocation5 + $0x34] sm:$0xf] %vm6000, %v5835
    %6015 = vst.msk [vmem:[#allocation5 + $0x38] sm:$0xf] %vm6000, %v5837
    %6016 = vst.msk [vmem:[#allocation5 + $0x3c] sm:$0xf] %vm6000, %v5839
    %6017 = vst.msk [vmem:[#allocation5 + $0x40] sm:$0xf] %vm6000, %v5841
    %6018 = vst.msk [vmem:[#allocation5 + $0x44] sm:$0xf] %vm6000, %v5843
    %6019 = vst.msk [vmem:[#allocation5 + $0x48] sm:$0xf] %vm6000, %v5845
    %6020 = vst.msk [vmem:[#allocation5 + $0x4c] sm:$0xf] %vm6000, %v5847
    %6021 = vst.msk [vmem:[#allocation5 + $0x50] sm:$0xf] %vm6000, %v5849
    %6022 = vst.msk [vmem:[#allocation5 + $0x54] sm:$0xf] %vm6000, %v5851
    %6023 = vst.msk [vmem:[#allocation5 + $0x58] sm:$0xf] %vm6000, %v5853
    %6024 = vst.msk [vmem:[#allocation5 + $0x5c] sm:$0xf] %vm6000, %v5855
    %6025 = vst.msk [vmem:[#allocation5 + $0x60] sm:$0xf] %vm6000, %v5857
    %6026 = vst.msk [vmem:[#allocation5 + $0x64] sm:$0xf] %vm6000, %v5859
    %6027 = vst.msk [vmem:[#allocation5 + $0x68] sm:$0xf] %vm6000, %v5861
    %6028 = vst.msk [vmem:[#allocation5 + $0x6c] sm:$0xf] %vm6000, %v5863
    %6029 = vst.msk [vmem:[#allocation5 + $0x70] sm:$0xf] %vm6000, %v5865
    %6030 = vst.msk [vmem:[#allocation5 + $0x74] sm:$0xf] %vm6000, %v5867
    %6031 = vst.msk [vmem:[#allocation5 + $0x78] sm:$0xf] %vm6000, %v5869
    %6032 = vst.msk [vmem:[#allocation5 + $0x7c] sm:$0xf] %vm6000, %v5871
    %6033 = vst.msk [vmem:[#allocation5 + $0x80] sm:$0xf] %vm6000, %v5873
    %6034 = vst.msk [vmem:[#allocation5 + $0x84] sm:$0xf] %vm6000, %v5875
    %6035 = vst.msk [vmem:[#allocation5 + $0x88] sm:$0xf] %vm6000, %v5877
    %6036 = vst.msk [vmem:[#allocation5 + $0x8c] sm:$0xf] %vm6000, %v5879
    %6037 = vst.msk [vmem:[#allocation5 + $0x90] sm:$0xf] %vm6000, %v5881
    %6038 = vst.msk [vmem:[#allocation5 + $0x94] sm:$0xf] %vm6000, %v5883
    %6039 = vst.msk [vmem:[#allocation5 + $0x98] sm:$0xf] %vm6000, %v5885
    %6040 = vst.msk [vmem:[#allocation5 + $0x9c] sm:$0xf] %vm6000, %v5887
    %6041 = vst.msk [vmem:[#allocation5 + $0xa0] sm:$0xf] %vm6000, %v5889
    %6042 = vst.msk [vmem:[#allocation5 + $0xa4] sm:$0xf] %vm6000, %v5891
    %6043 = vst.msk [vmem:[#allocation5 + $0xa8] sm:$0xf] %vm6000, %v5893
    %6044 = vst.msk [vmem:[#allocation5 + $0xac] sm:$0xf] %vm6000, %v5895
    %6045 = vst.msk [vmem:[#allocation5 + $0xb0] sm:$0xf] %vm6000, %v5897
    %6046 = vst.msk [vmem:[#allocation5 + $0xb4] sm:$0xf] %vm6000, %v5899
    %6047 = vst.msk [vmem:[#allocation5 + $0xb8] sm:$0xf] %vm6000, %v5901
    %6048 = vst.msk [vmem:[#allocation5 + $0xbc] sm:$0xf] %vm6000, %v5903
    %6049 = vst.msk [vmem:[#allocation5 + $0xc0] sm:$0xf] %vm6000, %v5905
    %6050 = vst.msk [vmem:[#allocation5 + $0xc4] sm:$0xf] %vm6000, %v5907
    %6051 = vst.msk [vmem:[#allocation5 + $0xc8] sm:$0xf] %vm6000, %v5909
    %6052 = vst.msk [vmem:[#allocation5 + $0xcc] sm:$0xf] %vm6000, %v5911
    %6053 = vst.msk [vmem:[#allocation5 + $0xd0] sm:$0xf] %vm6000, %v5913
    %6054 = vst.msk [vmem:[#allocation5 + $0xd4] sm:$0xf] %vm6000, %v5915
    %6055 = vst.msk [vmem:[#allocation5 + $0xd8] sm:$0xf] %vm6000, %v5917
    %6056 = vst.msk [vmem:[#allocation5 + $0xdc] sm:$0xf] %vm6000, %v5919
    %6057 = vst.msk [vmem:[#allocation5 + $0xe0] sm:$0xf] %vm6000, %v5921
    %6058 = vst.msk [vmem:[#allocation5 + $0xe4] sm:$0xf] %vm6000, %v5923
    %6059 = vst.msk [vmem:[#allocation5 + $0xe8] sm:$0xf] %vm6000, %v5925
    %6060 = vst.msk [vmem:[#allocation5 + $0xec] sm:$0xf] %vm6000, %v5927
    %6061 = vst.msk [vmem:[#allocation5 + $0xf0] sm:$0xf] %vm6000, %v5929
    %6062 = vst.msk [vmem:[#allocation5 + $0xf4] sm:$0xf] %vm6000, %v5931
    %6063 = vst.msk [vmem:[#allocation5 + $0xf8] sm:$0xf] %vm6000, %v5933
    %6064 = vst.msk [vmem:[#allocation5 + $0xfc] sm:$0xf] %vm6000, %v5935
    %v6065 = vld [vmem:[#allocation3 + $0x2] sm:$0xff]
    %v6066 = vld [vmem:[#allocation3 + $0xa] sm:$0xff]
    %v6067 = vld [vmem:[#allocation3 + $0x1a] sm:$0xff]
    %v6068 = vld [vmem:[#allocation3 + $0x22] sm:$0xff]
    %v6069 = vld [vmem:[#allocation3 + $0x32] sm:$0xff]
    %v6070 = vld [vmem:[#allocation3 + $0x3a] sm:$0xff]
    %v6071 = vld [vmem:[#allocation3 + $0x4a] sm:$0xff]
    %v6072 = vld [vmem:[#allocation3 + $0x52] sm:$0xff]
    %v6073 = vld [vmem:[#allocation3 + $0x62] sm:$0xff]
    %v6074 = vld [vmem:[#allocation3 + $0x6a] sm:$0xff]
    %v6075 = vld [vmem:[#allocation3 + $0x7a] sm:$0xff]
    %v6076 = vld [vmem:[#allocation3 + $0x82] sm:$0xff]
    %v6077 = vld [vmem:[#allocation3 + $0x92] sm:$0xff]
    %v6078 = vld [vmem:[#allocation3 + $0x9a] sm:$0xff]
    %v6079 = vld [vmem:[#allocation3 + $0xaa] sm:$0xff]
    %v6080 = vld [vmem:[#allocation3 + $0xb2] sm:$0xff]
    %v6081 = vld [vmem:[#allocation3 + $0xc2] sm:$0xff]
    %v6082 = vld [vmem:[#allocation3 + $0xca] sm:$0xff]
    %v6083 = vld [vmem:[#allocation3 + $0xda] sm:$0xff]
    %v6084 = vld [vmem:[#allocation3 + $0xe2] sm:$0xff]
    %v6085 = vld [vmem:[#allocation3 + $0xf2] sm:$0xff]
    %v6086 = vld [vmem:[#allocation3 + $0xfa] sm:$0xff]
    %v6087 = vld [vmem:[#allocation3 + $0x10a] sm:$0xff]
    %v6088 = vld [vmem:[#allocation3 + $0x112] sm:$0xff]
    %v6089 = vld [vmem:[#allocation3 + $0x122] sm:$0xff]
    %v6090 = vld [vmem:[#allocation3 + $0x12a] sm:$0xff]
    %v6091 = vld [vmem:[#allocation3 + $0x13a] sm:$0xff]
    %v6092 = vld [vmem:[#allocation3 + $0x142] sm:$0xff]
    %v6093 = vld [vmem:[#allocation3 + $0x152] sm:$0xff]
    %v6094 = vld [vmem:[#allocation3 + $0x15a] sm:$0xff]
    %v6095 = vld [vmem:[#allocation3 + $0x16a] sm:$0xff]
    %v6096 = vld [vmem:[#allocation3 + $0x172] sm:$0xff]
    %v6097 = vld [vmem:[#allocation3 + $0x1b2] sm:$0xff]
    %v6098 = vld [vmem:[#allocation3 + $0x1ba] sm:$0xff]
    %v6099 = vld [vmem:[#allocation3 + $0x1ca] sm:$0xff]
    %v6100 = vld [vmem:[#allocation3 + $0x1d2] sm:$0xff]
    %v6101 = vld [vmem:[#allocation3 + $0x1e2] sm:$0xff]
    %v6102 = vld [vmem:[#allocation3 + $0x1ea] sm:$0xff]
    %v6103 = vld [vmem:[#allocation3 + $0x1fa] sm:$0xff]
    %v6104 = vld [vmem:[#allocation3 + $0x202] sm:$0xff]
    %v6105 = vld [vmem:[#allocation3 + $0x212] sm:$0xff]
    %v6106 = vld [vmem:[#allocation3 + $0x21a] sm:$0xff]
    %v6107 = vld [vmem:[#allocation3 + $0x22a] sm:$0xff]
    %v6108 = vld [vmem:[#allocation3 + $0x232] sm:$0xff]
    %v6109 = vld [vmem:[#allocation3 + $0x242] sm:$0xff]
    %v6110 = vld [vmem:[#allocation3 + $0x24a] sm:$0xff]
    %v6111 = vld [vmem:[#allocation3 + $0x25a] sm:$0xff]
    %v6112 = vld [vmem:[#allocation3 + $0x262] sm:$0xff]
    %v6113 = vld [vmem:[#allocation3 + $0x272] sm:$0xff]
    %v6114 = vld [vmem:[#allocation3 + $0x27a] sm:$0xff]
    %v6115 = vld [vmem:[#allocation3 + $0x28a] sm:$0xff]
    %v6116 = vld [vmem:[#allocation3 + $0x292] sm:$0xff]
    %v6117 = vld [vmem:[#allocation3 + $0x2a2] sm:$0xff]
    %v6118 = vld [vmem:[#allocation3 + $0x2aa] sm:$0xff]
    %v6119 = vld [vmem:[#allocation3 + $0x2ba] sm:$0xff]
    %v6120 = vld [vmem:[#allocation3 + $0x2c2] sm:$0xff]
    %v6121 = vld [vmem:[#allocation3 + $0x2d2] sm:$0xff]
    %v6122 = vld [vmem:[#allocation3 + $0x2da] sm:$0xff]
    %v6123 = vld [vmem:[#allocation3 + $0x2ea] sm:$0xff]
    %v6124 = vld [vmem:[#allocation3 + $0x2f2] sm:$0xff]
    %v6125 = vld [vmem:[#allocation3 + $0x302] sm:$0xff]
    %v6126 = vld [vmem:[#allocation3 + $0x30a] sm:$0xff]
    %v6127 = vld [vmem:[#allocation3 + $0x31a] sm:$0xff]
    %v6128 = vld [vmem:[#allocation3 + $0x322] sm:$0xff]
    %v6129 = vpack.c.bf16 %v6065, %v6065
    %v6130 = vpack.c.bf16 %v6066, %v6066
    %v6131 = vpack.c.bf16 %v6067, %v6067
    %v6132 = vpack.c.bf16 %v6068, %v6068
    %v6133 = vpack.c.bf16 %v6069, %v6069
    %v6134 = vpack.c.bf16 %v6070, %v6070
    %v6135 = vpack.c.bf16 %v6071, %v6071
    %v6136 = vpack.c.bf16 %v6072, %v6072
    %v6137 = vpack.c.bf16 %v6073, %v6073
    %v6138 = vpack.c.bf16 %v6074, %v6074
    %v6139 = vpack.c.bf16 %v6075, %v6075
    %v6140 = vpack.c.bf16 %v6076, %v6076
    %v6141 = vpack.c.bf16 %v6077, %v6077
    %v6142 = vpack.c.bf16 %v6078, %v6078
    %v6143 = vpack.c.bf16 %v6079, %v6079
    %v6144 = vpack.c.bf16 %v6080, %v6080
    %v6145 = vpack.c.bf16 %v6081, %v6081
    %v6146 = vpack.c.bf16 %v6082, %v6082
    %v6147 = vpack.c.bf16 %v6083, %v6083
    %v6148 = vpack.c.bf16 %v6084, %v6084
    %v6149 = vpack.c.bf16 %v6085, %v6085
    %v6150 = vpack.c.bf16 %v6086, %v6086
    %v6151 = vpack.c.bf16 %v6087, %v6087
    %v6152 = vpack.c.bf16 %v6088, %v6088
    %v6153 = vpack.c.bf16 %v6089, %v6089
    %v6154 = vpack.c.bf16 %v6090, %v6090
    %v6155 = vpack.c.bf16 %v6091, %v6091
    %v6156 = vpack.c.bf16 %v6092, %v6092
    %v6157 = vpack.c.bf16 %v6093, %v6093
    %v6158 = vpack.c.bf16 %v6094, %v6094
    %v6159 = vpack.c.bf16 %v6095, %v6095
    %v6160 = vpack.c.bf16 %v6096, %v6096
    %v6161 = vpack.c.bf16 %v6097, %v6097
    %v6162 = vpack.c.bf16 %v6098, %v6098
    %v6163 = vpack.c.bf16 %v6099, %v6099
    %v6164 = vpack.c.bf16 %v6100, %v6100
    %v6165 = vpack.c.bf16 %v6101, %v6101
    %v6166 = vpack.c.bf16 %v6102, %v6102
    %v6167 = vpack.c.bf16 %v6103, %v6103
    %v6168 = vpack.c.bf16 %v6104, %v6104
    %v6169 = vpack.c.bf16 %v6105, %v6105
    %v6170 = vpack.c.bf16 %v6106, %v6106
    %v6171 = vpack.c.bf16 %v6107, %v6107
    %v6172 = vpack.c.bf16 %v6108, %v6108
    %v6173 = vpack.c.bf16 %v6109, %v6109
    %v6174 = vpack.c.bf16 %v6110, %v6110
    %v6175 = vpack.c.bf16 %v6111, %v6111
    %v6176 = vpack.c.bf16 %v6112, %v6112
    %v6177 = vpack.c.bf16 %v6113, %v6113
    %v6178 = vpack.c.bf16 %v6114, %v6114
    %v6179 = vpack.c.bf16 %v6115, %v6115
    %v6180 = vpack.c.bf16 %v6116, %v6116
    %v6181 = vpack.c.bf16 %v6117, %v6117
    %v6182 = vpack.c.bf16 %v6118, %v6118
    %v6183 = vpack.c.bf16 %v6119, %v6119
    %v6184 = vpack.c.bf16 %v6120, %v6120
    %v6185 = vpack.c.bf16 %v6121, %v6121
    %v6186 = vpack.c.bf16 %v6122, %v6122
    %v6187 = vpack.c.bf16 %v6123, %v6123
    %v6188 = vpack.c.bf16 %v6124, %v6124
    %v6189 = vpack.c.bf16 %v6125, %v6125
    %v6190 = vpack.c.bf16 %v6126, %v6126
    %v6191 = vpack.c.bf16 %v6127, %v6127
    %v6192 = vpack.c.bf16 %v6128, %v6128
    %6257 = vrot.lane.b32.xlu0 %v6129, 16
    %v6258 = vpop.permute.xlu0 %6257
    %6259 = vrot.lane.b32.xlu0 %v6130, 16
    %v6260 = vpop.permute.xlu0 %6259
    %6261 = vrot.lane.b32.xlu0 %v6131, 16
    %v6262 = vpop.permute.xlu0 %6261
    %6263 = vrot.lane.b32.xlu0 %v6132, 16
    %v6264 = vpop.permute.xlu0 %6263
    %6265 = vrot.lane.b32.xlu0 %v6133, 16
    %v6266 = vpop.permute.xlu0 %6265
    %6267 = vrot.lane.b32.xlu0 %v6134, 16
    %v6268 = vpop.permute.xlu0 %6267
    %6269 = vrot.lane.b32.xlu0 %v6135, 16
    %v6270 = vpop.permute.xlu0 %6269
    %6271 = vrot.lane.b32.xlu0 %v6136, 16
    %v6272 = vpop.permute.xlu0 %6271
    %6273 = vrot.lane.b32.xlu0 %v6137, 16
    %v6274 = vpop.permute.xlu0 %6273
    %6275 = vrot.lane.b32.xlu0 %v6138, 16
    %v6276 = vpop.permute.xlu0 %6275
    %6277 = vrot.lane.b32.xlu0 %v6139, 16
    %v6278 = vpop.permute.xlu0 %6277
    %6279 = vrot.lane.b32.xlu0 %v6140, 16
    %v6280 = vpop.permute.xlu0 %6279
    %6281 = vrot.lane.b32.xlu0 %v6141, 16
    %v6282 = vpop.permute.xlu0 %6281
    %6283 = vrot.lane.b32.xlu0 %v6142, 16
    %v6284 = vpop.permute.xlu0 %6283
    %6285 = vrot.lane.b32.xlu0 %v6143, 16
    %v6286 = vpop.permute.xlu0 %6285
    %6287 = vrot.lane.b32.xlu0 %v6144, 16
    %v6288 = vpop.permute.xlu0 %6287
    %6289 = vrot.lane.b32.xlu0 %v6145, 16
    %v6290 = vpop.permute.xlu0 %6289
    %6291 = vrot.lane.b32.xlu0 %v6146, 16
    %v6292 = vpop.permute.xlu0 %6291
    %6293 = vrot.lane.b32.xlu0 %v6147, 16
    %v6294 = vpop.permute.xlu0 %6293
    %6295 = vrot.lane.b32.xlu0 %v6148, 16
    %v6296 = vpop.permute.xlu0 %6295
    %6297 = vrot.lane.b32.xlu0 %v6149, 16
    %v6298 = vpop.permute.xlu0 %6297
    %6299 = vrot.lane.b32.xlu0 %v6150, 16
    %v6300 = vpop.permute.xlu0 %6299
    %6301 = vrot.lane.b32.xlu0 %v6151, 16
    %v6302 = vpop.permute.xlu0 %6301
    %6303 = vrot.lane.b32.xlu0 %v6152, 16
    %v6304 = vpop.permute.xlu0 %6303
    %6305 = vrot.lane.b32.xlu0 %v6153, 16
    %v6306 = vpop.permute.xlu0 %6305
    %6307 = vrot.lane.b32.xlu0 %v6154, 16
    %v6308 = vpop.permute.xlu0 %6307
    %6309 = vrot.lane.b32.xlu0 %v6155, 16
    %v6310 = vpop.permute.xlu0 %6309
    %6311 = vrot.lane.b32.xlu0 %v6156, 16
    %v6312 = vpop.permute.xlu0 %6311
    %6313 = vrot.lane.b32.xlu0 %v6157, 16
    %v6314 = vpop.permute.xlu0 %6313
    %6315 = vrot.lane.b32.xlu0 %v6158, 16
    %v6316 = vpop.permute.xlu0 %6315
    %6317 = vrot.lane.b32.xlu0 %v6159, 16
    %v6318 = vpop.permute.xlu0 %6317
    %6319 = vrot.lane.b32.xlu0 %v6160, 16
    %v6320 = vpop.permute.xlu0 %6319
    %6321 = vrot.lane.b32.xlu0 %v6161, 16
    %v6322 = vpop.permute.xlu0 %6321
    %6323 = vrot.lane.b32.xlu0 %v6162, 16
    %v6324 = vpop.permute.xlu0 %6323
    %6325 = vrot.lane.b32.xlu0 %v6163, 16
    %v6326 = vpop.permute.xlu0 %6325
    %6327 = vrot.lane.b32.xlu0 %v6164, 16
    %v6328 = vpop.permute.xlu0 %6327
    %6329 = vrot.lane.b32.xlu0 %v6165, 16
    %v6330 = vpop.permute.xlu0 %6329
    %6331 = vrot.lane.b32.xlu0 %v6166, 16
    %v6332 = vpop.permute.xlu0 %6331
    %6333 = vrot.lane.b32.xlu0 %v6167, 16
    %v6334 = vpop.permute.xlu0 %6333
    %6335 = vrot.lane.b32.xlu0 %v6168, 16
    %v6336 = vpop.permute.xlu0 %6335
    %6337 = vrot.lane.b32.xlu0 %v6169, 16
    %v6338 = vpop.permute.xlu0 %6337
    %6339 = vrot.lane.b32.xlu0 %v6170, 16
    %v6340 = vpop.permute.xlu0 %6339
    %6341 = vrot.lane.b32.xlu0 %v6171, 16
    %v6342 = vpop.permute.xlu0 %6341
    %6343 = vrot.lane.b32.xlu0 %v6172, 16
    %v6344 = vpop.permute.xlu0 %6343
    %6345 = vrot.lane.b32.xlu0 %v6173, 16
    %v6346 = vpop.permute.xlu0 %6345
    %6347 = vrot.lane.b32.xlu0 %v6174, 16
    %v6348 = vpop.permute.xlu0 %6347
    %6349 = vrot.lane.b32.xlu0 %v6175, 16
    %v6350 = vpop.permute.xlu0 %6349
    %6351 = vrot.lane.b32.xlu0 %v6176, 16
    %v6352 = vpop.permute.xlu0 %6351
    %6353 = vrot.lane.b32.xlu0 %v6177, 16
    %v6354 = vpop.permute.xlu0 %6353
    %6355 = vrot.lane.b32.xlu0 %v6178, 16
    %v6356 = vpop.permute.xlu0 %6355
    %6357 = vrot.lane.b32.xlu0 %v6179, 16
    %v6358 = vpop.permute.xlu0 %6357
    %6359 = vrot.lane.b32.xlu0 %v6180, 16
    %v6360 = vpop.permute.xlu0 %6359
    %6361 = vrot.lane.b32.xlu0 %v6181, 16
    %v6362 = vpop.permute.xlu0 %6361
    %6363 = vrot.lane.b32.xlu0 %v6182, 16
    %v6364 = vpop.permute.xlu0 %6363
    %6365 = vrot.lane.b32.xlu0 %v6183, 16
    %v6366 = vpop.permute.xlu0 %6365
    %6367 = vrot.lane.b32.xlu0 %v6184, 16
    %v6368 = vpop.permute.xlu0 %6367
    %6369 = vrot.lane.b32.xlu0 %v6185, 16
    %v6370 = vpop.permute.xlu0 %6369
    %6371 = vrot.lane.b32.xlu0 %v6186, 16
    %v6372 = vpop.permute.xlu0 %6371
    %6373 = vrot.lane.b32.xlu0 %v6187, 16
    %v6374 = vpop.permute.xlu0 %6373
    %6375 = vrot.lane.b32.xlu0 %v6188, 16
    %v6376 = vpop.permute.xlu0 %6375
    %6377 = vrot.lane.b32.xlu0 %v6189, 16
    %v6378 = vpop.permute.xlu0 %6377
    %6379 = vrot.lane.b32.xlu0 %v6190, 16
    %v6380 = vpop.permute.xlu0 %6379
    %6381 = vrot.lane.b32.xlu0 %v6191, 16
    %v6382 = vpop.permute.xlu0 %6381
    %6383 = vrot.lane.b32.xlu0 %v6192, 16
    %v6384 = vpop.permute.xlu0 %6383
    %vm6449 = vcmask 191616
    %6450 = vst.msk [vmem:[#allocation5] sm:$0xf] %vm6449, %v6258
    %6451 = vst.msk [vmem:[#allocation5 + $0x4] sm:$0xf] %vm6449, %v6260
    %6452 = vst.msk [vmem:[#allocation5 + $0x8] sm:$0xf] %vm6449, %v6262
    %6453 = vst.msk [vmem:[#allocation5 + $0xc] sm:$0xf] %vm6449, %v6264
    %6454 = vst.msk [vmem:[#allocation5 + $0x10] sm:$0xf] %vm6449, %v6266
    %6455 = vst.msk [vmem:[#allocation5 + $0x14] sm:$0xf] %vm6449, %v6268
    %6456 = vst.msk [vmem:[#allocation5 + $0x18] sm:$0xf] %vm6449, %v6270
    %6457 = vst.msk [vmem:[#allocation5 + $0x1c] sm:$0xf] %vm6449, %v6272
    %6458 = vst.msk [vmem:[#allocation5 + $0x20] sm:$0xf] %vm6449, %v6274
    %6459 = vst.msk [vmem:[#allocation5 + $0x24] sm:$0xf] %vm6449, %v6276
    %6460 = vst.msk [vmem:[#allocation5 + $0x28] sm:$0xf] %vm6449, %v6278
    %6461 = vst.msk [vmem:[#allocation5 + $0x2c] sm:$0xf] %vm6449, %v6280
    %6462 = vst.msk [vmem:[#allocation5 + $0x30] sm:$0xf] %vm6449, %v6282
    %6463 = vst.msk [vmem:[#allocation5 + $0x34] sm:$0xf] %vm6449, %v6284
    %6464 = vst.msk [vmem:[#allocation5 + $0x38] sm:$0xf] %vm6449, %v6286
    %6465 = vst.msk [vmem:[#allocation5 + $0x3c] sm:$0xf] %vm6449, %v6288
    %6466 = vst.msk [vmem:[#allocation5 + $0x40] sm:$0xf] %vm6449, %v6290
    %6467 = vst.msk [vmem:[#allocation5 + $0x44] sm:$0xf] %vm6449, %v6292
    %6468 = vst.msk [vmem:[#allocation5 + $0x48] sm:$0xf] %vm6449, %v6294
    %6469 = vst.msk [vmem:[#allocation5 + $0x4c] sm:$0xf] %vm6449, %v6296
    %6470 = vst.msk [vmem:[#allocation5 + $0x50] sm:$0xf] %vm6449, %v6298
    %6471 = vst.msk [vmem:[#allocation5 + $0x54] sm:$0xf] %vm6449, %v6300
    %6472 = vst.msk [vmem:[#allocation5 + $0x58] sm:$0xf] %vm6449, %v6302
    %6473 = vst.msk [vmem:[#allocation5 + $0x5c] sm:$0xf] %vm6449, %v6304
    %6474 = vst.msk [vmem:[#allocation5 + $0x60] sm:$0xf] %vm6449, %v6306
    %6475 = vst.msk [vmem:[#allocation5 + $0x64] sm:$0xf] %vm6449, %v6308
    %6476 = vst.msk [vmem:[#allocation5 + $0x68] sm:$0xf] %vm6449, %v6310
    %6477 = vst.msk [vmem:[#allocation5 + $0x6c] sm:$0xf] %vm6449, %v6312
    %6478 = vst.msk [vmem:[#allocation5 + $0x70] sm:$0xf] %vm6449, %v6314
    %6479 = vst.msk [vmem:[#allocation5 + $0x74] sm:$0xf] %vm6449, %v6316
    %6480 = vst.msk [vmem:[#allocation5 + $0x78] sm:$0xf] %vm6449, %v6318
    %6481 = vst.msk [vmem:[#allocation5 + $0x7c] sm:$0xf] %vm6449, %v6320
    %6482 = vst.msk [vmem:[#allocation5 + $0x80] sm:$0xf] %vm6449, %v6322
    %6483 = vst.msk [vmem:[#allocation5 + $0x84] sm:$0xf] %vm6449, %v6324
    %6484 = vst.msk [vmem:[#allocation5 + $0x88] sm:$0xf] %vm6449, %v6326
    %6485 = vst.msk [vmem:[#allocation5 + $0x8c] sm:$0xf] %vm6449, %v6328
    %6486 = vst.msk [vmem:[#allocation5 + $0x90] sm:$0xf] %vm6449, %v6330
    %6487 = vst.msk [vmem:[#allocation5 + $0x94] sm:$0xf] %vm6449, %v6332
    %6488 = vst.msk [vmem:[#allocation5 + $0x98] sm:$0xf] %vm6449, %v6334
    %6489 = vst.msk [vmem:[#allocation5 + $0x9c] sm:$0xf] %vm6449, %v6336
    %6490 = vst.msk [vmem:[#allocation5 + $0xa0] sm:$0xf] %vm6449, %v6338
    %6491 = vst.msk [vmem:[#allocation5 + $0xa4] sm:$0xf] %vm6449, %v6340
    %6492 = vst.msk [vmem:[#allocation5 + $0xa8] sm:$0xf] %vm6449, %v6342
    %6493 = vst.msk [vmem:[#allocation5 + $0xac] sm:$0xf] %vm6449, %v6344
    %6494 = vst.msk [vmem:[#allocation5 + $0xb0] sm:$0xf] %vm6449, %v6346
    %6495 = vst.msk [vmem:[#allocation5 + $0xb4] sm:$0xf] %vm6449, %v6348
    %6496 = vst.msk [vmem:[#allocation5 + $0xb8] sm:$0xf] %vm6449, %v6350
    %6497 = vst.msk [vmem:[#allocation5 + $0xbc] sm:$0xf] %vm6449, %v6352
    %6498 = vst.msk [vmem:[#allocation5 + $0xc0] sm:$0xf] %vm6449, %v6354
    %6499 = vst.msk [vmem:[#allocation5 + $0xc4] sm:$0xf] %vm6449, %v6356
    %6500 = vst.msk [vmem:[#allocation5 + $0xc8] sm:$0xf] %vm6449, %v6358
    %6501 = vst.msk [vmem:[#allocation5 + $0xcc] sm:$0xf] %vm6449, %v6360
    %6502 = vst.msk [vmem:[#allocation5 + $0xd0] sm:$0xf] %vm6449, %v6362
    %6503 = vst.msk [vmem:[#allocation5 + $0xd4] sm:$0xf] %vm6449, %v6364
    %6504 = vst.msk [vmem:[#allocation5 + $0xd8] sm:$0xf] %vm6449, %v6366
    %6505 = vst.msk [vmem:[#allocation5 + $0xdc] sm:$0xf] %vm6449, %v6368
    %6506 = vst.msk [vmem:[#allocation5 + $0xe0] sm:$0xf] %vm6449, %v6370
    %6507 = vst.msk [vmem:[#allocation5 + $0xe4] sm:$0xf] %vm6449, %v6372
    %6508 = vst.msk [vmem:[#allocation5 + $0xe8] sm:$0xf] %vm6449, %v6374
    %6509 = vst.msk [vmem:[#allocation5 + $0xec] sm:$0xf] %vm6449, %v6376
    %6510 = vst.msk [vmem:[#allocation5 + $0xf0] sm:$0xf] %vm6449, %v6378
    %6511 = vst.msk [vmem:[#allocation5 + $0xf4] sm:$0xf] %vm6449, %v6380
    %6512 = vst.msk [vmem:[#allocation5 + $0xf8] sm:$0xf] %vm6449, %v6382
    %6513 = vst.msk [vmem:[#allocation5 + $0xfc] sm:$0xf] %vm6449, %v6384
    %v6514 = vld [vmem:[%s5358] sm:$0xff]
    %v6515 = vld [vmem:[%s5358 + $0x8] sm:$0xff]
    %v6516 = vld [vmem:[%s5358 + $0x18] sm:$0xff]
    %v6517 = vld [vmem:[%s5358 + $0x20] sm:$0xff]
    %v6518 = vld [vmem:[%s5358 + $0x30] sm:$0xff]
    %v6519 = vld [vmem:[%s5358 + $0x38] sm:$0xff]
    %v6520 = vld [vmem:[%s5358 + $0x48] sm:$0xff]
    %v6521 = vld [vmem:[%s5358 + $0x50] sm:$0xff]
    %v6522 = vld [vmem:[%s5358 + $0x60] sm:$0xff]
    %v6523 = vld [vmem:[%s5358 + $0x68] sm:$0xff]
    %v6524 = vld [vmem:[%s5358 + $0x78] sm:$0xff]
    %v6525 = vld [vmem:[%s5358 + $0x80] sm:$0xff]
    %v6526 = vld [vmem:[%s5358 + $0x90] sm:$0xff]
    %v6527 = vld [vmem:[%s5358 + $0x98] sm:$0xff]
    %v6528 = vld [vmem:[%s5358 + $0xa8] sm:$0xff]
    %v6529 = vld [vmem:[%s5358 + $0xb0] sm:$0xff]
    %v6530 = vld [vmem:[%s5358 + $0xc0] sm:$0xff]
    %v6531 = vld [vmem:[%s5358 + $0xc8] sm:$0xff]
    %v6532 = vld [vmem:[%s5358 + $0xd8] sm:$0xff]
    %v6533 = vld [vmem:[%s5358 + $0xe0] sm:$0xff]
    %v6534 = vld [vmem:[%s5358 + $0xf0] sm:$0xff]
    %v6535 = vld [vmem:[%s5358 + $0xf8] sm:$0xff]
    %v6536 = vld [vmem:[%s5358 + $0x108] sm:$0xff]
    %v6537 = vld [vmem:[%s5358 + $0x110] sm:$0xff]
    %v6538 = vld [vmem:[%s5358 + $0x120] sm:$0xff]
    %v6539 = vld [vmem:[%s5358 + $0x128] sm:$0xff]
    %v6540 = vld [vmem:[%s5358 + $0x138] sm:$0xff]
    %v6541 = vld [vmem:[%s5358 + $0x140] sm:$0xff]
    %v6542 = vld [vmem:[%s5358 + $0x150] sm:$0xff]
    %v6543 = vld [vmem:[%s5358 + $0x158] sm:$0xff]
    %v6544 = vld [vmem:[%s5358 + $0x168] sm:$0xff]
    %v6545 = vld [vmem:[%s5358 + $0x170] sm:$0xff]
    %v6546 = vld [vmem:[%s5358 + $0x1b0] sm:$0xff]
    %v6547 = vld [vmem:[%s5358 + $0x1b8] sm:$0xff]
    %v6548 = vld [vmem:[%s5358 + $0x1c8] sm:$0xff]
    %v6549 = vld [vmem:[%s5358 + $0x1d0] sm:$0xff]
    %v6550 = vld [vmem:[%s5358 + $0x1e0] sm:$0xff]
    %v6551 = vld [vmem:[%s5358 + $0x1e8] sm:$0xff]
    %v6552 = vld [vmem:[%s5358 + $0x1f8] sm:$0xff]
    %v6553 = vld [vmem:[%s5358 + $0x200] sm:$0xff]
    %v6554 = vld [vmem:[%s5358 + $0x210] sm:$0xff]
    %v6555 = vld [vmem:[%s5358 + $0x218] sm:$0xff]
    %v6556 = vld [vmem:[%s5358 + $0x228] sm:$0xff]
    %v6557 = vld [vmem:[%s5358 + $0x230] sm:$0xff]
    %v6558 = vld [vmem:[%s5358 + $0x240] sm:$0xff]
    %v6559 = vld [vmem:[%s5358 + $0x248] sm:$0xff]
    %v6560 = vld [vmem:[%s5358 + $0x258] sm:$0xff]
    %v6561 = vld [vmem:[%s5358 + $0x260] sm:$0xff]
    %v6562 = vld [vmem:[%s5358 + $0x270] sm:$0xff]
    %v6563 = vld [vmem:[%s5358 + $0x278] sm:$0xff]
    %v6564 = vld [vmem:[%s5358 + $0x288] sm:$0xff]
    %v6565 = vld [vmem:[%s5358 + $0x290] sm:$0xff]
    %v6566 = vld [vmem:[%s5358 + $0x2a0] sm:$0xff]
    %v6567 = vld [vmem:[%s5358 + $0x2a8] sm:$0xff]
    %v6568 = vld [vmem:[%s5358 + $0x2b8] sm:$0xff]
    %v6569 = vld [vmem:[%s5358 + $0x2c0] sm:$0xff]
    %v6570 = vld [vmem:[%s5358 + $0x2d0] sm:$0xff]
    %v6571 = vld [vmem:[%s5358 + $0x2d8] sm:$0xff]
    %v6572 = vld [vmem:[%s5358 + $0x2e8] sm:$0xff]
    %v6573 = vld [vmem:[%s5358 + $0x2f0] sm:$0xff]
    %v6574 = vld [vmem:[%s5358 + $0x300] sm:$0xff]
    %v6575 = vld [vmem:[%s5358 + $0x308] sm:$0xff]
    %v6576 = vld [vmem:[%s5358 + $0x318] sm:$0xff]
    %v6577 = vld [vmem:[%s5358 + $0x320] sm:$0xff]
    %v6578 = vpack.c.bf16 %v6514, %v6514
    %v6579 = vpack.c.bf16 %v6515, %v6515
    %v6580 = vpack.c.bf16 %v6516, %v6516
    %v6581 = vpack.c.bf16 %v6517, %v6517
    %v6582 = vpack.c.bf16 %v6518, %v6518
    %v6583 = vpack.c.bf16 %v6519, %v6519
    %v6584 = vpack.c.bf16 %v6520, %v6520
    %v6585 = vpack.c.bf16 %v6521, %v6521
    %v6586 = vpack.c.bf16 %v6522, %v6522
    %v6587 = vpack.c.bf16 %v6523, %v6523
    %v6588 = vpack.c.bf16 %v6524, %v6524
    %v6589 = vpack.c.bf16 %v6525, %v6525
    %v6590 = vpack.c.bf16 %v6526, %v6526
    %v6591 = vpack.c.bf16 %v6527, %v6527
    %v6592 = vpack.c.bf16 %v6528, %v6528
    %v6593 = vpack.c.bf16 %v6529, %v6529
    %v6594 = vpack.c.bf16 %v6530, %v6530
    %v6595 = vpack.c.bf16 %v6531, %v6531
    %v6596 = vpack.c.bf16 %v6532, %v6532
    %v6597 = vpack.c.bf16 %v6533, %v6533
    %v6598 = vpack.c.bf16 %v6534, %v6534
    %v6599 = vpack.c.bf16 %v6535, %v6535
    %v6600 = vpack.c.bf16 %v6536, %v6536
    %v6601 = vpack.c.bf16 %v6537, %v6537
    %v6602 = vpack.c.bf16 %v6538, %v6538
    %v6603 = vpack.c.bf16 %v6539, %v6539
    %v6604 = vpack.c.bf16 %v6540, %v6540
    %v6605 = vpack.c.bf16 %v6541, %v6541
    %v6606 = vpack.c.bf16 %v6542, %v6542
    %v6607 = vpack.c.bf16 %v6543, %v6543
    %v6608 = vpack.c.bf16 %v6544, %v6544
    %v6609 = vpack.c.bf16 %v6545, %v6545
    %v6610 = vpack.c.bf16 %v6546, %v6546
    %v6611 = vpack.c.bf16 %v6547, %v6547
    %v6612 = vpack.c.bf16 %v6548, %v6548
    %v6613 = vpack.c.bf16 %v6549, %v6549
    %v6614 = vpack.c.bf16 %v6550, %v6550
    %v6615 = vpack.c.bf16 %v6551, %v6551
    %v6616 = vpack.c.bf16 %v6552, %v6552
    %v6617 = vpack.c.bf16 %v6553, %v6553
    %v6618 = vpack.c.bf16 %v6554, %v6554
    %v6619 = vpack.c.bf16 %v6555, %v6555
    %v6620 = vpack.c.bf16 %v6556, %v6556
    %v6621 = vpack.c.bf16 %v6557, %v6557
    %v6622 = vpack.c.bf16 %v6558, %v6558
    %v6623 = vpack.c.bf16 %v6559, %v6559
    %v6624 = vpack.c.bf16 %v6560, %v6560
    %v6625 = vpack.c.bf16 %v6561, %v6561
    %v6626 = vpack.c.bf16 %v6562, %v6562
    %v6627 = vpack.c.bf16 %v6563, %v6563
    %v6628 = vpack.c.bf16 %v6564, %v6564
    %v6629 = vpack.c.bf16 %v6565, %v6565
    %v6630 = vpack.c.bf16 %v6566, %v6566
    %v6631 = vpack.c.bf16 %v6567, %v6567
    %v6632 = vpack.c.bf16 %v6568, %v6568
    %v6633 = vpack.c.bf16 %v6569, %v6569
    %v6634 = vpack.c.bf16 %v6570, %v6570
    %v6635 = vpack.c.bf16 %v6571, %v6571
    %v6636 = vpack.c.bf16 %v6572, %v6572
    %v6637 = vpack.c.bf16 %v6573, %v6573
    %v6638 = vpack.c.bf16 %v6574, %v6574
    %v6639 = vpack.c.bf16 %v6575, %v6575
    %v6640 = vpack.c.bf16 %v6576, %v6576
    %v6641 = vpack.c.bf16 %v6577, %v6577
    %6706 = vrot.lane.b32.xlu0 %v6578, 24
    %v6707 = vpop.permute.xlu0 %6706
    %6708 = vrot.lane.b32.xlu0 %v6579, 24
    %v6709 = vpop.permute.xlu0 %6708
    %6710 = vrot.lane.b32.xlu0 %v6580, 24
    %v6711 = vpop.permute.xlu0 %6710
    %6712 = vrot.lane.b32.xlu0 %v6581, 24
    %v6713 = vpop.permute.xlu0 %6712
    %6714 = vrot.lane.b32.xlu0 %v6582, 24
    %v6715 = vpop.permute.xlu0 %6714
    %6716 = vrot.lane.b32.xlu0 %v6583, 24
    %v6717 = vpop.permute.xlu0 %6716
    %6718 = vrot.lane.b32.xlu0 %v6584, 24
    %v6719 = vpop.permute.xlu0 %6718
    %6720 = vrot.lane.b32.xlu0 %v6585, 24
    %v6721 = vpop.permute.xlu0 %6720
    %6722 = vrot.lane.b32.xlu0 %v6586, 24
    %v6723 = vpop.permute.xlu0 %6722
    %6724 = vrot.lane.b32.xlu0 %v6587, 24
    %v6725 = vpop.permute.xlu0 %6724
    %6726 = vrot.lane.b32.xlu0 %v6588, 24
    %v6727 = vpop.permute.xlu0 %6726
    %6728 = vrot.lane.b32.xlu0 %v6589, 24
    %v6729 = vpop.permute.xlu0 %6728
    %6730 = vrot.lane.b32.xlu0 %v6590, 24
    %v6731 = vpop.permute.xlu0 %6730
    %6732 = vrot.lane.b32.xlu0 %v6591, 24
    %v6733 = vpop.permute.xlu0 %6732
    %6734 = vrot.lane.b32.xlu0 %v6592, 24
    %v6735 = vpop.permute.xlu0 %6734
    %6736 = vrot.lane.b32.xlu0 %v6593, 24
    %v6737 = vpop.permute.xlu0 %6736
    %6738 = vrot.lane.b32.xlu0 %v6594, 24
    %v6739 = vpop.permute.xlu0 %6738
    %6740 = vrot.lane.b32.xlu0 %v6595, 24
    %v6741 = vpop.permute.xlu0 %6740
    %6742 = vrot.lane.b32.xlu0 %v6596, 24
    %v6743 = vpop.permute.xlu0 %6742
    %6744 = vrot.lane.b32.xlu0 %v6597, 24
    %v6745 = vpop.permute.xlu0 %6744
    %6746 = vrot.lane.b32.xlu0 %v6598, 24
    %v6747 = vpop.permute.xlu0 %6746
    %6748 = vrot.lane.b32.xlu0 %v6599, 24
    %v6749 = vpop.permute.xlu0 %6748
    %6750 = vrot.lane.b32.xlu0 %v6600, 24
    %v6751 = vpop.permute.xlu0 %6750
    %6752 = vrot.lane.b32.xlu0 %v6601, 24
    %v6753 = vpop.permute.xlu0 %6752
    %6754 = vrot.lane.b32.xlu0 %v6602, 24
    %v6755 = vpop.permute.xlu0 %6754
    %6756 = vrot.lane.b32.xlu0 %v6603, 24
    %v6757 = vpop.permute.xlu0 %6756
    %6758 = vrot.lane.b32.xlu0 %v6604, 24
    %v6759 = vpop.permute.xlu0 %6758
    %6760 = vrot.lane.b32.xlu0 %v6605, 24
    %v6761 = vpop.permute.xlu0 %6760
    %6762 = vrot.lane.b32.xlu0 %v6606, 24
    %v6763 = vpop.permute.xlu0 %6762
    %6764 = vrot.lane.b32.xlu0 %v6607, 24
    %v6765 = vpop.permute.xlu0 %6764
    %6766 = vrot.lane.b32.xlu0 %v6608, 24
    %v6767 = vpop.permute.xlu0 %6766
    %6768 = vrot.lane.b32.xlu0 %v6609, 24
    %v6769 = vpop.permute.xlu0 %6768
    %6770 = vrot.lane.b32.xlu0 %v6610, 24
    %v6771 = vpop.permute.xlu0 %6770
    %6772 = vrot.lane.b32.xlu0 %v6611, 24
    %v6773 = vpop.permute.xlu0 %6772
    %6774 = vrot.lane.b32.xlu0 %v6612, 24
    %v6775 = vpop.permute.xlu0 %6774
    %6776 = vrot.lane.b32.xlu0 %v6613, 24
    %v6777 = vpop.permute.xlu0 %6776
    %6778 = vrot.lane.b32.xlu0 %v6614, 24
    %v6779 = vpop.permute.xlu0 %6778
    %6780 = vrot.lane.b32.xlu0 %v6615, 24
    %v6781 = vpop.permute.xlu0 %6780
    %6782 = vrot.lane.b32.xlu0 %v6616, 24
    %v6783 = vpop.permute.xlu0 %6782
    %6784 = vrot.lane.b32.xlu0 %v6617, 24
    %v6785 = vpop.permute.xlu0 %6784
    %6786 = vrot.lane.b32.xlu0 %v6618, 24
    %v6787 = vpop.permute.xlu0 %6786
    %6788 = vrot.lane.b32.xlu0 %v6619, 24
    %v6789 = vpop.permute.xlu0 %6788
    %6790 = vrot.lane.b32.xlu0 %v6620, 24
    %v6791 = vpop.permute.xlu0 %6790
    %6792 = vrot.lane.b32.xlu0 %v6621, 24
    %v6793 = vpop.permute.xlu0 %6792
    %6794 = vrot.lane.b32.xlu0 %v6622, 24
    %v6795 = vpop.permute.xlu0 %6794
    %6796 = vrot.lane.b32.xlu0 %v6623, 24
    %v6797 = vpop.permute.xlu0 %6796
    %6798 = vrot.lane.b32.xlu0 %v6624, 24
    %v6799 = vpop.permute.xlu0 %6798
    %6800 = vrot.lane.b32.xlu0 %v6625, 24
    %v6801 = vpop.permute.xlu0 %6800
    %6802 = vrot.lane.b32.xlu0 %v6626, 24
    %v6803 = vpop.permute.xlu0 %6802
    %6804 = vrot.lane.b32.xlu0 %v6627, 24
    %v6805 = vpop.permute.xlu0 %6804
    %6806 = vrot.lane.b32.xlu0 %v6628, 24
    %v6807 = vpop.permute.xlu0 %6806
    %6808 = vrot.lane.b32.xlu0 %v6629, 24
    %v6809 = vpop.permute.xlu0 %6808
    %6810 = vrot.lane.b32.xlu0 %v6630, 24
    %v6811 = vpop.permute.xlu0 %6810
    %6812 = vrot.lane.b32.xlu0 %v6631, 24
    %v6813 = vpop.permute.xlu0 %6812
    %6814 = vrot.lane.b32.xlu0 %v6632, 24
    %v6815 = vpop.permute.xlu0 %6814
    %6816 = vrot.lane.b32.xlu0 %v6633, 24
    %v6817 = vpop.permute.xlu0 %6816
    %6818 = vrot.lane.b32.xlu0 %v6634, 24
    %v6819 = vpop.permute.xlu0 %6818
    %6820 = vrot.lane.b32.xlu0 %v6635, 24
    %v6821 = vpop.permute.xlu0 %6820
    %6822 = vrot.lane.b32.xlu0 %v6636, 24
    %v6823 = vpop.permute.xlu0 %6822
    %6824 = vrot.lane.b32.xlu0 %v6637, 24
    %v6825 = vpop.permute.xlu0 %6824
    %6826 = vrot.lane.b32.xlu0 %v6638, 24
    %v6827 = vpop.permute.xlu0 %6826
    %6828 = vrot.lane.b32.xlu0 %v6639, 24
    %v6829 = vpop.permute.xlu0 %6828
    %6830 = vrot.lane.b32.xlu0 %v6640, 24
    %v6831 = vpop.permute.xlu0 %6830
    %6832 = vrot.lane.b32.xlu0 %v6641, 24
    %v6833 = vpop.permute.xlu0 %6832
    %vm6898 = vcmask 257216
    %6899 = vst.msk [vmem:[#allocation5] sm:$0xf] %vm6898, %v6707
    %6900 = vst.msk [vmem:[#allocation5 + $0x4] sm:$0xf] %vm6898, %v6709
    %6901 = vst.msk [vmem:[#allocation5 + $0x8] sm:$0xf] %vm6898, %v6711
    %6902 = vst.msk [vmem:[#allocation5 + $0xc] sm:$0xf] %vm6898, %v6713
    %6903 = vst.msk [vmem:[#allocation5 + $0x10] sm:$0xf] %vm6898, %v6715
    %6904 = vst.msk [vmem:[#allocation5 + $0x14] sm:$0xf] %vm6898, %v6717
    %6905 = vst.msk [vmem:[#allocation5 + $0x18] sm:$0xf] %vm6898, %v6719
    %6906 = vst.msk [vmem:[#allocation5 + $0x1c] sm:$0xf] %vm6898, %v6721
    %6907 = vst.msk [vmem:[#allocation5 + $0x20] sm:$0xf] %vm6898, %v6723
    %6908 = vst.msk [vmem:[#allocation5 + $0x24] sm:$0xf] %vm6898, %v6725
    %6909 = vst.msk [vmem:[#allocation5 + $0x28] sm:$0xf] %vm6898, %v6727
    %6910 = vst.msk [vmem:[#allocation5 + $0x2c] sm:$0xf] %vm6898, %v6729
    %6911 = vst.msk [vmem:[#allocation5 + $0x30] sm:$0xf] %vm6898, %v6731
    %6912 = vst.msk [vmem:[#allocation5 + $0x34] sm:$0xf] %vm6898, %v6733
    %6913 = vst.msk [vmem:[#allocation5 + $0x38] sm:$0xf] %vm6898, %v6735
    %6914 = vst.msk [vmem:[#allocation5 + $0x3c] sm:$0xf] %vm6898, %v6737
    %6915 = vst.msk [vmem:[#allocation5 + $0x40] sm:$0xf] %vm6898, %v6739
    %6916 = vst.msk [vmem:[#allocation5 + $0x44] sm:$0xf] %vm6898, %v6741
    %6917 = vst.msk [vmem:[#allocation5 + $0x48] sm:$0xf] %vm6898, %v6743
    %6918 = vst.msk [vmem:[#allocation5 + $0x4c] sm:$0xf] %vm6898, %v6745
    %6919 = vst.msk [vmem:[#allocation5 + $0x50] sm:$0xf] %vm6898, %v6747
    %6920 = vst.msk [vmem:[#allocation5 + $0x54] sm:$0xf] %vm6898, %v6749
    %6921 = vst.msk [vmem:[#allocation5 + $0x58] sm:$0xf] %vm6898, %v6751
    %6922 = vst.msk [vmem:[#allocation5 + $0x5c] sm:$0xf] %vm6898, %v6753
    %6923 = vst.msk [vmem:[#allocation5 + $0x60] sm:$0xf] %vm6898, %v6755
    %6924 = vst.msk [vmem:[#allocation5 + $0x64] sm:$0xf] %vm6898, %v6757
    %6925 = vst.msk [vmem:[#allocation5 + $0x68] sm:$0xf] %vm6898, %v6759
    %6926 = vst.msk [vmem:[#allocation5 + $0x6c] sm:$0xf] %vm6898, %v6761
    %6927 = vst.msk [vmem:[#allocation5 + $0x70] sm:$0xf] %vm6898, %v6763
    %6928 = vst.msk [vmem:[#allocation5 + $0x74] sm:$0xf] %vm6898, %v6765
    %6929 = vst.msk [vmem:[#allocation5 + $0x78] sm:$0xf] %vm6898, %v6767
    %6930 = vst.msk [vmem:[#allocation5 + $0x7c] sm:$0xf] %vm6898, %v6769
    %6931 = vst.msk [vmem:[#allocation5 + $0x80] sm:$0xf] %vm6898, %v6771
    %6932 = vst.msk [vmem:[#allocation5 + $0x84] sm:$0xf] %vm6898, %v6773
    %6933 = vst.msk [vmem:[#allocation5 + $0x88] sm:$0xf] %vm6898, %v6775
    %6934 = vst.msk [vmem:[#allocation5 + $0x8c] sm:$0xf] %vm6898, %v6777
    %6935 = vst.msk [vmem:[#allocation5 + $0x90] sm:$0xf] %vm6898, %v6779
    %6936 = vst.msk [vmem:[#allocation5 + $0x94] sm:$0xf] %vm6898, %v6781
    %6937 = vst.msk [vmem:[#allocation5 + $0x98] sm:$0xf] %vm6898, %v6783
    %6938 = vst.msk [vmem:[#allocation5 + $0x9c] sm:$0xf] %vm6898, %v6785
    %6939 = vst.msk [vmem:[#allocation5 + $0xa0] sm:$0xf] %vm6898, %v6787
    %6940 = vst.msk [vmem:[#allocation5 + $0xa4] sm:$0xf] %vm6898, %v6789
    %6941 = vst.msk [vmem:[#allocation5 + $0xa8] sm:$0xf] %vm6898, %v6791
    %6942 = vst.msk [vmem:[#allocation5 + $0xac] sm:$0xf] %vm6898, %v6793
    %6943 = vst.msk [vmem:[#allocation5 + $0xb0] sm:$0xf] %vm6898, %v6795
    %6944 = vst.msk [vmem:[#allocation5 + $0xb4] sm:$0xf] %vm6898, %v6797
    %6945 = vst.msk [vmem:[#allocation5 + $0xb8] sm:$0xf] %vm6898, %v6799
    %6946 = vst.msk [vmem:[#allocation5 + $0xbc] sm:$0xf] %vm6898, %v6801
    %6947 = vst.msk [vmem:[#allocation5 + $0xc0] sm:$0xf] %vm6898, %v6803
    %6948 = vst.msk [vmem:[#allocation5 + $0xc4] sm:$0xf] %vm6898, %v6805
    %6949 = vst.msk [vmem:[#allocation5 + $0xc8] sm:$0xf] %vm6898, %v6807
    %6950 = vst.msk [vmem:[#allocation5 + $0xcc] sm:$0xf] %vm6898, %v6809
    %6951 = vst.msk [vmem:[#allocation5 + $0xd0] sm:$0xf] %vm6898, %v6811
    %6952 = vst.msk [vmem:[#allocation5 + $0xd4] sm:$0xf] %vm6898, %v6813
    %6953 = vst.msk [vmem:[#allocation5 + $0xd8] sm:$0xf] %vm6898, %v6815
    %6954 = vst.msk [vmem:[#allocation5 + $0xdc] sm:$0xf] %vm6898, %v6817
    %6955 = vst.msk [vmem:[#allocation5 + $0xe0] sm:$0xf] %vm6898, %v6819
    %6956 = vst.msk [vmem:[#allocation5 + $0xe4] sm:$0xf] %vm6898, %v6821
    %6957 = vst.msk [vmem:[#allocation5 + $0xe8] sm:$0xf] %vm6898, %v6823
    %6958 = vst.msk [vmem:[#allocation5 + $0xec] sm:$0xf] %vm6898, %v6825
    %6959 = vst.msk [vmem:[#allocation5 + $0xf0] sm:$0xf] %vm6898, %v6827
    %6960 = vst.msk [vmem:[#allocation5 + $0xf4] sm:$0xf] %vm6898, %v6829
    %6961 = vst.msk [vmem:[#allocation5 + $0xf8] sm:$0xf] %vm6898, %v6831
    %6962 = vst.msk [vmem:[#allocation5 + $0xfc] sm:$0xf] %vm6898, %v6833
    %v6963 = vld [vmem:[%s5358 + $0x1] sm:$0xff]
    %v6964 = vld [vmem:[%s5358 + $0x9] sm:$0xff]
    %v6965 = vld [vmem:[%s5358 + $0x19] sm:$0xff]
    %v6966 = vld [vmem:[%s5358 + $0x21] sm:$0xff]
    %v6967 = vld [vmem:[%s5358 + $0x31] sm:$0xff]
    %v6968 = vld [vmem:[%s5358 + $0x39] sm:$0xff]
    %v6969 = vld [vmem:[%s5358 + $0x49] sm:$0xff]
    %v6970 = vld [vmem:[%s5358 + $0x51] sm:$0xff]
    %v6971 = vld [vmem:[%s5358 + $0x61] sm:$0xff]
    %v6972 = vld [vmem:[%s5358 + $0x69] sm:$0xff]
    %v6973 = vld [vmem:[%s5358 + $0x79] sm:$0xff]
    %v6974 = vld [vmem:[%s5358 + $0x81] sm:$0xff]
    %v6975 = vld [vmem:[%s5358 + $0x91] sm:$0xff]
    %v6976 = vld [vmem:[%s5358 + $0x99] sm:$0xff]
    %v6977 = vld [vmem:[%s5358 + $0xa9] sm:$0xff]
    %v6978 = vld [vmem:[%s5358 + $0xb1] sm:$0xff]
    %v6979 = vld [vmem:[%s5358 + $0xc1] sm:$0xff]
    %v6980 = vld [vmem:[%s5358 + $0xc9] sm:$0xff]
    %v6981 = vld [vmem:[%s5358 + $0xd9] sm:$0xff]
    %v6982 = vld [vmem:[%s5358 + $0xe1] sm:$0xff]
    %v6983 = vld [vmem:[%s5358 + $0xf1] sm:$0xff]
    %v6984 = vld [vmem:[%s5358 + $0xf9] sm:$0xff]
    %v6985 = vld [vmem:[%s5358 + $0x109] sm:$0xff]
    %v6986 = vld [vmem:[%s5358 + $0x111] sm:$0xff]
    %v6987 = vld [vmem:[%s5358 + $0x121] sm:$0xff]
    %v6988 = vld [vmem:[%s5358 + $0x129] sm:$0xff]
    %v6989 = vld [vmem:[%s5358 + $0x139] sm:$0xff]
    %v6990 = vld [vmem:[%s5358 + $0x141] sm:$0xff]
    %v6991 = vld [vmem:[%s5358 + $0x151] sm:$0xff]
    %v6992 = vld [vmem:[%s5358 + $0x159] sm:$0xff]
    %v6993 = vld [vmem:[%s5358 + $0x169] sm:$0xff]
    %v6994 = vld [vmem:[%s5358 + $0x171] sm:$0xff]
    %v6995 = vld [vmem:[%s5358 + $0x1b1] sm:$0xff]
    %v6996 = vld [vmem:[%s5358 + $0x1b9] sm:$0xff]
    %v6997 = vld [vmem:[%s5358 + $0x1c9] sm:$0xff]
    %v6998 = vld [vmem:[%s5358 + $0x1d1] sm:$0xff]
    %v6999 = vld [vmem:[%s5358 + $0x1e1] sm:$0xff]
    %v7000 = vld [vmem:[%s5358 + $0x1e9] sm:$0xff]
    %v7001 = vld [vmem:[%s5358 + $0x1f9] sm:$0xff]
    %v7002 = vld [vmem:[%s5358 + $0x201] sm:$0xff]
    %v7003 = vld [vmem:[%s5358 + $0x211] sm:$0xff]
    %v7004 = vld [vmem:[%s5358 + $0x219] sm:$0xff]
    %v7005 = vld [vmem:[%s5358 + $0x229] sm:$0xff]
    %v7006 = vld [vmem:[%s5358 + $0x231] sm:$0xff]
    %v7007 = vld [vmem:[%s5358 + $0x241] sm:$0xff]
    %v7008 = vld [vmem:[%s5358 + $0x249] sm:$0xff]
    %v7009 = vld [vmem:[%s5358 + $0x259] sm:$0xff]
    %v7010 = vld [vmem:[%s5358 + $0x261] sm:$0xff]
    %v7011 = vld [vmem:[%s5358 + $0x271] sm:$0xff]
    %v7012 = vld [vmem:[%s5358 + $0x279] sm:$0xff]
    %v7013 = vld [vmem:[%s5358 + $0x289] sm:$0xff]
    %v7014 = vld [vmem:[%s5358 + $0x291] sm:$0xff]
    %v7015 = vld [vmem:[%s5358 + $0x2a1] sm:$0xff]
    %v7016 = vld [vmem:[%s5358 + $0x2a9] sm:$0xff]
    %v7017 = vld [vmem:[%s5358 + $0x2b9] sm:$0xff]
    %v7018 = vld [vmem:[%s5358 + $0x2c1] sm:$0xff]
    %v7019 = vld [vmem:[%s5358 + $0x2d1] sm:$0xff]
    %v7020 = vld [vmem:[%s5358 + $0x2d9] sm:$0xff]
    %v7021 = vld [vmem:[%s5358 + $0x2e9] sm:$0xff]
    %v7022 = vld [vmem:[%s5358 + $0x2f1] sm:$0xff]
    %v7023 = vld [vmem:[%s5358 + $0x301] sm:$0xff]
    %v7024 = vld [vmem:[%s5358 + $0x309] sm:$0xff]
    %v7025 = vld [vmem:[%s5358 + $0x319] sm:$0xff]
    %v7026 = vld [vmem:[%s5358 + $0x321] sm:$0xff]
    %v7027 = vpack.c.bf16 %v6963, %v6963
    %v7028 = vpack.c.bf16 %v6964, %v6964
    %v7029 = vpack.c.bf16 %v6965, %v6965
    %v7030 = vpack.c.bf16 %v6966, %v6966
    %v7031 = vpack.c.bf16 %v6967, %v6967
    %v7032 = vpack.c.bf16 %v6968, %v6968
    %v7033 = vpack.c.bf16 %v6969, %v6969
    %v7034 = vpack.c.bf16 %v6970, %v6970
    %v7035 = vpack.c.bf16 %v6971, %v6971
    %v7036 = vpack.c.bf16 %v6972, %v6972
    %v7037 = vpack.c.bf16 %v6973, %v6973
    %v7038 = vpack.c.bf16 %v6974, %v6974
    %v7039 = vpack.c.bf16 %v6975, %v6975
    %v7040 = vpack.c.bf16 %v6976, %v6976
    %v7041 = vpack.c.bf16 %v6977, %v6977
    %v7042 = vpack.c.bf16 %v6978, %v6978
    %v7043 = vpack.c.bf16 %v6979, %v6979
    %v7044 = vpack.c.bf16 %v6980, %v6980
    %v7045 = vpack.c.bf16 %v6981, %v6981
    %v7046 = vpack.c.bf16 %v6982, %v6982
    %v7047 = vpack.c.bf16 %v6983, %v6983
    %v7048 = vpack.c.bf16 %v6984, %v6984
    %v7049 = vpack.c.bf16 %v6985, %v6985
    %v7050 = vpack.c.bf16 %v6986, %v6986
    %v7051 = vpack.c.bf16 %v6987, %v6987
    %v7052 = vpack.c.bf16 %v6988, %v6988
    %v7053 = vpack.c.bf16 %v6989, %v6989
    %v7054 = vpack.c.bf16 %v6990, %v6990
    %v7055 = vpack.c.bf16 %v6991, %v6991
    %v7056 = vpack.c.bf16 %v6992, %v6992
    %v7057 = vpack.c.bf16 %v6993, %v6993
    %v7058 = vpack.c.bf16 %v6994, %v6994
    %v7059 = vpack.c.bf16 %v6995, %v6995
    %v7060 = vpack.c.bf16 %v6996, %v6996
    %v7061 = vpack.c.bf16 %v6997, %v6997
    %v7062 = vpack.c.bf16 %v6998, %v6998
    %v7063 = vpack.c.bf16 %v6999, %v6999
    %v7064 = vpack.c.bf16 %v7000, %v7000
    %v7065 = vpack.c.bf16 %v7001, %v7001
    %v7066 = vpack.c.bf16 %v7002, %v7002
    %v7067 = vpack.c.bf16 %v7003, %v7003
    %v7068 = vpack.c.bf16 %v7004, %v7004
    %v7069 = vpack.c.bf16 %v7005, %v7005
    %v7070 = vpack.c.bf16 %v7006, %v7006
    %v7071 = vpack.c.bf16 %v7007, %v7007
    %v7072 = vpack.c.bf16 %v7008, %v7008
    %v7073 = vpack.c.bf16 %v7009, %v7009
    %v7074 = vpack.c.bf16 %v7010, %v7010
    %v7075 = vpack.c.bf16 %v7011, %v7011
    %v7076 = vpack.c.bf16 %v7012, %v7012
    %v7077 = vpack.c.bf16 %v7013, %v7013
    %v7078 = vpack.c.bf16 %v7014, %v7014
    %v7079 = vpack.c.bf16 %v7015, %v7015
    %v7080 = vpack.c.bf16 %v7016, %v7016
    %v7081 = vpack.c.bf16 %v7017, %v7017
    %v7082 = vpack.c.bf16 %v7018, %v7018
    %v7083 = vpack.c.bf16 %v7019, %v7019
    %v7084 = vpack.c.bf16 %v7020, %v7020
    %v7085 = vpack.c.bf16 %v7021, %v7021
    %v7086 = vpack.c.bf16 %v7022, %v7022
    %v7087 = vpack.c.bf16 %v7023, %v7023
    %v7088 = vpack.c.bf16 %v7024, %v7024
    %v7089 = vpack.c.bf16 %v7025, %v7025
    %v7090 = vpack.c.bf16 %v7026, %v7026
    %7155 = vrot.lane.b32.xlu0 %v7027, 32
    %v7156 = vpop.permute.xlu0 %7155
    %7157 = vrot.lane.b32.xlu0 %v7028, 32
    %v7158 = vpop.permute.xlu0 %7157
    %7159 = vrot.lane.b32.xlu0 %v7029, 32
    %v7160 = vpop.permute.xlu0 %7159
    %7161 = vrot.lane.b32.xlu0 %v7030, 32
    %v7162 = vpop.permute.xlu0 %7161
    %7163 = vrot.lane.b32.xlu0 %v7031, 32
    %v7164 = vpop.permute.xlu0 %7163
    %7165 = vrot.lane.b32.xlu0 %v7032, 32
    %v7166 = vpop.permute.xlu0 %7165
    %7167 = vrot.lane.b32.xlu0 %v7033, 32
    %v7168 = vpop.permute.xlu0 %7167
    %7169 = vrot.lane.b32.xlu0 %v7034, 32
    %v7170 = vpop.permute.xlu0 %7169
    %7171 = vrot.lane.b32.xlu0 %v7035, 32
    %v7172 = vpop.permute.xlu0 %7171
    %7173 = vrot.lane.b32.xlu0 %v7036, 32
    %v7174 = vpop.permute.xlu0 %7173
    %7175 = vrot.lane.b32.xlu0 %v7037, 32
    %v7176 = vpop.permute.xlu0 %7175
    %7177 = vrot.lane.b32.xlu0 %v7038, 32
    %v7178 = vpop.permute.xlu0 %7177
    %7179 = vrot.lane.b32.xlu0 %v7039, 32
    %v7180 = vpop.permute.xlu0 %7179
    %7181 = vrot.lane.b32.xlu0 %v7040, 32
    %v7182 = vpop.permute.xlu0 %7181
    %7183 = vrot.lane.b32.xlu0 %v7041, 32
    %v7184 = vpop.permute.xlu0 %7183
    %7185 = vrot.lane.b32.xlu0 %v7042, 32
    %v7186 = vpop.permute.xlu0 %7185
    %7187 = vrot.lane.b32.xlu0 %v7043, 32
    %v7188 = vpop.permute.xlu0 %7187
    %7189 = vrot.lane.b32.xlu0 %v7044, 32
    %v7190 = vpop.permute.xlu0 %7189
    %7191 = vrot.lane.b32.xlu0 %v7045, 32
    %v7192 = vpop.permute.xlu0 %7191
    %7193 = vrot.lane.b32.xlu0 %v7046, 32
    %v7194 = vpop.permute.xlu0 %7193
    %7195 = vrot.lane.b32.xlu0 %v7047, 32
    %v7196 = vpop.permute.xlu0 %7195
    %7197 = vrot.lane.b32.xlu0 %v7048, 32
    %v7198 = vpop.permute.xlu0 %7197
    %7199 = vrot.lane.b32.xlu0 %v7049, 32
    %v7200 = vpop.permute.xlu0 %7199
    %7201 = vrot.lane.b32.xlu0 %v7050, 32
    %v7202 = vpop.permute.xlu0 %7201
    %7203 = vrot.lane.b32.xlu0 %v7051, 32
    %v7204 = vpop.permute.xlu0 %7203
    %7205 = vrot.lane.b32.xlu0 %v7052, 32
    %v7206 = vpop.permute.xlu0 %7205
    %7207 = vrot.lane.b32.xlu0 %v7053, 32
    %v7208 = vpop.permute.xlu0 %7207
    %7209 = vrot.lane.b32.xlu0 %v7054, 32
    %v7210 = vpop.permute.xlu0 %7209
    %7211 = vrot.lane.b32.xlu0 %v7055, 32
    %v7212 = vpop.permute.xlu0 %7211
    %7213 = vrot.lane.b32.xlu0 %v7056, 32
    %v7214 = vpop.permute.xlu0 %7213
    %7215 = vrot.lane.b32.xlu0 %v7057, 32
    %v7216 = vpop.permute.xlu0 %7215
    %7217 = vrot.lane.b32.xlu0 %v7058, 32
    %v7218 = vpop.permute.xlu0 %7217
    %7219 = vrot.lane.b32.xlu0 %v7059, 32
    %v7220 = vpop.permute.xlu0 %7219
    %7221 = vrot.lane.b32.xlu0 %v7060, 32
    %v7222 = vpop.permute.xlu0 %7221
    %7223 = vrot.lane.b32.xlu0 %v7061, 32
    %v7224 = vpop.permute.xlu0 %7223
    %7225 = vrot.lane.b32.xlu0 %v7062, 32
    %v7226 = vpop.permute.xlu0 %7225
    %7227 = vrot.lane.b32.xlu0 %v7063, 32
    %v7228 = vpop.permute.xlu0 %7227
    %7229 = vrot.lane.b32.xlu0 %v7064, 32
    %v7230 = vpop.permute.xlu0 %7229
    %7231 = vrot.lane.b32.xlu0 %v7065, 32
    %v7232 = vpop.permute.xlu0 %7231
    %7233 = vrot.lane.b32.xlu0 %v7066, 32
    %v7234 = vpop.permute.xlu0 %7233
    %7235 = vrot.lane.b32.xlu0 %v7067, 32
    %v7236 = vpop.permute.xlu0 %7235
    %7237 = vrot.lane.b32.xlu0 %v7068, 32
    %v7238 = vpop.permute.xlu0 %7237
    %7239 = vrot.lane.b32.xlu0 %v7069, 32
    %v7240 = vpop.permute.xlu0 %7239
    %7241 = vrot.lane.b32.xlu0 %v7070, 32
    %v7242 = vpop.permute.xlu0 %7241
    %7243 = vrot.lane.b32.xlu0 %v7071, 32
    %v7244 = vpop.permute.xlu0 %7243
    %7245 = vrot.lane.b32.xlu0 %v7072, 32
    %v7246 = vpop.permute.xlu0 %7245
    %7247 = vrot.lane.b32.xlu0 %v7073, 32
    %v7248 = vpop.permute.xlu0 %7247
    %7249 = vrot.lane.b32.xlu0 %v7074, 32
    %v7250 = vpop.permute.xlu0 %7249
    %7251 = vrot.lane.b32.xlu0 %v7075, 32
    %v7252 = vpop.permute.xlu0 %7251
    %7253 = vrot.lane.b32.xlu0 %v7076, 32
    %v7254 = vpop.permute.xlu0 %7253
    %7255 = vrot.lane.b32.xlu0 %v7077, 32
    %v7256 = vpop.permute.xlu0 %7255
    %7257 = vrot.lane.b32.xlu0 %v7078, 32
    %v7258 = vpop.permute.xlu0 %7257
    %7259 = vrot.lane.b32.xlu0 %v7079, 32
    %v7260 = vpop.permute.xlu0 %7259
    %7261 = vrot.lane.b32.xlu0 %v7080, 32
    %v7262 = vpop.permute.xlu0 %7261
    %7263 = vrot.lane.b32.xlu0 %v7081, 32
    %v7264 = vpop.permute.xlu0 %7263
    %7265 = vrot.lane.b32.xlu0 %v7082, 32
    %v7266 = vpop.permute.xlu0 %7265
    %7267 = vrot.lane.b32.xlu0 %v7083, 32
    %v7268 = vpop.permute.xlu0 %7267
    %7269 = vrot.lane.b32.xlu0 %v7084, 32
    %v7270 = vpop.permute.xlu0 %7269
    %7271 = vrot.lane.b32.xlu0 %v7085, 32
    %v7272 = vpop.permute.xlu0 %7271
    %7273 = vrot.lane.b32.xlu0 %v7086, 32
    %v7274 = vpop.permute.xlu0 %7273
    %7275 = vrot.lane.b32.xlu0 %v7087, 32
    %v7276 = vpop.permute.xlu0 %7275
    %7277 = vrot.lane.b32.xlu0 %v7088, 32
    %v7278 = vpop.permute.xlu0 %7277
    %7279 = vrot.lane.b32.xlu0 %v7089, 32
    %v7280 = vpop.permute.xlu0 %7279
    %7281 = vrot.lane.b32.xlu0 %v7090, 32
    %v7282 = vpop.permute.xlu0 %7281
    %vm7347 = vcmask 322816
    %7348 = vst.msk [vmem:[#allocation5] sm:$0xf] %vm7347, %v7156
    %7349 = vst.msk [vmem:[#allocation5 + $0x4] sm:$0xf] %vm7347, %v7158
    %7350 = vst.msk [vmem:[#allocation5 + $0x8] sm:$0xf] %vm7347, %v7160
    %7351 = vst.msk [vmem:[#allocation5 + $0xc] sm:$0xf] %vm7347, %v7162
    %7352 = vst.msk [vmem:[#allocation5 + $0x10] sm:$0xf] %vm7347, %v7164
    %7353 = vst.msk [vmem:[#allocation5 + $0x14] sm:$0xf] %vm7347, %v7166
    %7354 = vst.msk [vmem:[#allocation5 + $0x18] sm:$0xf] %vm7347, %v7168
    %7355 = vst.msk [vmem:[#allocation5 + $0x1c] sm:$0xf] %vm7347, %v7170
    %7356 = vst.msk [vmem:[#allocation5 + $0x20] sm:$0xf] %vm7347, %v7172
    %7357 = vst.msk [vmem:[#allocation5 + $0x24] sm:$0xf] %vm7347, %v7174
    %7358 = vst.msk [vmem:[#allocation5 + $0x28] sm:$0xf] %vm7347, %v7176
    %7359 = vst.msk [vmem:[#allocation5 + $0x2c] sm:$0xf] %vm7347, %v7178
    %7360 = vst.msk [vmem:[#allocation5 + $0x30] sm:$0xf] %vm7347, %v7180
    %7361 = vst.msk [vmem:[#allocation5 + $0x34] sm:$0xf] %vm7347, %v7182
    %7362 = vst.msk [vmem:[#allocation5 + $0x38] sm:$0xf] %vm7347, %v7184
    %7363 = vst.msk [vmem:[#allocation5 + $0x3c] sm:$0xf] %vm7347, %v7186
    %7364 = vst.msk [vmem:[#allocation5 + $0x40] sm:$0xf] %vm7347, %v7188
    %7365 = vst.msk [vmem:[#allocation5 + $0x44] sm:$0xf] %vm7347, %v7190
    %7366 = vst.msk [vmem:[#allocation5 + $0x48] sm:$0xf] %vm7347, %v7192
    %7367 = vst.msk [vmem:[#allocation5 + $0x4c] sm:$0xf] %vm7347, %v7194
    %7368 = vst.msk [vmem:[#allocation5 + $0x50] sm:$0xf] %vm7347, %v7196
    %7369 = vst.msk [vmem:[#allocation5 + $0x54] sm:$0xf] %vm7347, %v7198
    %7370 = vst.msk [vmem:[#allocation5 + $0x58] sm:$0xf] %vm7347, %v7200
    %7371 = vst.msk [vmem:[#allocation5 + $0x5c] sm:$0xf] %vm7347, %v7202
    %7372 = vst.msk [vmem:[#allocation5 + $0x60] sm:$0xf] %vm7347, %v7204
    %7373 = vst.msk [vmem:[#allocation5 + $0x64] sm:$0xf] %vm7347, %v7206
    %7374 = vst.msk [vmem:[#allocation5 + $0x68] sm:$0xf] %vm7347, %v7208
    %7375 = vst.msk [vmem:[#allocation5 + $0x6c] sm:$0xf] %vm7347, %v7210
    %7376 = vst.msk [vmem:[#allocation5 + $0x70] sm:$0xf] %vm7347, %v7212
    %7377 = vst.msk [vmem:[#allocation5 + $0x74] sm:$0xf] %vm7347, %v7214
    %7378 = vst.msk [vmem:[#allocation5 + $0x78] sm:$0xf] %vm7347, %v7216
    %7379 = vst.msk [vmem:[#allocation5 + $0x7c] sm:$0xf] %vm7347, %v7218
    %7380 = vst.msk [vmem:[#allocation5 + $0x80] sm:$0xf] %vm7347, %v7220
    %7381 = vst.msk [vmem:[#allocation5 + $0x84] sm:$0xf] %vm7347, %v7222
    %7382 = vst.msk [vmem:[#allocation5 + $0x88] sm:$0xf] %vm7347, %v7224
    %7383 = vst.msk [vmem:[#allocation5 + $0x8c] sm:$0xf] %vm7347, %v7226
    %7384 = vst.msk [vmem:[#allocation5 + $0x90] sm:$0xf] %vm7347, %v7228
    %7385 = vst.msk [vmem:[#allocation5 + $0x94] sm:$0xf] %vm7347, %v7230
    %7386 = vst.msk [vmem:[#allocation5 + $0x98] sm:$0xf] %vm7347, %v7232
    %7387 = vst.msk [vmem:[#allocation5 + $0x9c] sm:$0xf] %vm7347, %v7234
    %7388 = vst.msk [vmem:[#allocation5 + $0xa0] sm:$0xf] %vm7347, %v7236
    %7389 = vst.msk [vmem:[#allocation5 + $0xa4] sm:$0xf] %vm7347, %v7238
    %7390 = vst.msk [vmem:[#allocation5 + $0xa8] sm:$0xf] %vm7347, %v7240
    %7391 = vst.msk [vmem:[#allocation5 + $0xac] sm:$0xf] %vm7347, %v7242
    %7392 = vst.msk [vmem:[#allocation5 + $0xb0] sm:$0xf] %vm7347, %v7244
    %7393 = vst.msk [vmem:[#allocation5 + $0xb4] sm:$0xf] %vm7347, %v7246
    %7394 = vst.msk [vmem:[#allocation5 + $0xb8] sm:$0xf] %vm7347, %v7248
    %7395 = vst.msk [vmem:[#allocation5 + $0xbc] sm:$0xf] %vm7347, %v7250
    %7396 = vst.msk [vmem:[#allocation5 + $0xc0] sm:$0xf] %vm7347, %v7252
    %7397 = vst.msk [vmem:[#allocation5 + $0xc4] sm:$0xf] %vm7347, %v7254
    %7398 = vst.msk [vmem:[#allocation5 + $0xc8] sm:$0xf] %vm7347, %v7256
    %7399 = vst.msk [vmem:[#allocation5 + $0xcc] sm:$0xf] %vm7347, %v7258
    %7400 = vst.msk [vmem:[#allocation5 + $0xd0] sm:$0xf] %vm7347, %v7260
    %7401 = vst.msk [vmem:[#allocation5 + $0xd4] sm:$0xf] %vm7347, %v7262
    %7402 = vst.msk [vmem:[#allocation5 + $0xd8] sm:$0xf] %vm7347, %v7264
    %7403 = vst.msk [vmem:[#allocation5 + $0xdc] sm:$0xf] %vm7347, %v7266
    %7404 = vst.msk [vmem:[#allocation5 + $0xe0] sm:$0xf] %vm7347, %v7268
    %7405 = vst.msk [vmem:[#allocation5 + $0xe4] sm:$0xf] %vm7347, %v7270
    %7406 = vst.msk [vmem:[#allocation5 + $0xe8] sm:$0xf] %vm7347, %v7272
    %7407 = vst.msk [vmem:[#allocation5 + $0xec] sm:$0xf] %vm7347, %v7274
    %7408 = vst.msk [vmem:[#allocation5 + $0xf0] sm:$0xf] %vm7347, %v7276
    %7409 = vst.msk [vmem:[#allocation5 + $0xf4] sm:$0xf] %vm7347, %v7278
    %7410 = vst.msk [vmem:[#allocation5 + $0xf8] sm:$0xf] %vm7347, %v7280
    %7411 = vst.msk [vmem:[#allocation5 + $0xfc] sm:$0xf] %vm7347, %v7282
    %v7412 = vld [vmem:[%s5358 + $0x2] sm:$0xff]
    %v7413 = vld [vmem:[%s5358 + $0xa] sm:$0xff]
    %v7414 = vld [vmem:[%s5358 + $0x1a] sm:$0xff]
    %v7415 = vld [vmem:[%s5358 + $0x22] sm:$0xff]
    %v7416 = vld [vmem:[%s5358 + $0x32] sm:$0xff]
    %v7417 = vld [vmem:[%s5358 + $0x3a] sm:$0xff]
    %v7418 = vld [vmem:[%s5358 + $0x4a] sm:$0xff]
    %v7419 = vld [vmem:[%s5358 + $0x52] sm:$0xff]
    %v7420 = vld [vmem:[%s5358 + $0x62] sm:$0xff]
    %v7421 = vld [vmem:[%s5358 + $0x6a] sm:$0xff]
    %v7422 = vld [vmem:[%s5358 + $0x7a] sm:$0xff]
    %v7423 = vld [vmem:[%s5358 + $0x82] sm:$0xff]
    %v7424 = vld [vmem:[%s5358 + $0x92] sm:$0xff]
    %v7425 = vld [vmem:[%s5358 + $0x9a] sm:$0xff]
    %v7426 = vld [vmem:[%s5358 + $0xaa] sm:$0xff]
    %v7427 = vld [vmem:[%s5358 + $0xb2] sm:$0xff]
    %v7428 = vld [vmem:[%s5358 + $0xc2] sm:$0xff]
    %v7429 = vld [vmem:[%s5358 + $0xca] sm:$0xff]
    %v7430 = vld [vmem:[%s5358 + $0xda] sm:$0xff]
    %v7431 = vld [vmem:[%s5358 + $0xe2] sm:$0xff]
    %v7432 = vld [vmem:[%s5358 + $0xf2] sm:$0xff]
    %v7433 = vld [vmem:[%s5358 + $0xfa] sm:$0xff]
    %v7434 = vld [vmem:[%s5358 + $0x10a] sm:$0xff]
    %v7435 = vld [vmem:[%s5358 + $0x112] sm:$0xff]
    %v7436 = vld [vmem:[%s5358 + $0x122] sm:$0xff]
    %v7437 = vld [vmem:[%s5358 + $0x12a] sm:$0xff]
    %v7438 = vld [vmem:[%s5358 + $0x13a] sm:$0xff]
    %v7439 = vld [vmem:[%s5358 + $0x142] sm:$0xff]
    %v7440 = vld [vmem:[%s5358 + $0x152] sm:$0xff]
    %v7441 = vld [vmem:[%s5358 + $0x15a] sm:$0xff]
    %v7442 = vld [vmem:[%s5358 + $0x16a] sm:$0xff]
    %v7443 = vld [vmem:[%s5358 + $0x172] sm:$0xff]
    %v7444 = vld [vmem:[%s5358 + $0x1b2] sm:$0xff]
    %v7445 = vld [vmem:[%s5358 + $0x1ba] sm:$0xff]
    %v7446 = vld [vmem:[%s5358 + $0x1ca] sm:$0xff]
    %v7447 = vld [vmem:[%s5358 + $0x1d2] sm:$0xff]
    %v7448 = vld [vmem:[%s5358 + $0x1e2] sm:$0xff]
    %v7449 = vld [vmem:[%s5358 + $0x1ea] sm:$0xff]
    %v7450 = vld [vmem:[%s5358 + $0x1fa] sm:$0xff]
    %v7451 = vld [vmem:[%s5358 + $0x202] sm:$0xff]
    %v7452 = vld [vmem:[%s5358 + $0x212] sm:$0xff]
    %v7453 = vld [vmem:[%s5358 + $0x21a] sm:$0xff]
    %v7454 = vld [vmem:[%s5358 + $0x22a] sm:$0xff]
    %v7455 = vld [vmem:[%s5358 + $0x232] sm:$0xff]
    %v7456 = vld [vmem:[%s5358 + $0x242] sm:$0xff]
    %v7457 = vld [vmem:[%s5358 + $0x24a] sm:$0xff]
    %v7458 = vld [vmem:[%s5358 + $0x25a] sm:$0xff]
    %v7459 = vld [vmem:[%s5358 + $0x262] sm:$0xff]
    %v7460 = vld [vmem:[%s5358 + $0x272] sm:$0xff]
    %v7461 = vld [vmem:[%s5358 + $0x27a] sm:$0xff]
    %v7462 = vld [vmem:[%s5358 + $0x28a] sm:$0xff]
    %v7463 = vld [vmem:[%s5358 + $0x292] sm:$0xff]
    %v7464 = vld [vmem:[%s5358 + $0x2a2] sm:$0xff]
    %v7465 = vld [vmem:[%s5358 + $0x2aa] sm:$0xff]
    %v7466 = vld [vmem:[%s5358 + $0x2ba] sm:$0xff]
    %v7467 = vld [vmem:[%s5358 + $0x2c2] sm:$0xff]
    %v7468 = vld [vmem:[%s5358 + $0x2d2] sm:$0xff]
    %v7469 = vld [vmem:[%s5358 + $0x2da] sm:$0xff]
    %v7470 = vld [vmem:[%s5358 + $0x2ea] sm:$0xff]
    %v7471 = vld [vmem:[%s5358 + $0x2f2] sm:$0xff]
    %v7472 = vld [vmem:[%s5358 + $0x302] sm:$0xff]
    %v7473 = vld [vmem:[%s5358 + $0x30a] sm:$0xff]
    %v7474 = vld [vmem:[%s5358 + $0x31a] sm:$0xff]
    %v7475 = vld [vmem:[%s5358 + $0x322] sm:$0xff]
    %v7476 = vpack.c.bf16 %v7412, %v7412
    %v7477 = vpack.c.bf16 %v7413, %v7413
    %v7478 = vpack.c.bf16 %v7414, %v7414
    %v7479 = vpack.c.bf16 %v7415, %v7415
    %v7480 = vpack.c.bf16 %v7416, %v7416
    %v7481 = vpack.c.bf16 %v7417, %v7417
    %v7482 = vpack.c.bf16 %v7418, %v7418
    %v7483 = vpack.c.bf16 %v7419, %v7419
    %v7484 = vpack.c.bf16 %v7420, %v7420
    %v7485 = vpack.c.bf16 %v7421, %v7421
    %v7486 = vpack.c.bf16 %v7422, %v7422
    %v7487 = vpack.c.bf16 %v7423, %v7423
    %v7488 = vpack.c.bf16 %v7424, %v7424
    %v7489 = vpack.c.bf16 %v7425, %v7425
    %v7490 = vpack.c.bf16 %v7426, %v7426
    %v7491 = vpack.c.bf16 %v7427, %v7427
    %v7492 = vpack.c.bf16 %v7428, %v7428
    %v7493 = vpack.c.bf16 %v7429, %v7429
    %v7494 = vpack.c.bf16 %v7430, %v7430
    %v7495 = vpack.c.bf16 %v7431, %v7431
    %v7496 = vpack.c.bf16 %v7432, %v7432
    %v7497 = vpack.c.bf16 %v7433, %v7433
    %v7498 = vpack.c.bf16 %v7434, %v7434
    %v7499 = vpack.c.bf16 %v7435, %v7435
    %v7500 = vpack.c.bf16 %v7436, %v7436
    %v7501 = vpack.c.bf16 %v7437, %v7437
    %v7502 = vpack.c.bf16 %v7438, %v7438
    %v7503 = vpack.c.bf16 %v7439, %v7439
    %v7504 = vpack.c.bf16 %v7440, %v7440
    %v7505 = vpack.c.bf16 %v7441, %v7441
    %v7506 = vpack.c.bf16 %v7442, %v7442
    %v7507 = vpack.c.bf16 %v7443, %v7443
    %v7508 = vpack.c.bf16 %v7444, %v7444
    %v7509 = vpack.c.bf16 %v7445, %v7445
    %v7510 = vpack.c.bf16 %v7446, %v7446
    %v7511 = vpack.c.bf16 %v7447, %v7447
    %v7512 = vpack.c.bf16 %v7448, %v7448
    %v7513 = vpack.c.bf16 %v7449, %v7449
    %v7514 = vpack.c.bf16 %v7450, %v7450
    %v7515 = vpack.c.bf16 %v7451, %v7451
    %v7516 = vpack.c.bf16 %v7452, %v7452
    %v7517 = vpack.c.bf16 %v7453, %v7453
    %v7518 = vpack.c.bf16 %v7454, %v7454
    %v7519 = vpack.c.bf16 %v7455, %v7455
    %v7520 = vpack.c.bf16 %v7456, %v7456
    %v7521 = vpack.c.bf16 %v7457, %v7457
    %v7522 = vpack.c.bf16 %v7458, %v7458
    %v7523 = vpack.c.bf16 %v7459, %v7459
    %v7524 = vpack.c.bf16 %v7460, %v7460
    %v7525 = vpack.c.bf16 %v7461, %v7461
    %v7526 = vpack.c.bf16 %v7462, %v7462
    %v7527 = vpack.c.bf16 %v7463, %v7463
    %v7528 = vpack.c.bf16 %v7464, %v7464
    %v7529 = vpack.c.bf16 %v7465, %v7465
    %v7530 = vpack.c.bf16 %v7466, %v7466
    %v7531 = vpack.c.bf16 %v7467, %v7467
    %v7532 = vpack.c.bf16 %v7468, %v7468
    %v7533 = vpack.c.bf16 %v7469, %v7469
    %v7534 = vpack.c.bf16 %v7470, %v7470
    %v7535 = vpack.c.bf16 %v7471, %v7471
    %v7536 = vpack.c.bf16 %v7472, %v7472
    %v7537 = vpack.c.bf16 %v7473, %v7473
    %v7538 = vpack.c.bf16 %v7474, %v7474
    %v7539 = vpack.c.bf16 %v7475, %v7475
    %7604 = vrot.lane.b32.xlu0 %v7476, 40
    %v7605 = vpop.permute.xlu0 %7604
    %7606 = vrot.lane.b32.xlu0 %v7477, 40
    %v7607 = vpop.permute.xlu0 %7606
    %7608 = vrot.lane.b32.xlu0 %v7478, 40
    %v7609 = vpop.permute.xlu0 %7608
    %7610 = vrot.lane.b32.xlu0 %v7479, 40
    %v7611 = vpop.permute.xlu0 %7610
    %7612 = vrot.lane.b32.xlu0 %v7480, 40
    %v7613 = vpop.permute.xlu0 %7612
    %7614 = vrot.lane.b32.xlu0 %v7481, 40
    %v7615 = vpop.permute.xlu0 %7614
    %7616 = vrot.lane.b32.xlu0 %v7482, 40
    %v7617 = vpop.permute.xlu0 %7616
    %7618 = vrot.lane.b32.xlu0 %v7483, 40
    %v7619 = vpop.permute.xlu0 %7618
    %7620 = vrot.lane.b32.xlu0 %v7484, 40
    %v7621 = vpop.permute.xlu0 %7620
    %7622 = vrot.lane.b32.xlu0 %v7485, 40
    %v7623 = vpop.permute.xlu0 %7622
    %7624 = vrot.lane.b32.xlu0 %v7486, 40
    %v7625 = vpop.permute.xlu0 %7624
    %7626 = vrot.lane.b32.xlu0 %v7487, 40
    %v7627 = vpop.permute.xlu0 %7626
    %7628 = vrot.lane.b32.xlu0 %v7488, 40
    %v7629 = vpop.permute.xlu0 %7628
    %7630 = vrot.lane.b32.xlu0 %v7489, 40
    %v7631 = vpop.permute.xlu0 %7630
    %7632 = vrot.lane.b32.xlu0 %v7490, 40
    %v7633 = vpop.permute.xlu0 %7632
    %7634 = vrot.lane.b32.xlu0 %v7491, 40
    %v7635 = vpop.permute.xlu0 %7634
    %7636 = vrot.lane.b32.xlu0 %v7492, 40
    %v7637 = vpop.permute.xlu0 %7636
    %7638 = vrot.lane.b32.xlu0 %v7493, 40
    %v7639 = vpop.permute.xlu0 %7638
    %7640 = vrot.lane.b32.xlu0 %v7494, 40
    %v7641 = vpop.permute.xlu0 %7640
    %7642 = vrot.lane.b32.xlu0 %v7495, 40
    %v7643 = vpop.permute.xlu0 %7642
    %7644 = vrot.lane.b32.xlu0 %v7496, 40
    %v7645 = vpop.permute.xlu0 %7644
    %7646 = vrot.lane.b32.xlu0 %v7497, 40
    %v7647 = vpop.permute.xlu0 %7646
    %7648 = vrot.lane.b32.xlu0 %v7498, 40
    %v7649 = vpop.permute.xlu0 %7648
    %7650 = vrot.lane.b32.xlu0 %v7499, 40
    %v7651 = vpop.permute.xlu0 %7650
    %7652 = vrot.lane.b32.xlu0 %v7500, 40
    %v7653 = vpop.permute.xlu0 %7652
    %7654 = vrot.lane.b32.xlu0 %v7501, 40
    %v7655 = vpop.permute.xlu0 %7654
    %7656 = vrot.lane.b32.xlu0 %v7502, 40
    %v7657 = vpop.permute.xlu0 %7656
    %7658 = vrot.lane.b32.xlu0 %v7503, 40
    %v7659 = vpop.permute.xlu0 %7658
    %7660 = vrot.lane.b32.xlu0 %v7504, 40
    %v7661 = vpop.permute.xlu0 %7660
    %7662 = vrot.lane.b32.xlu0 %v7505, 40
    %v7663 = vpop.permute.xlu0 %7662
    %7664 = vrot.lane.b32.xlu0 %v7506, 40
    %v7665 = vpop.permute.xlu0 %7664
    %7666 = vrot.lane.b32.xlu0 %v7507, 40
    %v7667 = vpop.permute.xlu0 %7666
    %7668 = vrot.lane.b32.xlu0 %v7508, 40
    %v7669 = vpop.permute.xlu0 %7668
    %7670 = vrot.lane.b32.xlu0 %v7509, 40
    %v7671 = vpop.permute.xlu0 %7670
    %7672 = vrot.lane.b32.xlu0 %v7510, 40
    %v7673 = vpop.permute.xlu0 %7672
    %7674 = vrot.lane.b32.xlu0 %v7511, 40
    %v7675 = vpop.permute.xlu0 %7674
    %7676 = vrot.lane.b32.xlu0 %v7512, 40
    %v7677 = vpop.permute.xlu0 %7676
    %7678 = vrot.lane.b32.xlu0 %v7513, 40
    %v7679 = vpop.permute.xlu0 %7678
    %7680 = vrot.lane.b32.xlu0 %v7514, 40
    %v7681 = vpop.permute.xlu0 %7680
    %7682 = vrot.lane.b32.xlu0 %v7515, 40
    %v7683 = vpop.permute.xlu0 %7682
    %7684 = vrot.lane.b32.xlu0 %v7516, 40
    %v7685 = vpop.permute.xlu0 %7684
    %7686 = vrot.lane.b32.xlu0 %v7517, 40
    %v7687 = vpop.permute.xlu0 %7686
    %7688 = vrot.lane.b32.xlu0 %v7518, 40
    %v7689 = vpop.permute.xlu0 %7688
    %7690 = vrot.lane.b32.xlu0 %v7519, 40
    %v7691 = vpop.permute.xlu0 %7690
    %7692 = vrot.lane.b32.xlu0 %v7520, 40
    %v7693 = vpop.permute.xlu0 %7692
    %7694 = vrot.lane.b32.xlu0 %v7521, 40
    %v7695 = vpop.permute.xlu0 %7694
    %7696 = vrot.lane.b32.xlu0 %v7522, 40
    %v7697 = vpop.permute.xlu0 %7696
    %7698 = vrot.lane.b32.xlu0 %v7523, 40
    %v7699 = vpop.permute.xlu0 %7698
    %7700 = vrot.lane.b32.xlu0 %v7524, 40
    %v7701 = vpop.permute.xlu0 %7700
    %7702 = vrot.lane.b32.xlu0 %v7525, 40
    %v7703 = vpop.permute.xlu0 %7702
    %7704 = vrot.lane.b32.xlu0 %v7526, 40
    %v7705 = vpop.permute.xlu0 %7704
    %7706 = vrot.lane.b32.xlu0 %v7527, 40
    %v7707 = vpop.permute.xlu0 %7706
    %7708 = vrot.lane.b32.xlu0 %v7528, 40
    %v7709 = vpop.permute.xlu0 %7708
    %7710 = vrot.lane.b32.xlu0 %v7529, 40
    %v7711 = vpop.permute.xlu0 %7710
    %7712 = vrot.lane.b32.xlu0 %v7530, 40
    %v7713 = vpop.permute.xlu0 %7712
    %7714 = vrot.lane.b32.xlu0 %v7531, 40
    %v7715 = vpop.permute.xlu0 %7714
    %7716 = vrot.lane.b32.xlu0 %v7532, 40
    %v7717 = vpop.permute.xlu0 %7716
    %7718 = vrot.lane.b32.xlu0 %v7533, 40
    %v7719 = vpop.permute.xlu0 %7718
    %7720 = vrot.lane.b32.xlu0 %v7534, 40
    %v7721 = vpop.permute.xlu0 %7720
    %7722 = vrot.lane.b32.xlu0 %v7535, 40
    %v7723 = vpop.permute.xlu0 %7722
    %7724 = vrot.lane.b32.xlu0 %v7536, 40
    %v7725 = vpop.permute.xlu0 %7724
    %7726 = vrot.lane.b32.xlu0 %v7537, 40
    %v7727 = vpop.permute.xlu0 %7726
    %7728 = vrot.lane.b32.xlu0 %v7538, 40
    %v7729 = vpop.permute.xlu0 %7728
    %7730 = vrot.lane.b32.xlu0 %v7539, 40
    %v7731 = vpop.permute.xlu0 %7730
    %vm7796 = vcmask 388416
    %7797 = vst.msk [vmem:[#allocation5] sm:$0xf] %vm7796, %v7605
    %7798 = vst.msk [vmem:[#allocation5 + $0x4] sm:$0xf] %vm7796, %v7607
    %7799 = vst.msk [vmem:[#allocation5 + $0x8] sm:$0xf] %vm7796, %v7609
    %7800 = vst.msk [vmem:[#allocation5 + $0xc] sm:$0xf] %vm7796, %v7611
    %7801 = vst.msk [vmem:[#allocation5 + $0x10] sm:$0xf] %vm7796, %v7613
    %7802 = vst.msk [vmem:[#allocation5 + $0x14] sm:$0xf] %vm7796, %v7615
    %7803 = vst.msk [vmem:[#allocation5 + $0x18] sm:$0xf] %vm7796, %v7617
    %7804 = vst.msk [vmem:[#allocation5 + $0x1c] sm:$0xf] %vm7796, %v7619
    %7805 = vst.msk [vmem:[#allocation5 + $0x20] sm:$0xf] %vm7796, %v7621
    %7806 = vst.msk [vmem:[#allocation5 + $0x24] sm:$0xf] %vm7796, %v7623
    %7807 = vst.msk [vmem:[#allocation5 + $0x28] sm:$0xf] %vm7796, %v7625
    %7808 = vst.msk [vmem:[#allocation5 + $0x2c] sm:$0xf] %vm7796, %v7627
    %7809 = vst.msk [vmem:[#allocation5 + $0x30] sm:$0xf] %vm7796, %v7629
    %7810 = vst.msk [vmem:[#allocation5 + $0x34] sm:$0xf] %vm7796, %v7631
    %7811 = vst.msk [vmem:[#allocation5 + $0x38] sm:$0xf] %vm7796, %v7633
    %7812 = vst.msk [vmem:[#allocation5 + $0x3c] sm:$0xf] %vm7796, %v7635
    %7813 = vst.msk [vmem:[#allocation5 + $0x40] sm:$0xf] %vm7796, %v7637
    %7814 = vst.msk [vmem:[#allocation5 + $0x44] sm:$0xf] %vm7796, %v7639
    %7815 = vst.msk [vmem:[#allocation5 + $0x48] sm:$0xf] %vm7796, %v7641
    %7816 = vst.msk [vmem:[#allocation5 + $0x4c] sm:$0xf] %vm7796, %v7643
    %7817 = vst.msk [vmem:[#allocation5 + $0x50] sm:$0xf] %vm7796, %v7645
    %7818 = vst.msk [vmem:[#allocation5 + $0x54] sm:$0xf] %vm7796, %v7647
    %7819 = vst.msk [vmem:[#allocation5 + $0x58] sm:$0xf] %vm7796, %v7649
    %7820 = vst.msk [vmem:[#allocation5 + $0x5c] sm:$0xf] %vm7796, %v7651
    %7821 = vst.msk [vmem:[#allocation5 + $0x60] sm:$0xf] %vm7796, %v7653
    %7822 = vst.msk [vmem:[#allocation5 + $0x64] sm:$0xf] %vm7796, %v7655
    %7823 = vst.msk [vmem:[#allocation5 + $0x68] sm:$0xf] %vm7796, %v7657
    %7824 = vst.msk [vmem:[#allocation5 + $0x6c] sm:$0xf] %vm7796, %v7659
    %7825 = vst.msk [vmem:[#allocation5 + $0x70] sm:$0xf] %vm7796, %v7661
    %7826 = vst.msk [vmem:[#allocation5 + $0x74] sm:$0xf] %vm7796, %v7663
    %7827 = vst.msk [vmem:[#allocation5 + $0x78] sm:$0xf] %vm7796, %v7665
    %7828 = vst.msk [vmem:[#allocation5 + $0x7c] sm:$0xf] %vm7796, %v7667
    %7829 = vst.msk [vmem:[#allocation5 + $0x80] sm:$0xf] %vm7796, %v7669
    %7830 = vst.msk [vmem:[#allocation5 + $0x84] sm:$0xf] %vm7796, %v7671
    %7831 = vst.msk [vmem:[#allocation5 + $0x88] sm:$0xf] %vm7796, %v7673
    %7832 = vst.msk [vmem:[#allocation5 + $0x8c] sm:$0xf] %vm7796, %v7675
    %7833 = vst.msk [vmem:[#allocation5 + $0x90] sm:$0xf] %vm7796, %v7677
    %7834 = vst.msk [vmem:[#allocation5 + $0x94] sm:$0xf] %vm7796, %v7679
    %7835 = vst.msk [vmem:[#allocation5 + $0x98] sm:$0xf] %vm7796, %v7681
    %7836 = vst.msk [vmem:[#allocation5 + $0x9c] sm:$0xf] %vm7796, %v7683
    %7837 = vst.msk [vmem:[#allocation5 + $0xa0] sm:$0xf] %vm7796, %v7685
    %7838 = vst.msk [vmem:[#allocation5 + $0xa4] sm:$0xf] %vm7796, %v7687
    %7839 = vst.msk [vmem:[#allocation5 + $0xa8] sm:$0xf] %vm7796, %v7689
    %7840 = vst.msk [vmem:[#allocation5 + $0xac] sm:$0xf] %vm7796, %v7691
    %7841 = vst.msk [vmem:[#allocation5 + $0xb0] sm:$0xf] %vm7796, %v7693
    %7842 = vst.msk [vmem:[#allocation5 + $0xb4] sm:$0xf] %vm7796, %v7695
    %7843 = vst.msk [vmem:[#allocation5 + $0xb8] sm:$0xf] %vm7796, %v7697
    %7844 = vst.msk [vmem:[#allocation5 + $0xbc] sm:$0xf] %vm7796, %v7699
    %7845 = vst.msk [vmem:[#allocation5 + $0xc0] sm:$0xf] %vm7796, %v7701
    %7846 = vst.msk [vmem:[#allocation5 + $0xc4] sm:$0xf] %vm7796, %v7703
    %7847 = vst.msk [vmem:[#allocation5 + $0xc8] sm:$0xf] %vm7796, %v7705
    %7848 = vst.msk [vmem:[#allocation5 + $0xcc] sm:$0xf] %vm7796, %v7707
    %7849 = vst.msk [vmem:[#allocation5 + $0xd0] sm:$0xf] %vm7796, %v7709
    %7850 = vst.msk [vmem:[#allocation5 + $0xd4] sm:$0xf] %vm7796, %v7711
    %7851 = vst.msk [vmem:[#allocation5 + $0xd8] sm:$0xf] %vm7796, %v7713
    %7852 = vst.msk [vmem:[#allocation5 + $0xdc] sm:$0xf] %vm7796, %v7715
    %7853 = vst.msk [vmem:[#allocation5 + $0xe0] sm:$0xf] %vm7796, %v7717
    %7854 = vst.msk [vmem:[#allocation5 + $0xe4] sm:$0xf] %vm7796, %v7719
    %7855 = vst.msk [vmem:[#allocation5 + $0xe8] sm:$0xf] %vm7796, %v7721
    %7856 = vst.msk [vmem:[#allocation5 + $0xec] sm:$0xf] %vm7796, %v7723
    %7857 = vst.msk [vmem:[#allocation5 + $0xf0] sm:$0xf] %vm7796, %v7725
    %7858 = vst.msk [vmem:[#allocation5 + $0xf4] sm:$0xf] %vm7796, %v7727
    %7859 = vst.msk [vmem:[#allocation5 + $0xf8] sm:$0xf] %vm7796, %v7729
    %7860 = vst.msk [vmem:[#allocation5 + $0xfc] sm:$0xf] %vm7796, %v7731
    %s7861 = scalar_lea.vmem [#allocation3], 48
    %v7862 = vld [vmem:[%s7861] sm:$0xff]
    %v7863 = vld [vmem:[%s7861 + $0x8] sm:$0xff]
    %v7864 = vld [vmem:[%s7861 + $0x18] sm:$0xff]
    %v7865 = vld [vmem:[%s7861 + $0x20] sm:$0xff]
    %v7866 = vld [vmem:[%s7861 + $0x30] sm:$0xff]
    %v7867 = vld [vmem:[%s7861 + $0x38] sm:$0xff]
    %v7868 = vld [vmem:[%s7861 + $0x48] sm:$0xff]
    %v7869 = vld [vmem:[%s7861 + $0x50] sm:$0xff]
    %v7870 = vld [vmem:[%s7861 + $0x60] sm:$0xff]
    %v7871 = vld [vmem:[%s7861 + $0x68] sm:$0xff]
    %v7872 = vld [vmem:[%s7861 + $0x78] sm:$0xff]
    %v7873 = vld [vmem:[%s7861 + $0x80] sm:$0xff]
    %v7874 = vld [vmem:[%s7861 + $0x90] sm:$0xff]
    %v7875 = vld [vmem:[%s7861 + $0x98] sm:$0xff]
    %v7876 = vld [vmem:[%s7861 + $0xa8] sm:$0xff]
    %v7877 = vld [vmem:[%s7861 + $0xb0] sm:$0xff]
    %v7878 = vld [vmem:[%s7861 + $0xc0] sm:$0xff]
    %v7879 = vld [vmem:[%s7861 + $0xc8] sm:$0xff]
    %v7880 = vld [vmem:[%s7861 + $0xd8] sm:$0xff]
    %v7881 = vld [vmem:[%s7861 + $0xe0] sm:$0xff]
    %v7882 = vld [vmem:[%s7861 + $0xf0] sm:$0xff]
    %v7883 = vld [vmem:[%s7861 + $0xf8] sm:$0xff]
    %v7884 = vld [vmem:[%s7861 + $0x108] sm:$0xff]
    %v7885 = vld [vmem:[%s7861 + $0x110] sm:$0xff]
    %v7886 = vld [vmem:[%s7861 + $0x120] sm:$0xff]
    %v7887 = vld [vmem:[%s7861 + $0x128] sm:$0xff]
    %v7888 = vld [vmem:[%s7861 + $0x138] sm:$0xff]
    %v7889 = vld [vmem:[%s7861 + $0x140] sm:$0xff]
    %v7890 = vld [vmem:[%s7861 + $0x150] sm:$0xff]
    %v7891 = vld [vmem:[%s7861 + $0x158] sm:$0xff]
    %v7892 = vld [vmem:[%s7861 + $0x168] sm:$0xff]
    %v7893 = vld [vmem:[%s7861 + $0x170] sm:$0xff]
    %v7894 = vld [vmem:[%s7861 + $0x1b0] sm:$0xff]
    %v7895 = vld [vmem:[%s7861 + $0x1b8] sm:$0xff]
    %v7896 = vld [vmem:[%s7861 + $0x1c8] sm:$0xff]
    %v7897 = vld [vmem:[%s7861 + $0x1d0] sm:$0xff]
    %v7898 = vld [vmem:[%s7861 + $0x1e0] sm:$0xff]
    %v7899 = vld [vmem:[%s7861 + $0x1e8] sm:$0xff]
    %v7900 = vld [vmem:[%s7861 + $0x1f8] sm:$0xff]
    %v7901 = vld [vmem:[%s7861 + $0x200] sm:$0xff]
    %v7902 = vld [vmem:[%s7861 + $0x210] sm:$0xff]
    %v7903 = vld [vmem:[%s7861 + $0x218] sm:$0xff]
    %v7904 = vld [vmem:[%s7861 + $0x228] sm:$0xff]
    %v7905 = vld [vmem:[%s7861 + $0x230] sm:$0xff]
    %v7906 = vld [vmem:[%s7861 + $0x240] sm:$0xff]
    %v7907 = vld [vmem:[%s7861 + $0x248] sm:$0xff]
    %v7908 = vld [vmem:[%s7861 + $0x258] sm:$0xff]
    %v7909 = vld [vmem:[%s7861 + $0x260] sm:$0xff]
    %v7910 = vld [vmem:[%s7861 + $0x270] sm:$0xff]
    %v7911 = vld [vmem:[%s7861 + $0x278] sm:$0xff]
    %v7912 = vld [vmem:[%s7861 + $0x288] sm:$0xff]
    %v7913 = vld [vmem:[%s7861 + $0x290] sm:$0xff]
    %v7914 = vld [vmem:[%s7861 + $0x2a0] sm:$0xff]
    %v7915 = vld [vmem:[%s7861 + $0x2a8] sm:$0xff]
    %v7916 = vld [vmem:[%s7861 + $0x2b8] sm:$0xff]
    %v7917 = vld [vmem:[%s7861 + $0x2c0] sm:$0xff]
    %v7918 = vld [vmem:[%s7861 + $0x2d0] sm:$0xff]
    %v7919 = vld [vmem:[%s7861 + $0x2d8] sm:$0xff]
    %v7920 = vld [vmem:[%s7861 + $0x2e8] sm:$0xff]
    %v7921 = vld [vmem:[%s7861 + $0x2f0] sm:$0xff]
    %v7922 = vld [vmem:[%s7861 + $0x300] sm:$0xff]
    %v7923 = vld [vmem:[%s7861 + $0x308] sm:$0xff]
    %v7924 = vld [vmem:[%s7861 + $0x318] sm:$0xff]
    %v7925 = vld [vmem:[%s7861 + $0x320] sm:$0xff]
    %v7926 = vpack.c.bf16 %v7862, %v7862
    %v7927 = vpack.c.bf16 %v7863, %v7863
    %v7928 = vpack.c.bf16 %v7864, %v7864
    %v7929 = vpack.c.bf16 %v7865, %v7865
    %v7930 = vpack.c.bf16 %v7866, %v7866
    %v7931 = vpack.c.bf16 %v7867, %v7867
    %v7932 = vpack.c.bf16 %v7868, %v7868
    %v7933 = vpack.c.bf16 %v7869, %v7869
    %v7934 = vpack.c.bf16 %v7870, %v7870
    %v7935 = vpack.c.bf16 %v7871, %v7871
    %v7936 = vpack.c.bf16 %v7872, %v7872
    %v7937 = vpack.c.bf16 %v7873, %v7873
    %v7938 = vpack.c.bf16 %v7874, %v7874
    %v7939 = vpack.c.bf16 %v7875, %v7875
    %v7940 = vpack.c.bf16 %v7876, %v7876
    %v7941 = vpack.c.bf16 %v7877, %v7877
    %v7942 = vpack.c.bf16 %v7878, %v7878
    %v7943 = vpack.c.bf16 %v7879, %v7879
    %v7944 = vpack.c.bf16 %v7880, %v7880
    %v7945 = vpack.c.bf16 %v7881, %v7881
    %v7946 = vpack.c.bf16 %v7882, %v7882
    %v7947 = vpack.c.bf16 %v7883, %v7883
    %v7948 = vpack.c.bf16 %v7884, %v7884
    %v7949 = vpack.c.bf16 %v7885, %v7885
    %v7950 = vpack.c.bf16 %v7886, %v7886
    %v7951 = vpack.c.bf16 %v7887, %v7887
    %v7952 = vpack.c.bf16 %v7888, %v7888
    %v7953 = vpack.c.bf16 %v7889, %v7889
    %v7954 = vpack.c.bf16 %v7890, %v7890
    %v7955 = vpack.c.bf16 %v7891, %v7891
    %v7956 = vpack.c.bf16 %v7892, %v7892
    %v7957 = vpack.c.bf16 %v7893, %v7893
    %v7958 = vpack.c.bf16 %v7894, %v7894
    %v7959 = vpack.c.bf16 %v7895, %v7895
    %v7960 = vpack.c.bf16 %v7896, %v7896
    %v7961 = vpack.c.bf16 %v7897, %v7897
    %v7962 = vpack.c.bf16 %v7898, %v7898
    %v7963 = vpack.c.bf16 %v7899, %v7899
    %v7964 = vpack.c.bf16 %v7900, %v7900
    %v7965 = vpack.c.bf16 %v7901, %v7901
    %v7966 = vpack.c.bf16 %v7902, %v7902
    %v7967 = vpack.c.bf16 %v7903, %v7903
    %v7968 = vpack.c.bf16 %v7904, %v7904
    %v7969 = vpack.c.bf16 %v7905, %v7905
    %v7970 = vpack.c.bf16 %v7906, %v7906
    %v7971 = vpack.c.bf16 %v7907, %v7907
    %v7972 = vpack.c.bf16 %v7908, %v7908
    %v7973 = vpack.c.bf16 %v7909, %v7909
    %v7974 = vpack.c.bf16 %v7910, %v7910
    %v7975 = vpack.c.bf16 %v7911, %v7911
    %v7976 = vpack.c.bf16 %v7912, %v7912
    %v7977 = vpack.c.bf16 %v7913, %v7913
    %v7978 = vpack.c.bf16 %v7914, %v7914
    %v7979 = vpack.c.bf16 %v7915, %v7915
    %v7980 = vpack.c.bf16 %v7916, %v7916
    %v7981 = vpack.c.bf16 %v7917, %v7917
    %v7982 = vpack.c.bf16 %v7918, %v7918
    %v7983 = vpack.c.bf16 %v7919, %v7919
    %v7984 = vpack.c.bf16 %v7920, %v7920
    %v7985 = vpack.c.bf16 %v7921, %v7921
    %v7986 = vpack.c.bf16 %v7922, %v7922
    %v7987 = vpack.c.bf16 %v7923, %v7923
    %v7988 = vpack.c.bf16 %v7924, %v7924
    %v7989 = vpack.c.bf16 %v7925, %v7925
    %8054 = vrot.lane.b32.xlu0 %v7926, 48
    %v8055 = vpop.permute.xlu0 %8054
    %8056 = vrot.lane.b32.xlu0 %v7927, 48
    %v8057 = vpop.permute.xlu0 %8056
    %8058 = vrot.lane.b32.xlu0 %v7928, 48
    %v8059 = vpop.permute.xlu0 %8058
    %8060 = vrot.lane.b32.xlu0 %v7929, 48
    %v8061 = vpop.permute.xlu0 %8060
    %8062 = vrot.lane.b32.xlu0 %v7930, 48
    %v8063 = vpop.permute.xlu0 %8062
    %8064 = vrot.lane.b32.xlu0 %v7931, 48
    %v8065 = vpop.permute.xlu0 %8064
    %8066 = vrot.lane.b32.xlu0 %v7932, 48
    %v8067 = vpop.permute.xlu0 %8066
    %8068 = vrot.lane.b32.xlu0 %v7933, 48
    %v8069 = vpop.permute.xlu0 %8068
    %8070 = vrot.lane.b32.xlu0 %v7934, 48
    %v8071 = vpop.permute.xlu0 %8070
    %8072 = vrot.lane.b32.xlu0 %v7935, 48
    %v8073 = vpop.permute.xlu0 %8072
    %8074 = vrot.lane.b32.xlu0 %v7936, 48
    %v8075 = vpop.permute.xlu0 %8074
    %8076 = vrot.lane.b32.xlu0 %v7937, 48
    %v8077 = vpop.permute.xlu0 %8076
    %8078 = vrot.lane.b32.xlu0 %v7938, 48
    %v8079 = vpop.permute.xlu0 %8078
    %8080 = vrot.lane.b32.xlu0 %v7939, 48
    %v8081 = vpop.permute.xlu0 %8080
    %8082 = vrot.lane.b32.xlu0 %v7940, 48
    %v8083 = vpop.permute.xlu0 %8082
    %8084 = vrot.lane.b32.xlu0 %v7941, 48
    %v8085 = vpop.permute.xlu0 %8084
    %8086 = vrot.lane.b32.xlu0 %v7942, 48
    %v8087 = vpop.permute.xlu0 %8086
    %8088 = vrot.lane.b32.xlu0 %v7943, 48
    %v8089 = vpop.permute.xlu0 %8088
    %8090 = vrot.lane.b32.xlu0 %v7944, 48
    %v8091 = vpop.permute.xlu0 %8090
    %8092 = vrot.lane.b32.xlu0 %v7945, 48
    %v8093 = vpop.permute.xlu0 %8092
    %8094 = vrot.lane.b32.xlu0 %v7946, 48
    %v8095 = vpop.permute.xlu0 %8094
    %8096 = vrot.lane.b32.xlu0 %v7947, 48
    %v8097 = vpop.permute.xlu0 %8096
    %8098 = vrot.lane.b32.xlu0 %v7948, 48
    %v8099 = vpop.permute.xlu0 %8098
    %8100 = vrot.lane.b32.xlu0 %v7949, 48
    %v8101 = vpop.permute.xlu0 %8100
    %8102 = vrot.lane.b32.xlu0 %v7950, 48
    %v8103 = vpop.permute.xlu0 %8102
    %8104 = vrot.lane.b32.xlu0 %v7951, 48
    %v8105 = vpop.permute.xlu0 %8104
    %8106 = vrot.lane.b32.xlu0 %v7952, 48
    %v8107 = vpop.permute.xlu0 %8106
    %8108 = vrot.lane.b32.xlu0 %v7953, 48
    %v8109 = vpop.permute.xlu0 %8108
    %8110 = vrot.lane.b32.xlu0 %v7954, 48
    %v8111 = vpop.permute.xlu0 %8110
    %8112 = vrot.lane.b32.xlu0 %v7955, 48
    %v8113 = vpop.permute.xlu0 %8112
    %8114 = vrot.lane.b32.xlu0 %v7956, 48
    %v8115 = vpop.permute.xlu0 %8114
    %8116 = vrot.lane.b32.xlu0 %v7957, 48
    %v8117 = vpop.permute.xlu0 %8116
    %8118 = vrot.lane.b32.xlu0 %v7958, 48
    %v8119 = vpop.permute.xlu0 %8118
    %8120 = vrot.lane.b32.xlu0 %v7959, 48
    %v8121 = vpop.permute.xlu0 %8120
    %8122 = vrot.lane.b32.xlu0 %v7960, 48
    %v8123 = vpop.permute.xlu0 %8122
    %8124 = vrot.lane.b32.xlu0 %v7961, 48
    %v8125 = vpop.permute.xlu0 %8124
    %8126 = vrot.lane.b32.xlu0 %v7962, 48
    %v8127 = vpop.permute.xlu0 %8126
    %8128 = vrot.lane.b32.xlu0 %v7963, 48
    %v8129 = vpop.permute.xlu0 %8128
    %8130 = vrot.lane.b32.xlu0 %v7964, 48
    %v8131 = vpop.permute.xlu0 %8130
    %8132 = vrot.lane.b32.xlu0 %v7965, 48
    %v8133 = vpop.permute.xlu0 %8132
    %8134 = vrot.lane.b32.xlu0 %v7966, 48
    %v8135 = vpop.permute.xlu0 %8134
    %8136 = vrot.lane.b32.xlu0 %v7967, 48
    %v8137 = vpop.permute.xlu0 %8136
    %8138 = vrot.lane.b32.xlu0 %v7968, 48
    %v8139 = vpop.permute.xlu0 %8138
    %8140 = vrot.lane.b32.xlu0 %v7969, 48
    %v8141 = vpop.permute.xlu0 %8140
    %8142 = vrot.lane.b32.xlu0 %v7970, 48
    %v8143 = vpop.permute.xlu0 %8142
    %8144 = vrot.lane.b32.xlu0 %v7971, 48
    %v8145 = vpop.permute.xlu0 %8144
    %8146 = vrot.lane.b32.xlu0 %v7972, 48
    %v8147 = vpop.permute.xlu0 %8146
    %8148 = vrot.lane.b32.xlu0 %v7973, 48
    %v8149 = vpop.permute.xlu0 %8148
    %8150 = vrot.lane.b32.xlu0 %v7974, 48
    %v8151 = vpop.permute.xlu0 %8150
    %8152 = vrot.lane.b32.xlu0 %v7975, 48
    %v8153 = vpop.permute.xlu0 %8152
    %8154 = vrot.lane.b32.xlu0 %v7976, 48
    %v8155 = vpop.permute.xlu0 %8154
    %8156 = vrot.lane.b32.xlu0 %v7977, 48
    %v8157 = vpop.permute.xlu0 %8156
    %8158 = vrot.lane.b32.xlu0 %v7978, 48
    %v8159 = vpop.permute.xlu0 %8158
    %8160 = vrot.lane.b32.xlu0 %v7979, 48
    %v8161 = vpop.permute.xlu0 %8160
    %8162 = vrot.lane.b32.xlu0 %v7980, 48
    %v8163 = vpop.permute.xlu0 %8162
    %8164 = vrot.lane.b32.xlu0 %v7981, 48
    %v8165 = vpop.permute.xlu0 %8164
    %8166 = vrot.lane.b32.xlu0 %v7982, 48
    %v8167 = vpop.permute.xlu0 %8166
    %8168 = vrot.lane.b32.xlu0 %v7983, 48
    %v8169 = vpop.permute.xlu0 %8168
    %8170 = vrot.lane.b32.xlu0 %v7984, 48
    %v8171 = vpop.permute.xlu0 %8170
    %8172 = vrot.lane.b32.xlu0 %v7985, 48
    %v8173 = vpop.permute.xlu0 %8172
    %8174 = vrot.lane.b32.xlu0 %v7986, 48
    %v8175 = vpop.permute.xlu0 %8174
    %8176 = vrot.lane.b32.xlu0 %v7987, 48
    %v8177 = vpop.permute.xlu0 %8176
    %8178 = vrot.lane.b32.xlu0 %v7988, 48
    %v8179 = vpop.permute.xlu0 %8178
    %8180 = vrot.lane.b32.xlu0 %v7989, 48
    %v8181 = vpop.permute.xlu0 %8180
    %vm8246 = vcmask 454016
    %8247 = vst.msk [vmem:[#allocation5] sm:$0xf] %vm8246, %v8055
    %8248 = vst.msk [vmem:[#allocation5 + $0x4] sm:$0xf] %vm8246, %v8057
    %8249 = vst.msk [vmem:[#allocation5 + $0x8] sm:$0xf] %vm8246, %v8059
    %8250 = vst.msk [vmem:[#allocation5 + $0xc] sm:$0xf] %vm8246, %v8061
    %8251 = vst.msk [vmem:[#allocation5 + $0x10] sm:$0xf] %vm8246, %v8063
    %8252 = vst.msk [vmem:[#allocation5 + $0x14] sm:$0xf] %vm8246, %v8065
    %8253 = vst.msk [vmem:[#allocation5 + $0x18] sm:$0xf] %vm8246, %v8067
    %8254 = vst.msk [vmem:[#allocation5 + $0x1c] sm:$0xf] %vm8246, %v8069
    %8255 = vst.msk [vmem:[#allocation5 + $0x20] sm:$0xf] %vm8246, %v8071
    %8256 = vst.msk [vmem:[#allocation5 + $0x24] sm:$0xf] %vm8246, %v8073
    %8257 = vst.msk [vmem:[#allocation5 + $0x28] sm:$0xf] %vm8246, %v8075
    %8258 = vst.msk [vmem:[#allocation5 + $0x2c] sm:$0xf] %vm8246, %v8077
    %8259 = vst.msk [vmem:[#allocation5 + $0x30] sm:$0xf] %vm8246, %v8079
    %8260 = vst.msk [vmem:[#allocation5 + $0x34] sm:$0xf] %vm8246, %v8081
    %8261 = vst.msk [vmem:[#allocation5 + $0x38] sm:$0xf] %vm8246, %v8083
    %8262 = vst.msk [vmem:[#allocation5 + $0x3c] sm:$0xf] %vm8246, %v8085
    %8263 = vst.msk [vmem:[#allocation5 + $0x40] sm:$0xf] %vm8246, %v8087
    %8264 = vst.msk [vmem:[#allocation5 + $0x44] sm:$0xf] %vm8246, %v8089
    %8265 = vst.msk [vmem:[#allocation5 + $0x48] sm:$0xf] %vm8246, %v8091
    %8266 = vst.msk [vmem:[#allocation5 + $0x4c] sm:$0xf] %vm8246, %v8093
    %8267 = vst.msk [vmem:[#allocation5 + $0x50] sm:$0xf] %vm8246, %v8095
    %8268 = vst.msk [vmem:[#allocation5 + $0x54] sm:$0xf] %vm8246, %v8097
    %8269 = vst.msk [vmem:[#allocation5 + $0x58] sm:$0xf] %vm8246, %v8099
    %8270 = vst.msk [vmem:[#allocation5 + $0x5c] sm:$0xf] %vm8246, %v8101
    %8271 = vst.msk [vmem:[#allocation5 + $0x60] sm:$0xf] %vm8246, %v8103
    %8272 = vst.msk [vmem:[#allocation5 + $0x64] sm:$0xf] %vm8246, %v8105
    %8273 = vst.msk [vmem:[#allocation5 + $0x68] sm:$0xf] %vm8246, %v8107
    %8274 = vst.msk [vmem:[#allocation5 + $0x6c] sm:$0xf] %vm8246, %v8109
    %8275 = vst.msk [vmem:[#allocation5 + $0x70] sm:$0xf] %vm8246, %v8111
    %8276 = vst.msk [vmem:[#allocation5 + $0x74] sm:$0xf] %vm8246, %v8113
    %8277 = vst.msk [vmem:[#allocation5 + $0x78] sm:$0xf] %vm8246, %v8115
    %8278 = vst.msk [vmem:[#allocation5 + $0x7c] sm:$0xf] %vm8246, %v8117
    %8279 = vst.msk [vmem:[#allocation5 + $0x80] sm:$0xf] %vm8246, %v8119
    %8280 = vst.msk [vmem:[#allocation5 + $0x84] sm:$0xf] %vm8246, %v8121
    %8281 = vst.msk [vmem:[#allocation5 + $0x88] sm:$0xf] %vm8246, %v8123
    %8282 = vst.msk [vmem:[#allocation5 + $0x8c] sm:$0xf] %vm8246, %v8125
    %8283 = vst.msk [vmem:[#allocation5 + $0x90] sm:$0xf] %vm8246, %v8127
    %8284 = vst.msk [vmem:[#allocation5 + $0x94] sm:$0xf] %vm8246, %v8129
    %8285 = vst.msk [vmem:[#allocation5 + $0x98] sm:$0xf] %vm8246, %v8131
    %8286 = vst.msk [vmem:[#allocation5 + $0x9c] sm:$0xf] %vm8246, %v8133
    %8287 = vst.msk [vmem:[#allocation5 + $0xa0] sm:$0xf] %vm8246, %v8135
    %8288 = vst.msk [vmem:[#allocation5 + $0xa4] sm:$0xf] %vm8246, %v8137
    %8289 = vst.msk [vmem:[#allocation5 + $0xa8] sm:$0xf] %vm8246, %v8139
    %8290 = vst.msk [vmem:[#allocation5 + $0xac] sm:$0xf] %vm8246, %v8141
    %8291 = vst.msk [vmem:[#allocation5 + $0xb0] sm:$0xf] %vm8246, %v8143
    %8292 = vst.msk [vmem:[#allocation5 + $0xb4] sm:$0xf] %vm8246, %v8145
    %8293 = vst.msk [vmem:[#allocation5 + $0xb8] sm:$0xf] %vm8246, %v8147
    %8294 = vst.msk [vmem:[#allocation5 + $0xbc] sm:$0xf] %vm8246, %v8149
    %8295 = vst.msk [vmem:[#allocation5 + $0xc0] sm:$0xf] %vm8246, %v8151
    %8296 = vst.msk [vmem:[#allocation5 + $0xc4] sm:$0xf] %vm8246, %v8153
    %8297 = vst.msk [vmem:[#allocation5 + $0xc8] sm:$0xf] %vm8246, %v8155
    %8298 = vst.msk [vmem:[#allocation5 + $0xcc] sm:$0xf] %vm8246, %v8157
    %8299 = vst.msk [vmem:[#allocation5 + $0xd0] sm:$0xf] %vm8246, %v8159
    %8300 = vst.msk [vmem:[#allocation5 + $0xd4] sm:$0xf] %vm8246, %v8161
    %8301 = vst.msk [vmem:[#allocation5 + $0xd8] sm:$0xf] %vm8246, %v8163
    %8302 = vst.msk [vmem:[#allocation5 + $0xdc] sm:$0xf] %vm8246, %v8165
    %8303 = vst.msk [vmem:[#allocation5 + $0xe0] sm:$0xf] %vm8246, %v8167
    %8304 = vst.msk [vmem:[#allocation5 + $0xe4] sm:$0xf] %vm8246, %v8169
    %8305 = vst.msk [vmem:[#allocation5 + $0xe8] sm:$0xf] %vm8246, %v8171
    %8306 = vst.msk [vmem:[#allocation5 + $0xec] sm:$0xf] %vm8246, %v8173
    %8307 = vst.msk [vmem:[#allocation5 + $0xf0] sm:$0xf] %vm8246, %v8175
    %8308 = vst.msk [vmem:[#allocation5 + $0xf4] sm:$0xf] %vm8246, %v8177
    %8309 = vst.msk [vmem:[#allocation5 + $0xf8] sm:$0xf] %vm8246, %v8179
    %8310 = vst.msk [vmem:[#allocation5 + $0xfc] sm:$0xf] %vm8246, %v8181
    %v8311 = vld [vmem:[%s7861 + $0x1] sm:$0xff]
    %v8312 = vld [vmem:[%s7861 + $0x9] sm:$0xff]
    %v8313 = vld [vmem:[%s7861 + $0x19] sm:$0xff]
    %v8314 = vld [vmem:[%s7861 + $0x21] sm:$0xff]
    %v8315 = vld [vmem:[%s7861 + $0x31] sm:$0xff]
    %v8316 = vld [vmem:[%s7861 + $0x39] sm:$0xff]
    %v8317 = vld [vmem:[%s7861 + $0x49] sm:$0xff]
    %v8318 = vld [vmem:[%s7861 + $0x51] sm:$0xff]
    %v8319 = vld [vmem:[%s7861 + $0x61] sm:$0xff]
    %v8320 = vld [vmem:[%s7861 + $0x69] sm:$0xff]
    %v8321 = vld [vmem:[%s7861 + $0x79] sm:$0xff]
    %v8322 = vld [vmem:[%s7861 + $0x81] sm:$0xff]
    %v8323 = vld [vmem:[%s7861 + $0x91] sm:$0xff]
    %v8324 = vld [vmem:[%s7861 + $0x99] sm:$0xff]
    %v8325 = vld [vmem:[%s7861 + $0xa9] sm:$0xff]
    %v8326 = vld [vmem:[%s7861 + $0xb1] sm:$0xff]
    %v8327 = vld [vmem:[%s7861 + $0xc1] sm:$0xff]
    %v8328 = vld [vmem:[%s7861 + $0xc9] sm:$0xff]
    %v8329 = vld [vmem:[%s7861 + $0xd9] sm:$0xff]
    %v8330 = vld [vmem:[%s7861 + $0xe1] sm:$0xff]
    %v8331 = vld [vmem:[%s7861 + $0xf1] sm:$0xff]
    %v8332 = vld [vmem:[%s7861 + $0xf9] sm:$0xff]
    %v8333 = vld [vmem:[%s7861 + $0x109] sm:$0xff]
    %v8334 = vld [vmem:[%s7861 + $0x111] sm:$0xff]
    %v8335 = vld [vmem:[%s7861 + $0x121] sm:$0xff]
    %v8336 = vld [vmem:[%s7861 + $0x129] sm:$0xff]
    %v8337 = vld [vmem:[%s7861 + $0x139] sm:$0xff]
    %v8338 = vld [vmem:[%s7861 + $0x141] sm:$0xff]
    %v8339 = vld [vmem:[%s7861 + $0x151] sm:$0xff]
    %v8340 = vld [vmem:[%s7861 + $0x159] sm:$0xff]
    %v8341 = vld [vmem:[%s7861 + $0x169] sm:$0xff]
    %v8342 = vld [vmem:[%s7861 + $0x171] sm:$0xff]
    %v8343 = vld [vmem:[%s7861 + $0x1b1] sm:$0xff]
    %v8344 = vld [vmem:[%s7861 + $0x1b9] sm:$0xff]
    %v8345 = vld [vmem:[%s7861 + $0x1c9] sm:$0xff]
    %v8346 = vld [vmem:[%s7861 + $0x1d1] sm:$0xff]
    %v8347 = vld [vmem:[%s7861 + $0x1e1] sm:$0xff]
    %v8348 = vld [vmem:[%s7861 + $0x1e9] sm:$0xff]
    %v8349 = vld [vmem:[%s7861 + $0x1f9] sm:$0xff]
    %v8350 = vld [vmem:[%s7861 + $0x201] sm:$0xff]
    %v8351 = vld [vmem:[%s7861 + $0x211] sm:$0xff]
    %v8352 = vld [vmem:[%s7861 + $0x219] sm:$0xff]
    %v8353 = vld [vmem:[%s7861 + $0x229] sm:$0xff]
    %v8354 = vld [vmem:[%s7861 + $0x231] sm:$0xff]
    %v8355 = vld [vmem:[%s7861 + $0x241] sm:$0xff]
    %v8356 = vld [vmem:[%s7861 + $0x249] sm:$0xff]
    %v8357 = vld [vmem:[%s7861 + $0x259] sm:$0xff]
    %v8358 = vld [vmem:[%s7861 + $0x261] sm:$0xff]
    %v8359 = vld [vmem:[%s7861 + $0x271] sm:$0xff]
    %v8360 = vld [vmem:[%s7861 + $0x279] sm:$0xff]
    %v8361 = vld [vmem:[%s7861 + $0x289] sm:$0xff]
    %v8362 = vld [vmem:[%s7861 + $0x291] sm:$0xff]
    %v8363 = vld [vmem:[%s7861 + $0x2a1] sm:$0xff]
    %v8364 = vld [vmem:[%s7861 + $0x2a9] sm:$0xff]
    %v8365 = vld [vmem:[%s7861 + $0x2b9] sm:$0xff]
    %v8366 = vld [vmem:[%s7861 + $0x2c1] sm:$0xff]
    %v8367 = vld [vmem:[%s7861 + $0x2d1] sm:$0xff]
    %v8368 = vld [vmem:[%s7861 + $0x2d9] sm:$0xff]
    %v8369 = vld [vmem:[%s7861 + $0x2e9] sm:$0xff]
    %v8370 = vld [vmem:[%s7861 + $0x2f1] sm:$0xff]
    %v8371 = vld [vmem:[%s7861 + $0x301] sm:$0xff]
    %v8372 = vld [vmem:[%s7861 + $0x309] sm:$0xff]
    %v8373 = vld [vmem:[%s7861 + $0x319] sm:$0xff]
    %v8374 = vld [vmem:[%s7861 + $0x321] sm:$0xff]
    %v8375 = vpack.c.bf16 %v8311, %v8311
    %v8376 = vpack.c.bf16 %v8312, %v8312
    %v8377 = vpack.c.bf16 %v8313, %v8313
    %v8378 = vpack.c.bf16 %v8314, %v8314
    %v8379 = vpack.c.bf16 %v8315, %v8315
    %v8380 = vpack.c.bf16 %v8316, %v8316
    %v8381 = vpack.c.bf16 %v8317, %v8317
    %v8382 = vpack.c.bf16 %v8318, %v8318
    %v8383 = vpack.c.bf16 %v8319, %v8319
    %v8384 = vpack.c.bf16 %v8320, %v8320
    %v8385 = vpack.c.bf16 %v8321, %v8321
    %v8386 = vpack.c.bf16 %v8322, %v8322
    %v8387 = vpack.c.bf16 %v8323, %v8323
    %v8388 = vpack.c.bf16 %v8324, %v8324
    %v8389 = vpack.c.bf16 %v8325, %v8325
    %v8390 = vpack.c.bf16 %v8326, %v8326
    %v8391 = vpack.c.bf16 %v8327, %v8327
    %v8392 = vpack.c.bf16 %v8328, %v8328
    %v8393 = vpack.c.bf16 %v8329, %v8329
    %v8394 = vpack.c.bf16 %v8330, %v8330
    %v8395 = vpack.c.bf16 %v8331, %v8331
    %v8396 = vpack.c.bf16 %v8332, %v8332
    %v8397 = vpack.c.bf16 %v8333, %v8333
    %v8398 = vpack.c.bf16 %v8334, %v8334
    %v8399 = vpack.c.bf16 %v8335, %v8335
    %v8400 = vpack.c.bf16 %v8336, %v8336
    %v8401 = vpack.c.bf16 %v8337, %v8337
    %v8402 = vpack.c.bf16 %v8338, %v8338
    %v8403 = vpack.c.bf16 %v8339, %v8339
    %v8404 = vpack.c.bf16 %v8340, %v8340
    %v8405 = vpack.c.bf16 %v8341, %v8341
    %v8406 = vpack.c.bf16 %v8342, %v8342
    %v8407 = vpack.c.bf16 %v8343, %v8343
    %v8408 = vpack.c.bf16 %v8344, %v8344
    %v8409 = vpack.c.bf16 %v8345, %v8345
    %v8410 = vpack.c.bf16 %v8346, %v8346
    %v8411 = vpack.c.bf16 %v8347, %v8347
    %v8412 = vpack.c.bf16 %v8348, %v8348
    %v8413 = vpack.c.bf16 %v8349, %v8349
    %v8414 = vpack.c.bf16 %v8350, %v8350
    %v8415 = vpack.c.bf16 %v8351, %v8351
    %v8416 = vpack.c.bf16 %v8352, %v8352
    %v8417 = vpack.c.bf16 %v8353, %v8353
    %v8418 = vpack.c.bf16 %v8354, %v8354
    %v8419 = vpack.c.bf16 %v8355, %v8355
    %v8420 = vpack.c.bf16 %v8356, %v8356
    %v8421 = vpack.c.bf16 %v8357, %v8357
    %v8422 = vpack.c.bf16 %v8358, %v8358
    %v8423 = vpack.c.bf16 %v8359, %v8359
    %v8424 = vpack.c.bf16 %v8360, %v8360
    %v8425 = vpack.c.bf16 %v8361, %v8361
    %v8426 = vpack.c.bf16 %v8362, %v8362
    %v8427 = vpack.c.bf16 %v8363, %v8363
    %v8428 = vpack.c.bf16 %v8364, %v8364
    %v8429 = vpack.c.bf16 %v8365, %v8365
    %v8430 = vpack.c.bf16 %v8366, %v8366
    %v8431 = vpack.c.bf16 %v8367, %v8367
    %v8432 = vpack.c.bf16 %v8368, %v8368
    %v8433 = vpack.c.bf16 %v8369, %v8369
    %v8434 = vpack.c.bf16 %v8370, %v8370
    %v8435 = vpack.c.bf16 %v8371, %v8371
    %v8436 = vpack.c.bf16 %v8372, %v8372
    %v8437 = vpack.c.bf16 %v8373, %v8373
    %v8438 = vpack.c.bf16 %v8374, %v8374
    %8503 = vrot.lane.b32.xlu0 %v8375, 56
    %v8504 = vpop.permute.xlu0 %8503
    %8505 = vrot.lane.b32.xlu0 %v8376, 56
    %v8506 = vpop.permute.xlu0 %8505
    %8507 = vrot.lane.b32.xlu0 %v8377, 56
    %v8508 = vpop.permute.xlu0 %8507
    %8509 = vrot.lane.b32.xlu0 %v8378, 56
    %v8510 = vpop.permute.xlu0 %8509
    %8511 = vrot.lane.b32.xlu0 %v8379, 56
    %v8512 = vpop.permute.xlu0 %8511
    %8513 = vrot.lane.b32.xlu0 %v8380, 56
    %v8514 = vpop.permute.xlu0 %8513
    %8515 = vrot.lane.b32.xlu0 %v8381, 56
    %v8516 = vpop.permute.xlu0 %8515
    %8517 = vrot.lane.b32.xlu0 %v8382, 56
    %v8518 = vpop.permute.xlu0 %8517
    %8519 = vrot.lane.b32.xlu0 %v8383, 56
    %v8520 = vpop.permute.xlu0 %8519
    %8521 = vrot.lane.b32.xlu0 %v8384, 56
    %v8522 = vpop.permute.xlu0 %8521
    %8523 = vrot.lane.b32.xlu0 %v8385, 56
    %v8524 = vpop.permute.xlu0 %8523
    %8525 = vrot.lane.b32.xlu0 %v8386, 56
    %v8526 = vpop.permute.xlu0 %8525
    %8527 = vrot.lane.b32.xlu0 %v8387, 56
    %v8528 = vpop.permute.xlu0 %8527
    %8529 = vrot.lane.b32.xlu0 %v8388, 56
    %v8530 = vpop.permute.xlu0 %8529
    %8531 = vrot.lane.b32.xlu0 %v8389, 56
    %v8532 = vpop.permute.xlu0 %8531
    %8533 = vrot.lane.b32.xlu0 %v8390, 56
    %v8534 = vpop.permute.xlu0 %8533
    %8535 = vrot.lane.b32.xlu0 %v8391, 56
    %v8536 = vpop.permute.xlu0 %8535
    %8537 = vrot.lane.b32.xlu0 %v8392, 56
    %v8538 = vpop.permute.xlu0 %8537
    %8539 = vrot.lane.b32.xlu0 %v8393, 56
    %v8540 = vpop.permute.xlu0 %8539
    %8541 = vrot.lane.b32.xlu0 %v8394, 56
    %v8542 = vpop.permute.xlu0 %8541
    %8543 = vrot.lane.b32.xlu0 %v8395, 56
    %v8544 = vpop.permute.xlu0 %8543
    %8545 = vrot.lane.b32.xlu0 %v8396, 56
    %v8546 = vpop.permute.xlu0 %8545
    %8547 = vrot.lane.b32.xlu0 %v8397, 56
    %v8548 = vpop.permute.xlu0 %8547
    %8549 = vrot.lane.b32.xlu0 %v8398, 56
    %v8550 = vpop.permute.xlu0 %8549
    %8551 = vrot.lane.b32.xlu0 %v8399, 56
    %v8552 = vpop.permute.xlu0 %8551
    %8553 = vrot.lane.b32.xlu0 %v8400, 56
    %v8554 = vpop.permute.xlu0 %8553
    %8555 = vrot.lane.b32.xlu0 %v8401, 56
    %v8556 = vpop.permute.xlu0 %8555
    %8557 = vrot.lane.b32.xlu0 %v8402, 56
    %v8558 = vpop.permute.xlu0 %8557
    %8559 = vrot.lane.b32.xlu0 %v8403, 56
    %v8560 = vpop.permute.xlu0 %8559
    %8561 = vrot.lane.b32.xlu0 %v8404, 56
    %v8562 = vpop.permute.xlu0 %8561
    %8563 = vrot.lane.b32.xlu0 %v8405, 56
    %v8564 = vpop.permute.xlu0 %8563
    %8565 = vrot.lane.b32.xlu0 %v8406, 56
    %v8566 = vpop.permute.xlu0 %8565
    %8567 = vrot.lane.b32.xlu0 %v8407, 56
    %v8568 = vpop.permute.xlu0 %8567
    %8569 = vrot.lane.b32.xlu0 %v8408, 56
    %v8570 = vpop.permute.xlu0 %8569
    %8571 = vrot.lane.b32.xlu0 %v8409, 56
    %v8572 = vpop.permute.xlu0 %8571
    %8573 = vrot.lane.b32.xlu0 %v8410, 56
    %v8574 = vpop.permute.xlu0 %8573
    %8575 = vrot.lane.b32.xlu0 %v8411, 56
    %v8576 = vpop.permute.xlu0 %8575
    %8577 = vrot.lane.b32.xlu0 %v8412, 56
    %v8578 = vpop.permute.xlu0 %8577
    %8579 = vrot.lane.b32.xlu0 %v8413, 56
    %v8580 = vpop.permute.xlu0 %8579
    %8581 = vrot.lane.b32.xlu0 %v8414, 56
    %v8582 = vpop.permute.xlu0 %8581
    %8583 = vrot.lane.b32.xlu0 %v8415, 56
    %v8584 = vpop.permute.xlu0 %8583
    %8585 = vrot.lane.b32.xlu0 %v8416, 56
    %v8586 = vpop.permute.xlu0 %8585
    %8587 = vrot.lane.b32.xlu0 %v8417, 56
    %v8588 = vpop.permute.xlu0 %8587
    %8589 = vrot.lane.b32.xlu0 %v8418, 56
    %v8590 = vpop.permute.xlu0 %8589
    %8591 = vrot.lane.b32.xlu0 %v8419, 56
    %v8592 = vpop.permute.xlu0 %8591
    %8593 = vrot.lane.b32.xlu0 %v8420, 56
    %v8594 = vpop.permute.xlu0 %8593
    %8595 = vrot.lane.b32.xlu0 %v8421, 56
    %v8596 = vpop.permute.xlu0 %8595
    %8597 = vrot.lane.b32.xlu0 %v8422, 56
    %v8598 = vpop.permute.xlu0 %8597
    %8599 = vrot.lane.b32.xlu0 %v8423, 56
    %v8600 = vpop.permute.xlu0 %8599
    %8601 = vrot.lane.b32.xlu0 %v8424, 56
    %v8602 = vpop.permute.xlu0 %8601
    %8603 = vrot.lane.b32.xlu0 %v8425, 56
    %v8604 = vpop.permute.xlu0 %8603
    %8605 = vrot.lane.b32.xlu0 %v8426, 56
    %v8606 = vpop.permute.xlu0 %8605
    %8607 = vrot.lane.b32.xlu0 %v8427, 56
    %v8608 = vpop.permute.xlu0 %8607
    %8609 = vrot.lane.b32.xlu0 %v8428, 56
    %v8610 = vpop.permute.xlu0 %8609
    %8611 = vrot.lane.b32.xlu0 %v8429, 56
    %v8612 = vpop.permute.xlu0 %8611
    %8613 = vrot.lane.b32.xlu0 %v8430, 56
    %v8614 = vpop.permute.xlu0 %8613
    %8615 = vrot.lane.b32.xlu0 %v8431, 56
    %v8616 = vpop.permute.xlu0 %8615
    %8617 = vrot.lane.b32.xlu0 %v8432, 56
    %v8618 = vpop.permute.xlu0 %8617
    %8619 = vrot.lane.b32.xlu0 %v8433, 56
    %v8620 = vpop.permute.xlu0 %8619
    %8621 = vrot.lane.b32.xlu0 %v8434, 56
    %v8622 = vpop.permute.xlu0 %8621
    %8623 = vrot.lane.b32.xlu0 %v8435, 56
    %v8624 = vpop.permute.xlu0 %8623
    %8625 = vrot.lane.b32.xlu0 %v8436, 56
    %v8626 = vpop.permute.xlu0 %8625
    %8627 = vrot.lane.b32.xlu0 %v8437, 56
    %v8628 = vpop.permute.xlu0 %8627
    %8629 = vrot.lane.b32.xlu0 %v8438, 56
    %v8630 = vpop.permute.xlu0 %8629
    %vm8695 = vcmask 519616
    %8696 = vst.msk [vmem:[#allocation5] sm:$0xf] %vm8695, %v8504
    %8697 = vst.msk [vmem:[#allocation5 + $0x4] sm:$0xf] %vm8695, %v8506
    %8698 = vst.msk [vmem:[#allocation5 + $0x8] sm:$0xf] %vm8695, %v8508
    %8699 = vst.msk [vmem:[#allocation5 + $0xc] sm:$0xf] %vm8695, %v8510
    %8700 = vst.msk [vmem:[#allocation5 + $0x10] sm:$0xf] %vm8695, %v8512
    %8701 = vst.msk [vmem:[#allocation5 + $0x14] sm:$0xf] %vm8695, %v8514
    %8702 = vst.msk [vmem:[#allocation5 + $0x18] sm:$0xf] %vm8695, %v8516
    %8703 = vst.msk [vmem:[#allocation5 + $0x1c] sm:$0xf] %vm8695, %v8518
    %8704 = vst.msk [vmem:[#allocation5 + $0x20] sm:$0xf] %vm8695, %v8520
    %8705 = vst.msk [vmem:[#allocation5 + $0x24] sm:$0xf] %vm8695, %v8522
    %8706 = vst.msk [vmem:[#allocation5 + $0x28] sm:$0xf] %vm8695, %v8524
    %8707 = vst.msk [vmem:[#allocation5 + $0x2c] sm:$0xf] %vm8695, %v8526
    %8708 = vst.msk [vmem:[#allocation5 + $0x30] sm:$0xf] %vm8695, %v8528
    %8709 = vst.msk [vmem:[#allocation5 + $0x34] sm:$0xf] %vm8695, %v8530
    %8710 = vst.msk [vmem:[#allocation5 + $0x38] sm:$0xf] %vm8695, %v8532
    %8711 = vst.msk [vmem:[#allocation5 + $0x3c] sm:$0xf] %vm8695, %v8534
    %8712 = vst.msk [vmem:[#allocation5 + $0x40] sm:$0xf] %vm8695, %v8536
    %8713 = vst.msk [vmem:[#allocation5 + $0x44] sm:$0xf] %vm8695, %v8538
    %8714 = vst.msk [vmem:[#allocation5 + $0x48] sm:$0xf] %vm8695, %v8540
    %8715 = vst.msk [vmem:[#allocation5 + $0x4c] sm:$0xf] %vm8695, %v8542
    %8716 = vst.msk [vmem:[#allocation5 + $0x50] sm:$0xf] %vm8695, %v8544
    %8717 = vst.msk [vmem:[#allocation5 + $0x54] sm:$0xf] %vm8695, %v8546
    %8718 = vst.msk [vmem:[#allocation5 + $0x58] sm:$0xf] %vm8695, %v8548
    %8719 = vst.msk [vmem:[#allocation5 + $0x5c] sm:$0xf] %vm8695, %v8550
    %8720 = vst.msk [vmem:[#allocation5 + $0x60] sm:$0xf] %vm8695, %v8552
    %8721 = vst.msk [vmem:[#allocation5 + $0x64] sm:$0xf] %vm8695, %v8554
    %8722 = vst.msk [vmem:[#allocation5 + $0x68] sm:$0xf] %vm8695, %v8556
    %8723 = vst.msk [vmem:[#allocation5 + $0x6c] sm:$0xf] %vm8695, %v8558
    %8724 = vst.msk [vmem:[#allocation5 + $0x70] sm:$0xf] %vm8695, %v8560
    %8725 = vst.msk [vmem:[#allocation5 + $0x74] sm:$0xf] %vm8695, %v8562
    %8726 = vst.msk [vmem:[#allocation5 + $0x78] sm:$0xf] %vm8695, %v8564
    %8727 = vst.msk [vmem:[#allocation5 + $0x7c] sm:$0xf] %vm8695, %v8566
    %8728 = vst.msk [vmem:[#allocation5 + $0x80] sm:$0xf] %vm8695, %v8568
    %8729 = vst.msk [vmem:[#allocation5 + $0x84] sm:$0xf] %vm8695, %v8570
    %8730 = vst.msk [vmem:[#allocation5 + $0x88] sm:$0xf] %vm8695, %v8572
    %8731 = vst.msk [vmem:[#allocation5 + $0x8c] sm:$0xf] %vm8695, %v8574
    %8732 = vst.msk [vmem:[#allocation5 + $0x90] sm:$0xf] %vm8695, %v8576
    %8733 = vst.msk [vmem:[#allocation5 + $0x94] sm:$0xf] %vm8695, %v8578
    %8734 = vst.msk [vmem:[#allocation5 + $0x98] sm:$0xf] %vm8695, %v8580
    %8735 = vst.msk [vmem:[#allocation5 + $0x9c] sm:$0xf] %vm8695, %v8582
    %8736 = vst.msk [vmem:[#allocation5 + $0xa0] sm:$0xf] %vm8695, %v8584
    %8737 = vst.msk [vmem:[#allocation5 + $0xa4] sm:$0xf] %vm8695, %v8586
    %8738 = vst.msk [vmem:[#allocation5 + $0xa8] sm:$0xf] %vm8695, %v8588
    %8739 = vst.msk [vmem:[#allocation5 + $0xac] sm:$0xf] %vm8695, %v8590
    %8740 = vst.msk [vmem:[#allocation5 + $0xb0] sm:$0xf] %vm8695, %v8592
    %8741 = vst.msk [vmem:[#allocation5 + $0xb4] sm:$0xf] %vm8695, %v8594
    %8742 = vst.msk [vmem:[#allocation5 + $0xb8] sm:$0xf] %vm8695, %v8596
    %8743 = vst.msk [vmem:[#allocation5 + $0xbc] sm:$0xf] %vm8695, %v8598
    %8744 = vst.msk [vmem:[#allocation5 + $0xc0] sm:$0xf] %vm8695, %v8600
    %8745 = vst.msk [vmem:[#allocation5 + $0xc4] sm:$0xf] %vm8695, %v8602
    %8746 = vst.msk [vmem:[#allocation5 + $0xc8] sm:$0xf] %vm8695, %v8604
    %8747 = vst.msk [vmem:[#allocation5 + $0xcc] sm:$0xf] %vm8695, %v8606
    %8748 = vst.msk [vmem:[#allocation5 + $0xd0] sm:$0xf] %vm8695, %v8608
    %8749 = vst.msk [vmem:[#allocation5 + $0xd4] sm:$0xf] %vm8695, %v8610
    %8750 = vst.msk [vmem:[#allocation5 + $0xd8] sm:$0xf] %vm8695, %v8612
    %8751 = vst.msk [vmem:[#allocation5 + $0xdc] sm:$0xf] %vm8695, %v8614
    %8752 = vst.msk [vmem:[#allocation5 + $0xe0] sm:$0xf] %vm8695, %v8616
    %8753 = vst.msk [vmem:[#allocation5 + $0xe4] sm:$0xf] %vm8695, %v8618
    %8754 = vst.msk [vmem:[#allocation5 + $0xe8] sm:$0xf] %vm8695, %v8620
    %8755 = vst.msk [vmem:[#allocation5 + $0xec] sm:$0xf] %vm8695, %v8622
    %8756 = vst.msk [vmem:[#allocation5 + $0xf0] sm:$0xf] %vm8695, %v8624
    %8757 = vst.msk [vmem:[#allocation5 + $0xf4] sm:$0xf] %vm8695, %v8626
    %8758 = vst.msk [vmem:[#allocation5 + $0xf8] sm:$0xf] %vm8695, %v8628
    %8759 = vst.msk [vmem:[#allocation5 + $0xfc] sm:$0xf] %vm8695, %v8630
    %v8760 = vld [vmem:[%s7861 + $0x2] sm:$0xff]
    %v8761 = vld [vmem:[%s7861 + $0xa] sm:$0xff]
    %v8762 = vld [vmem:[%s7861 + $0x1a] sm:$0xff]
    %v8763 = vld [vmem:[%s7861 + $0x22] sm:$0xff]
    %v8764 = vld [vmem:[%s7861 + $0x32] sm:$0xff]
    %v8765 = vld [vmem:[%s7861 + $0x3a] sm:$0xff]
    %v8766 = vld [vmem:[%s7861 + $0x4a] sm:$0xff]
    %v8767 = vld [vmem:[%s7861 + $0x52] sm:$0xff]
    %v8768 = vld [vmem:[%s7861 + $0x62] sm:$0xff]
    %v8769 = vld [vmem:[%s7861 + $0x6a] sm:$0xff]
    %v8770 = vld [vmem:[%s7861 + $0x7a] sm:$0xff]
    %v8771 = vld [vmem:[%s7861 + $0x82] sm:$0xff]
    %v8772 = vld [vmem:[%s7861 + $0x92] sm:$0xff]
    %v8773 = vld [vmem:[%s7861 + $0x9a] sm:$0xff]
    %v8774 = vld [vmem:[%s7861 + $0xaa] sm:$0xff]
    %v8775 = vld [vmem:[%s7861 + $0xb2] sm:$0xff]
    %v8776 = vld [vmem:[%s7861 + $0xc2] sm:$0xff]
    %v8777 = vld [vmem:[%s7861 + $0xca] sm:$0xff]
    %v8778 = vld [vmem:[%s7861 + $0xda] sm:$0xff]
    %v8779 = vld [vmem:[%s7861 + $0xe2] sm:$0xff]
    %v8780 = vld [vmem:[%s7861 + $0xf2] sm:$0xff]
    %v8781 = vld [vmem:[%s7861 + $0xfa] sm:$0xff]
    %v8782 = vld [vmem:[%s7861 + $0x10a] sm:$0xff]
    %v8783 = vld [vmem:[%s7861 + $0x112] sm:$0xff]
    %v8784 = vld [vmem:[%s7861 + $0x122] sm:$0xff]
    %v8785 = vld [vmem:[%s7861 + $0x12a] sm:$0xff]
    %v8786 = vld [vmem:[%s7861 + $0x13a] sm:$0xff]
    %v8787 = vld [vmem:[%s7861 + $0x142] sm:$0xff]
    %v8788 = vld [vmem:[%s7861 + $0x152] sm:$0xff]
    %v8789 = vld [vmem:[%s7861 + $0x15a] sm:$0xff]
    %v8790 = vld [vmem:[%s7861 + $0x16a] sm:$0xff]
    %v8791 = vld [vmem:[%s7861 + $0x172] sm:$0xff]
    %v8792 = vld [vmem:[%s7861 + $0x1b2] sm:$0xff]
    %v8793 = vld [vmem:[%s7861 + $0x1ba] sm:$0xff]
    %v8794 = vld [vmem:[%s7861 + $0x1ca] sm:$0xff]
    %v8795 = vld [vmem:[%s7861 + $0x1d2] sm:$0xff]
    %v8796 = vld [vmem:[%s7861 + $0x1e2] sm:$0xff]
    %v8797 = vld [vmem:[%s7861 + $0x1ea] sm:$0xff]
    %v8798 = vld [vmem:[%s7861 + $0x1fa] sm:$0xff]
    %v8799 = vld [vmem:[%s7861 + $0x202] sm:$0xff]
    %v8800 = vld [vmem:[%s7861 + $0x212] sm:$0xff]
    %v8801 = vld [vmem:[%s7861 + $0x21a] sm:$0xff]
    %v8802 = vld [vmem:[%s7861 + $0x22a] sm:$0xff]
    %v8803 = vld [vmem:[%s7861 + $0x232] sm:$0xff]
    %v8804 = vld [vmem:[%s7861 + $0x242] sm:$0xff]
    %v8805 = vld [vmem:[%s7861 + $0x24a] sm:$0xff]
    %v8806 = vld [vmem:[%s7861 + $0x25a] sm:$0xff]
    %v8807 = vld [vmem:[%s7861 + $0x262] sm:$0xff]
    %v8808 = vld [vmem:[%s7861 + $0x272] sm:$0xff]
    %v8809 = vld [vmem:[%s7861 + $0x27a] sm:$0xff]
    %v8810 = vld [vmem:[%s7861 + $0x28a] sm:$0xff]
    %v8811 = vld [vmem:[%s7861 + $0x292] sm:$0xff]
    %v8812 = vld [vmem:[%s7861 + $0x2a2] sm:$0xff]
    %v8813 = vld [vmem:[%s7861 + $0x2aa] sm:$0xff]
    %v8814 = vld [vmem:[%s7861 + $0x2ba] sm:$0xff]
    %v8815 = vld [vmem:[%s7861 + $0x2c2] sm:$0xff]
    %v8816 = vld [vmem:[%s7861 + $0x2d2] sm:$0xff]
    %v8817 = vld [vmem:[%s7861 + $0x2da] sm:$0xff]
    %v8818 = vld [vmem:[%s7861 + $0x2ea] sm:$0xff]
    %v8819 = vld [vmem:[%s7861 + $0x2f2] sm:$0xff]
    %v8820 = vld [vmem:[%s7861 + $0x302] sm:$0xff]
    %v8821 = vld [vmem:[%s7861 + $0x30a] sm:$0xff]
    %v8822 = vld [vmem:[%s7861 + $0x31a] sm:$0xff]
    %v8823 = vld [vmem:[%s7861 + $0x322] sm:$0xff]
    %v8824 = vpack.c.bf16 %v8760, %v8760
    %v8825 = vpack.c.bf16 %v8761, %v8761
    %v8826 = vpack.c.bf16 %v8762, %v8762
    %v8827 = vpack.c.bf16 %v8763, %v8763
    %v8828 = vpack.c.bf16 %v8764, %v8764
    %v8829 = vpack.c.bf16 %v8765, %v8765
    %v8830 = vpack.c.bf16 %v8766, %v8766
    %v8831 = vpack.c.bf16 %v8767, %v8767
    %v8832 = vpack.c.bf16 %v8768, %v8768
    %v8833 = vpack.c.bf16 %v8769, %v8769
    %v8834 = vpack.c.bf16 %v8770, %v8770
    %v8835 = vpack.c.bf16 %v8771, %v8771
    %v8836 = vpack.c.bf16 %v8772, %v8772
    %v8837 = vpack.c.bf16 %v8773, %v8773
    %v8838 = vpack.c.bf16 %v8774, %v8774
    %v8839 = vpack.c.bf16 %v8775, %v8775
    %v8840 = vpack.c.bf16 %v8776, %v8776
    %v8841 = vpack.c.bf16 %v8777, %v8777
    %v8842 = vpack.c.bf16 %v8778, %v8778
    %v8843 = vpack.c.bf16 %v8779, %v8779
    %v8844 = vpack.c.bf16 %v8780, %v8780
    %v8845 = vpack.c.bf16 %v8781, %v8781
    %v8846 = vpack.c.bf16 %v8782, %v8782
    %v8847 = vpack.c.bf16 %v8783, %v8783
    %v8848 = vpack.c.bf16 %v8784, %v8784
    %v8849 = vpack.c.bf16 %v8785, %v8785
    %v8850 = vpack.c.bf16 %v8786, %v8786
    %v8851 = vpack.c.bf16 %v8787, %v8787
    %v8852 = vpack.c.bf16 %v8788, %v8788
    %v8853 = vpack.c.bf16 %v8789, %v8789
    %v8854 = vpack.c.bf16 %v8790, %v8790
    %v8855 = vpack.c.bf16 %v8791, %v8791
    %v8856 = vpack.c.bf16 %v8792, %v8792
    %v8857 = vpack.c.bf16 %v8793, %v8793
    %v8858 = vpack.c.bf16 %v8794, %v8794
    %v8859 = vpack.c.bf16 %v8795, %v8795
    %v8860 = vpack.c.bf16 %v8796, %v8796
    %v8861 = vpack.c.bf16 %v8797, %v8797
    %v8862 = vpack.c.bf16 %v8798, %v8798
    %v8863 = vpack.c.bf16 %v8799, %v8799
    %v8864 = vpack.c.bf16 %v8800, %v8800
    %v8865 = vpack.c.bf16 %v8801, %v8801
    %v8866 = vpack.c.bf16 %v8802, %v8802
    %v8867 = vpack.c.bf16 %v8803, %v8803
    %v8868 = vpack.c.bf16 %v8804, %v8804
    %v8869 = vpack.c.bf16 %v8805, %v8805
    %v8870 = vpack.c.bf16 %v8806, %v8806
    %v8871 = vpack.c.bf16 %v8807, %v8807
    %v8872 = vpack.c.bf16 %v8808, %v8808
    %v8873 = vpack.c.bf16 %v8809, %v8809
    %v8874 = vpack.c.bf16 %v8810, %v8810
    %v8875 = vpack.c.bf16 %v8811, %v8811
    %v8876 = vpack.c.bf16 %v8812, %v8812
    %v8877 = vpack.c.bf16 %v8813, %v8813
    %v8878 = vpack.c.bf16 %v8814, %v8814
    %v8879 = vpack.c.bf16 %v8815, %v8815
    %v8880 = vpack.c.bf16 %v8816, %v8816
    %v8881 = vpack.c.bf16 %v8817, %v8817
    %v8882 = vpack.c.bf16 %v8818, %v8818
    %v8883 = vpack.c.bf16 %v8819, %v8819
    %v8884 = vpack.c.bf16 %v8820, %v8820
    %v8885 = vpack.c.bf16 %v8821, %v8821
    %v8886 = vpack.c.bf16 %v8822, %v8822
    %v8887 = vpack.c.bf16 %v8823, %v8823
    %8952 = vrot.lane.b32.xlu0 %v8824, 64
    %v8953 = vpop.permute.xlu0 %8952
    %8954 = vrot.lane.b32.xlu0 %v8825, 64
    %v8955 = vpop.permute.xlu0 %8954
    %8956 = vrot.lane.b32.xlu0 %v8826, 64
    %v8957 = vpop.permute.xlu0 %8956
    %8958 = vrot.lane.b32.xlu0 %v8827, 64
    %v8959 = vpop.permute.xlu0 %8958
    %8960 = vrot.lane.b32.xlu0 %v8828, 64
    %v8961 = vpop.permute.xlu0 %8960
    %8962 = vrot.lane.b32.xlu0 %v8829, 64
    %v8963 = vpop.permute.xlu0 %8962
    %8964 = vrot.lane.b32.xlu0 %v8830, 64
    %v8965 = vpop.permute.xlu0 %8964
    %8966 = vrot.lane.b32.xlu0 %v8831, 64
    %v8967 = vpop.permute.xlu0 %8966
    %8968 = vrot.lane.b32.xlu0 %v8832, 64
    %v8969 = vpop.permute.xlu0 %8968
    %8970 = vrot.lane.b32.xlu0 %v8833, 64
    %v8971 = vpop.permute.xlu0 %8970
    %8972 = vrot.lane.b32.xlu0 %v8834, 64
    %v8973 = vpop.permute.xlu0 %8972
    %8974 = vrot.lane.b32.xlu0 %v8835, 64
    %v8975 = vpop.permute.xlu0 %8974
    %8976 = vrot.lane.b32.xlu0 %v8836, 64
    %v8977 = vpop.permute.xlu0 %8976
    %8978 = vrot.lane.b32.xlu0 %v8837, 64
    %v8979 = vpop.permute.xlu0 %8978
    %8980 = vrot.lane.b32.xlu0 %v8838, 64
    %v8981 = vpop.permute.xlu0 %8980
    %8982 = vrot.lane.b32.xlu0 %v8839, 64
    %v8983 = vpop.permute.xlu0 %8982
    %8984 = vrot.lane.b32.xlu0 %v8840, 64
    %v8985 = vpop.permute.xlu0 %8984
    %8986 = vrot.lane.b32.xlu0 %v8841, 64
    %v8987 = vpop.permute.xlu0 %8986
    %8988 = vrot.lane.b32.xlu0 %v8842, 64
    %v8989 = vpop.permute.xlu0 %8988
    %8990 = vrot.lane.b32.xlu0 %v8843, 64
    %v8991 = vpop.permute.xlu0 %8990
    %8992 = vrot.lane.b32.xlu0 %v8844, 64
    %v8993 = vpop.permute.xlu0 %8992
    %8994 = vrot.lane.b32.xlu0 %v8845, 64
    %v8995 = vpop.permute.xlu0 %8994
    %8996 = vrot.lane.b32.xlu0 %v8846, 64
    %v8997 = vpop.permute.xlu0 %8996
    %8998 = vrot.lane.b32.xlu0 %v8847, 64
    %v8999 = vpop.permute.xlu0 %8998
    %9000 = vrot.lane.b32.xlu0 %v8848, 64
    %v9001 = vpop.permute.xlu0 %9000
    %9002 = vrot.lane.b32.xlu0 %v8849, 64
    %v9003 = vpop.permute.xlu0 %9002
    %9004 = vrot.lane.b32.xlu0 %v8850, 64
    %v9005 = vpop.permute.xlu0 %9004
    %9006 = vrot.lane.b32.xlu0 %v8851, 64
    %v9007 = vpop.permute.xlu0 %9006
    %9008 = vrot.lane.b32.xlu0 %v8852, 64
    %v9009 = vpop.permute.xlu0 %9008
    %9010 = vrot.lane.b32.xlu0 %v8853, 64
    %v9011 = vpop.permute.xlu0 %9010
    %9012 = vrot.lane.b32.xlu0 %v8854, 64
    %v9013 = vpop.permute.xlu0 %9012
    %9014 = vrot.lane.b32.xlu0 %v8855, 64
    %v9015 = vpop.permute.xlu0 %9014
    %9016 = vrot.lane.b32.xlu0 %v8856, 64
    %v9017 = vpop.permute.xlu0 %9016
    %9018 = vrot.lane.b32.xlu0 %v8857, 64
    %v9019 = vpop.permute.xlu0 %9018
    %9020 = vrot.lane.b32.xlu0 %v8858, 64
    %v9021 = vpop.permute.xlu0 %9020
    %9022 = vrot.lane.b32.xlu0 %v8859, 64
    %v9023 = vpop.permute.xlu0 %9022
    %9024 = vrot.lane.b32.xlu0 %v8860, 64
    %v9025 = vpop.permute.xlu0 %9024
    %9026 = vrot.lane.b32.xlu0 %v8861, 64
    %v9027 = vpop.permute.xlu0 %9026
    %9028 = vrot.lane.b32.xlu0 %v8862, 64
    %v9029 = vpop.permute.xlu0 %9028
    %9030 = vrot.lane.b32.xlu0 %v8863, 64
    %v9031 = vpop.permute.xlu0 %9030
    %9032 = vrot.lane.b32.xlu0 %v8864, 64
    %v9033 = vpop.permute.xlu0 %9032
    %9034 = vrot.lane.b32.xlu0 %v8865, 64
    %v9035 = vpop.permute.xlu0 %9034
    %9036 = vrot.lane.b32.xlu0 %v8866, 64
    %v9037 = vpop.permute.xlu0 %9036
    %9038 = vrot.lane.b32.xlu0 %v8867, 64
    %v9039 = vpop.permute.xlu0 %9038
    %9040 = vrot.lane.b32.xlu0 %v8868, 64
    %v9041 = vpop.permute.xlu0 %9040
    %9042 = vrot.lane.b32.xlu0 %v8869, 64
    %v9043 = vpop.permute.xlu0 %9042
    %9044 = vrot.lane.b32.xlu0 %v8870, 64
    %v9045 = vpop.permute.xlu0 %9044
    %9046 = vrot.lane.b32.xlu0 %v8871, 64
    %v9047 = vpop.permute.xlu0 %9046
    %9048 = vrot.lane.b32.xlu0 %v8872, 64
    %v9049 = vpop.permute.xlu0 %9048
    %9050 = vrot.lane.b32.xlu0 %v8873, 64
    %v9051 = vpop.permute.xlu0 %9050
    %9052 = vrot.lane.b32.xlu0 %v8874, 64
    %v9053 = vpop.permute.xlu0 %9052
    %9054 = vrot.lane.b32.xlu0 %v8875, 64
    %v9055 = vpop.permute.xlu0 %9054
    %9056 = vrot.lane.b32.xlu0 %v8876, 64
    %v9057 = vpop.permute.xlu0 %9056
    %9058 = vrot.lane.b32.xlu0 %v8877, 64
    %v9059 = vpop.permute.xlu0 %9058
    %9060 = vrot.lane.b32.xlu0 %v8878, 64
    %v9061 = vpop.permute.xlu0 %9060
    %9062 = vrot.lane.b32.xlu0 %v8879, 64
    %v9063 = vpop.permute.xlu0 %9062
    %9064 = vrot.lane.b32.xlu0 %v8880, 64
    %v9065 = vpop.permute.xlu0 %9064
    %9066 = vrot.lane.b32.xlu0 %v8881, 64
    %v9067 = vpop.permute.xlu0 %9066
    %9068 = vrot.lane.b32.xlu0 %v8882, 64
    %v9069 = vpop.permute.xlu0 %9068
    %9070 = vrot.lane.b32.xlu0 %v8883, 64
    %v9071 = vpop.permute.xlu0 %9070
    %9072 = vrot.lane.b32.xlu0 %v8884, 64
    %v9073 = vpop.permute.xlu0 %9072
    %9074 = vrot.lane.b32.xlu0 %v8885, 64
    %v9075 = vpop.permute.xlu0 %9074
    %9076 = vrot.lane.b32.xlu0 %v8886, 64
    %v9077 = vpop.permute.xlu0 %9076
    %9078 = vrot.lane.b32.xlu0 %v8887, 64
    %v9079 = vpop.permute.xlu0 %9078
    %vm9144 = vcmask 585216
    %9145 = vst.msk [vmem:[#allocation5] sm:$0xf] %vm9144, %v8953
    %9146 = vst.msk [vmem:[#allocation5 + $0x4] sm:$0xf] %vm9144, %v8955
    %9147 = vst.msk [vmem:[#allocation5 + $0x8] sm:$0xf] %vm9144, %v8957
    %9148 = vst.msk [vmem:[#allocation5 + $0xc] sm:$0xf] %vm9144, %v8959
    %9149 = vst.msk [vmem:[#allocation5 + $0x10] sm:$0xf] %vm9144, %v8961
    %9150 = vst.msk [vmem:[#allocation5 + $0x14] sm:$0xf] %vm9144, %v8963
    %9151 = vst.msk [vmem:[#allocation5 + $0x18] sm:$0xf] %vm9144, %v8965
    %9152 = vst.msk [vmem:[#allocation5 + $0x1c] sm:$0xf] %vm9144, %v8967
    %9153 = vst.msk [vmem:[#allocation5 + $0x20] sm:$0xf] %vm9144, %v8969
    %9154 = vst.msk [vmem:[#allocation5 + $0x24] sm:$0xf] %vm9144, %v8971
    %9155 = vst.msk [vmem:[#allocation5 + $0x28] sm:$0xf] %vm9144, %v8973
    %9156 = vst.msk [vmem:[#allocation5 + $0x2c] sm:$0xf] %vm9144, %v8975
    %9157 = vst.msk [vmem:[#allocation5 + $0x30] sm:$0xf] %vm9144, %v8977
    %9158 = vst.msk [vmem:[#allocation5 + $0x34] sm:$0xf] %vm9144, %v8979
    %9159 = vst.msk [vmem:[#allocation5 + $0x38] sm:$0xf] %vm9144, %v8981
    %9160 = vst.msk [vmem:[#allocation5 + $0x3c] sm:$0xf] %vm9144, %v8983
    %9161 = vst.msk [vmem:[#allocation5 + $0x40] sm:$0xf] %vm9144, %v8985
    %9162 = vst.msk [vmem:[#allocation5 + $0x44] sm:$0xf] %vm9144, %v8987
    %9163 = vst.msk [vmem:[#allocation5 + $0x48] sm:$0xf] %vm9144, %v8989
    %9164 = vst.msk [vmem:[#allocation5 + $0x4c] sm:$0xf] %vm9144, %v8991
    %9165 = vst.msk [vmem:[#allocation5 + $0x50] sm:$0xf] %vm9144, %v8993
    %9166 = vst.msk [vmem:[#allocation5 + $0x54] sm:$0xf] %vm9144, %v8995
    %9167 = vst.msk [vmem:[#allocation5 + $0x58] sm:$0xf] %vm9144, %v8997
    %9168 = vst.msk [vmem:[#allocation5 + $0x5c] sm:$0xf] %vm9144, %v8999
    %9169 = vst.msk [vmem:[#allocation5 + $0x60] sm:$0xf] %vm9144, %v9001
    %9170 = vst.msk [vmem:[#allocation5 + $0x64] sm:$0xf] %vm9144, %v9003
    %9171 = vst.msk [vmem:[#allocation5 + $0x68] sm:$0xf] %vm9144, %v9005
    %9172 = vst.msk [vmem:[#allocation5 + $0x6c] sm:$0xf] %vm9144, %v9007
    %9173 = vst.msk [vmem:[#allocation5 + $0x70] sm:$0xf] %vm9144, %v9009
    %9174 = vst.msk [vmem:[#allocation5 + $0x74] sm:$0xf] %vm9144, %v9011
    %9175 = vst.msk [vmem:[#allocation5 + $0x78] sm:$0xf] %vm9144, %v9013
    %9176 = vst.msk [vmem:[#allocation5 + $0x7c] sm:$0xf] %vm9144, %v9015
    %9177 = vst.msk [vmem:[#allocation5 + $0x80] sm:$0xf] %vm9144, %v9017
    %9178 = vst.msk [vmem:[#allocation5 + $0x84] sm:$0xf] %vm9144, %v9019
    %9179 = vst.msk [vmem:[#allocation5 + $0x88] sm:$0xf] %vm9144, %v9021
    %9180 = vst.msk [vmem:[#allocation5 + $0x8c] sm:$0xf] %vm9144, %v9023
    %9181 = vst.msk [vmem:[#allocation5 + $0x90] sm:$0xf] %vm9144, %v9025
    %9182 = vst.msk [vmem:[#allocation5 + $0x94] sm:$0xf] %vm9144, %v9027
    %9183 = vst.msk [vmem:[#allocation5 + $0x98] sm:$0xf] %vm9144, %v9029
    %9184 = vst.msk [vmem:[#allocation5 + $0x9c] sm:$0xf] %vm9144, %v9031
    %9185 = vst.msk [vmem:[#allocation5 + $0xa0] sm:$0xf] %vm9144, %v9033
    %9186 = vst.msk [vmem:[#allocation5 + $0xa4] sm:$0xf] %vm9144, %v9035
    %9187 = vst.msk [vmem:[#allocation5 + $0xa8] sm:$0xf] %vm9144, %v9037
    %9188 = vst.msk [vmem:[#allocation5 + $0xac] sm:$0xf] %vm9144, %v9039
    %9189 = vst.msk [vmem:[#allocation5 + $0xb0] sm:$0xf] %vm9144, %v9041
    %9190 = vst.msk [vmem:[#allocation5 + $0xb4] sm:$0xf] %vm9144, %v9043
    %9191 = vst.msk [vmem:[#allocation5 + $0xb8] sm:$0xf] %vm9144, %v9045
    %9192 = vst.msk [vmem:[#allocation5 + $0xbc] sm:$0xf] %vm9144, %v9047
    %9193 = vst.msk [vmem:[#allocation5 + $0xc0] sm:$0xf] %vm9144, %v9049
    %9194 = vst.msk [vmem:[#allocation5 + $0xc4] sm:$0xf] %vm9144, %v9051
    %9195 = vst.msk [vmem:[#allocation5 + $0xc8] sm:$0xf] %vm9144, %v9053
    %9196 = vst.msk [vmem:[#allocation5 + $0xcc] sm:$0xf] %vm9144, %v9055
    %9197 = vst.msk [vmem:[#allocation5 + $0xd0] sm:$0xf] %vm9144, %v9057
    %9198 = vst.msk [vmem:[#allocation5 + $0xd4] sm:$0xf] %vm9144, %v9059
    %9199 = vst.msk [vmem:[#allocation5 + $0xd8] sm:$0xf] %vm9144, %v9061
    %9200 = vst.msk [vmem:[#allocation5 + $0xdc] sm:$0xf] %vm9144, %v9063
    %9201 = vst.msk [vmem:[#allocation5 + $0xe0] sm:$0xf] %vm9144, %v9065
    %9202 = vst.msk [vmem:[#allocation5 + $0xe4] sm:$0xf] %vm9144, %v9067
    %9203 = vst.msk [vmem:[#allocation5 + $0xe8] sm:$0xf] %vm9144, %v9069
    %9204 = vst.msk [vmem:[#allocation5 + $0xec] sm:$0xf] %vm9144, %v9071
    %9205 = vst.msk [vmem:[#allocation5 + $0xf0] sm:$0xf] %vm9144, %v9073
    %9206 = vst.msk [vmem:[#allocation5 + $0xf4] sm:$0xf] %vm9144, %v9075
    %9207 = vst.msk [vmem:[#allocation5 + $0xf8] sm:$0xf] %vm9144, %v9077
    %9208 = vst.msk [vmem:[#allocation5 + $0xfc] sm:$0xf] %vm9144, %v9079
    %v9209 = vld [vmem:[#allocation5] sm:$0xf]
    %v9210 = vld [vmem:[#allocation5 + $0x4] sm:$0xf]
    %v9211 = vld [vmem:[#allocation5 + $0x8] sm:$0xf]
    %v9212 = vld [vmem:[#allocation5 + $0xc] sm:$0xf]
    %v9213 = vld [vmem:[#allocation5 + $0x10] sm:$0xf]
    %v9214 = vld [vmem:[#allocation5 + $0x14] sm:$0xf]
    %v9215 = vld [vmem:[#allocation5 + $0x18] sm:$0xf]
    %v9216 = vld [vmem:[#allocation5 + $0x1c] sm:$0xf]
    %v9217 = vld [vmem:[#allocation5 + $0x20] sm:$0xf]
    %v9218 = vld [vmem:[#allocation5 + $0x24] sm:$0xf]
    %v9219 = vld [vmem:[#allocation5 + $0x28] sm:$0xf]
    %v9220 = vld [vmem:[#allocation5 + $0x2c] sm:$0xf]
    %v9221 = vld [vmem:[#allocation5 + $0x30] sm:$0xf]
    %v9222 = vld [vmem:[#allocation5 + $0x34] sm:$0xf]
    %v9223 = vld [vmem:[#allocation5 + $0x38] sm:$0xf]
    %v9224 = vld [vmem:[#allocation5 + $0x3c] sm:$0xf]
    %v9225 = vld [vmem:[#allocation5 + $0x40] sm:$0xf]
    %v9226 = vld [vmem:[#allocation5 + $0x44] sm:$0xf]
    %v9227 = vld [vmem:[#allocation5 + $0x48] sm:$0xf]
    %v9228 = vld [vmem:[#allocation5 + $0x4c] sm:$0xf]
    %v9229 = vld [vmem:[#allocation5 + $0x50] sm:$0xf]
    %v9230 = vld [vmem:[#allocation5 + $0x54] sm:$0xf]
    %v9231 = vld [vmem:[#allocation5 + $0x58] sm:$0xf]
    %v9232 = vld [vmem:[#allocation5 + $0x5c] sm:$0xf]
    %v9233 = vld [vmem:[#allocation5 + $0x60] sm:$0xf]
    %v9234 = vld [vmem:[#allocation5 + $0x64] sm:$0xf]
    %v9235 = vld [vmem:[#allocation5 + $0x68] sm:$0xf]
    %v9236 = vld [vmem:[#allocation5 + $0x6c] sm:$0xf]
    %v9237 = vld [vmem:[#allocation5 + $0x70] sm:$0xf]
    %v9238 = vld [vmem:[#allocation5 + $0x74] sm:$0xf]
    %v9239 = vld [vmem:[#allocation5 + $0x78] sm:$0xf]
    %v9240 = vld [vmem:[#allocation5 + $0x7c] sm:$0xf]
    %v9241 = vld [vmem:[#allocation5 + $0x80] sm:$0xf]
    %v9242 = vld [vmem:[#allocation5 + $0x84] sm:$0xf]
    %v9243 = vld [vmem:[#allocation5 + $0x88] sm:$0xf]
    %v9244 = vld [vmem:[#allocation5 + $0x8c] sm:$0xf]
    %v9245 = vld [vmem:[#allocation5 + $0x90] sm:$0xf]
    %v9246 = vld [vmem:[#allocation5 + $0x94] sm:$0xf]
    %v9247 = vld [vmem:[#allocation5 + $0x98] sm:$0xf]
    %v9248 = vld [vmem:[#allocation5 + $0x9c] sm:$0xf]
    %v9249 = vld [vmem:[#allocation5 + $0xa0] sm:$0xf]
    %v9250 = vld [vmem:[#allocation5 + $0xa4] sm:$0xf]
    %v9251 = vld [vmem:[#allocation5 + $0xa8] sm:$0xf]
    %v9252 = vld [vmem:[#allocation5 + $0xac] sm:$0xf]
    %v9253 = vld [vmem:[#allocation5 + $0xb0] sm:$0xf]
    %v9254 = vld [vmem:[#allocation5 + $0xb4] sm:$0xf]
    %v9255 = vld [vmem:[#allocation5 + $0xb8] sm:$0xf]
    %v9256 = vld [vmem:[#allocation5 + $0xbc] sm:$0xf]
    %v9257 = vld [vmem:[#allocation5 + $0xc0] sm:$0xf]
    %v9258 = vld [vmem:[#allocation5 + $0xc4] sm:$0xf]
    %v9259 = vld [vmem:[#allocation5 + $0xc8] sm:$0xf]
    %v9260 = vld [vmem:[#allocation5 + $0xcc] sm:$0xf]
    %v9261 = vld [vmem:[#allocation5 + $0xd0] sm:$0xf]
    %v9262 = vld [vmem:[#allocation5 + $0xd4] sm:$0xf]
    %v9263 = vld [vmem:[#allocation5 + $0xd8] sm:$0xf]
    %v9264 = vld [vmem:[#allocation5 + $0xdc] sm:$0xf]
    %v9265 = vld [vmem:[#allocation5 + $0xe0] sm:$0xf]
    %v9266 = vld [vmem:[#allocation5 + $0xe4] sm:$0xf]
    %v9267 = vld [vmem:[#allocation5 + $0xe8] sm:$0xf]
    %v9268 = vld [vmem:[#allocation5 + $0xec] sm:$0xf]
    %v9269 = vld [vmem:[#allocation5 + $0xf0] sm:$0xf]
    %v9270 = vld [vmem:[#allocation5 + $0xf4] sm:$0xf]
    %v9271 = vld [vmem:[#allocation5 + $0xf8] sm:$0xf]
    %v9272 = vld [vmem:[#allocation5 + $0xfc] sm:$0xf]
    %v9273 = vld [vmem:[%s8] sm:$0xf]
    %v9274 = vld [vmem:[%s8 + $0x4] sm:$0xf]
    %v9275 = vld [vmem:[%s8 + $0x8] sm:$0xf]
    %v9276 = vld [vmem:[%s8 + $0xc] sm:$0xf]
    %v9277 = vld [vmem:[%s8 + $0x10] sm:$0xf]
    %v9278 = vld [vmem:[%s8 + $0x14] sm:$0xf]
    %v9279 = vld [vmem:[%s8 + $0x18] sm:$0xf]
    %v9280 = vld [vmem:[%s8 + $0x1c] sm:$0xf]
    %v9281 = vld [vmem:[%s8 + $0x20] sm:$0xf]
    %v9282 = vld [vmem:[%s9] sm:$0x1]
    %v9284 = vperm.slane %v9282, 0
    %v9350 = vunpack.c.l.b16 %v9209
    %v9351 = vunpack.c.l.b16 %v9210
    %v9352 = vunpack.c.l.b16 %v9211
    %v9353 = vunpack.c.l.b16 %v9212
    %v9354 = vunpack.c.l.b16 %v9213
    %v9355 = vunpack.c.l.b16 %v9214
    %v9356 = vunpack.c.l.b16 %v9215
    %v9357 = vunpack.c.l.b16 %v9216
    %v9358 = vunpack.c.l.b16 %v9217
    %v9359 = vunpack.c.l.b16 %v9218
    %v9360 = vunpack.c.l.b16 %v9219
    %v9361 = vunpack.c.l.b16 %v9220
    %v9362 = vunpack.c.l.b16 %v9221
    %v9363 = vunpack.c.l.b16 %v9222
    %v9364 = vunpack.c.l.b16 %v9223
    %v9365 = vunpack.c.l.b16 %v9224
    %v9366 = vunpack.c.l.b16 %v9225
    %v9367 = vunpack.c.l.b16 %v9226
    %v9368 = vunpack.c.l.b16 %v9227
    %v9369 = vunpack.c.l.b16 %v9228
    %v9370 = vunpack.c.l.b16 %v9229
    %v9371 = vunpack.c.l.b16 %v9230
    %v9372 = vunpack.c.l.b16 %v9231
    %v9373 = vunpack.c.l.b16 %v9232
    %v9374 = vunpack.c.l.b16 %v9233
    %v9375 = vunpack.c.l.b16 %v9234
    %v9376 = vunpack.c.l.b16 %v9235
    %v9377 = vunpack.c.l.b16 %v9236
    %v9378 = vunpack.c.l.b16 %v9237
    %v9379 = vunpack.c.l.b16 %v9238
    %v9380 = vunpack.c.l.b16 %v9239
    %v9381 = vunpack.c.l.b16 %v9240
    %v9382 = vunpack.c.l.b16 %v9241
    %v9383 = vunpack.c.l.b16 %v9242
    %v9384 = vunpack.c.l.b16 %v9243
    %v9385 = vunpack.c.l.b16 %v9244
    %v9386 = vunpack.c.l.b16 %v9245
    %v9387 = vunpack.c.l.b16 %v9246
    %v9388 = vunpack.c.l.b16 %v9247
    %v9389 = vunpack.c.l.b16 %v9248
    %v9390 = vunpack.c.l.b16 %v9249
    %v9391 = vunpack.c.l.b16 %v9250
    %v9392 = vunpack.c.l.b16 %v9251
    %v9393 = vunpack.c.l.b16 %v9252
    %v9394 = vunpack.c.l.b16 %v9253
    %v9395 = vunpack.c.l.b16 %v9254
    %v9396 = vunpack.c.l.b16 %v9255
    %v9397 = vunpack.c.l.b16 %v9256
    %v9398 = vunpack.c.l.b16 %v9257
    %v9399 = vunpack.c.l.b16 %v9258
    %v9400 = vunpack.c.l.b16 %v9259
    %v9401 = vunpack.c.l.b16 %v9260
    %v9402 = vunpack.c.l.b16 %v9261
    %v9403 = vunpack.c.l.b16 %v9262
    %v9404 = vunpack.c.l.b16 %v9263
    %v9405 = vunpack.c.l.b16 %v9264
    %v9406 = vunpack.c.l.b16 %v9265
    %v9407 = vunpack.c.l.b16 %v9266
    %v9408 = vunpack.c.l.b16 %v9267
    %v9409 = vunpack.c.l.b16 %v9268
    %v9410 = vunpack.c.l.b16 %v9269
    %v9411 = vunpack.c.l.b16 %v9270
    %v9412 = vunpack.c.l.b16 %v9271
    %v9413 = vunpack.c.l.b16 %v9272
    %v9414 = vpack.c.b16 %v9351, %v9350
    %v9415 = vpack.c.b16 %v9353, %v9352
    %v9416 = vpack.c.b16 %v9355, %v9354
    %v9417 = vpack.c.b16 %v9357, %v9356
    %v9418 = vpack.c.b16 %v9359, %v9358
    %v9419 = vpack.c.b16 %v9361, %v9360
    %v9420 = vpack.c.b16 %v9363, %v9362
    %v9421 = vpack.c.b16 %v9365, %v9364
    %v9422 = vpack.c.b16 %v9367, %v9366
    %v9423 = vpack.c.b16 %v9369, %v9368
    %v9424 = vpack.c.b16 %v9371, %v9370
    %v9425 = vpack.c.b16 %v9373, %v9372
    %v9426 = vpack.c.b16 %v9375, %v9374
    %v9427 = vpack.c.b16 %v9377, %v9376
    %v9428 = vpack.c.b16 %v9379, %v9378
    %v9429 = vpack.c.b16 %v9381, %v9380
    %v9430 = vpack.c.b16 %v9383, %v9382
    %v9431 = vpack.c.b16 %v9385, %v9384
    %v9432 = vpack.c.b16 %v9387, %v9386
    %v9433 = vpack.c.b16 %v9389, %v9388
    %v9434 = vpack.c.b16 %v9391, %v9390
    %v9435 = vpack.c.b16 %v9393, %v9392
    %v9436 = vpack.c.b16 %v9395, %v9394
    %v9437 = vpack.c.b16 %v9397, %v9396
    %v9438 = vpack.c.b16 %v9399, %v9398
    %v9439 = vpack.c.b16 %v9401, %v9400
    %v9440 = vpack.c.b16 %v9403, %v9402
    %v9441 = vpack.c.b16 %v9405, %v9404
    %v9442 = vpack.c.b16 %v9407, %v9406
    %v9443 = vpack.c.b16 %v9409, %v9408
    %v9444 = vpack.c.b16 %v9411, %v9410
    %v9445 = vpack.c.b16 %v9413, %v9412
    %v9455 = vunpack.c.l.b16 %v9273
    %v9456 = vunpack.c.l.b16 %v9274
    %v9457 = vunpack.c.l.b16 %v9275
    %v9458 = vunpack.c.l.b16 %v9276
    %v9459 = vunpack.c.l.b16 %v9277
    %v9460 = vunpack.c.l.b16 %v9278
    %v9461 = vunpack.c.l.b16 %v9279
    %v9462 = vunpack.c.l.b16 %v9280
    %v9463 = vunpack.c.l.b16 %v9281
    %v9464 = vpack.c.b16 %v9456, %v9455
    %v9465 = vpack.c.b16 %v9458, %v9457
    %v9466 = vpack.c.b16 %v9460, %v9459
    %v9467 = vpack.c.b16 %v9462, %v9461
    %v9468 = vpack.c.b16 %v9463, %v9463
    %vm9473 = vcmask 588800
    %v9475 = vsel %vm9473, %v9414, 0
    %v9478 = vsel %vm9473, %v9415, 0
    %v9481 = vsel %vm9473, %v9416, 0
    %v9484 = vsel %vm9473, %v9417, 0
    %v9487 = vsel %vm9473, %v9418, 0
    %v9490 = vsel %vm9473, %v9419, 0
    %v9493 = vsel %vm9473, %v9420, 0
    %v9496 = vsel %vm9473, %v9421, 0
    %v9499 = vsel %vm9473, %v9422, 0
    %v9502 = vsel %vm9473, %v9423, 0
    %v9505 = vsel %vm9473, %v9424, 0
    %v9508 = vsel %vm9473, %v9425, 0
    %v9511 = vsel %vm9473, %v9426, 0
    %v9514 = vsel %vm9473, %v9427, 0
    %v9517 = vsel %vm9473, %v9428, 0
    %v9520 = vsel %vm9473, %v9429, 0
    %v9523 = vsel %vm9473, %v9430, 0
    %v9526 = vsel %vm9473, %v9431, 0
    %v9529 = vsel %vm9473, %v9432, 0
    %v9532 = vsel %vm9473, %v9433, 0
    %v9535 = vsel %vm9473, %v9434, 0
    %v9538 = vsel %vm9473, %v9435, 0
    %v9541 = vsel %vm9473, %v9436, 0
    %v9544 = vsel %vm9473, %v9437, 0
    %v9547 = vsel %vm9473, %v9438, 0
    %v9550 = vsel %vm9473, %v9439, 0
    %v9553 = vsel %vm9473, %v9440, 0
    %v9556 = vsel %vm9473, %v9441, 0
    %v9559 = vsel %vm9473, %v9442, 0
    %v9562 = vsel %vm9473, %v9443, 0
    %v9565 = vsel %vm9473, %v9444, 0
    %v9568 = vsel %vm9473, %v9445, 0
    %vm9570 = vcmask 1043456
    %v9572 = vsel %vm9570, %v9468, 0
    %9574 = vmatpush.bf16.msra.mxu0 0
    %9575 = vmatpush.bf16.msra.mxu0 0
    %9576 = vmatpush.bf16.msra.mxu0 0
    %9577 = vmatpush.bf16.msra.mxu0 %v9572
    %9578 = vmatpush.bf16.msra.mxu0 %v9467
    %9579 = vmatpush.bf16.msra.mxu0 %v9466
    %9580 = vmatpush.bf16.msra.mxu0 %v9465
    %9581 = vmatpush.bf16.msra.mxu0 %v9464
    %9582 = vmatmul.bf16.gmra.mxu0 %v9475
    %v9583 = vpop.f32.mrf.mxu0
    %v9584 = vadd.f32 %v9284, %v9583
    %v9585 = vpop.f32.mrf.mxu0
    %v9586 = vadd.f32 %v9284, %v9585
    %9587 = vmatmul.bf16.gmra.mxu0 %v9478
    %v9588 = vpop.f32.mrf.mxu0
    %v9589 = vadd.f32 %v9284, %v9588
    %v9590 = vpop.f32.mrf.mxu0
    %v9591 = vadd.f32 %v9284, %v9590
    %9592 = vmatmul.bf16.gmra.mxu0 %v9481
    %v9593 = vpop.f32.mrf.mxu0
    %v9594 = vadd.f32 %v9284, %v9593
    %v9595 = vpop.f32.mrf.mxu0
    %v9596 = vadd.f32 %v9284, %v9595
    %9597 = vmatmul.bf16.gmra.mxu0 %v9484
    %v9598 = vpop.f32.mrf.mxu0
    %v9599 = vadd.f32 %v9284, %v9598
    %v9600 = vpop.f32.mrf.mxu0
    %v9601 = vadd.f32 %v9284, %v9600
    %9602 = vmatmul.bf16.gmra.mxu0 %v9487
    %v9603 = vpop.f32.mrf.mxu0
    %v9604 = vadd.f32 %v9284, %v9603
    %v9605 = vpop.f32.mrf.mxu0
    %v9606 = vadd.f32 %v9284, %v9605
    %9607 = vmatmul.bf16.gmra.mxu0 %v9490
    %v9608 = vpop.f32.mrf.mxu0
    %v9609 = vadd.f32 %v9284, %v9608
    %v9610 = vpop.f32.mrf.mxu0
    %v9611 = vadd.f32 %v9284, %v9610
    %9612 = vmatmul.bf16.gmra.mxu0 %v9493
    %v9613 = vpop.f32.mrf.mxu0
    %v9614 = vadd.f32 %v9284, %v9613
    %v9615 = vpop.f32.mrf.mxu0
    %v9616 = vadd.f32 %v9284, %v9615
    %9617 = vmatmul.bf16.gmra.mxu0 %v9496
    %v9618 = vpop.f32.mrf.mxu0
    %v9619 = vadd.f32 %v9284, %v9618
    %v9620 = vpop.f32.mrf.mxu0
    %v9621 = vadd.f32 %v9284, %v9620
    %9622 = vmatmul.bf16.gmra.mxu0 %v9499
    %v9623 = vpop.f32.mrf.mxu0
    %v9624 = vadd.f32 %v9284, %v9623
    %v9625 = vpop.f32.mrf.mxu0
    %v9626 = vadd.f32 %v9284, %v9625
    %9627 = vmatmul.bf16.gmra.mxu0 %v9502
    %v9628 = vpop.f32.mrf.mxu0
    %v9629 = vadd.f32 %v9284, %v9628
    %v9630 = vpop.f32.mrf.mxu0
    %v9631 = vadd.f32 %v9284, %v9630
    %9632 = vmatmul.bf16.gmra.mxu0 %v9505
    %v9633 = vpop.f32.mrf.mxu0
    %v9634 = vadd.f32 %v9284, %v9633
    %v9635 = vpop.f32.mrf.mxu0
    %v9636 = vadd.f32 %v9284, %v9635
    %9637 = vmatmul.bf16.gmra.mxu0 %v9508
    %v9638 = vpop.f32.mrf.mxu0
    %v9639 = vadd.f32 %v9284, %v9638
    %v9640 = vpop.f32.mrf.mxu0
    %v9641 = vadd.f32 %v9284, %v9640
    %9642 = vmatmul.bf16.gmra.mxu0 %v9511
    %v9643 = vpop.f32.mrf.mxu0
    %v9644 = vadd.f32 %v9284, %v9643
    %v9645 = vpop.f32.mrf.mxu0
    %v9646 = vadd.f32 %v9284, %v9645
    %9647 = vmatmul.bf16.gmra.mxu0 %v9514
    %v9648 = vpop.f32.mrf.mxu0
    %v9649 = vadd.f32 %v9284, %v9648
    %v9650 = vpop.f32.mrf.mxu0
    %v9651 = vadd.f32 %v9284, %v9650
    %9652 = vmatmul.bf16.gmra.mxu0 %v9517
    %v9653 = vpop.f32.mrf.mxu0
    %v9654 = vadd.f32 %v9284, %v9653
    %v9655 = vpop.f32.mrf.mxu0
    %v9656 = vadd.f32 %v9284, %v9655
    %9657 = vmatmul.bf16.gmra.mxu0 %v9520
    %v9658 = vpop.f32.mrf.mxu0
    %v9659 = vadd.f32 %v9284, %v9658
    %v9660 = vpop.f32.mrf.mxu0
    %v9661 = vadd.f32 %v9284, %v9660
    %9662 = vmatmul.bf16.gmra.mxu0 %v9523
    %v9663 = vpop.f32.mrf.mxu0
    %v9664 = vadd.f32 %v9284, %v9663
    %v9665 = vpop.f32.mrf.mxu0
    %v9666 = vadd.f32 %v9284, %v9665
    %9667 = vmatmul.bf16.gmra.mxu0 %v9526
    %v9668 = vpop.f32.mrf.mxu0
    %v9669 = vadd.f32 %v9284, %v9668
    %v9670 = vpop.f32.mrf.mxu0
    %v9671 = vadd.f32 %v9284, %v9670
    %9672 = vmatmul.bf16.gmra.mxu0 %v9529
    %v9673 = vpop.f32.mrf.mxu0
    %v9674 = vadd.f32 %v9284, %v9673
    %v9675 = vpop.f32.mrf.mxu0
    %v9676 = vadd.f32 %v9284, %v9675
    %9677 = vmatmul.bf16.gmra.mxu0 %v9532
    %v9678 = vpop.f32.mrf.mxu0
    %v9679 = vadd.f32 %v9284, %v9678
    %v9680 = vpop.f32.mrf.mxu0
    %v9681 = vadd.f32 %v9284, %v9680
    %9682 = vmatmul.bf16.gmra.mxu0 %v9535
    %v9683 = vpop.f32.mrf.mxu0
    %v9684 = vadd.f32 %v9284, %v9683
    %v9685 = vpop.f32.mrf.mxu0
    %v9686 = vadd.f32 %v9284, %v9685
    %9687 = vmatmul.bf16.gmra.mxu0 %v9538
    %v9688 = vpop.f32.mrf.mxu0
    %v9689 = vadd.f32 %v9284, %v9688
    %v9690 = vpop.f32.mrf.mxu0
    %v9691 = vadd.f32 %v9284, %v9690
    %9692 = vmatmul.bf16.gmra.mxu0 %v9541
    %v9693 = vpop.f32.mrf.mxu0
    %v9694 = vadd.f32 %v9284, %v9693
    %v9695 = vpop.f32.mrf.mxu0
    %v9696 = vadd.f32 %v9284, %v9695
    %9697 = vmatmul.bf16.gmra.mxu0 %v9544
    %v9698 = vpop.f32.mrf.mxu0
    %v9699 = vadd.f32 %v9284, %v9698
    %v9700 = vpop.f32.mrf.mxu0
    %v9701 = vadd.f32 %v9284, %v9700
    %9702 = vmatmul.bf16.gmra.mxu0 %v9547
    %v9703 = vpop.f32.mrf.mxu0
    %v9704 = vadd.f32 %v9284, %v9703
    %v9705 = vpop.f32.mrf.mxu0
    %v9706 = vadd.f32 %v9284, %v9705
    %9707 = vmatmul.bf16.gmra.mxu0 %v9550
    %v9708 = vpop.f32.mrf.mxu0
    %v9709 = vadd.f32 %v9284, %v9708
    %v9710 = vpop.f32.mrf.mxu0
    %v9711 = vadd.f32 %v9284, %v9710
    %9712 = vmatmul.bf16.gmra.mxu0 %v9553
    %v9713 = vpop.f32.mrf.mxu0
    %v9714 = vadd.f32 %v9284, %v9713
    %v9715 = vpop.f32.mrf.mxu0
    %v9716 = vadd.f32 %v9284, %v9715
    %9717 = vmatmul.bf16.gmra.mxu0 %v9556
    %v9718 = vpop.f32.mrf.mxu0
    %v9719 = vadd.f32 %v9284, %v9718
    %v9720 = vpop.f32.mrf.mxu0
    %v9721 = vadd.f32 %v9284, %v9720
    %9722 = vmatmul.bf16.gmra.mxu0 %v9559
    %v9723 = vpop.f32.mrf.mxu0
    %v9724 = vadd.f32 %v9284, %v9723
    %v9725 = vpop.f32.mrf.mxu0
    %v9726 = vadd.f32 %v9284, %v9725
    %9727 = vmatmul.bf16.gmra.mxu0 %v9562
    %v9728 = vpop.f32.mrf.mxu0
    %v9729 = vadd.f32 %v9284, %v9728
    %v9730 = vpop.f32.mrf.mxu0
    %v9731 = vadd.f32 %v9284, %v9730
    %9732 = vmatmul.bf16.gmra.mxu0 %v9565
    %v9733 = vpop.f32.mrf.mxu0
    %v9734 = vadd.f32 %v9284, %v9733
    %v9735 = vpop.f32.mrf.mxu0
    %v9736 = vadd.f32 %v9284, %v9735
    %9737 = vmatmul.bf16.gmra.mxu0 %v9568
    %v9738 = vpop.f32.mrf.mxu0
    %v9739 = vadd.f32 %v9284, %v9738
    %v9740 = vpop.f32.mrf.mxu0
    %v9741 = vadd.f32 %v9284, %v9740
    %9742 = vdwg.mxu0
    %v9743 = vmax.f32 %v9584, 0.0
    %v9744 = vmax.f32 %v9586, 0.0
    %v9745 = vmax.f32 %v9589, 0.0
    %v9746 = vmax.f32 %v9591, 0.0
    %v9747 = vmax.f32 %v9594, 0.0
    %v9748 = vmax.f32 %v9596, 0.0
    %v9749 = vmax.f32 %v9599, 0.0
    %v9750 = vmax.f32 %v9601, 0.0
    %v9751 = vmax.f32 %v9604, 0.0
    %v9752 = vmax.f32 %v9606, 0.0
    %v9753 = vmax.f32 %v9609, 0.0
    %v9754 = vmax.f32 %v9611, 0.0
    %v9755 = vmax.f32 %v9614, 0.0
    %v9756 = vmax.f32 %v9616, 0.0
    %v9757 = vmax.f32 %v9619, 0.0
    %v9758 = vmax.f32 %v9621, 0.0
    %v9759 = vmax.f32 %v9624, 0.0
    %v9760 = vmax.f32 %v9626, 0.0
    %v9761 = vmax.f32 %v9629, 0.0
    %v9762 = vmax.f32 %v9631, 0.0
    %v9763 = vmax.f32 %v9634, 0.0
    %v9764 = vmax.f32 %v9636, 0.0
    %v9765 = vmax.f32 %v9639, 0.0
    %v9766 = vmax.f32 %v9641, 0.0
    %v9767 = vmax.f32 %v9644, 0.0
    %v9768 = vmax.f32 %v9646, 0.0
    %v9769 = vmax.f32 %v9649, 0.0
    %v9770 = vmax.f32 %v9651, 0.0
    %v9771 = vmax.f32 %v9654, 0.0
    %v9772 = vmax.f32 %v9656, 0.0
    %v9773 = vmax.f32 %v9659, 0.0
    %v9774 = vmax.f32 %v9661, 0.0
    %v9775 = vmax.f32 %v9664, 0.0
    %v9776 = vmax.f32 %v9666, 0.0
    %v9777 = vmax.f32 %v9669, 0.0
    %v9778 = vmax.f32 %v9671, 0.0
    %v9779 = vmax.f32 %v9674, 0.0
    %v9780 = vmax.f32 %v9676, 0.0
    %v9781 = vmax.f32 %v9679, 0.0
    %v9782 = vmax.f32 %v9681, 0.0
    %v9783 = vmax.f32 %v9684, 0.0
    %v9784 = vmax.f32 %v9686, 0.0
    %v9785 = vmax.f32 %v9689, 0.0
    %v9786 = vmax.f32 %v9691, 0.0
    %v9787 = vmax.f32 %v9694, 0.0
    %v9788 = vmax.f32 %v9696, 0.0
    %v9789 = vmax.f32 %v9699, 0.0
    %v9790 = vmax.f32 %v9701, 0.0
    %v9791 = vmax.f32 %v9704, 0.0
    %v9792 = vmax.f32 %v9706, 0.0
    %v9793 = vmax.f32 %v9709, 0.0
    %v9794 = vmax.f32 %v9711, 0.0
    %v9795 = vmax.f32 %v9714, 0.0
    %v9796 = vmax.f32 %v9716, 0.0
    %v9797 = vmax.f32 %v9719, 0.0
    %v9798 = vmax.f32 %v9721, 0.0
    %v9799 = vmax.f32 %v9724, 0.0
    %v9800 = vmax.f32 %v9726, 0.0
    %v9801 = vmax.f32 %v9729, 0.0
    %v9802 = vmax.f32 %v9731, 0.0
    %v9803 = vmax.f32 %v9734, 0.0
    %v9804 = vmax.f32 %v9736, 0.0
    %v9805 = vmax.f32 %v9739, 0.0
    %v9806 = vmax.f32 %v9741, 0.0
    %v9807 = vsel %vm4650, %v9743, 0.0
    %v9808 = vsel %vm4650, %v9744, 0.0
    %v9809 = vadd.f32 %v9807, %v9808
    %v9810 = vsel %vm4650, %v9745, 0.0
    %v9811 = vadd.f32 %v9809, %v9810
    %v9812 = vsel %vm4650, %v9746, 0.0
    %v9813 = vadd.f32 %v9811, %v9812
    %v9814 = vsel %vm4650, %v9747, 0.0
    %v9815 = vadd.f32 %v9813, %v9814
    %v9816 = vsel %vm4650, %v9748, 0.0
    %v9817 = vadd.f32 %v9815, %v9816
    %v9818 = vsel %vm4650, %v9749, 0.0
    %v9819 = vadd.f32 %v9817, %v9818
    %v9820 = vsel %vm4650, %v9750, 0.0
    %v9821 = vadd.f32 %v9819, %v9820
    %v9822 = vsel %vm4650, %v9751, 0.0
    %v9823 = vadd.f32 %v9821, %v9822
    %v9824 = vsel %vm4650, %v9752, 0.0
    %v9825 = vadd.f32 %v9823, %v9824
    %v9826 = vsel %vm4650, %v9753, 0.0
    %v9827 = vadd.f32 %v9825, %v9826
    %v9828 = vsel %vm4650, %v9754, 0.0
    %v9829 = vadd.f32 %v9827, %v9828
    %v9830 = vsel %vm4650, %v9755, 0.0
    %v9831 = vadd.f32 %v9829, %v9830
    %v9832 = vsel %vm4650, %v9756, 0.0
    %v9833 = vadd.f32 %v9831, %v9832
    %v9834 = vsel %vm4650, %v9757, 0.0
    %v9835 = vadd.f32 %v9833, %v9834
    %v9836 = vsel %vm4650, %v9758, 0.0
    %v9837 = vadd.f32 %v9835, %v9836
    %v9838 = vsel %vm4650, %v9759, 0.0
    %v9839 = vadd.f32 %v9837, %v9838
    %v9840 = vsel %vm4650, %v9760, 0.0
    %v9841 = vadd.f32 %v9839, %v9840
    %v9842 = vsel %vm4650, %v9761, 0.0
    %v9843 = vadd.f32 %v9841, %v9842
    %v9844 = vsel %vm4650, %v9762, 0.0
    %v9845 = vadd.f32 %v9843, %v9844
    %v9846 = vsel %vm4650, %v9763, 0.0
    %v9847 = vadd.f32 %v9845, %v9846
    %v9848 = vsel %vm4650, %v9764, 0.0
    %v9849 = vadd.f32 %v9847, %v9848
    %v9850 = vsel %vm4650, %v9765, 0.0
    %v9851 = vadd.f32 %v9849, %v9850
    %v9852 = vsel %vm4650, %v9766, 0.0
    %v9853 = vadd.f32 %v9851, %v9852
    %v9854 = vsel %vm4650, %v9767, 0.0
    %v9855 = vadd.f32 %v9853, %v9854
    %v9856 = vsel %vm4650, %v9768, 0.0
    %v9857 = vadd.f32 %v9855, %v9856
    %v9858 = vsel %vm4650, %v9769, 0.0
    %v9859 = vadd.f32 %v9857, %v9858
    %v9860 = vsel %vm4650, %v9770, 0.0
    %v9861 = vadd.f32 %v9859, %v9860
    %v9862 = vsel %vm4650, %v9771, 0.0
    %v9863 = vadd.f32 %v9861, %v9862
    %v9864 = vsel %vm4650, %v9772, 0.0
    %v9865 = vadd.f32 %v9863, %v9864
    %v9866 = vsel %vm4650, %v9773, 0.0
    %v9867 = vadd.f32 %v9865, %v9866
    %v9868 = vsel %vm4650, %v9774, 0.0
    %v9869 = vadd.f32 %v9867, %v9868
    %v9870 = vsel %vm4650, %v9775, 0.0
    %v9871 = vadd.f32 %v9869, %v9870
    %v9872 = vsel %vm4650, %v9776, 0.0
    %v9873 = vadd.f32 %v9871, %v9872
    %v9874 = vsel %vm4650, %v9777, 0.0
    %v9875 = vadd.f32 %v9873, %v9874
    %v9876 = vsel %vm4650, %v9778, 0.0
    %v9877 = vadd.f32 %v9875, %v9876
    %v9878 = vsel %vm4650, %v9779, 0.0
    %v9879 = vadd.f32 %v9877, %v9878
    %v9880 = vsel %vm4650, %v9780, 0.0
    %v9881 = vadd.f32 %v9879, %v9880
    %v9882 = vsel %vm4650, %v9781, 0.0
    %v9883 = vadd.f32 %v9881, %v9882
    %v9884 = vsel %vm4650, %v9782, 0.0
    %v9885 = vadd.f32 %v9883, %v9884
    %v9886 = vsel %vm4650, %v9783, 0.0
    %v9887 = vadd.f32 %v9885, %v9886
    %v9888 = vsel %vm4650, %v9784, 0.0
    %v9889 = vadd.f32 %v9887, %v9888
    %v9890 = vsel %vm4650, %v9785, 0.0
    %v9891 = vadd.f32 %v9889, %v9890
    %v9892 = vsel %vm4650, %v9786, 0.0
    %v9893 = vadd.f32 %v9891, %v9892
    %v9894 = vsel %vm4650, %v9787, 0.0
    %v9895 = vadd.f32 %v9893, %v9894
    %v9896 = vsel %vm4650, %v9788, 0.0
    %v9897 = vadd.f32 %v9895, %v9896
    %v9898 = vsel %vm4650, %v9789, 0.0
    %v9899 = vadd.f32 %v9897, %v9898
    %v9900 = vsel %vm4650, %v9790, 0.0
    %v9901 = vadd.f32 %v9899, %v9900
    %v9902 = vsel %vm4650, %v9791, 0.0
    %v9903 = vadd.f32 %v9901, %v9902
    %v9904 = vsel %vm4650, %v9792, 0.0
    %v9905 = vadd.f32 %v9903, %v9904
    %v9906 = vsel %vm4650, %v9793, 0.0
    %v9907 = vadd.f32 %v9905, %v9906
    %v9908 = vsel %vm4650, %v9794, 0.0
    %v9909 = vadd.f32 %v9907, %v9908
    %v9910 = vsel %vm4650, %v9795, 0.0
    %v9911 = vadd.f32 %v9909, %v9910
    %v9912 = vsel %vm4650, %v9796, 0.0
    %v9913 = vadd.f32 %v9911, %v9912
    %v9914 = vsel %vm4650, %v9797, 0.0
    %v9915 = vadd.f32 %v9913, %v9914
    %v9916 = vsel %vm4650, %v9798, 0.0
    %v9917 = vadd.f32 %v9915, %v9916
    %v9918 = vsel %vm4650, %v9799, 0.0
    %v9919 = vadd.f32 %v9917, %v9918
    %v9920 = vsel %vm4650, %v9800, 0.0
    %v9921 = vadd.f32 %v9919, %v9920
    %v9922 = vsel %vm4650, %v9801, 0.0
    %v9923 = vadd.f32 %v9921, %v9922
    %v9924 = vsel %vm4650, %v9802, 0.0
    %v9925 = vadd.f32 %v9923, %v9924
    %v9926 = vsel %vm4650, %v9803, 0.0
    %v9927 = vadd.f32 %v9925, %v9926
    %v9928 = vsel %vm4650, %v9804, 0.0
    %v9929 = vadd.f32 %v9927, %v9928
    %v9930 = vsel %vm4650, %v9805, 0.0
    %v9931 = vadd.f32 %v9929, %v9930
    %v9932 = vsel %vm4650, %v9806, 0.0
    %v9933 = vadd.f32 %v9931, %v9932
    %v9934 = vrot.slane %v9933, 4
    %v9935 = vadd.f32 %v9933, %v9934
    %v9936 = vrot.slane %v9935, 2
    %v9937 = vadd.f32 %v9935, %v9936
    %v9938 = vrot.slane %v9937, 1
    %v9939 = vadd.f32 %v9937, %v9938
    %v9940 = vmul.f32 %v9939, %v4790
    %v9941 = vmul.f32 %v9743, %v9743
    %v9942 = vmul.f32 %v9744, %v9744
    %v9943 = vmul.f32 %v9745, %v9745
    %v9944 = vmul.f32 %v9746, %v9746
    %v9945 = vmul.f32 %v9747, %v9747
    %v9946 = vmul.f32 %v9748, %v9748
    %v9947 = vmul.f32 %v9749, %v9749
    %v9948 = vmul.f32 %v9750, %v9750
    %v9949 = vmul.f32 %v9751, %v9751
    %v9950 = vmul.f32 %v9752, %v9752
    %v9951 = vmul.f32 %v9753, %v9753
    %v9952 = vmul.f32 %v9754, %v9754
    %v9953 = vmul.f32 %v9755, %v9755
    %v9954 = vmul.f32 %v9756, %v9756
    %v9955 = vmul.f32 %v9757, %v9757
    %v9956 = vmul.f32 %v9758, %v9758
    %v9957 = vmul.f32 %v9759, %v9759
    %v9958 = vmul.f32 %v9760, %v9760
    %v9959 = vmul.f32 %v9761, %v9761
    %v9960 = vmul.f32 %v9762, %v9762
    %v9961 = vmul.f32 %v9763, %v9763
    %v9962 = vmul.f32 %v9764, %v9764
    %v9963 = vmul.f32 %v9765, %v9765
    %v9964 = vmul.f32 %v9766, %v9766
    %v9965 = vmul.f32 %v9767, %v9767
    %v9966 = vmul.f32 %v9768, %v9768
    %v9967 = vmul.f32 %v9769, %v9769
    %v9968 = vmul.f32 %v9770, %v9770
    %v9969 = vmul.f32 %v9771, %v9771
    %v9970 = vmul.f32 %v9772, %v9772
    %v9971 = vmul.f32 %v9773, %v9773
    %v9972 = vmul.f32 %v9774, %v9774
    %v9973 = vmul.f32 %v9775, %v9775
    %v9974 = vmul.f32 %v9776, %v9776
    %v9975 = vmul.f32 %v9777, %v9777
    %v9976 = vmul.f32 %v9778, %v9778
    %v9977 = vmul.f32 %v9779, %v9779
    %v9978 = vmul.f32 %v9780, %v9780
    %v9979 = vmul.f32 %v9781, %v9781
    %v9980 = vmul.f32 %v9782, %v9782
    %v9981 = vmul.f32 %v9783, %v9783
    %v9982 = vmul.f32 %v9784, %v9784
    %v9983 = vmul.f32 %v9785, %v9785
    %v9984 = vmul.f32 %v9786, %v9786
    %v9985 = vmul.f32 %v9787, %v9787
    %v9986 = vmul.f32 %v9788, %v9788
    %v9987 = vmul.f32 %v9789, %v9789
    %v9988 = vmul.f32 %v9790, %v9790
    %v9989 = vmul.f32 %v9791, %v9791
    %v9990 = vmul.f32 %v9792, %v9792
    %v9991 = vmul.f32 %v9793, %v9793
    %v9992 = vmul.f32 %v9794, %v9794
    %v9993 = vmul.f32 %v9795, %v9795
    %v9994 = vmul.f32 %v9796, %v9796
    %v9995 = vmul.f32 %v9797, %v9797
    %v9996 = vmul.f32 %v9798, %v9798
    %v9997 = vmul.f32 %v9799, %v9799
    %v9998 = vmul.f32 %v9800, %v9800
    %v9999 = vmul.f32 %v9801, %v9801
    %v10000 = vmul.f32 %v9802, %v9802
    %v10001 = vmul.f32 %v9803, %v9803
    %v10002 = vmul.f32 %v9804, %v9804
    %v10003 = vmul.f32 %v9805, %v9805
    %v10004 = vmul.f32 %v9806, %v9806
    %v10005 = vsel %vm4650, %v9941, 0.0
    %v10006 = vsel %vm4650, %v9942, 0.0
    %v10007 = vadd.f32 %v10005, %v10006
    %v10008 = vsel %vm4650, %v9943, 0.0
    %v10009 = vadd.f32 %v10007, %v10008
    %v10010 = vsel %vm4650, %v9944, 0.0
    %v10011 = vadd.f32 %v10009, %v10010
    %v10012 = vsel %vm4650, %v9945, 0.0
    %v10013 = vadd.f32 %v10011, %v10012
    %v10014 = vsel %vm4650, %v9946, 0.0
    %v10015 = vadd.f32 %v10013, %v10014
    %v10016 = vsel %vm4650, %v9947, 0.0
    %v10017 = vadd.f32 %v10015, %v10016
    %v10018 = vsel %vm4650, %v9948, 0.0
    %v10019 = vadd.f32 %v10017, %v10018
    %v10020 = vsel %vm4650, %v9949, 0.0
    %v10021 = vadd.f32 %v10019, %v10020
    %v10022 = vsel %vm4650, %v9950, 0.0
    %v10023 = vadd.f32 %v10021, %v10022
    %v10024 = vsel %vm4650, %v9951, 0.0
    %v10025 = vadd.f32 %v10023, %v10024
    %v10026 = vsel %vm4650, %v9952, 0.0
    %v10027 = vadd.f32 %v10025, %v10026
    %v10028 = vsel %vm4650, %v9953, 0.0
    %v10029 = vadd.f32 %v10027, %v10028
    %v10030 = vsel %vm4650, %v9954, 0.0
    %v10031 = vadd.f32 %v10029, %v10030
    %v10032 = vsel %vm4650, %v9955, 0.0
    %v10033 = vadd.f32 %v10031, %v10032
    %v10034 = vsel %vm4650, %v9956, 0.0
    %v10035 = vadd.f32 %v10033, %v10034
    %v10036 = vsel %vm4650, %v9957, 0.0
    %v10037 = vadd.f32 %v10035, %v10036
    %v10038 = vsel %vm4650, %v9958, 0.0
    %v10039 = vadd.f32 %v10037, %v10038
    %v10040 = vsel %vm4650, %v9959, 0.0
    %v10041 = vadd.f32 %v10039, %v10040
    %v10042 = vsel %vm4650, %v9960, 0.0
    %v10043 = vadd.f32 %v10041, %v10042
    %v10044 = vsel %vm4650, %v9961, 0.0
    %v10045 = vadd.f32 %v10043, %v10044
    %v10046 = vsel %vm4650, %v9962, 0.0
    %v10047 = vadd.f32 %v10045, %v10046
    %v10048 = vsel %vm4650, %v9963, 0.0
    %v10049 = vadd.f32 %v10047, %v10048
    %v10050 = vsel %vm4650, %v9964, 0.0
    %v10051 = vadd.f32 %v10049, %v10050
    %v10052 = vsel %vm4650, %v9965, 0.0
    %v10053 = vadd.f32 %v10051, %v10052
    %v10054 = vsel %vm4650, %v9966, 0.0
    %v10055 = vadd.f32 %v10053, %v10054
    %v10056 = vsel %vm4650, %v9967, 0.0
    %v10057 = vadd.f32 %v10055, %v10056
    %v10058 = vsel %vm4650, %v9968, 0.0
    %v10059 = vadd.f32 %v10057, %v10058
    %v10060 = vsel %vm4650, %v9969, 0.0
    %v10061 = vadd.f32 %v10059, %v10060
    %v10062 = vsel %vm4650, %v9970, 0.0
    %v10063 = vadd.f32 %v10061, %v10062
    %v10064 = vsel %vm4650, %v9971, 0.0
    %v10065 = vadd.f32 %v10063, %v10064
    %v10066 = vsel %vm4650, %v9972, 0.0
    %v10067 = vadd.f32 %v10065, %v10066
    %v10068 = vsel %vm4650, %v9973, 0.0
    %v10069 = vadd.f32 %v10067, %v10068
    %v10070 = vsel %vm4650, %v9974, 0.0
    %v10071 = vadd.f32 %v10069, %v10070
    %v10072 = vsel %vm4650, %v9975, 0.0
    %v10073 = vadd.f32 %v10071, %v10072
    %v10074 = vsel %vm4650, %v9976, 0.0
    %v10075 = vadd.f32 %v10073, %v10074
    %v10076 = vsel %vm4650, %v9977, 0.0
    %v10077 = vadd.f32 %v10075, %v10076
    %v10078 = vsel %vm4650, %v9978, 0.0
    %v10079 = vadd.f32 %v10077, %v10078
    %v10080 = vsel %vm4650, %v9979, 0.0
    %v10081 = vadd.f32 %v10079, %v10080
    %v10082 = vsel %vm4650, %v9980, 0.0
    %v10083 = vadd.f32 %v10081, %v10082
    %v10084 = vsel %vm4650, %v9981, 0.0
    %v10085 = vadd.f32 %v10083, %v10084
    %v10086 = vsel %vm4650, %v9982, 0.0
    %v10087 = vadd.f32 %v10085, %v10086
    %v10088 = vsel %vm4650, %v9983, 0.0
    %v10089 = vadd.f32 %v10087, %v10088
    %v10090 = vsel %vm4650, %v9984, 0.0
    %v10091 = vadd.f32 %v10089, %v10090
    %v10092 = vsel %vm4650, %v9985, 0.0
    %v10093 = vadd.f32 %v10091, %v10092
    %v10094 = vsel %vm4650, %v9986, 0.0
    %v10095 = vadd.f32 %v10093, %v10094
    %v10096 = vsel %vm4650, %v9987, 0.0
    %v10097 = vadd.f32 %v10095, %v10096
    %v10098 = vsel %vm4650, %v9988, 0.0
    %v10099 = vadd.f32 %v10097, %v10098
    %v10100 = vsel %vm4650, %v9989, 0.0
    %v10101 = vadd.f32 %v10099, %v10100
    %v10102 = vsel %vm4650, %v9990, 0.0
    %v10103 = vadd.f32 %v10101, %v10102
    %v10104 = vsel %vm4650, %v9991, 0.0
    %v10105 = vadd.f32 %v10103, %v10104
    %v10106 = vsel %vm4650, %v9992, 0.0
    %v10107 = vadd.f32 %v10105, %v10106
    %v10108 = vsel %vm4650, %v9993, 0.0
    %v10109 = vadd.f32 %v10107, %v10108
    %v10110 = vsel %vm4650, %v9994, 0.0
    %v10111 = vadd.f32 %v10109, %v10110
    %v10112 = vsel %vm4650, %v9995, 0.0
    %v10113 = vadd.f32 %v10111, %v10112
    %v10114 = vsel %vm4650, %v9996, 0.0
    %v10115 = vadd.f32 %v10113, %v10114
    %v10116 = vsel %vm4650, %v9997, 0.0
    %v10117 = vadd.f32 %v10115, %v10116
    %v10118 = vsel %vm4650, %v9998, 0.0
    %v10119 = vadd.f32 %v10117, %v10118
    %v10120 = vsel %vm4650, %v9999, 0.0
    %v10121 = vadd.f32 %v10119, %v10120
    %v10122 = vsel %vm4650, %v10000, 0.0
    %v10123 = vadd.f32 %v10121, %v10122
    %v10124 = vsel %vm4650, %v10001, 0.0
    %v10125 = vadd.f32 %v10123, %v10124
    %v10126 = vsel %vm4650, %v10002, 0.0
    %v10127 = vadd.f32 %v10125, %v10126
    %v10128 = vsel %vm4650, %v10003, 0.0
    %v10129 = vadd.f32 %v10127, %v10128
    %v10130 = vsel %vm4650, %v10004, 0.0
    %v10131 = vadd.f32 %v10129, %v10130
    %v10132 = vrot.slane %v10131, 4
    %v10133 = vadd.f32 %v10131, %v10132
    %v10134 = vrot.slane %v10133, 2
    %v10135 = vadd.f32 %v10133, %v10134
    %v10136 = vrot.slane %v10135, 1
    %v10137 = vadd.f32 %v10135, %v10136
    %v10138 = vmul.f32 %v10137, %v4790
    %v10139 = vmul.f32 %v9940, %v9940
    %v10140 = vsub.f32 %v10138, %v10139
    %v10141 = vadd.f32 %v10140, 1e-05
    %v10142 = vrsqrt.pop %v10141
    %v10143 = vmul.f32 %v10142, %v10141
    %v10144 = vmul.f32 %v10143, %v10142
    %v10145 = vmul.f32 0.5, %v10144
    %v10146 = vsub.f32 1.5, %v10145
    %v10147 = vmul.f32 %v10142, %v10146
    %vm10148 = vweird.f32 %v10141
    %vm10149 = vweird.f32 %v10142
    %vm10150 = vmor %vm10148, %vm10149
    %v10151 = vsel %vm10150, %v10142, %v10147
    %v10152 = vld [vmem:[%s10] sm:$0x1]
    %v10153 = vmul.f32 %v10151, %v10152
    %v10154 = vld [vmem:[%s11] sm:$0x1]
    %v10155 = vmul.f32 %v9940, %v10153
    %v10156 = vsub.f32 %v10154, %v10155
    %v10157 = vperm.slane %v10153, 0
    %v10158 = vmul.f32 %v9743, %v10157
    %v10159 = vmul.f32 %v9744, %v10157
    %v10160 = vmul.f32 %v9745, %v10157
    %v10161 = vmul.f32 %v9746, %v10157
    %v10162 = vmul.f32 %v9747, %v10157
    %v10163 = vmul.f32 %v9748, %v10157
    %v10164 = vmul.f32 %v9749, %v10157
    %v10165 = vmul.f32 %v9750, %v10157
    %v10166 = vmul.f32 %v9751, %v10157
    %v10167 = vmul.f32 %v9752, %v10157
    %v10168 = vmul.f32 %v9753, %v10157
    %v10169 = vmul.f32 %v9754, %v10157
    %v10170 = vmul.f32 %v9755, %v10157
    %v10171 = vmul.f32 %v9756, %v10157
    %v10172 = vmul.f32 %v9757, %v10157
    %v10173 = vmul.f32 %v9758, %v10157
    %v10174 = vmul.f32 %v9759, %v10157
    %v10175 = vmul.f32 %v9760, %v10157
    %v10176 = vmul.f32 %v9761, %v10157
    %v10177 = vmul.f32 %v9762, %v10157
    %v10178 = vmul.f32 %v9763, %v10157
    %v10179 = vmul.f32 %v9764, %v10157
    %v10180 = vmul.f32 %v9765, %v10157
    %v10181 = vmul.f32 %v9766, %v10157
    %v10182 = vmul.f32 %v9767, %v10157
    %v10183 = vmul.f32 %v9768, %v10157
    %v10184 = vmul.f32 %v9769, %v10157
    %v10185 = vmul.f32 %v9770, %v10157
    %v10186 = vmul.f32 %v9771, %v10157
    %v10187 = vmul.f32 %v9772, %v10157
    %v10188 = vmul.f32 %v9773, %v10157
    %v10189 = vmul.f32 %v9774, %v10157
    %v10190 = vmul.f32 %v9775, %v10157
    %v10191 = vmul.f32 %v9776, %v10157
    %v10192 = vmul.f32 %v9777, %v10157
    %v10193 = vmul.f32 %v9778, %v10157
    %v10194 = vmul.f32 %v9779, %v10157
    %v10195 = vmul.f32 %v9780, %v10157
    %v10196 = vmul.f32 %v9781, %v10157
    %v10197 = vmul.f32 %v9782, %v10157
    %v10198 = vmul.f32 %v9783, %v10157
    %v10199 = vmul.f32 %v9784, %v10157
    %v10200 = vmul.f32 %v9785, %v10157
    %v10201 = vmul.f32 %v9786, %v10157
    %v10202 = vmul.f32 %v9787, %v10157
    %v10203 = vmul.f32 %v9788, %v10157
    %v10204 = vmul.f32 %v9789, %v10157
    %v10205 = vmul.f32 %v9790, %v10157
    %v10206 = vmul.f32 %v9791, %v10157
    %v10207 = vmul.f32 %v9792, %v10157
    %v10208 = vmul.f32 %v9793, %v10157
    %v10209 = vmul.f32 %v9794, %v10157
    %v10210 = vmul.f32 %v9795, %v10157
    %v10211 = vmul.f32 %v9796, %v10157
    %v10212 = vmul.f32 %v9797, %v10157
    %v10213 = vmul.f32 %v9798, %v10157
    %v10214 = vmul.f32 %v9799, %v10157
    %v10215 = vmul.f32 %v9800, %v10157
    %v10216 = vmul.f32 %v9801, %v10157
    %v10217 = vmul.f32 %v9802, %v10157
    %v10218 = vmul.f32 %v9803, %v10157
    %v10219 = vmul.f32 %v9804, %v10157
    %v10220 = vmul.f32 %v9805, %v10157
    %v10221 = vmul.f32 %v9806, %v10157
    %v10223 = vperm.slane %v10156, 0
    %v10225 = vadd.f32 %v10158, %v10223
    %v10226 = vadd.f32 %v10159, %v10223
    %v10227 = vadd.f32 %v10160, %v10223
    %v10228 = vadd.f32 %v10161, %v10223
    %v10229 = vadd.f32 %v10162, %v10223
    %v10230 = vadd.f32 %v10163, %v10223
    %v10231 = vadd.f32 %v10164, %v10223
    %v10232 = vadd.f32 %v10165, %v10223
    %v10233 = vadd.f32 %v10166, %v10223
    %v10234 = vadd.f32 %v10167, %v10223
    %v10235 = vadd.f32 %v10168, %v10223
    %v10236 = vadd.f32 %v10169, %v10223
    %v10237 = vadd.f32 %v10170, %v10223
    %v10238 = vadd.f32 %v10171, %v10223
    %v10239 = vadd.f32 %v10172, %v10223
    %v10240 = vadd.f32 %v10173, %v10223
    %v10241 = vadd.f32 %v10174, %v10223
    %v10242 = vadd.f32 %v10175, %v10223
    %v10243 = vadd.f32 %v10176, %v10223
    %v10244 = vadd.f32 %v10177, %v10223
    %v10245 = vadd.f32 %v10178, %v10223
    %v10246 = vadd.f32 %v10179, %v10223
    %v10247 = vadd.f32 %v10180, %v10223
    %v10248 = vadd.f32 %v10181, %v10223
    %v10249 = vadd.f32 %v10182, %v10223
    %v10250 = vadd.f32 %v10183, %v10223
    %v10251 = vadd.f32 %v10184, %v10223
    %v10252 = vadd.f32 %v10185, %v10223
    %v10253 = vadd.f32 %v10186, %v10223
    %v10254 = vadd.f32 %v10187, %v10223
    %v10255 = vadd.f32 %v10188, %v10223
    %v10256 = vadd.f32 %v10189, %v10223
    %v10257 = vadd.f32 %v10190, %v10223
    %v10258 = vadd.f32 %v10191, %v10223
    %v10259 = vadd.f32 %v10192, %v10223
    %v10260 = vadd.f32 %v10193, %v10223
    %v10261 = vadd.f32 %v10194, %v10223
    %v10262 = vadd.f32 %v10195, %v10223
    %v10263 = vadd.f32 %v10196, %v10223
    %v10264 = vadd.f32 %v10197, %v10223
    %v10265 = vadd.f32 %v10198, %v10223
    %v10266 = vadd.f32 %v10199, %v10223
    %v10267 = vadd.f32 %v10200, %v10223
    %v10268 = vadd.f32 %v10201, %v10223
    %v10269 = vadd.f32 %v10202, %v10223
    %v10270 = vadd.f32 %v10203, %v10223
    %v10271 = vadd.f32 %v10204, %v10223
    %v10272 = vadd.f32 %v10205, %v10223
    %v10273 = vadd.f32 %v10206, %v10223
    %v10274 = vadd.f32 %v10207, %v10223
    %v10275 = vadd.f32 %v10208, %v10223
    %v10276 = vadd.f32 %v10209, %v10223
    %v10277 = vadd.f32 %v10210, %v10223
    %v10278 = vadd.f32 %v10211, %v10223
    %v10279 = vadd.f32 %v10212, %v10223
    %v10280 = vadd.f32 %v10213, %v10223
    %v10281 = vadd.f32 %v10214, %v10223
    %v10282 = vadd.f32 %v10215, %v10223
    %v10283 = vadd.f32 %v10216, %v10223
    %v10284 = vadd.f32 %v10217, %v10223
    %v10285 = vadd.f32 %v10218, %v10223
    %v10286 = vadd.f32 %v10219, %v10223
    %v10287 = vadd.f32 %v10220, %v10223
    %v10288 = vadd.f32 %v10221, %v10223
    %v10289 = vmax.f32 %v10225, %v10227
    %v10290 = vmax.f32 %v10226, %v10228
    %v10291 = vmax.f32 %v10229, %v10231
    %v10292 = vmax.f32 %v10230, %v10232
    %v10293 = vmax.f32 %v10233, %v10235
    %v10294 = vmax.f32 %v10234, %v10236
    %v10295 = vmax.f32 %v10237, %v10239
    %v10296 = vmax.f32 %v10238, %v10240
    %v10297 = vmax.f32 %v10241, %v10243
    %v10298 = vmax.f32 %v10242, %v10244
    %v10299 = vmax.f32 %v10245, %v10247
    %v10300 = vmax.f32 %v10246, %v10248
    %v10301 = vmax.f32 %v10249, %v10251
    %v10302 = vmax.f32 %v10250, %v10252
    %v10303 = vmax.f32 %v10253, %v10255
    %v10304 = vmax.f32 %v10254, %v10256
    %v10305 = vmax.f32 %v10257, %v10259
    %v10306 = vmax.f32 %v10258, %v10260
    %v10307 = vmax.f32 %v10261, %v10263
    %v10308 = vmax.f32 %v10262, %v10264
    %v10309 = vmax.f32 %v10265, %v10267
    %v10310 = vmax.f32 %v10266, %v10268
    %v10311 = vmax.f32 %v10269, %v10271
    %v10312 = vmax.f32 %v10270, %v10272
    %v10313 = vmax.f32 %v10273, %v10275
    %v10314 = vmax.f32 %v10274, %v10276
    %v10315 = vmax.f32 %v10277, %v10279
    %v10316 = vmax.f32 %v10278, %v10280
    %v10317 = vmax.f32 %v10281, %v10283
    %v10318 = vmax.f32 %v10282, %v10284
    %v10319 = vmax.f32 %v10285, %v10287
    %v10320 = vmax.f32 %v10286, %v10288
    %v10321 = vlaneseq
    %v10322 = vshrl.u32 %v10321, 7
    %v10323 = vadd.s32 %v10322, 8
    %v10324 = vadd.s32 %v10322, 16
    %v10325 = vadd.s32 %v10322, 24
    %v10326 = vadd.s32 %v10322, 32
    %v10327 = vadd.s32 %v10322, 40
    %v10328 = vadd.s32 %v10322, 48
    %v10329 = vadd.s32 %v10322, 56
    %v10330 = vadd.s32 %v10322, 64
    %v10331 = vadd.s32 %v10322, 72
    %v10332 = vadd.s32 %v10322, 80
    %v10333 = vadd.s32 %v10322, 88
    %v10334 = vadd.s32 %v10322, 96
    %v10335 = vadd.s32 %v10322, 104
    %v10336 = vadd.s32 %v10322, 112
    %v10337 = vadd.s32 %v10322, 120
    %v10338 = vadd.s32 %v10322, 128
    %v10339 = vadd.s32 %v10322, 136
    %v10340 = vadd.s32 %v10322, 144
    %v10341 = vadd.s32 %v10322, 152
    %v10342 = vadd.s32 %v10322, 160
    %v10343 = vadd.s32 %v10322, 168
    %v10344 = vadd.s32 %v10322, 176
    %v10345 = vadd.s32 %v10322, 184
    %v10346 = vadd.s32 %v10322, 192
    %v10347 = vadd.s32 %v10322, 200
    %v10348 = vadd.s32 %v10322, 208
    %v10349 = vadd.s32 %v10322, 216
    %v10350 = vadd.s32 %v10322, 224
    %v10351 = vadd.s32 %v10322, 232
    %v10352 = vadd.s32 %v10322, 240
    %v10353 = vadd.s32 %v10322, 248
    %v10354 = vlaneseq
    %v10355 = vand.u32 %v10354, 127
    %v10356 = vmul.u32 %v10355, 2
    %vm10357 = vcmp.eq.s32.totalorder %v10322, %v10356
    %vm10358 = vcmp.eq.s32.totalorder %v10323, %v10356
    %vm10359 = vcmp.eq.s32.totalorder %v10324, %v10356
    %vm10360 = vcmp.eq.s32.totalorder %v10325, %v10356
    %vm10361 = vcmp.eq.s32.totalorder %v10326, %v10356
    %vm10362 = vcmp.eq.s32.totalorder %v10327, %v10356
    %vm10363 = vcmp.eq.s32.totalorder %v10328, %v10356
    %vm10364 = vcmp.eq.s32.totalorder %v10329, %v10356
    %vm10365 = vcmp.eq.s32.totalorder %v10330, %v10356
    %vm10366 = vcmp.eq.s32.totalorder %v10331, %v10356
    %vm10367 = vcmp.eq.s32.totalorder %v10332, %v10356
    %vm10368 = vcmp.eq.s32.totalorder %v10333, %v10356
    %vm10369 = vcmp.eq.s32.totalorder %v10334, %v10356
    %vm10370 = vcmp.eq.s32.totalorder %v10335, %v10356
    %vm10371 = vcmp.eq.s32.totalorder %v10336, %v10356
    %vm10372 = vcmp.eq.s32.totalorder %v10337, %v10356
    %vm10373 = vcmp.eq.s32.totalorder %v10338, %v10356
    %vm10374 = vcmp.eq.s32.totalorder %v10339, %v10356
    %vm10375 = vcmp.eq.s32.totalorder %v10340, %v10356
    %vm10376 = vcmp.eq.s32.totalorder %v10341, %v10356
    %vm10377 = vcmp.eq.s32.totalorder %v10342, %v10356
    %vm10378 = vcmp.eq.s32.totalorder %v10343, %v10356
    %vm10379 = vcmp.eq.s32.totalorder %v10344, %v10356
    %vm10380 = vcmp.eq.s32.totalorder %v10345, %v10356
    %vm10381 = vcmp.eq.s32.totalorder %v10346, %v10356
    %vm10382 = vcmp.eq.s32.totalorder %v10347, %v10356
    %vm10383 = vcmp.eq.s32.totalorder %v10348, %v10356
    %vm10384 = vcmp.eq.s32.totalorder %v10349, %v10356
    %vm10385 = vcmp.eq.s32.totalorder %v10350, %v10356
    %vm10386 = vcmp.eq.s32.totalorder %v10351, %v10356
    %vm10387 = vcmp.eq.s32.totalorder %v10352, %v10356
    %vm10388 = vcmp.eq.s32.totalorder %v10353, %v10356
    %v10389 = vsel %vm10357, 1, 0
    %v10390 = vsel %vm10358, 1, 0
    %v10391 = vsel %vm10359, 1, 0
    %v10392 = vsel %vm10360, 1, 0
    %v10393 = vsel %vm10361, 1, 0
    %v10394 = vsel %vm10362, 1, 0
    %v10395 = vsel %vm10363, 1, 0
    %v10396 = vsel %vm10364, 1, 0
    %v10397 = vsel %vm10365, 1, 0
    %v10398 = vsel %vm10366, 1, 0
    %v10399 = vsel %vm10367, 1, 0
    %v10400 = vsel %vm10368, 1, 0
    %v10401 = vsel %vm10369, 1, 0
    %v10402 = vsel %vm10370, 1, 0
    %v10403 = vsel %vm10371, 1, 0
    %v10404 = vsel %vm10372, 1, 0
    %v10405 = vsel %vm10373, 1, 0
    %v10406 = vsel %vm10374, 1, 0
    %v10407 = vsel %vm10375, 1, 0
    %v10408 = vsel %vm10376, 1, 0
    %v10409 = vsel %vm10377, 1, 0
    %v10410 = vsel %vm10378, 1, 0
    %v10411 = vsel %vm10379, 1, 0
    %v10412 = vsel %vm10380, 1, 0
    %v10413 = vsel %vm10381, 1, 0
    %v10414 = vsel %vm10382, 1, 0
    %v10415 = vsel %vm10383, 1, 0
    %v10416 = vsel %vm10384, 1, 0
    %v10417 = vsel %vm10385, 1, 0
    %v10418 = vsel %vm10386, 1, 0
    %v10419 = vsel %vm10387, 1, 0
    %v10420 = vsel %vm10388, 1, 0
    %v10421 = vcvt.s32.f32 %v10389
    %v10422 = vcvt.s32.f32 %v10390
    %v10423 = vcvt.s32.f32 %v10391
    %v10424 = vcvt.s32.f32 %v10392
    %v10425 = vcvt.s32.f32 %v10393
    %v10426 = vcvt.s32.f32 %v10394
    %v10427 = vcvt.s32.f32 %v10395
    %v10428 = vcvt.s32.f32 %v10396
    %v10429 = vcvt.s32.f32 %v10397
    %v10430 = vcvt.s32.f32 %v10398
    %v10431 = vcvt.s32.f32 %v10399
    %v10432 = vcvt.s32.f32 %v10400
    %v10433 = vcvt.s32.f32 %v10401
    %v10434 = vcvt.s32.f32 %v10402
    %v10435 = vcvt.s32.f32 %v10403
    %v10436 = vcvt.s32.f32 %v10404
    %v10437 = vcvt.s32.f32 %v10405
    %v10438 = vcvt.s32.f32 %v10406
    %v10439 = vcvt.s32.f32 %v10407
    %v10440 = vcvt.s32.f32 %v10408
    %v10441 = vcvt.s32.f32 %v10409
    %v10442 = vcvt.s32.f32 %v10410
    %v10443 = vcvt.s32.f32 %v10411
    %v10444 = vcvt.s32.f32 %v10412
    %v10445 = vcvt.s32.f32 %v10413
    %v10446 = vcvt.s32.f32 %v10414
    %v10447 = vcvt.s32.f32 %v10415
    %v10448 = vcvt.s32.f32 %v10416
    %v10449 = vcvt.s32.f32 %v10417
    %v10450 = vcvt.s32.f32 %v10418
    %v10451 = vcvt.s32.f32 %v10419
    %v10452 = vcvt.s32.f32 %v10420
    %v10453 = vadd.s32 %v10356, 1
    %vm10454 = vcmp.eq.s32.totalorder %v10322, %v10453
    %vm10455 = vcmp.eq.s32.totalorder %v10323, %v10453
    %vm10456 = vcmp.eq.s32.totalorder %v10324, %v10453
    %vm10457 = vcmp.eq.s32.totalorder %v10325, %v10453
    %vm10458 = vcmp.eq.s32.totalorder %v10326, %v10453
    %vm10459 = vcmp.eq.s32.totalorder %v10327, %v10453
    %vm10460 = vcmp.eq.s32.totalorder %v10328, %v10453
    %vm10461 = vcmp.eq.s32.totalorder %v10329, %v10453
    %vm10462 = vcmp.eq.s32.totalorder %v10330, %v10453
    %vm10463 = vcmp.eq.s32.totalorder %v10331, %v10453
    %vm10464 = vcmp.eq.s32.totalorder %v10332, %v10453
    %vm10465 = vcmp.eq.s32.totalorder %v10333, %v10453
    %vm10466 = vcmp.eq.s32.totalorder %v10334, %v10453
    %vm10467 = vcmp.eq.s32.totalorder %v10335, %v10453
    %vm10468 = vcmp.eq.s32.totalorder %v10336, %v10453
    %vm10469 = vcmp.eq.s32.totalorder %v10337, %v10453
    %vm10470 = vcmp.eq.s32.totalorder %v10338, %v10453
    %vm10471 = vcmp.eq.s32.totalorder %v10339, %v10453
    %vm10472 = vcmp.eq.s32.totalorder %v10340, %v10453
    %vm10473 = vcmp.eq.s32.totalorder %v10341, %v10453
    %vm10474 = vcmp.eq.s32.totalorder %v10342, %v10453
    %vm10475 = vcmp.eq.s32.totalorder %v10343, %v10453
    %vm10476 = vcmp.eq.s32.totalorder %v10344, %v10453
    %vm10477 = vcmp.eq.s32.totalorder %v10345, %v10453
    %vm10478 = vcmp.eq.s32.totalorder %v10346, %v10453
    %vm10479 = vcmp.eq.s32.totalorder %v10347, %v10453
    %vm10480 = vcmp.eq.s32.totalorder %v10348, %v10453
    %vm10481 = vcmp.eq.s32.totalorder %v10349, %v10453
    %vm10482 = vcmp.eq.s32.totalorder %v10350, %v10453
    %vm10483 = vcmp.eq.s32.totalorder %v10351, %v10453
    %vm10484 = vcmp.eq.s32.totalorder %v10352, %v10453
    %vm10485 = vcmp.eq.s32.totalorder %v10353, %v10453
    %v10486 = vsel %vm10454, 1, 0
    %v10487 = vsel %vm10455, 1, 0
    %v10488 = vsel %vm10456, 1, 0
    %v10489 = vsel %vm10457, 1, 0
    %v10490 = vsel %vm10458, 1, 0
    %v10491 = vsel %vm10459, 1, 0
    %v10492 = vsel %vm10460, 1, 0
    %v10493 = vsel %vm10461, 1, 0
    %v10494 = vsel %vm10462, 1, 0
    %v10495 = vsel %vm10463, 1, 0
    %v10496 = vsel %vm10464, 1, 0
    %v10497 = vsel %vm10465, 1, 0
    %v10498 = vsel %vm10466, 1, 0
    %v10499 = vsel %vm10467, 1, 0
    %v10500 = vsel %vm10468, 1, 0
    %v10501 = vsel %vm10469, 1, 0
    %v10502 = vsel %vm10470, 1, 0
    %v10503 = vsel %vm10471, 1, 0
    %v10504 = vsel %vm10472, 1, 0
    %v10505 = vsel %vm10473, 1, 0
    %v10506 = vsel %vm10474, 1, 0
    %v10507 = vsel %vm10475, 1, 0
    %v10508 = vsel %vm10476, 1, 0
    %v10509 = vsel %vm10477, 1, 0
    %v10510 = vsel %vm10478, 1, 0
    %v10511 = vsel %vm10479, 1, 0
    %v10512 = vsel %vm10480, 1, 0
    %v10513 = vsel %vm10481, 1, 0
    %v10514 = vsel %vm10482, 1, 0
    %v10515 = vsel %vm10483, 1, 0
    %v10516 = vsel %vm10484, 1, 0
    %v10517 = vsel %vm10485, 1, 0
    %v10518 = vcvt.s32.f32 %v10486
    %v10519 = vcvt.s32.f32 %v10487
    %v10520 = vcvt.s32.f32 %v10488
    %v10521 = vcvt.s32.f32 %v10489
    %v10522 = vcvt.s32.f32 %v10490
    %v10523 = vcvt.s32.f32 %v10491
    %v10524 = vcvt.s32.f32 %v10492
    %v10525 = vcvt.s32.f32 %v10493
    %v10526 = vcvt.s32.f32 %v10494
    %v10527 = vcvt.s32.f32 %v10495
    %v10528 = vcvt.s32.f32 %v10496
    %v10529 = vcvt.s32.f32 %v10497
    %v10530 = vcvt.s32.f32 %v10498
    %v10531 = vcvt.s32.f32 %v10499
    %v10532 = vcvt.s32.f32 %v10500
    %v10533 = vcvt.s32.f32 %v10501
    %v10534 = vcvt.s32.f32 %v10502
    %v10535 = vcvt.s32.f32 %v10503
    %v10536 = vcvt.s32.f32 %v10504
    %v10537 = vcvt.s32.f32 %v10505
    %v10538 = vcvt.s32.f32 %v10506
    %v10539 = vcvt.s32.f32 %v10507
    %v10540 = vcvt.s32.f32 %v10508
    %v10541 = vcvt.s32.f32 %v10509
    %v10542 = vcvt.s32.f32 %v10510
    %v10543 = vcvt.s32.f32 %v10511
    %v10544 = vcvt.s32.f32 %v10512
    %v10545 = vcvt.s32.f32 %v10513
    %v10546 = vcvt.s32.f32 %v10514
    %v10547 = vcvt.s32.f32 %v10515
    %v10548 = vcvt.s32.f32 %v10516
    %v10549 = vcvt.s32.f32 %v10517
    %10550 = vxpose.xlu0.b32.start [1/16] %v10289, 128
    %10551 = vxpose.xlu0.b32.cont [2/16] %v10290, 128
    %10552 = vxpose.xlu0.b32.cont [3/16] %v10291, 128
    %10553 = vxpose.xlu0.b32.cont [4/16] %v10292, 128
    %10554 = vxpose.xlu0.b32.cont [5/16] %v10293, 128
    %10555 = vxpose.xlu0.b32.cont [6/16] %v10294, 128
    %10556 = vxpose.xlu0.b32.cont [7/16] %v10295, 128
    %10557 = vxpose.xlu0.b32.cont [8/16] %v10296, 128
    %10558 = vxpose.xlu0.b32.cont [9/16] %v10297, 128
    %10559 = vxpose.xlu0.b32.cont [10/16] %v10298, 128
    %10560 = vxpose.xlu0.b32.cont [11/16] %v10299, 128
    %10561 = vxpose.xlu0.b32.cont [12/16] %v10300, 128
    %10562 = vxpose.xlu0.b32.cont [13/16] %v10301, 128
    %10563 = vxpose.xlu0.b32.cont [14/16] %v10302, 128
    %10564 = vxpose.xlu0.b32.cont [15/16] %v10303, 128
    %10565 = vxpose.xlu0.b32.end [16/16] %v10304, 128
    %v10566 = vpop.trf.xlu0
    %v10567 = vpop.trf.xlu0
    %v10568 = vpop.trf.xlu0
    %v10569 = vpop.trf.xlu0
    %v10570 = vpop.trf.xlu0
    %v10571 = vpop.trf.xlu0
    %v10572 = vpop.trf.xlu0
    %v10573 = vpop.trf.xlu0
    %v10574 = vpop.trf.xlu0
    %v10575 = vpop.trf.xlu0
    %v10576 = vpop.trf.xlu0
    %v10577 = vpop.trf.xlu0
    %v10578 = vpop.trf.xlu0
    %v10579 = vpop.trf.xlu0
    %v10580 = vpop.trf.xlu0
    %v10581 = vpop.trf.xlu0
    %10582 = vxpose.xlu0.b32.start [1/16] %v10305, 128
    %10583 = vxpose.xlu0.b32.cont [2/16] %v10306, 128
    %10584 = vxpose.xlu0.b32.cont [3/16] %v10307, 128
    %10585 = vxpose.xlu0.b32.cont [4/16] %v10308, 128
    %10586 = vxpose.xlu0.b32.cont [5/16] %v10309, 128
    %10587 = vxpose.xlu0.b32.cont [6/16] %v10310, 128
    %10588 = vxpose.xlu0.b32.cont [7/16] %v10311, 128
    %10589 = vxpose.xlu0.b32.cont [8/16] %v10312, 128
    %10590 = vxpose.xlu0.b32.cont [9/16] %v10313, 128
    %10591 = vxpose.xlu0.b32.cont [10/16] %v10314, 128
    %10592 = vxpose.xlu0.b32.cont [11/16] %v10315, 128
    %10593 = vxpose.xlu0.b32.cont [12/16] %v10316, 128
    %10594 = vxpose.xlu0.b32.cont [13/16] %v10317, 128
    %10595 = vxpose.xlu0.b32.cont [14/16] %v10318, 128
    %10596 = vxpose.xlu0.b32.cont [15/16] %v10319, 128
    %10597 = vxpose.xlu0.b32.end [16/16] %v10320, 128
    %v10598 = vpop.trf.xlu0
    %v10599 = vpop.trf.xlu0
    %v10600 = vpop.trf.xlu0
    %v10601 = vpop.trf.xlu0
    %v10602 = vpop.trf.xlu0
    %v10603 = vpop.trf.xlu0
    %v10604 = vpop.trf.xlu0
    %v10605 = vpop.trf.xlu0
    %v10606 = vpop.trf.xlu0
    %v10607 = vpop.trf.xlu0
    %v10608 = vpop.trf.xlu0
    %v10609 = vpop.trf.xlu0
    %v10610 = vpop.trf.xlu0
    %v10611 = vpop.trf.xlu0
    %v10612 = vpop.trf.xlu0
    %v10613 = vpop.trf.xlu0
    %10614 = vmatpush.msra.mxu0 %v10436
    %10615 = vmatpush.msra.mxu0 %v10435
    %10616 = vmatpush.msra.mxu0 %v10434
    %10617 = vmatpush.msra.mxu0 %v10433
    %10618 = vmatpush.msra.mxu0 %v10432
    %10619 = vmatpush.msra.mxu0 %v10431
    %10620 = vmatpush.msra.mxu0 %v10430
    %10621 = vmatpush.msra.mxu0 %v10429
    %10622 = vmatpush.msra.mxu0 %v10428
    %10623 = vmatpush.msra.mxu0 %v10427
    %10624 = vmatpush.msra.mxu0 %v10426
    %10625 = vmatpush.msra.mxu0 %v10425
    %10626 = vmatpush.msra.mxu0 %v10424
    %10627 = vmatpush.msra.mxu0 %v10423
    %10628 = vmatpush.msra.mxu0 %v10422
    %10629 = vmatpush.msra.mxu0 %v10421
    %10630 = vmatmul.f32.gmra.mxu0 %v10566
    %v10631 = vpop.f32.mrf.mxu0
    %v10632 = vadd.f32 0.0, %v10631
    %10633 = vdwg.mxu0
    %10634 = vmatpush.msra.mxu0 %v10452
    %10635 = vmatpush.msra.mxu0 %v10451
    %10636 = vmatpush.msra.mxu0 %v10450
    %10637 = vmatpush.msra.mxu0 %v10449
    %10638 = vmatpush.msra.mxu0 %v10448
    %10639 = vmatpush.msra.mxu0 %v10447
    %10640 = vmatpush.msra.mxu0 %v10446
    %10641 = vmatpush.msra.mxu0 %v10445
    %10642 = vmatpush.msra.mxu0 %v10444
    %10643 = vmatpush.msra.mxu0 %v10443
    %10644 = vmatpush.msra.mxu0 %v10442
    %10645 = vmatpush.msra.mxu0 %v10441
    %10646 = vmatpush.msra.mxu0 %v10440
    %10647 = vmatpush.msra.mxu0 %v10439
    %10648 = vmatpush.msra.mxu0 %v10438
    %10649 = vmatpush.msra.mxu0 %v10437
    %10650 = vmatmul.f32.gmra.mxu0 %v10598
    %v10651 = vpop.f32.mrf.mxu0
    %v10652 = vadd.f32 %v10632, %v10651
    %10653 = vdwg.mxu0
    %10654 = vmatpush.msra.mxu0 %v10533
    %10655 = vmatpush.msra.mxu0 %v10532
    %10656 = vmatpush.msra.mxu0 %v10531
    %10657 = vmatpush.msra.mxu0 %v10530
    %10658 = vmatpush.msra.mxu0 %v10529
    %10659 = vmatpush.msra.mxu0 %v10528
    %10660 = vmatpush.msra.mxu0 %v10527
    %10661 = vmatpush.msra.mxu0 %v10526
    %10662 = vmatpush.msra.mxu0 %v10525
    %10663 = vmatpush.msra.mxu0 %v10524
    %10664 = vmatpush.msra.mxu0 %v10523
    %10665 = vmatpush.msra.mxu0 %v10522
    %10666 = vmatpush.msra.mxu0 %v10521
    %10667 = vmatpush.msra.mxu0 %v10520
    %10668 = vmatpush.msra.mxu0 %v10519
    %10669 = vmatpush.msra.mxu0 %v10518
    %10670 = vmatmul.f32.gmra.mxu0 %v10566
    %v10671 = vpop.f32.mrf.mxu0
    %v10672 = vadd.f32 0.0, %v10671
    %10673 = vdwg.mxu0
    %10674 = vmatpush.msra.mxu0 %v10549
    %10675 = vmatpush.msra.mxu0 %v10548
    %10676 = vmatpush.msra.mxu0 %v10547
    %10677 = vmatpush.msra.mxu0 %v10546
    %10678 = vmatpush.msra.mxu0 %v10545
    %10679 = vmatpush.msra.mxu0 %v10544
    %10680 = vmatpush.msra.mxu0 %v10543
    %10681 = vmatpush.msra.mxu0 %v10542
    %10682 = vmatpush.msra.mxu0 %v10541
    %10683 = vmatpush.msra.mxu0 %v10540
    %10684 = vmatpush.msra.mxu0 %v10539
    %10685 = vmatpush.msra.mxu0 %v10538
    %10686 = vmatpush.msra.mxu0 %v10537
    %10687 = vmatpush.msra.mxu0 %v10536
    %10688 = vmatpush.msra.mxu0 %v10535
    %10689 = vmatpush.msra.mxu0 %v10534
    %10690 = vmatmul.f32.gmra.mxu0 %v10598
    %v10691 = vpop.f32.mrf.mxu0
    %v10692 = vadd.f32 %v10672, %v10691
    %10693 = vdwg.mxu0
    %v10694 = vmax.f32 %v10652, %v10692
    %10695 = vst [vmem:[#allocation6] sm:$0xff] %v10694
    // Predicated region
    $region50: #{tpu_custom_call.1} parent=1 // pred_check
      _
    $region51: #{tpu_custom_call.1} parent=1 // pred_check_branch
      %10697 = sbr.rel (0) target = $region53
    $region52: #{tpu_custom_call.1} parent=1 // pred_region
      %10699 = vsyncadd [#allocation7], 0
      %s10701 = sshll.u32 [#allocation6], 4
      %s10702 = int_to_ptr.vmem [resolvable:$true] %s10701
      %s10703 = sshll.u32 %s12, 4
      %s10704 = int_to_ptr.hbm [resolvable:$true] %s10703
      %10706 = dma.vmem_to_hbm [thread:$0]  %s10702, 128, %s10704, [#allocation7]
    $region53: #{tpu_custom_call.1} parent=1 // pred_fallthru
      _
    // Predicated region
    $region54: #{tpu_custom_call.1} parent=1 // pred_check
      _
    $region55: #{tpu_custom_call.1} parent=1 // pred_check_branch
      %10708 = sbr.rel (0) target = $region57
    $region56: #{tpu_custom_call.1} parent=1 // pred_region
      %10710 = dma.done [#allocation7], 128
    $region57: #{tpu_custom_call.1} parent=1 // pred_fallthru
      _
    %10711 = vsyncpa [#allocation7], 1

</llo_original>
